<compile_context>
chip_gen: v7x
topology: tpu7x:2x2x1
jax: 0.10.0
libtpu: 0.0.40
codegen_flags: <defaults>
</compile_context>

<pallas_src>
import jax
import jax.numpy as jnp
from jax import lax
from jax.experimental import pallas as pl
from jax.experimental.pallas import tpu as pltpu


# -----------------------------------------------------------------------------
# Kernel A: fused GEMM + bias + ReLU (used for conv1 and conv2 on im2col patches)
# -----------------------------------------------------------------------------
def _gemm_bias_relu_kernel(x_ref, w_ref, b_ref, o_ref):
    acc = jnp.dot(x_ref[...], w_ref[...], preferred_element_type=jnp.float32)
    acc = acc + b_ref[...]                       # (1, N) broadcast over rows
    o_ref[...] = jnp.maximum(acc, 0.0).astype(o_ref.dtype)


def _gemm_bias_relu(x2d, w2d, b2d):
    M, K = x2d.shape
    N = w2d.shape[1]
    return pl.pallas_call(
        _gemm_bias_relu_kernel,
        out_shape=jax.ShapeDtypeStruct((M, N), jnp.float32),
        grid=(1,),
        in_specs=[
            pl.BlockSpec((M, K), lambda i: (0, 0)),
            pl.BlockSpec((K, N), lambda i: (0, 0)),
            pl.BlockSpec((1, N), lambda i: (0, 0)),
        ],
        out_specs=pl.BlockSpec((M, N), lambda i: (0, 0)),
        compiler_params=pltpu.CompilerParams(dimension_semantics=("arbitrary",)),
        cost_estimate=pl.CostEstimate(
            flops=2 * M * K * N,
            transcendentals=0,
            bytes_accessed=4 * (M * K + K * N + N + M * N)),
    )(x2d, w2d, b2d)


# -----------------------------------------------------------------------------
# Kernel B: fc1 as a K-tiled matmul with resident accumulator + fused bias
# -----------------------------------------------------------------------------
def _fc_kernel(x_ref, w_ref, b_ref, o_ref):
    k = pl.program_id(0)

    @pl.when(k == 0)
    def _init():
        o_ref[...] = jnp.zeros_like(o_ref)

    o_ref[...] += jnp.dot(x_ref[...], w_ref[...],
                          preferred_element_type=jnp.float32)

    @pl.when(k == pl.num_programs(0) - 1)
    def _finalize():
        o_ref[...] += b_ref[...]                 # (1, N) broadcast


def _fc_forward(x2d, wT, b2d, *, block_k=2304):
    # wT: (K, N) — pre-transposed once in prepare_params (no per-call transpose).
    M, K = x2d.shape
    N = wT.shape[1]
    if K % block_k != 0:                         # fallback: single-block reduction
        block_k = K
    nk = K // block_k
    return pl.pallas_call(
        _fc_kernel,
        out_shape=jax.ShapeDtypeStruct((M, N), jnp.float32),
        grid=(nk,),                              # reduction axis (last, "arbitrary")
        in_specs=[
            pl.BlockSpec((M, block_k), lambda k: (0, k)),
            pl.BlockSpec((block_k, N), lambda k: (k, 0)),
            pl.BlockSpec((1, N), lambda k: (0, 0)),
        ],
        out_specs=pl.BlockSpec((M, N), lambda k: (0, 0)),
        compiler_params=pltpu.CompilerParams(dimension_semantics=("arbitrary",)),
        cost_estimate=pl.CostEstimate(
            flops=2 * M * K * N,
            transcendentals=0,
            bytes_accessed=4 * (M * K + K * N + N + M * N)),
    )(x2d, wT, b2d)


# -----------------------------------------------------------------------------
# One-time parameter preparation (PyTorch layouts -> kernel-friendly layouts)
# -----------------------------------------------------------------------------
def prepare_params(w1, b1, w2, b2, fc_w, fc_b, conv2_out_hw):
    H2, W2 = conv2_out_hw
    C1 = w1.shape[0]
    C2 = w2.shape[0]
    O = fc_w.shape[0]

    # conv1: (C1, 1, 3, 3) -> (9, C1), row index = kh*3 + kw
    w1m = w1.reshape(C1, 9).T
    b1m = b1.reshape(1, C1)

    # conv2: (C2, C1, 3, 3) -> (9*C1, C2), row index = (kh*3 + kw)*C1 + ci
    w2m = jnp.transpose(w2, (2, 3, 1, 0)).reshape(9 * C1, C2)
    b2m = b2.reshape(1, C2)

    # fc1: PyTorch weight indexes NCHW-flattened features; our activations are
    # NHWC-flattened, so permute columns once and pre-transpose to (K, O).
    fc_wm = (fc_w.reshape(O, C2, H2, W2)
                  .transpose(0, 2, 3, 1)         # (O, H2, W2, C2)
                  .reshape(O, H2 * W2 * C2)
                  .T)                            # (K, O)
    fc_bm = fc_b.reshape(1, O)
    return w1m, b1m, w2m, b2m, fc_wm, fc_bm


# -----------------------------------------------------------------------------
# Forward pass (AudioModel.forward semantics)
# -----------------------------------------------------------------------------
def audio_model_forward(x, params):
    w1m, b1m, w2m, b2m, fc_wm, fc_bm = params
    B = x.shape[0]
    xs = x[:, 0, :, :]                           # in_channels == 1
    H, W = xs.shape[1], xs.shape[2]
    H1, W1 = H - 2, W - 2                        # conv1: 3x3, stride 1, valid
    H2, W2 = (H1 - 3) // 2 + 1, (W1 - 3) // 2 + 1  # conv2: 3x3, stride 2, valid
    C1 = w1m.shape[1]
    C2 = w2m.shape[1]

    # conv1 as im2col + GEMM (+bias, +ReLU)
    p1 = jnp.stack([xs[:, kh:kh + H1, kw:kw + W1]
                    for kh in range(3) for kw in range(3)], axis=-1)  # (B,H1,W1,9)
    p1 = p1.reshape(B * H1 * W1, 9)
    y1 = _gemm_bias_relu(p1, w1m, b1m)           # (B*H1*W1, C1)
    y1 = y1.reshape(B, H1, W1, C1)               # channels-last

    # conv2 (stride 2) as im2col + GEMM (+bias, +ReLU)
    p2 = jnp.concatenate(
        [y1[:, kh:kh + 2 * H2:2, kw:kw + 2 * W2:2, :]
         for kh in range(3) for kw in range(3)], axis=-1)             # (B,H2,W2,9*C1)
    p2 = p2.reshape(B * H2 * W2, 9 * C1)
    y2 = _gemm_bias_relu(p2, w2m, b2m)           # (B*H2*W2, C2)

    # fc1 on NHWC-flattened features (fc weight columns were permuted to match)
    feat = y2.reshape(B, H2 * W2 * C2)           # (B, 11520)
    return _fc_forward(feat, fc_wm, fc_bm)       # (B, output_dim)


# -----------------------------------------------------------------------------
# Pure-JAX reference of the PyTorch module (NCHW convs + NCHW flatten)
# -----------------------------------------------------------------------------
def reference_forward(x, w1, b1, w2, b2, fc_w, fc_b):
    dn = ('NCHW', 'OIHW', 'NCHW')
    h = lax.conv_general_dilated(x, w1, (1, 1), 'VALID', dimension_numbers=dn,
                                 precision=lax.Precision.HIGHEST)
    h = jnp.maximum(h + b1.reshape(1, -1, 1, 1), 0.0)
    h = lax.conv_general_dilated(h, w2, (2, 2), 'VALID', dimension_numbers=dn,
                                 precision=lax.Precision.HIGHEST)
    h = jnp.maximum(h + b2.reshape(1, -1, 1, 1), 0.0)
    flat = h.reshape(x.shape[0], -1)             # PyTorch x.view(n_b, -1) (NCHW)
    return jnp.dot(flat, fc_w.T, precision=lax.Precision.HIGHEST) + fc_b


if __name__ == "__main__":
    # Input spatial size chosen so the NCHW flatten is exactly 11520 = 32*18*20,
    # matching fc1's in_features in the PyTorch module.
    B = 2
    H, W = 39, 43
    C1, C2 = 32, 32
    OUT = 64
    H1, W1 = H - 2, W - 2
    H2, W2 = (H1 - 3) // 2 + 1, (W1 - 3) // 2 + 1
    D_IN = C2 * H2 * W2
    assert D_IN == 11520

    key = jax.random.PRNGKey(0)
    ks = jax.random.split(key, 7)
    x = jax.random.normal(ks[0], (B, 1, H, W), dtype=jnp.float32)

    def uinit(k, shape, fan_in):
        bnd = 1.0 / (fan_in ** 0.5)
        return jax.random.uniform(k, shape, minval=-bnd, maxval=bnd,
                                  dtype=jnp.float32)

    w1 = uinit(ks[1], (C1, 1, 3, 3), 9)
    b1 = uinit(ks[2], (C1,), 9)
    w2 = uinit(ks[3], (C2, C1, 3, 3), C1 * 9)
    b2 = uinit(ks[4], (C2,), C1 * 9)
    fc_w = uinit(ks[5], (OUT, D_IN), D_IN)
    fc_b = uinit(ks[6], (OUT,), D_IN)

    params = prepare_params(w1, b1, w2, b2, fc_w, fc_b, (H2, W2))

    fwd = jax.jit(audio_model_forward)
    out = jax.block_until_ready(fwd(x, params))

    ref = reference_forward(x, w1, b1, w2, b2, fc_w, fc_b)
    assert out.shape == (B, OUT)
    assert jnp.allclose(out, ref, atol=5e-3, rtol=5e-3), \
        float(jnp.max(jnp.abs(out - ref)))

    print("KERNEL_OK")
</pallas_src>

<mosaic_0001>
module attributes {stable_mosaic.version = 11 : i64} {
  func.func @_gemm_bias_relu_kernel(%arg0: i32, %arg1: memref<3034x9xf32, #tpu.memory_space<vmem>>, %arg2: memref<9x32xf32, #tpu.memory_space<vmem>>, %arg3: memref<1x32xf32, #tpu.memory_space<vmem>>, %arg4: memref<3034x32xf32, #tpu.memory_space<vmem>>) attributes {dimension_semantics = [#tpu.dimension_semantics<arbitrary>], iteration_bounds = array<i64: 1>, scalar_prefetch = 0 : i64, scratch_operands = 0 : i64, tpu.core_type = #tpu.core_type<tc>, window_params = [{pipeline_mode = #tpu.pipeline_mode<synchronous>, transform_indices = @transform_0, window_bounds = array<i64: 3034, 9>}, {pipeline_mode = #tpu.pipeline_mode<synchronous>, transform_indices = @transform_1, window_bounds = array<i64: 9, 32>}, {pipeline_mode = #tpu.pipeline_mode<synchronous>, transform_indices = @transform_2, window_bounds = array<i64: 1, 32>}, {pipeline_mode = #tpu.pipeline_mode<synchronous>, transform_indices = @transform_3, window_bounds = array<i64: 3034, 32>}]} {
    %c0 = arith.constant 0 : index
    %c0_0 = arith.constant 0 : index
    %0 = vector.load %arg1[%c0, %c0_0] : memref<3034x9xf32, #tpu.memory_space<vmem>>, vector<3034x9xf32>
    %c0_1 = arith.constant 0 : index
    %c0_2 = arith.constant 0 : index
    %1 = vector.load %arg2[%c0_1, %c0_2] : memref<9x32xf32, #tpu.memory_space<vmem>>, vector<9x32xf32>
    %cst = arith.constant dense<0.000000e+00> : vector<3034x32xf32>
    %2 = tpu.matmul %0, %1, %cst {dimension_numbers = #tpu.dot_dimension_numbers<[1], [0], [0], [1], [0, 0, 1, 1], [], []>} : vector<3034x9xf32>, vector<9x32xf32>, vector<3034x32xf32> -> vector<3034x32xf32>
    %c0_3 = arith.constant 0 : index
    %c0_4 = arith.constant 0 : index
    %3 = vector.load %arg3[%c0_3, %c0_4] : memref<1x32xf32, #tpu.memory_space<vmem>>, vector<1x32xf32>
    %4 = vector.broadcast %3 : vector<1x32xf32> to vector<3034x32xf32>
    %5 = arith.addf %2, %4 : vector<3034x32xf32>
    %cst_5 = arith.constant 0.000000e+00 : f32
    %6 = vector.broadcast %cst_5 : f32 to vector<3034x32xf32>
    %7 = arith.maximumf %5, %6 : vector<3034x32xf32>
    %c0_6 = arith.constant 0 : index
    %c0_7 = arith.constant 0 : index
    %8 = vector.load %arg4[%c0_6, %c0_7] : memref<3034x32xf32, #tpu.memory_space<vmem>>, vector<3034x32xf32>
    tpu.vector_store %arg4[%c0_6, %c0_7], %7 {strides = array<i32>} : memref<3034x32xf32, #tpu.memory_space<vmem>>, vector<3034x32xf32>,
    return
  }
  func.func @transform_0(%arg0: i32) -> (i32, i32) {
    %c0_i32 = arith.constant 0 : i32
    %c0_i32_0 = arith.constant 0 : i32
    %c0_i32_1 = arith.constant 0 : i32
    return %c0_i32, %c0_i32_0 : i32, i32
  }
  func.func @transform_1(%arg0: i32) -> (i32, i32) {
    %c0_i32 = arith.constant 0 : i32
    %c0_i32_0 = arith.constant 0 : i32
    %c0_i32_1 = arith.constant 0 : i32
    return %c0_i32, %c0_i32_0 : i32, i32
  }
  func.func @transform_2(%arg0: i32) -> (i32, i32) {
    %c0_i32 = arith.constant 0 : i32
    %c0_i32_0 = arith.constant 0 : i32
    %c0_i32_1 = arith.constant 0 : i32
    return %c0_i32, %c0_i32_0 : i32, i32
  }
  func.func @transform_3(%arg0: i32) -> (i32, i32) {
    %c0_i32 = arith.constant 0 : i32
    %c0_i32_0 = arith.constant 0 : i32
    %c0_i32_1 = arith.constant 0 : i32
    return %c0_i32, %c0_i32_0 : i32, i32
  }
}

module attributes {stable_mosaic.version = 11 : i64} {
  func.func @_gemm_bias_relu_kernel(%arg0: i32, %arg1: memref<720x288xf32, #tpu.memory_space<vmem>>, %arg2: memref<288x32xf32, #tpu.memory_space<vmem>>, %arg3: memref<1x32xf32, #tpu.memory_space<vmem>>, %arg4: memref<720x32xf32, #tpu.memory_space<vmem>>) attributes {dimension_semantics = [#tpu.dimension_semantics<arbitrary>], iteration_bounds = array<i64: 1>, scalar_prefetch = 0 : i64, scratch_operands = 0 : i64, tpu.core_type = #tpu.core_type<tc>, window_params = [{pipeline_mode = #tpu.pipeline_mode<synchronous>, transform_indices = @transform_0, window_bounds = array<i64: 720, 288>}, {pipeline_mode = #tpu.pipeline_mode<synchronous>, transform_indices = @transform_1, window_bounds = array<i64: 288, 32>}, {pipeline_mode = #tpu.pipeline_mode<synchronous>, transform_indices = @transform_2, window_bounds = array<i64: 1, 32>}, {pipeline_mode = #tpu.pipeline_mode<synchronous>, transform_indices = @transform_3, window_bounds = array<i64: 720, 32>}]} {
    %c0 = arith.constant 0 : index
    %c0_0 = arith.constant 0 : index
    %0 = vector.load %arg1[%c0, %c0_0] : memref<720x288xf32, #tpu.memory_space<vmem>>, vector<720x288xf32>
    %c0_1 = arith.constant 0 : index
    %c0_2 = arith.constant 0 : index
    %1 = vector.load %arg2[%c0_1, %c0_2] : memref<288x32xf32, #tpu.memory_space<vmem>>, vector<288x32xf32>
    %cst = arith.constant dense<0.000000e+00> : vector<720x32xf32>
    %2 = tpu.matmul %0, %1, %cst {dimension_numbers = #tpu.dot_dimension_numbers<[1], [0], [0], [1], [0, 0, 1, 1], [], []>} : vector<720x288xf32>, vector<288x32xf32>, vector<720x32xf32> -> vector<720x32xf32>
    %c0_3 = arith.constant 0 : index
    %c0_4 = arith.constant 0 : index
    %3 = vector.load %arg3[%c0_3, %c0_4] : memref<1x32xf32, #tpu.memory_space<vmem>>, vector<1x32xf32>
    %4 = vector.broadcast %3 : vector<1x32xf32> to vector<720x32xf32>
    %5 = arith.addf %2, %4 : vector<720x32xf32>
    %cst_5 = arith.constant 0.000000e+00 : f32
    %6 = vector.broadcast %cst_5 : f32 to vector<720x32xf32>
    %7 = arith.maximumf %5, %6 : vector<720x32xf32>
    %c0_6 = arith.constant 0 : index
    %c0_7 = arith.constant 0 : index
    %8 = vector.load %arg4[%c0_6, %c0_7] : memref<720x32xf32, #tpu.memory_space<vmem>>, vector<720x32xf32>
    tpu.vector_store %arg4[%c0_6, %c0_7], %7 {strides = array<i32>} : memref<720x32xf32, #tpu.memory_space<vmem>>, vector<720x32xf32>,
    return
  }
  func.func @transform_0(%arg0: i32) -> (i32, i32) {
    %c0_i32 = arith.constant 0 : i32
    %c0_i32_0 = arith.constant 0 : i32
    %c0_i32_1 = arith.constant 0 : i32
    return %c0_i32, %c0_i32_0 : i32, i32
  }
  func.func @transform_1(%arg0: i32) -> (i32, i32) {
    %c0_i32 = arith.constant 0 : i32
    %c0_i32_0 = arith.constant 0 : i32
    %c0_i32_1 = arith.constant 0 : i32
    return %c0_i32, %c0_i32_0 : i32, i32
  }
  func.func @transform_2(%arg0: i32) -> (i32, i32) {
    %c0_i32 = arith.constant 0 : i32
    %c0_i32_0 = arith.constant 0 : i32
    %c0_i32_1 = arith.constant 0 : i32
    return %c0_i32, %c0_i32_0 : i32, i32
  }
  func.func @transform_3(%arg0: i32) -> (i32, i32) {
    %c0_i32 = arith.constant 0 : i32
    %c0_i32_0 = arith.constant 0 : i32
    %c0_i32_1 = arith.constant 0 : i32
    return %c0_i32, %c0_i32_0 : i32, i32
  }
}

module attributes {stable_mosaic.version = 11 : i64} {
  func.func @_fc_kernel(%arg0: i32, %arg1: memref<2x2304xf32, #tpu.memory_space<vmem>>, %arg2: memref<2304x64xf32, #tpu.memory_space<vmem>>, %arg3: memref<1x64xf32, #tpu.memory_space<vmem>>, %arg4: memref<2x64xf32, #tpu.memory_space<vmem>>) attributes {dimension_semantics = [#tpu.dimension_semantics<arbitrary>], iteration_bounds = array<i64: 5>, scalar_prefetch = 0 : i64, scratch_operands = 0 : i64, tpu.core_type = #tpu.core_type<tc>, window_params = [{transform_indices = @transform_0, window_bounds = array<i64: 2, 2304>}, {transform_indices = @transform_1, window_bounds = array<i64: 2304, 64>}, {pipeline_mode = #tpu.pipeline_mode<synchronous>, transform_indices = @transform_2, window_bounds = array<i64: 1, 64>}, {pipeline_mode = #tpu.pipeline_mode<synchronous>, transform_indices = @transform_3, window_bounds = array<i64: 2, 64>}]} {
    %c0_i32 = arith.constant 0 : i32
    %0 = arith.cmpi eq, %arg0, %c0_i32 : i32
    %1 = arith.extui %0 : i1 to i32
    %c0_i32_0 = arith.constant 0 : i32
    %2 = arith.cmpi ne, %1, %c0_i32_0 : i32
    scf.if %2 {
      %cst_9 = arith.constant 0.000000e+00 : f32
      %12 = vector.broadcast %cst_9 : f32 to vector<2x64xf32>
      %c0_10 = arith.constant 0 : index
      %c0_11 = arith.constant 0 : index
      %13 = vector.load %arg4[%c0_10, %c0_11] : memref<2x64xf32, #tpu.memory_space<vmem>>, vector<2x64xf32>
      tpu.vector_store %arg4[%c0_10, %c0_11], %12 {strides = array<i32>} : memref<2x64xf32, #tpu.memory_space<vmem>>, vector<2x64xf32>,
    } else {
    }
    %c0 = arith.constant 0 : index
    %c0_1 = arith.constant 0 : index
    %3 = vector.load %arg4[%c0, %c0_1] : memref<2x64xf32, #tpu.memory_space<vmem>>, vector<2x64xf32>
    %c0_2 = arith.constant 0 : index
    %c0_3 = arith.constant 0 : index
    %4 = vector.load %arg1[%c0_2, %c0_3] : memref<2x2304xf32, #tpu.memory_space<vmem>>, vector<2x2304xf32>
    %c0_4 = arith.constant 0 : index
    %c0_5 = arith.constant 0 : index
    %5 = vector.load %arg2[%c0_4, %c0_5] : memref<2304x64xf32, #tpu.memory_space<vmem>>, vector<2304x64xf32>
    %cst = arith.constant dense<0.000000e+00> : vector<2x64xf32>
    %6 = tpu.matmul %4, %5, %cst {dimension_numbers = #tpu.dot_dimension_numbers<[1], [0], [0], [1], [0, 0, 1, 1], [], []>} : vector<2x2304xf32>, vector<2304x64xf32>, vector<2x64xf32> -> vector<2x64xf32>
    %7 = arith.addf %3, %6 : vector<2x64xf32>
    %c0_6 = arith.constant 0 : index
    %c0_7 = arith.constant 0 : index
    %8 = vector.load %arg4[%c0_6, %c0_7] : memref<2x64xf32, #tpu.memory_space<vmem>>, vector<2x64xf32>
    tpu.vector_store %arg4[%c0_6, %c0_7], %7 {strides = array<i32>} : memref<2x64xf32, #tpu.memory_space<vmem>>, vector<2x64xf32>,
    %c4_i32 = arith.constant 4 : i32
    %9 = arith.cmpi eq, %arg0, %c4_i32 : i32
    %10 = arith.extui %9 : i1 to i32
    %c0_i32_8 = arith.constant 0 : i32
    %11 = arith.cmpi ne, %10, %c0_i32_8 : i32
    scf.if %11 {
      %c0_9 = arith.constant 0 : index
      %c0_10 = arith.constant 0 : index
      %12 = vector.load %arg4[%c0_9, %c0_10] : memref<2x64xf32, #tpu.memory_space<vmem>>, vector<2x64xf32>
      %c0_11 = arith.constant 0 : index
      %c0_12 = arith.constant 0 : index
      %13 = vector.load %arg3[%c0_11, %c0_12] : memref<1x64xf32, #tpu.memory_space<vmem>>, vector<1x64xf32>
      %14 = vector.broadcast %13 : vector<1x64xf32> to vector<2x64xf32>
      %15 = arith.addf %12, %14 : vector<2x64xf32>
      %c0_13 = arith.constant 0 : index
      %c0_14 = arith.constant 0 : index
      %16 = vector.load %arg4[%c0_13, %c0_14] : memref<2x64xf32, #tpu.memory_space<vmem>>, vector<2x64xf32>
      tpu.vector_store %arg4[%c0_13, %c0_14], %15 {strides = array<i32>} : memref<2x64xf32, #tpu.memory_space<vmem>>, vector<2x64xf32>,
    } else {
    }
    return
  }
  func.func @transform_0(%arg0: i32) -> (i32, i32) {
    %c0_i32 = arith.constant 0 : i32
    %c0_i32_0 = arith.constant 0 : i32
    return %c0_i32, %arg0 : i32, i32
  }
  func.func @transform_1(%arg0: i32) -> (i32, i32) {
    %c0_i32 = arith.constant 0 : i32
    %c0_i32_0 = arith.constant 0 : i32
    return %arg0, %c0_i32 : i32, i32
  }
  func.func @transform_2(%arg0: i32) -> (i32, i32) {
    %c0_i32 = arith.constant 0 : i32
    %c0_i32_0 = arith.constant 0 : i32
    %c0_i32_1 = arith.constant 0 : i32
    return %c0_i32, %c0_i32_0 : i32, i32
  }
  func.func @transform_3(%arg0: i32) -> (i32, i32) {
    %c0_i32 = arith.constant 0 : i32
    %c0_i32_0 = arith.constant 0 : i32
    %c0_i32_1 = arith.constant 0 : i32
    return %c0_i32, %c0_i32_0 : i32, i32
  }
}

</mosaic_0001>

<llo_original>
// kernel: audio_model_forward.3
$region0: #{audio_model_forward.3}
  #allocation0 [shape = 'u32[]', space=smem, size = 0x4, offset = 0x4, fixed_abs, tag = 'smem constant byte address 0x4 - core index']
  #allocation1 [shape = 'u32[144,128]{1,0:T(1,128)}', space=vmem, size = 0x12000, scoped, tag = 'internal scratch']
  %s0 = inlined_call_operand.vmem [shape: f32[3034,9], index: 0, kind: input, shape index: {}]
  %s1 = inlined_call_operand.hbm [shape: f32[9,32], index: 1, kind: input, shape index: {}]
  %s2 = inlined_call_operand.hbm [shape: f32[1,32], index: 2, kind: input, shape index: {}]
  %s3 = inlined_call_operand.vmem [shape: f32[3034,32], index: 3, kind: output, shape index: {}]
  %s4 = sld [smem:[#allocation0]]
  $region30: #{audio_model_forward.3} parent=0
    _
  %s6 = ssub.s32 1, %s4
  %s7 = scalar_select 0, %s6, %s4
  $region1: #{audio_model_forward.3} parent=0
    #allocation2 [shape = 'u8[8192]{0}', space=vmem, size = 0x2000, scoped, tag = 'input window, operand 1, single buffered']
    #allocation3 [shape = 's32[1]{0}', space=sflag, size = 0x4, scoped, tag = 'scoped memory for audio_model_forward.3']
    #allocation4 [shape = 'u8[512]{0}', space=vmem, size = 0x400, scoped, tag = 'input window, operand 2, single buffered']
    #allocation5 [shape = 's32[1]{0}', space=sflag, size = 0x4, scoped, tag = 'scoped memory for audio_model_forward.3']
    %8 = vsyncpa [#allocation3], 0
    %9 = vsyncpa [#allocation5], 0
    // Predicated region
    $region2: #{audio_model_forward.3} parent=1 // pred_check
      _
    $region3: #{audio_model_forward.3} parent=1 // pred_check_branch
      %11 = sbr.rel (0) target = $region5
    $region4: #{audio_model_forward.3} parent=1 // pred_region
      _
    $region5: #{audio_model_forward.3} parent=1 // pred_fallthru
      _
    // Predicated region
    $region6: #{audio_model_forward.3} parent=1 // pred_check
      _
    $region7: #{audio_model_forward.3} parent=1 // pred_check_branch
      %13 = sbr.rel (0) target = $region9
    $region8: #{audio_model_forward.3} parent=1 // pred_region
      %s15 = ssub.s32 256, 256
      %16 = vsyncadd [#allocation3], %s15
      %s17 = sshll.u32 [#allocation2], 4
      %s18 = int_to_ptr.vmem [resolvable:$true] %s17
      %23 = dma.hbm_to_vmem [thread:$0]  %s1, 256, %s18, [#allocation3], 128, 128, 8
    $region9: #{audio_model_forward.3} parent=1 // pred_fallthru
      _
    // Predicated region
    $region10: #{audio_model_forward.3} parent=1 // pred_check
      _
    $region11: #{audio_model_forward.3} parent=1 // pred_check_branch
      %25 = sbr.rel (0) target = $region13
    $region12: #{audio_model_forward.3} parent=1 // pred_region
      %s27 = ssub.s32 16, 16
      %28 = vsyncadd [#allocation5], %s27
      %s30 = sshll.u32 [#allocation4], 4
      %s31 = int_to_ptr.vmem [resolvable:$true] %s30
      %33 = dma.hbm_to_vmem [thread:$0]  %s2, 16, %s31, [#allocation5]
    $region13: #{audio_model_forward.3} parent=1 // pred_fallthru
      _
    // Predicated region
    $region14: #{audio_model_forward.3} parent=1 // pred_check
      _
    $region15: #{audio_model_forward.3} parent=1 // pred_check_branch
      %35 = sbr.rel (0) target = $region17
    $region16: #{audio_model_forward.3} parent=1 // pred_region
      %36 = dma.done [#allocation3], 256
    $region17: #{audio_model_forward.3} parent=1 // pred_fallthru
      _
    // Predicated region
    $region18: #{audio_model_forward.3} parent=1 // pred_check
      _
    $region19: #{audio_model_forward.3} parent=1 // pred_check_branch
      %38 = sbr.rel (0) target = $region21
    $region20: #{audio_model_forward.3} parent=1 // pred_region
      %39 = dma.done [#allocation5], 16
    $region21: #{audio_model_forward.3} parent=1 // pred_fallthru
      _
    %v40 = vld [vmem:[%s0] sm:$0xff]
    %v41 = vld [vmem:[%s0 + $0x8] sm:$0xff]
    %v42 = vld [vmem:[%s0 + $0x10] sm:$0xff]
    %v43 = vld [vmem:[%s0 + $0x18] sm:$0xff]
    %v44 = vld [vmem:[%s0 + $0x20] sm:$0xff]
    %v45 = vld [vmem:[%s0 + $0x28] sm:$0xff]
    %v46 = vld [vmem:[%s0 + $0x30] sm:$0xff]
    %v47 = vld [vmem:[%s0 + $0x38] sm:$0xff]
    %v48 = vld [vmem:[%s0 + $0x40] sm:$0xff]
    %v49 = vld [vmem:[%s0 + $0x48] sm:$0xff]
    %v50 = vld [vmem:[%s0 + $0x50] sm:$0xff]
    %v51 = vld [vmem:[%s0 + $0x58] sm:$0xff]
    %v52 = vld [vmem:[%s0 + $0x60] sm:$0xff]
    %v53 = vld [vmem:[%s0 + $0x68] sm:$0xff]
    %v54 = vld [vmem:[%s0 + $0x70] sm:$0xff]
    %v55 = vld [vmem:[%s0 + $0x78] sm:$0xff]
    %v56 = vld [vmem:[%s0 + $0x80] sm:$0xff]
    %v57 = vld [vmem:[%s0 + $0x88] sm:$0xff]
    %v58 = vld [vmem:[%s0 + $0x90] sm:$0xff]
    %v59 = vld [vmem:[%s0 + $0x98] sm:$0xff]
    %v60 = vld [vmem:[%s0 + $0xa0] sm:$0xff]
    %v61 = vld [vmem:[%s0 + $0xa8] sm:$0xff]
    %v62 = vld [vmem:[%s0 + $0xb0] sm:$0xff]
    %v63 = vld [vmem:[%s0 + $0xb8] sm:$0xff]
    %v64 = vld [vmem:[%s0 + $0xc0] sm:$0xff]
    %v65 = vld [vmem:[%s0 + $0xc8] sm:$0xff]
    %v66 = vld [vmem:[%s0 + $0xd0] sm:$0xff]
    %v67 = vld [vmem:[%s0 + $0xd8] sm:$0xff]
    %v68 = vld [vmem:[%s0 + $0xe0] sm:$0xff]
    %v69 = vld [vmem:[%s0 + $0xe8] sm:$0xff]
    %v70 = vld [vmem:[%s0 + $0xf0] sm:$0xff]
    %v71 = vld [vmem:[%s0 + $0xf8] sm:$0xff]
    %v72 = vld [vmem:[%s0 + $0x100] sm:$0xff]
    %v73 = vld [vmem:[%s0 + $0x108] sm:$0xff]
    %v74 = vld [vmem:[%s0 + $0x110] sm:$0xff]
    %v75 = vld [vmem:[%s0 + $0x118] sm:$0xff]
    %v76 = vld [vmem:[%s0 + $0x120] sm:$0xff]
    %v77 = vld [vmem:[%s0 + $0x128] sm:$0xff]
    %v78 = vld [vmem:[%s0 + $0x130] sm:$0xff]
    %v79 = vld [vmem:[%s0 + $0x138] sm:$0xff]
    %v80 = vld [vmem:[%s0 + $0x140] sm:$0xff]
    %v81 = vld [vmem:[%s0 + $0x148] sm:$0xff]
    %v82 = vld [vmem:[%s0 + $0x150] sm:$0xff]
    %v83 = vld [vmem:[%s0 + $0x158] sm:$0xff]
    %v84 = vld [vmem:[%s0 + $0x160] sm:$0xff]
    %v85 = vld [vmem:[%s0 + $0x168] sm:$0xff]
    %v86 = vld [vmem:[%s0 + $0x170] sm:$0xff]
    %v87 = vld [vmem:[%s0 + $0x178] sm:$0xff]
    %v88 = vld [vmem:[%s0 + $0x180] sm:$0xff]
    %v89 = vld [vmem:[%s0 + $0x188] sm:$0xff]
    %v90 = vld [vmem:[%s0 + $0x190] sm:$0xff]
    %v91 = vld [vmem:[%s0 + $0x198] sm:$0xff]
    %v92 = vld [vmem:[%s0 + $0x1a0] sm:$0xff]
    %v93 = vld [vmem:[%s0 + $0x1a8] sm:$0xff]
    %v94 = vld [vmem:[%s0 + $0x1b0] sm:$0xff]
    %v95 = vld [vmem:[%s0 + $0x1b8] sm:$0xff]
    %v96 = vld [vmem:[%s0 + $0x1c0] sm:$0xff]
    %v97 = vld [vmem:[%s0 + $0x1c8] sm:$0xff]
    %v98 = vld [vmem:[%s0 + $0x1d0] sm:$0xff]
    %v99 = vld [vmem:[%s0 + $0x1d8] sm:$0xff]
    %v100 = vld [vmem:[%s0 + $0x1e0] sm:$0xff]
    %v101 = vld [vmem:[%s0 + $0x1e8] sm:$0xff]
    %v102 = vld [vmem:[%s0 + $0x1f0] sm:$0xff]
    %v103 = vld [vmem:[%s0 + $0x1f8] sm:$0xff]
    %v104 = vld [vmem:[%s0 + $0x200] sm:$0xff]
    %v105 = vld [vmem:[%s0 + $0x208] sm:$0xff]
    %v106 = vld [vmem:[%s0 + $0x210] sm:$0xff]
    %v107 = vld [vmem:[%s0 + $0x218] sm:$0xff]
    %v108 = vld [vmem:[%s0 + $0x220] sm:$0xff]
    %v109 = vld [vmem:[%s0 + $0x228] sm:$0xff]
    %v110 = vld [vmem:[%s0 + $0x230] sm:$0xff]
    %v111 = vld [vmem:[%s0 + $0x238] sm:$0xff]
    %v112 = vld [vmem:[%s0 + $0x240] sm:$0xff]
    %v113 = vld [vmem:[%s0 + $0x248] sm:$0xff]
    %v114 = vld [vmem:[%s0 + $0x250] sm:$0xff]
    %v115 = vld [vmem:[%s0 + $0x258] sm:$0xff]
    %v116 = vld [vmem:[%s0 + $0x260] sm:$0xff]
    %v117 = vld [vmem:[%s0 + $0x268] sm:$0xff]
    %v118 = vld [vmem:[%s0 + $0x270] sm:$0xff]
    %v119 = vld [vmem:[%s0 + $0x278] sm:$0xff]
    %v120 = vld [vmem:[%s0 + $0x280] sm:$0xff]
    %v121 = vld [vmem:[%s0 + $0x288] sm:$0xff]
    %v122 = vld [vmem:[%s0 + $0x290] sm:$0xff]
    %v123 = vld [vmem:[%s0 + $0x298] sm:$0xff]
    %v124 = vld [vmem:[%s0 + $0x2a0] sm:$0xff]
    %v125 = vld [vmem:[%s0 + $0x2a8] sm:$0xff]
    %v126 = vld [vmem:[%s0 + $0x2b0] sm:$0xff]
    %v127 = vld [vmem:[%s0 + $0x2b8] sm:$0xff]
    %v128 = vld [vmem:[%s0 + $0x2c0] sm:$0xff]
    %v129 = vld [vmem:[%s0 + $0x2c8] sm:$0xff]
    %v130 = vld [vmem:[%s0 + $0x2d0] sm:$0xff]
    %v131 = vld [vmem:[%s0 + $0x2d8] sm:$0xff]
    %v132 = vld [vmem:[%s0 + $0x2e0] sm:$0xff]
    %v133 = vld [vmem:[%s0 + $0x2e8] sm:$0xff]
    %v134 = vld [vmem:[%s0 + $0x2f0] sm:$0xff]
    %v135 = vld [vmem:[%s0 + $0x2f8] sm:$0xff]
    %v136 = vld [vmem:[%s0 + $0x300] sm:$0xff]
    %v137 = vld [vmem:[%s0 + $0x308] sm:$0xff]
    %v138 = vld [vmem:[%s0 + $0x310] sm:$0xff]
    %v139 = vld [vmem:[%s0 + $0x318] sm:$0xff]
    %v140 = vld [vmem:[%s0 + $0x320] sm:$0xff]
    %v141 = vld [vmem:[%s0 + $0x328] sm:$0xff]
    %v142 = vld [vmem:[%s0 + $0x330] sm:$0xff]
    %v143 = vld [vmem:[%s0 + $0x338] sm:$0xff]
    %v144 = vld [vmem:[%s0 + $0x340] sm:$0xff]
    %v145 = vld [vmem:[%s0 + $0x348] sm:$0xff]
    %v146 = vld [vmem:[%s0 + $0x350] sm:$0xff]
    %v147 = vld [vmem:[%s0 + $0x358] sm:$0xff]
    %v148 = vld [vmem:[%s0 + $0x360] sm:$0xff]
    %v149 = vld [vmem:[%s0 + $0x368] sm:$0xff]
    %v150 = vld [vmem:[%s0 + $0x370] sm:$0xff]
    %v151 = vld [vmem:[%s0 + $0x378] sm:$0xff]
    %v152 = vld [vmem:[%s0 + $0x380] sm:$0xff]
    %v153 = vld [vmem:[%s0 + $0x388] sm:$0xff]
    %v154 = vld [vmem:[%s0 + $0x390] sm:$0xff]
    %v155 = vld [vmem:[%s0 + $0x398] sm:$0xff]
    %v156 = vld [vmem:[%s0 + $0x3a0] sm:$0xff]
    %v157 = vld [vmem:[%s0 + $0x3a8] sm:$0xff]
    %v158 = vld [vmem:[%s0 + $0x3b0] sm:$0xff]
    %v159 = vld [vmem:[%s0 + $0x3b8] sm:$0xff]
    %v160 = vld [vmem:[%s0 + $0x3c0] sm:$0xff]
    %v161 = vld [vmem:[%s0 + $0x3c8] sm:$0xff]
    %v162 = vld [vmem:[%s0 + $0x3d0] sm:$0xff]
    %v163 = vld [vmem:[%s0 + $0x3d8] sm:$0xff]
    %v164 = vld [vmem:[%s0 + $0x3e0] sm:$0xff]
    %v165 = vld [vmem:[%s0 + $0x3e8] sm:$0xff]
    %v166 = vld [vmem:[%s0 + $0x3f0] sm:$0xff]
    %v167 = vld [vmem:[%s0 + $0x3f8] sm:$0xff]
    %v168 = vld [vmem:[%s0 + $0x400] sm:$0xff]
    %v169 = vld [vmem:[%s0 + $0x408] sm:$0xff]
    %v170 = vld [vmem:[%s0 + $0x410] sm:$0xff]
    %v171 = vld [vmem:[%s0 + $0x418] sm:$0xff]
    %v172 = vld [vmem:[%s0 + $0x420] sm:$0xff]
    %v173 = vld [vmem:[%s0 + $0x428] sm:$0xff]
    %v174 = vld [vmem:[%s0 + $0x430] sm:$0xff]
    %v175 = vld [vmem:[%s0 + $0x438] sm:$0xff]
    %v176 = vld [vmem:[%s0 + $0x440] sm:$0xff]
    %v177 = vld [vmem:[%s0 + $0x448] sm:$0xff]
    %v178 = vld [vmem:[%s0 + $0x450] sm:$0xff]
    %v179 = vld [vmem:[%s0 + $0x458] sm:$0xff]
    %v180 = vld [vmem:[%s0 + $0x460] sm:$0xff]
    %v181 = vld [vmem:[%s0 + $0x468] sm:$0xff]
    %v182 = vld [vmem:[%s0 + $0x470] sm:$0xff]
    %v183 = vld [vmem:[%s0 + $0x478] sm:$0xff]
    %v184 = vld [vmem:[%s0 + $0x480] sm:$0xff]
    %v185 = vld [vmem:[%s0 + $0x488] sm:$0xff]
    %v186 = vld [vmem:[%s0 + $0x490] sm:$0xff]
    %v187 = vld [vmem:[%s0 + $0x498] sm:$0xff]
    %v188 = vld [vmem:[%s0 + $0x4a0] sm:$0xff]
    %v189 = vld [vmem:[%s0 + $0x4a8] sm:$0xff]
    %v190 = vld [vmem:[%s0 + $0x4b0] sm:$0xff]
    %v191 = vld [vmem:[%s0 + $0x4b8] sm:$0xff]
    %v192 = vld [vmem:[%s0 + $0x4c0] sm:$0xff]
    %v193 = vld [vmem:[%s0 + $0x4c8] sm:$0xff]
    %v194 = vld [vmem:[%s0 + $0x4d0] sm:$0xff]
    %v195 = vld [vmem:[%s0 + $0x4d8] sm:$0xff]
    %v196 = vld [vmem:[%s0 + $0x4e0] sm:$0xff]
    %v197 = vld [vmem:[%s0 + $0x4e8] sm:$0xff]
    %v198 = vld [vmem:[%s0 + $0x4f0] sm:$0xff]
    %v199 = vld [vmem:[%s0 + $0x4f8] sm:$0xff]
    %v200 = vld [vmem:[%s0 + $0x500] sm:$0xff]
    %v201 = vld [vmem:[%s0 + $0x508] sm:$0xff]
    %v202 = vld [vmem:[%s0 + $0x510] sm:$0xff]
    %v203 = vld [vmem:[%s0 + $0x518] sm:$0xff]
    %v204 = vld [vmem:[%s0 + $0x520] sm:$0xff]
    %v205 = vld [vmem:[%s0 + $0x528] sm:$0xff]
    %v206 = vld [vmem:[%s0 + $0x530] sm:$0xff]
    %v207 = vld [vmem:[%s0 + $0x538] sm:$0xff]
    %v208 = vld [vmem:[%s0 + $0x540] sm:$0xff]
    %v209 = vld [vmem:[%s0 + $0x548] sm:$0xff]
    %v210 = vld [vmem:[%s0 + $0x550] sm:$0xff]
    %v211 = vld [vmem:[%s0 + $0x558] sm:$0xff]
    %v212 = vld [vmem:[%s0 + $0x560] sm:$0xff]
    %v213 = vld [vmem:[%s0 + $0x568] sm:$0xff]
    %v214 = vld [vmem:[%s0 + $0x570] sm:$0xff]
    %v215 = vld [vmem:[%s0 + $0x578] sm:$0xff]
    %v216 = vld [vmem:[%s0 + $0x580] sm:$0xff]
    %v217 = vld [vmem:[%s0 + $0x588] sm:$0xff]
    %v218 = vld [vmem:[%s0 + $0x590] sm:$0xff]
    %v219 = vld [vmem:[%s0 + $0x598] sm:$0xff]
    %v220 = vld [vmem:[%s0 + $0x5a0] sm:$0xff]
    %v221 = vld [vmem:[%s0 + $0x5a8] sm:$0xff]
    %v222 = vld [vmem:[%s0 + $0x5b0] sm:$0xff]
    %v223 = vld [vmem:[%s0 + $0x5b8] sm:$0xff]
    %v224 = vld [vmem:[%s0 + $0x5c0] sm:$0xff]
    %v225 = vld [vmem:[%s0 + $0x5c8] sm:$0xff]
    %v226 = vld [vmem:[%s0 + $0x5d0] sm:$0xff]
    %v227 = vld [vmem:[%s0 + $0x5d8] sm:$0xff]
    %v228 = vld [vmem:[%s0 + $0x5e0] sm:$0xff]
    %v229 = vld [vmem:[%s0 + $0x5e8] sm:$0xff]
    %v230 = vld [vmem:[%s0 + $0x5f0] sm:$0xff]
    %v231 = vld [vmem:[%s0 + $0x5f8] sm:$0xff]
    %v232 = vld [vmem:[%s0 + $0x600] sm:$0xff]
    %v233 = vld [vmem:[%s0 + $0x608] sm:$0xff]
    %v234 = vld [vmem:[%s0 + $0x610] sm:$0xff]
    %v235 = vld [vmem:[%s0 + $0x618] sm:$0xff]
    %v236 = vld [vmem:[%s0 + $0x620] sm:$0xff]
    %v237 = vld [vmem:[%s0 + $0x628] sm:$0xff]
    %v238 = vld [vmem:[%s0 + $0x630] sm:$0xff]
    %v239 = vld [vmem:[%s0 + $0x638] sm:$0xff]
    %v240 = vld [vmem:[%s0 + $0x640] sm:$0xff]
    %v241 = vld [vmem:[%s0 + $0x648] sm:$0xff]
    %v242 = vld [vmem:[%s0 + $0x650] sm:$0xff]
    %v243 = vld [vmem:[%s0 + $0x658] sm:$0xff]
    %v244 = vld [vmem:[%s0 + $0x660] sm:$0xff]
    %v245 = vld [vmem:[%s0 + $0x668] sm:$0xff]
    %v246 = vld [vmem:[%s0 + $0x670] sm:$0xff]
    %v247 = vld [vmem:[%s0 + $0x678] sm:$0xff]
    %v248 = vld [vmem:[%s0 + $0x680] sm:$0xff]
    %v249 = vld [vmem:[%s0 + $0x688] sm:$0xff]
    %v250 = vld [vmem:[%s0 + $0x690] sm:$0xff]
    %v251 = vld [vmem:[%s0 + $0x698] sm:$0xff]
    %v252 = vld [vmem:[%s0 + $0x6a0] sm:$0xff]
    %v253 = vld [vmem:[%s0 + $0x6a8] sm:$0xff]
    %v254 = vld [vmem:[%s0 + $0x6b0] sm:$0xff]
    %v255 = vld [vmem:[%s0 + $0x6b8] sm:$0xff]
    %v256 = vld [vmem:[%s0 + $0x6c0] sm:$0xff]
    %v257 = vld [vmem:[%s0 + $0x6c8] sm:$0xff]
    %v258 = vld [vmem:[%s0 + $0x6d0] sm:$0xff]
    %v259 = vld [vmem:[%s0 + $0x6d8] sm:$0xff]
    %v260 = vld [vmem:[%s0 + $0x6e0] sm:$0xff]
    %v261 = vld [vmem:[%s0 + $0x6e8] sm:$0xff]
    %v262 = vld [vmem:[%s0 + $0x6f0] sm:$0xff]
    %v263 = vld [vmem:[%s0 + $0x6f8] sm:$0xff]
    %v264 = vld [vmem:[%s0 + $0x700] sm:$0xff]
    %v265 = vld [vmem:[%s0 + $0x708] sm:$0xff]
    %v266 = vld [vmem:[%s0 + $0x710] sm:$0xff]
    %v267 = vld [vmem:[%s0 + $0x718] sm:$0xff]
    %v268 = vld [vmem:[%s0 + $0x720] sm:$0xff]
    %v269 = vld [vmem:[%s0 + $0x728] sm:$0xff]
    %v270 = vld [vmem:[%s0 + $0x730] sm:$0xff]
    %v271 = vld [vmem:[%s0 + $0x738] sm:$0xff]
    %v272 = vld [vmem:[%s0 + $0x740] sm:$0xff]
    %v273 = vld [vmem:[%s0 + $0x748] sm:$0xff]
    %v274 = vld [vmem:[%s0 + $0x750] sm:$0xff]
    %v275 = vld [vmem:[%s0 + $0x758] sm:$0xff]
    %v276 = vld [vmem:[%s0 + $0x760] sm:$0xff]
    %v277 = vld [vmem:[%s0 + $0x768] sm:$0xff]
    %v278 = vld [vmem:[%s0 + $0x770] sm:$0xff]
    %v279 = vld [vmem:[%s0 + $0x778] sm:$0xff]
    %v280 = vld [vmem:[%s0 + $0x780] sm:$0xff]
    %v281 = vld [vmem:[%s0 + $0x788] sm:$0xff]
    %v282 = vld [vmem:[%s0 + $0x790] sm:$0xff]
    %v283 = vld [vmem:[%s0 + $0x798] sm:$0xff]
    %v284 = vld [vmem:[%s0 + $0x7a0] sm:$0xff]
    %v285 = vld [vmem:[%s0 + $0x7a8] sm:$0xff]
    %v286 = vld [vmem:[%s0 + $0x7b0] sm:$0xff]
    %v287 = vld [vmem:[%s0 + $0x7b8] sm:$0xff]
    %v288 = vld [vmem:[%s0 + $0x7c0] sm:$0xff]
    %v289 = vld [vmem:[%s0 + $0x7c8] sm:$0xff]
    %v290 = vld [vmem:[%s0 + $0x7d0] sm:$0xff]
    %v291 = vld [vmem:[%s0 + $0x7d8] sm:$0xff]
    %v292 = vld [vmem:[%s0 + $0x7e0] sm:$0xff]
    %v293 = vld [vmem:[%s0 + $0x7e8] sm:$0xff]
    %v294 = vld [vmem:[%s0 + $0x7f0] sm:$0xff]
    %v295 = vld [vmem:[%s0 + $0x7f8] sm:$0xff]
    %v296 = vld [vmem:[%s0 + $0x800] sm:$0xff]
    %v297 = vld [vmem:[%s0 + $0x808] sm:$0xff]
    %v298 = vld [vmem:[%s0 + $0x810] sm:$0xff]
    %v299 = vld [vmem:[%s0 + $0x818] sm:$0xff]
    %v300 = vld [vmem:[%s0 + $0x820] sm:$0xff]
    %v301 = vld [vmem:[%s0 + $0x828] sm:$0xff]
    %v302 = vld [vmem:[%s0 + $0x830] sm:$0xff]
    %v303 = vld [vmem:[%s0 + $0x838] sm:$0xff]
    %v304 = vld [vmem:[%s0 + $0x840] sm:$0xff]
    %v305 = vld [vmem:[%s0 + $0x848] sm:$0xff]
    %v306 = vld [vmem:[%s0 + $0x850] sm:$0xff]
    %v307 = vld [vmem:[%s0 + $0x858] sm:$0xff]
    %v308 = vld [vmem:[%s0 + $0x860] sm:$0xff]
    %v309 = vld [vmem:[%s0 + $0x868] sm:$0xff]
    %v310 = vld [vmem:[%s0 + $0x870] sm:$0xff]
    %v311 = vld [vmem:[%s0 + $0x878] sm:$0xff]
    %v312 = vld [vmem:[%s0 + $0x880] sm:$0xff]
    %v313 = vld [vmem:[%s0 + $0x888] sm:$0xff]
    %v314 = vld [vmem:[%s0 + $0x890] sm:$0xff]
    %v315 = vld [vmem:[%s0 + $0x898] sm:$0xff]
    %v316 = vld [vmem:[%s0 + $0x8a0] sm:$0xff]
    %v317 = vld [vmem:[%s0 + $0x8a8] sm:$0xff]
    %v318 = vld [vmem:[%s0 + $0x8b0] sm:$0xff]
    %v319 = vld [vmem:[%s0 + $0x8b8] sm:$0xff]
    %v320 = vld [vmem:[%s0 + $0x8c0] sm:$0xff]
    %v321 = vld [vmem:[%s0 + $0x8c8] sm:$0xff]
    %v322 = vld [vmem:[%s0 + $0x8d0] sm:$0xff]
    %v323 = vld [vmem:[%s0 + $0x8d8] sm:$0xff]
    %v324 = vld [vmem:[%s0 + $0x8e0] sm:$0xff]
    %v325 = vld [vmem:[%s0 + $0x8e8] sm:$0xff]
    %v326 = vld [vmem:[%s0 + $0x8f0] sm:$0xff]
    %v327 = vld [vmem:[%s0 + $0x8f8] sm:$0xff]
    %v328 = vld [vmem:[%s0 + $0x900] sm:$0xff]
    %v329 = vld [vmem:[%s0 + $0x908] sm:$0xff]
    %v330 = vld [vmem:[%s0 + $0x910] sm:$0xff]
    %v331 = vld [vmem:[%s0 + $0x918] sm:$0xff]
    %v332 = vld [vmem:[%s0 + $0x920] sm:$0xff]
    %v333 = vld [vmem:[%s0 + $0x928] sm:$0xff]
    %v334 = vld [vmem:[%s0 + $0x930] sm:$0xff]
    %v335 = vld [vmem:[%s0 + $0x938] sm:$0xff]
    %v336 = vld [vmem:[%s0 + $0x940] sm:$0xff]
    %v337 = vld [vmem:[%s0 + $0x948] sm:$0xff]
    %v338 = vld [vmem:[%s0 + $0x950] sm:$0xff]
    %v339 = vld [vmem:[%s0 + $0x958] sm:$0xff]
    %v340 = vld [vmem:[%s0 + $0x960] sm:$0xff]
    %v341 = vld [vmem:[%s0 + $0x968] sm:$0xff]
    %v342 = vld [vmem:[%s0 + $0x970] sm:$0xff]
    %v343 = vld [vmem:[%s0 + $0x978] sm:$0xff]
    %v344 = vld [vmem:[%s0 + $0x980] sm:$0xff]
    %v345 = vld [vmem:[%s0 + $0x988] sm:$0xff]
    %v346 = vld [vmem:[%s0 + $0x990] sm:$0xff]
    %v347 = vld [vmem:[%s0 + $0x998] sm:$0xff]
    %v348 = vld [vmem:[%s0 + $0x9a0] sm:$0xff]
    %v349 = vld [vmem:[%s0 + $0x9a8] sm:$0xff]
    %v350 = vld [vmem:[%s0 + $0x9b0] sm:$0xff]
    %v351 = vld [vmem:[%s0 + $0x9b8] sm:$0xff]
    %v352 = vld [vmem:[%s0 + $0x9c0] sm:$0xff]
    %v353 = vld [vmem:[%s0 + $0x9c8] sm:$0xff]
    %v354 = vld [vmem:[%s0 + $0x9d0] sm:$0xff]
    %v355 = vld [vmem:[%s0 + $0x9d8] sm:$0xff]
    %v356 = vld [vmem:[%s0 + $0x9e0] sm:$0xff]
    %v357 = vld [vmem:[%s0 + $0x9e8] sm:$0xff]
    %v358 = vld [vmem:[%s0 + $0x9f0] sm:$0xff]
    %v359 = vld [vmem:[%s0 + $0x9f8] sm:$0xff]
    %v360 = vld [vmem:[%s0 + $0xa00] sm:$0xff]
    %v361 = vld [vmem:[%s0 + $0xa08] sm:$0xff]
    %v362 = vld [vmem:[%s0 + $0xa10] sm:$0xff]
    %v363 = vld [vmem:[%s0 + $0xa18] sm:$0xff]
    %v364 = vld [vmem:[%s0 + $0xa20] sm:$0xff]
    %v365 = vld [vmem:[%s0 + $0xa28] sm:$0xff]
    %v366 = vld [vmem:[%s0 + $0xa30] sm:$0xff]
    %v367 = vld [vmem:[%s0 + $0xa38] sm:$0xff]
    %v368 = vld [vmem:[%s0 + $0xa40] sm:$0xff]
    %v369 = vld [vmem:[%s0 + $0xa48] sm:$0xff]
    %v370 = vld [vmem:[%s0 + $0xa50] sm:$0xff]
    %v371 = vld [vmem:[%s0 + $0xa58] sm:$0xff]
    %v372 = vld [vmem:[%s0 + $0xa60] sm:$0xff]
    %v373 = vld [vmem:[%s0 + $0xa68] sm:$0xff]
    %v374 = vld [vmem:[%s0 + $0xa70] sm:$0xff]
    %v375 = vld [vmem:[%s0 + $0xa78] sm:$0xff]
    %v376 = vld [vmem:[%s0 + $0xa80] sm:$0xff]
    %v377 = vld [vmem:[%s0 + $0xa88] sm:$0xff]
    %v378 = vld [vmem:[%s0 + $0xa90] sm:$0xff]
    %v379 = vld [vmem:[%s0 + $0xa98] sm:$0xff]
    %v380 = vld [vmem:[%s0 + $0xaa0] sm:$0xff]
    %v381 = vld [vmem:[%s0 + $0xaa8] sm:$0xff]
    %v382 = vld [vmem:[%s0 + $0xab0] sm:$0xff]
    %v383 = vld [vmem:[%s0 + $0xab8] sm:$0xff]
    %v384 = vld [vmem:[%s0 + $0xac0] sm:$0xff]
    %v385 = vld [vmem:[%s0 + $0xac8] sm:$0xff]
    %v386 = vld [vmem:[%s0 + $0xad0] sm:$0xff]
    %v387 = vld [vmem:[%s0 + $0xad8] sm:$0xff]
    %v388 = vld [vmem:[%s0 + $0xae0] sm:$0xff]
    %v389 = vld [vmem:[%s0 + $0xae8] sm:$0xff]
    %v390 = vld [vmem:[%s0 + $0xaf0] sm:$0xff]
    %v391 = vld [vmem:[%s0 + $0xaf8] sm:$0xff]
    %v392 = vld [vmem:[%s0 + $0xb00] sm:$0xff]
    %v393 = vld [vmem:[%s0 + $0xb08] sm:$0xff]
    %v394 = vld [vmem:[%s0 + $0xb10] sm:$0xff]
    %v395 = vld [vmem:[%s0 + $0xb18] sm:$0xff]
    %v396 = vld [vmem:[%s0 + $0xb20] sm:$0xff]
    %v397 = vld [vmem:[%s0 + $0xb28] sm:$0xff]
    %v398 = vld [vmem:[%s0 + $0xb30] sm:$0xff]
    %v399 = vld [vmem:[%s0 + $0xb38] sm:$0xff]
    %v400 = vld [vmem:[%s0 + $0xb40] sm:$0xff]
    %v401 = vld [vmem:[%s0 + $0xb48] sm:$0xff]
    %v402 = vld [vmem:[%s0 + $0xb50] sm:$0xff]
    %v403 = vld [vmem:[%s0 + $0xb58] sm:$0xff]
    %v404 = vld [vmem:[%s0 + $0xb60] sm:$0xff]
    %v405 = vld [vmem:[%s0 + $0xb68] sm:$0xff]
    %v406 = vld [vmem:[%s0 + $0xb70] sm:$0xff]
    %v407 = vld [vmem:[%s0 + $0xb78] sm:$0xff]
    %v408 = vld [vmem:[%s0 + $0xb80] sm:$0xff]
    %v409 = vld [vmem:[%s0 + $0xb88] sm:$0xff]
    %v410 = vld [vmem:[%s0 + $0xb90] sm:$0xff]
    %v411 = vld [vmem:[%s0 + $0xb98] sm:$0xff]
    %v412 = vld [vmem:[%s0 + $0xba0] sm:$0xff]
    %v413 = vld [vmem:[%s0 + $0xba8] sm:$0xff]
    %v414 = vld [vmem:[%s0 + $0xbb0] sm:$0xff]
    %v415 = vld [vmem:[%s0 + $0xbb8] sm:$0xff]
    %v416 = vld [vmem:[%s0 + $0xbc0] sm:$0xff]
    %v417 = vld [vmem:[%s0 + $0xbc8] sm:$0xff]
    %v418 = vld [vmem:[%s0 + $0xbd0] sm:$0xff]
    %v419 = vld [vmem:[%s0 + $0xbd8] sm:$0x3]
    %v420 = vld [vmem:[#allocation2] sm:$0xff]
    %v421 = vld [vmem:[#allocation2 + $0x8] sm:$0x1]
    %v422 = vld [vmem:[#allocation4] sm:$0x1]
    %v424 = vlaneseq
    %v425 = vshrl.u32 %v424, 7
    %v426 = vsub.s32 0, %v425
    %v427 = vrot.slane %v422, %v426
    %vm429 = vcmask 72704
    %v431 = vsel %vm429, %v40, 0
    %v434 = vsel %vm429, %v41, 0
    %v437 = vsel %vm429, %v42, 0
    %v440 = vsel %vm429, %v43, 0
    %v443 = vsel %vm429, %v44, 0
    %v446 = vsel %vm429, %v45, 0
    %v449 = vsel %vm429, %v46, 0
    %v452 = vsel %vm429, %v47, 0
    %v455 = vsel %vm429, %v48, 0
    %v458 = vsel %vm429, %v49, 0
    %v461 = vsel %vm429, %v50, 0
    %v464 = vsel %vm429, %v51, 0
    %v467 = vsel %vm429, %v52, 0
    %v470 = vsel %vm429, %v53, 0
    %v473 = vsel %vm429, %v54, 0
    %v476 = vsel %vm429, %v55, 0
    %v479 = vsel %vm429, %v56, 0
    %v482 = vsel %vm429, %v57, 0
    %v485 = vsel %vm429, %v58, 0
    %v488 = vsel %vm429, %v59, 0
    %v491 = vsel %vm429, %v60, 0
    %v494 = vsel %vm429, %v61, 0
    %v497 = vsel %vm429, %v62, 0
    %v500 = vsel %vm429, %v63, 0
    %v503 = vsel %vm429, %v64, 0
    %v506 = vsel %vm429, %v65, 0
    %v509 = vsel %vm429, %v66, 0
    %v512 = vsel %vm429, %v67, 0
    %v515 = vsel %vm429, %v68, 0
    %v518 = vsel %vm429, %v69, 0
    %v521 = vsel %vm429, %v70, 0
    %v524 = vsel %vm429, %v71, 0
    %v527 = vsel %vm429, %v72, 0
    %v530 = vsel %vm429, %v73, 0
    %v533 = vsel %vm429, %v74, 0
    %v536 = vsel %vm429, %v75, 0
    %v539 = vsel %vm429, %v76, 0
    %v542 = vsel %vm429, %v77, 0
    %v545 = vsel %vm429, %v78, 0
    %v548 = vsel %vm429, %v79, 0
    %v551 = vsel %vm429, %v80, 0
    %v554 = vsel %vm429, %v81, 0
    %v557 = vsel %vm429, %v82, 0
    %v560 = vsel %vm429, %v83, 0
    %v563 = vsel %vm429, %v84, 0
    %v566 = vsel %vm429, %v85, 0
    %v569 = vsel %vm429, %v86, 0
    %v572 = vsel %vm429, %v87, 0
    %v575 = vsel %vm429, %v88, 0
    %v578 = vsel %vm429, %v89, 0
    %v581 = vsel %vm429, %v90, 0
    %v584 = vsel %vm429, %v91, 0
    %v587 = vsel %vm429, %v92, 0
    %v590 = vsel %vm429, %v93, 0
    %v593 = vsel %vm429, %v94, 0
    %v596 = vsel %vm429, %v95, 0
    %v599 = vsel %vm429, %v96, 0
    %v602 = vsel %vm429, %v97, 0
    %v605 = vsel %vm429, %v98, 0
    %v608 = vsel %vm429, %v99, 0
    %v611 = vsel %vm429, %v100, 0
    %v614 = vsel %vm429, %v101, 0
    %v617 = vsel %vm429, %v102, 0
    %v620 = vsel %vm429, %v103, 0
    %v623 = vsel %vm429, %v104, 0
    %v626 = vsel %vm429, %v105, 0
    %v629 = vsel %vm429, %v106, 0
    %v632 = vsel %vm429, %v107, 0
    %v635 = vsel %vm429, %v108, 0
    %v638 = vsel %vm429, %v109, 0
    %v641 = vsel %vm429, %v110, 0
    %v644 = vsel %vm429, %v111, 0
    %v647 = vsel %vm429, %v112, 0
    %v650 = vsel %vm429, %v113, 0
    %v653 = vsel %vm429, %v114, 0
    %v656 = vsel %vm429, %v115, 0
    %v659 = vsel %vm429, %v116, 0
    %v662 = vsel %vm429, %v117, 0
    %v665 = vsel %vm429, %v118, 0
    %v668 = vsel %vm429, %v119, 0
    %v671 = vsel %vm429, %v120, 0
    %v674 = vsel %vm429, %v121, 0
    %v677 = vsel %vm429, %v122, 0
    %v680 = vsel %vm429, %v123, 0
    %v683 = vsel %vm429, %v124, 0
    %v686 = vsel %vm429, %v125, 0
    %v689 = vsel %vm429, %v126, 0
    %v692 = vsel %vm429, %v127, 0
    %v695 = vsel %vm429, %v128, 0
    %v698 = vsel %vm429, %v129, 0
    %v701 = vsel %vm429, %v130, 0
    %v704 = vsel %vm429, %v131, 0
    %v707 = vsel %vm429, %v132, 0
    %v710 = vsel %vm429, %v133, 0
    %v713 = vsel %vm429, %v134, 0
    %v716 = vsel %vm429, %v135, 0
    %v719 = vsel %vm429, %v136, 0
    %v722 = vsel %vm429, %v137, 0
    %v725 = vsel %vm429, %v138, 0
    %v728 = vsel %vm429, %v139, 0
    %v731 = vsel %vm429, %v140, 0
    %v734 = vsel %vm429, %v141, 0
    %v737 = vsel %vm429, %v142, 0
    %v740 = vsel %vm429, %v143, 0
    %v743 = vsel %vm429, %v144, 0
    %v746 = vsel %vm429, %v145, 0
    %v749 = vsel %vm429, %v146, 0
    %v752 = vsel %vm429, %v147, 0
    %v755 = vsel %vm429, %v148, 0
    %v758 = vsel %vm429, %v149, 0
    %v761 = vsel %vm429, %v150, 0
    %v764 = vsel %vm429, %v151, 0
    %v767 = vsel %vm429, %v152, 0
    %v770 = vsel %vm429, %v153, 0
    %v773 = vsel %vm429, %v154, 0
    %v776 = vsel %vm429, %v155, 0
    %v779 = vsel %vm429, %v156, 0
    %v782 = vsel %vm429, %v157, 0
    %v785 = vsel %vm429, %v158, 0
    %v788 = vsel %vm429, %v159, 0
    %v791 = vsel %vm429, %v160, 0
    %v794 = vsel %vm429, %v161, 0
    %v797 = vsel %vm429, %v162, 0
    %v800 = vsel %vm429, %v163, 0
    %v803 = vsel %vm429, %v164, 0
    %v806 = vsel %vm429, %v165, 0
    %v809 = vsel %vm429, %v166, 0
    %v812 = vsel %vm429, %v167, 0
    %v815 = vsel %vm429, %v168, 0
    %v818 = vsel %vm429, %v169, 0
    %v821 = vsel %vm429, %v170, 0
    %v824 = vsel %vm429, %v171, 0
    %v827 = vsel %vm429, %v172, 0
    %v830 = vsel %vm429, %v173, 0
    %v833 = vsel %vm429, %v174, 0
    %v836 = vsel %vm429, %v175, 0
    %v839 = vsel %vm429, %v176, 0
    %v842 = vsel %vm429, %v177, 0
    %v845 = vsel %vm429, %v178, 0
    %v848 = vsel %vm429, %v179, 0
    %v851 = vsel %vm429, %v180, 0
    %v854 = vsel %vm429, %v181, 0
    %v857 = vsel %vm429, %v182, 0
    %v860 = vsel %vm429, %v183, 0
    %v863 = vsel %vm429, %v184, 0
    %v866 = vsel %vm429, %v185, 0
    %v869 = vsel %vm429, %v186, 0
    %v872 = vsel %vm429, %v187, 0
    %v875 = vsel %vm429, %v188, 0
    %v878 = vsel %vm429, %v189, 0
    %v881 = vsel %vm429, %v190, 0
    %v884 = vsel %vm429, %v191, 0
    %v887 = vsel %vm429, %v192, 0
    %v890 = vsel %vm429, %v193, 0
    %v893 = vsel %vm429, %v194, 0
    %v896 = vsel %vm429, %v195, 0
    %v899 = vsel %vm429, %v196, 0
    %v902 = vsel %vm429, %v197, 0
    %v905 = vsel %vm429, %v198, 0
    %v908 = vsel %vm429, %v199, 0
    %v911 = vsel %vm429, %v200, 0
    %v914 = vsel %vm429, %v201, 0
    %v917 = vsel %vm429, %v202, 0
    %v920 = vsel %vm429, %v203, 0
    %v923 = vsel %vm429, %v204, 0
    %v926 = vsel %vm429, %v205, 0
    %v929 = vsel %vm429, %v206, 0
    %v932 = vsel %vm429, %v207, 0
    %v935 = vsel %vm429, %v208, 0
    %v938 = vsel %vm429, %v209, 0
    %v941 = vsel %vm429, %v210, 0
    %v944 = vsel %vm429, %v211, 0
    %v947 = vsel %vm429, %v212, 0
    %v950 = vsel %vm429, %v213, 0
    %v953 = vsel %vm429, %v214, 0
    %v956 = vsel %vm429, %v215, 0
    %v959 = vsel %vm429, %v216, 0
    %v962 = vsel %vm429, %v217, 0
    %v965 = vsel %vm429, %v218, 0
    %v968 = vsel %vm429, %v219, 0
    %v971 = vsel %vm429, %v220, 0
    %v974 = vsel %vm429, %v221, 0
    %v977 = vsel %vm429, %v222, 0
    %v980 = vsel %vm429, %v223, 0
    %v983 = vsel %vm429, %v224, 0
    %v986 = vsel %vm429, %v225, 0
    %v989 = vsel %vm429, %v226, 0
    %v992 = vsel %vm429, %v227, 0
    %v995 = vsel %vm429, %v228, 0
    %v998 = vsel %vm429, %v229, 0
    %v1001 = vsel %vm429, %v230, 0
    %v1004 = vsel %vm429, %v231, 0
    %v1007 = vsel %vm429, %v232, 0
    %v1010 = vsel %vm429, %v233, 0
    %v1013 = vsel %vm429, %v234, 0
    %v1016 = vsel %vm429, %v235, 0
    %v1019 = vsel %vm429, %v236, 0
    %v1022 = vsel %vm429, %v237, 0
    %v1025 = vsel %vm429, %v238, 0
    %v1028 = vsel %vm429, %v239, 0
    %v1031 = vsel %vm429, %v240, 0
    %v1034 = vsel %vm429, %v241, 0
    %v1037 = vsel %vm429, %v242, 0
    %v1040 = vsel %vm429, %v243, 0
    %v1043 = vsel %vm429, %v244, 0
    %v1046 = vsel %vm429, %v245, 0
    %v1049 = vsel %vm429, %v246, 0
    %v1052 = vsel %vm429, %v247, 0
    %v1055 = vsel %vm429, %v248, 0
    %v1058 = vsel %vm429, %v249, 0
    %v1061 = vsel %vm429, %v250, 0
    %v1064 = vsel %vm429, %v251, 0
    %v1067 = vsel %vm429, %v252, 0
    %v1070 = vsel %vm429, %v253, 0
    %v1073 = vsel %vm429, %v254, 0
    %v1076 = vsel %vm429, %v255, 0
    %v1079 = vsel %vm429, %v256, 0
    %v1082 = vsel %vm429, %v257, 0
    %v1085 = vsel %vm429, %v258, 0
    %v1088 = vsel %vm429, %v259, 0
    %v1091 = vsel %vm429, %v260, 0
    %v1094 = vsel %vm429, %v261, 0
    %v1097 = vsel %vm429, %v262, 0
    %v1100 = vsel %vm429, %v263, 0
    %v1103 = vsel %vm429, %v264, 0
    %v1106 = vsel %vm429, %v265, 0
    %v1109 = vsel %vm429, %v266, 0
    %v1112 = vsel %vm429, %v267, 0
    %v1115 = vsel %vm429, %v268, 0
    %v1118 = vsel %vm429, %v269, 0
    %v1121 = vsel %vm429, %v270, 0
    %v1124 = vsel %vm429, %v271, 0
    %v1127 = vsel %vm429, %v272, 0
    %v1130 = vsel %vm429, %v273, 0
    %v1133 = vsel %vm429, %v274, 0
    %v1136 = vsel %vm429, %v275, 0
    %v1139 = vsel %vm429, %v276, 0
    %v1142 = vsel %vm429, %v277, 0
    %v1145 = vsel %vm429, %v278, 0
    %v1148 = vsel %vm429, %v279, 0
    %v1151 = vsel %vm429, %v280, 0
    %v1154 = vsel %vm429, %v281, 0
    %v1157 = vsel %vm429, %v282, 0
    %v1160 = vsel %vm429, %v283, 0
    %v1163 = vsel %vm429, %v284, 0
    %v1166 = vsel %vm429, %v285, 0
    %v1169 = vsel %vm429, %v286, 0
    %v1172 = vsel %vm429, %v287, 0
    %v1175 = vsel %vm429, %v288, 0
    %v1178 = vsel %vm429, %v289, 0
    %v1181 = vsel %vm429, %v290, 0
    %v1184 = vsel %vm429, %v291, 0
    %v1187 = vsel %vm429, %v292, 0
    %v1190 = vsel %vm429, %v293, 0
    %v1193 = vsel %vm429, %v294, 0
    %v1196 = vsel %vm429, %v295, 0
    %v1199 = vsel %vm429, %v296, 0
    %v1202 = vsel %vm429, %v297, 0
    %v1205 = vsel %vm429, %v298, 0
    %v1208 = vsel %vm429, %v299, 0
    %v1211 = vsel %vm429, %v300, 0
    %v1214 = vsel %vm429, %v301, 0
    %v1217 = vsel %vm429, %v302, 0
    %v1220 = vsel %vm429, %v303, 0
    %v1223 = vsel %vm429, %v304, 0
    %v1226 = vsel %vm429, %v305, 0
    %v1229 = vsel %vm429, %v306, 0
    %v1232 = vsel %vm429, %v307, 0
    %v1235 = vsel %vm429, %v308, 0
    %v1238 = vsel %vm429, %v309, 0
    %v1241 = vsel %vm429, %v310, 0
    %v1244 = vsel %vm429, %v311, 0
    %v1247 = vsel %vm429, %v312, 0
    %v1250 = vsel %vm429, %v313, 0
    %v1253 = vsel %vm429, %v314, 0
    %v1256 = vsel %vm429, %v315, 0
    %v1259 = vsel %vm429, %v316, 0
    %v1262 = vsel %vm429, %v317, 0
    %v1265 = vsel %vm429, %v318, 0
    %v1268 = vsel %vm429, %v319, 0
    %v1271 = vsel %vm429, %v320, 0
    %v1274 = vsel %vm429, %v321, 0
    %v1277 = vsel %vm429, %v322, 0
    %v1280 = vsel %vm429, %v323, 0
    %v1283 = vsel %vm429, %v324, 0
    %v1286 = vsel %vm429, %v325, 0
    %v1289 = vsel %vm429, %v326, 0
    %v1292 = vsel %vm429, %v327, 0
    %v1295 = vsel %vm429, %v328, 0
    %v1298 = vsel %vm429, %v329, 0
    %v1301 = vsel %vm429, %v330, 0
    %v1304 = vsel %vm429, %v331, 0
    %v1307 = vsel %vm429, %v332, 0
    %v1310 = vsel %vm429, %v333, 0
    %v1313 = vsel %vm429, %v334, 0
    %v1316 = vsel %vm429, %v335, 0
    %v1319 = vsel %vm429, %v336, 0
    %v1322 = vsel %vm429, %v337, 0
    %v1325 = vsel %vm429, %v338, 0
    %v1328 = vsel %vm429, %v339, 0
    %v1331 = vsel %vm429, %v340, 0
    %v1334 = vsel %vm429, %v341, 0
    %v1337 = vsel %vm429, %v342, 0
    %v1340 = vsel %vm429, %v343, 0
    %v1343 = vsel %vm429, %v344, 0
    %v1346 = vsel %vm429, %v345, 0
    %v1349 = vsel %vm429, %v346, 0
    %v1352 = vsel %vm429, %v347, 0
    %v1355 = vsel %vm429, %v348, 0
    %v1358 = vsel %vm429, %v349, 0
    %v1361 = vsel %vm429, %v350, 0
    %v1364 = vsel %vm429, %v351, 0
    %v1367 = vsel %vm429, %v352, 0
    %v1370 = vsel %vm429, %v353, 0
    %v1373 = vsel %vm429, %v354, 0
    %v1376 = vsel %vm429, %v355, 0
    %v1379 = vsel %vm429, %v356, 0
    %v1382 = vsel %vm429, %v357, 0
    %v1385 = vsel %vm429, %v358, 0
    %v1388 = vsel %vm429, %v359, 0
    %v1391 = vsel %vm429, %v360, 0
    %v1394 = vsel %vm429, %v361, 0
    %v1397 = vsel %vm429, %v362, 0
    %v1400 = vsel %vm429, %v363, 0
    %v1403 = vsel %vm429, %v364, 0
    %v1406 = vsel %vm429, %v365, 0
    %v1409 = vsel %vm429, %v366, 0
    %v1412 = vsel %vm429, %v367, 0
    %v1415 = vsel %vm429, %v368, 0
    %v1418 = vsel %vm429, %v369, 0
    %v1421 = vsel %vm429, %v370, 0
    %v1424 = vsel %vm429, %v371, 0
    %v1427 = vsel %vm429, %v372, 0
    %v1430 = vsel %vm429, %v373, 0
    %v1433 = vsel %vm429, %v374, 0
    %v1436 = vsel %vm429, %v375, 0
    %v1439 = vsel %vm429, %v376, 0
    %v1442 = vsel %vm429, %v377, 0
    %v1445 = vsel %vm429, %v378, 0
    %v1448 = vsel %vm429, %v379, 0
    %v1451 = vsel %vm429, %v380, 0
    %v1454 = vsel %vm429, %v381, 0
    %v1457 = vsel %vm429, %v382, 0
    %v1460 = vsel %vm429, %v383, 0
    %v1463 = vsel %vm429, %v384, 0
    %v1466 = vsel %vm429, %v385, 0
    %v1469 = vsel %vm429, %v386, 0
    %v1472 = vsel %vm429, %v387, 0
    %v1475 = vsel %vm429, %v388, 0
    %v1478 = vsel %vm429, %v389, 0
    %v1481 = vsel %vm429, %v390, 0
    %v1484 = vsel %vm429, %v391, 0
    %v1487 = vsel %vm429, %v392, 0
    %v1490 = vsel %vm429, %v393, 0
    %v1493 = vsel %vm429, %v394, 0
    %v1496 = vsel %vm429, %v395, 0
    %v1499 = vsel %vm429, %v396, 0
    %v1502 = vsel %vm429, %v397, 0
    %v1505 = vsel %vm429, %v398, 0
    %v1508 = vsel %vm429, %v399, 0
    %v1511 = vsel %vm429, %v400, 0
    %v1514 = vsel %vm429, %v401, 0
    %v1517 = vsel %vm429, %v402, 0
    %v1520 = vsel %vm429, %v403, 0
    %v1523 = vsel %vm429, %v404, 0
    %v1526 = vsel %vm429, %v405, 0
    %v1529 = vsel %vm429, %v406, 0
    %v1532 = vsel %vm429, %v407, 0
    %v1535 = vsel %vm429, %v408, 0
    %v1538 = vsel %vm429, %v409, 0
    %v1541 = vsel %vm429, %v410, 0
    %v1544 = vsel %vm429, %v411, 0
    %v1547 = vsel %vm429, %v412, 0
    %v1550 = vsel %vm429, %v413, 0
    %v1553 = vsel %vm429, %v414, 0
    %v1556 = vsel %vm429, %v415, 0
    %v1559 = vsel %vm429, %v416, 0
    %v1562 = vsel %vm429, %v417, 0
    %v1565 = vsel %vm429, %v418, 0
    %v1568 = vsel %vm429, %v419, 0
    %vm1570 = vcmask 1040384
    %v1572 = vsel %vm1570, %v421, 0
    %1574 = vmatprep.subr.mxu0 0.0
    %1575 = vmatpush1.msra.mxu0 %v420
    %1576 = vmatprep.subr.mxu0 0.0
    %1577 = vmatpush1.msra.mxu0 %v1572
    %1578 = vmatprep.subr.mxu0 0.0
    %1579 = vmatpush1.msra.mxu0 0.0
    %1580 = vmatprep.subr.mxu0 0.0
    %1581 = vmatpush1.msra.mxu0 0.0
    %1582 = vmatprep.subr.mxu0 0.0
    %1583 = vmatpush1.msra.mxu0 0.0
    %1584 = vmatprep.subr.mxu0 0.0
    %1585 = vmatpush1.msra.mxu0 0.0
    %1586 = vmatprep.subr.mxu0 0.0
    %1587 = vmatpush1.msra.mxu0 0.0
    %1588 = vmatprep.subr.mxu0 0.0
    %1589 = vmatpush1.msra.mxu0 0.0
    %1590 = vmatprep.subr.mxu0 0.0
    %1591 = vmatpush1.msra.mxu0 0.0
    %1592 = vmatprep.subr.mxu0 0.0
    %1593 = vmatpush1.msra.mxu0 0.0
    %1594 = vmatprep.subr.mxu0 0.0
    %1595 = vmatpush1.msra.mxu0 0.0
    %1596 = vmatprep.subr.mxu0 0.0
    %1597 = vmatpush1.msra.mxu0 0.0
    %1598 = vmatprep.subr.mxu0 0.0
    %1599 = vmatpush1.msra.mxu0 0.0
    %1600 = vmatprep.subr.mxu0 0.0
    %1601 = vmatpush1.msra.mxu0 0.0
    %1602 = vmatprep.subr.mxu0 0.0
    %1603 = vmatpush1.msra.mxu0 0.0
    %1604 = vmatprep.subr.mxu0 0.0
    %1605 = vmatpush1.msra.mxu0 0.0
    %1606 = vmatprep.subr.mxu0 0.0
    %1607 = vmatpush1.msra.mxu0 0.0
    %1608 = vmatprep.subr.mxu0 0.0
    %1609 = vmatpush1.msra.mxu0 0.0
    %1610 = vmatprep.subr.mxu0 0.0
    %1611 = vmatpush1.msra.mxu0 0.0
    %1612 = vmatprep.subr.mxu0 0.0
    %1613 = vmatpush1.msra.mxu0 0.0
    %1614 = vmatprep.subr.mxu0 0.0
    %1615 = vmatpush1.msra.mxu0 0.0
    %1616 = vmatprep.subr.mxu0 0.0
    %1617 = vmatpush1.msra.mxu0 0.0
    %1618 = vmatprep.subr.mxu0 0.0
    %1619 = vmatpush1.msra.mxu0 0.0
    %1620 = vmatprep.subr.mxu0 0.0
    %1621 = vmatpush1.msra.mxu0 0.0
    %1622 = vmatprep.subr.mxu0 0.0
    %1623 = vmatpush1.msra.mxu0 0.0
    %1624 = vmatprep.subr.mxu0 0.0
    %1625 = vmatpush1.msra.mxu0 0.0
    %1626 = vmatprep.subr.mxu0 0.0
    %1627 = vmatpush1.msra.mxu0 0.0
    %1628 = vmatprep.subr.mxu0 0.0
    %1629 = vmatpush1.msra.mxu0 0.0
    %1630 = vmatprep.subr.mxu0 0.0
    %1631 = vmatpush1.msra.mxu0 0.0
    %1632 = vmatprep.subr.mxu0 0.0
    %1633 = vmatpush1.msra.mxu0 0.0
    %1634 = vmatprep.subr.mxu0 0.0
    %1635 = vmatpush1.msra.mxu0 0.0
    %1636 = vmatprep.subr.mxu0 0.0
    %1637 = vmatpush1.msra.mxu0 0.0
    %1638 = vmatprep.mubr.f32.mxu0 0.0
    %1639 = vmatmul.mubr.f32.gmra.mrb[0].mxu0 %v431
    %v1640 = vpop.f32.mrb[0].mxu0
    %v1641 = vadd.f32 %v427, %v1640
    %v1642 = vpop.f32.mrb[0].mxu0
    %1643 = vmatprep.mubr.f32.mxu0 0.0
    %1644 = vmatmul.mubr.f32.gmra.mrb[0].mxu0 %v434
    %v1645 = vpop.f32.mrb[0].mxu0
    %v1646 = vadd.f32 %v427, %v1645
    %v1647 = vpop.f32.mrb[0].mxu0
    %1648 = vmatprep.mubr.f32.mxu0 0.0
    %1649 = vmatmul.mubr.f32.gmra.mrb[0].mxu0 %v437
    %v1650 = vpop.f32.mrb[0].mxu0
    %v1651 = vadd.f32 %v427, %v1650
    %v1652 = vpop.f32.mrb[0].mxu0
    %1653 = vmatprep.mubr.f32.mxu0 0.0
    %1654 = vmatmul.mubr.f32.gmra.mrb[0].mxu0 %v440
    %v1655 = vpop.f32.mrb[0].mxu0
    %v1656 = vadd.f32 %v427, %v1655
    %v1657 = vpop.f32.mrb[0].mxu0
    %1658 = vmatprep.mubr.f32.mxu0 0.0
    %1659 = vmatmul.mubr.f32.gmra.mrb[0].mxu0 %v443
    %v1660 = vpop.f32.mrb[0].mxu0
    %v1661 = vadd.f32 %v427, %v1660
    %v1662 = vpop.f32.mrb[0].mxu0
    %1663 = vmatprep.mubr.f32.mxu0 0.0
    %1664 = vmatmul.mubr.f32.gmra.mrb[0].mxu0 %v446
    %v1665 = vpop.f32.mrb[0].mxu0
    %v1666 = vadd.f32 %v427, %v1665
    %v1667 = vpop.f32.mrb[0].mxu0
    %1668 = vmatprep.mubr.f32.mxu0 0.0
    %1669 = vmatmul.mubr.f32.gmra.mrb[0].mxu0 %v449
    %v1670 = vpop.f32.mrb[0].mxu0
    %v1671 = vadd.f32 %v427, %v1670
    %v1672 = vpop.f32.mrb[0].mxu0
    %1673 = vmatprep.mubr.f32.mxu0 0.0
    %1674 = vmatmul.mubr.f32.gmra.mrb[0].mxu0 %v452
    %v1675 = vpop.f32.mrb[0].mxu0
    %v1676 = vadd.f32 %v427, %v1675
    %v1677 = vpop.f32.mrb[0].mxu0
    %1678 = vmatprep.mubr.f32.mxu0 0.0
    %1679 = vmatmul.mubr.f32.gmra.mrb[0].mxu0 %v455
    %v1680 = vpop.f32.mrb[0].mxu0
    %v1681 = vadd.f32 %v427, %v1680
    %v1682 = vpop.f32.mrb[0].mxu0
    %1683 = vmatprep.mubr.f32.mxu0 0.0
    %1684 = vmatmul.mubr.f32.gmra.mrb[0].mxu0 %v458
    %v1685 = vpop.f32.mrb[0].mxu0
    %v1686 = vadd.f32 %v427, %v1685
    %v1687 = vpop.f32.mrb[0].mxu0
    %1688 = vmatprep.mubr.f32.mxu0 0.0
    %1689 = vmatmul.mubr.f32.gmra.mrb[0].mxu0 %v461
    %v1690 = vpop.f32.mrb[0].mxu0
    %v1691 = vadd.f32 %v427, %v1690
    %v1692 = vpop.f32.mrb[0].mxu0
    %1693 = vmatprep.mubr.f32.mxu0 0.0
    %1694 = vmatmul.mubr.f32.gmra.mrb[0].mxu0 %v464
    %v1695 = vpop.f32.mrb[0].mxu0
    %v1696 = vadd.f32 %v427, %v1695
    %v1697 = vpop.f32.mrb[0].mxu0
    %1698 = vmatprep.mubr.f32.mxu0 0.0
    %1699 = vmatmul.mubr.f32.gmra.mrb[0].mxu0 %v467
    %v1700 = vpop.f32.mrb[0].mxu0
    %v1701 = vadd.f32 %v427, %v1700
    %v1702 = vpop.f32.mrb[0].mxu0
    %1703 = vmatprep.mubr.f32.mxu0 0.0
    %1704 = vmatmul.mubr.f32.gmra.mrb[0].mxu0 %v470
    %v1705 = vpop.f32.mrb[0].mxu0
    %v1706 = vadd.f32 %v427, %v1705
    %v1707 = vpop.f32.mrb[0].mxu0
    %1708 = vmatprep.mubr.f32.mxu0 0.0
    %1709 = vmatmul.mubr.f32.gmra.mrb[0].mxu0 %v473
    %v1710 = vpop.f32.mrb[0].mxu0
    %v1711 = vadd.f32 %v427, %v1710
    %v1712 = vpop.f32.mrb[0].mxu0
    %1713 = vmatprep.mubr.f32.mxu0 0.0
    %1714 = vmatmul.mubr.f32.gmra.mrb[0].mxu0 %v476
    %v1715 = vpop.f32.mrb[0].mxu0
    %v1716 = vadd.f32 %v427, %v1715
    %v1717 = vpop.f32.mrb[0].mxu0
    %1718 = vmatprep.mubr.f32.mxu0 0.0
    %1719 = vmatmul.mubr.f32.gmra.mrb[0].mxu0 %v479
    %v1720 = vpop.f32.mrb[0].mxu0
    %v1721 = vadd.f32 %v427, %v1720
    %v1722 = vpop.f32.mrb[0].mxu0
    %1723 = vmatprep.mubr.f32.mxu0 0.0
    %1724 = vmatmul.mubr.f32.gmra.mrb[0].mxu0 %v482
    %v1725 = vpop.f32.mrb[0].mxu0
    %v1726 = vadd.f32 %v427, %v1725
    %v1727 = vpop.f32.mrb[0].mxu0
    %1728 = vmatprep.mubr.f32.mxu0 0.0
    %1729 = vmatmul.mubr.f32.gmra.mrb[0].mxu0 %v485
    %v1730 = vpop.f32.mrb[0].mxu0
    %v1731 = vadd.f32 %v427, %v1730
    %v1732 = vpop.f32.mrb[0].mxu0
    %1733 = vmatprep.mubr.f32.mxu0 0.0
    %1734 = vmatmul.mubr.f32.gmra.mrb[0].mxu0 %v488
    %v1735 = vpop.f32.mrb[0].mxu0
    %v1736 = vadd.f32 %v427, %v1735
    %v1737 = vpop.f32.mrb[0].mxu0
    %1738 = vmatprep.mubr.f32.mxu0 0.0
    %1739 = vmatmul.mubr.f32.gmra.mrb[0].mxu0 %v491
    %v1740 = vpop.f32.mrb[0].mxu0
    %v1741 = vadd.f32 %v427, %v1740
    %v1742 = vpop.f32.mrb[0].mxu0
    %1743 = vmatprep.mubr.f32.mxu0 0.0
    %1744 = vmatmul.mubr.f32.gmra.mrb[0].mxu0 %v494
    %v1745 = vpop.f32.mrb[0].mxu0
    %v1746 = vadd.f32 %v427, %v1745
    %v1747 = vpop.f32.mrb[0].mxu0
    %1748 = vmatprep.mubr.f32.mxu0 0.0
    %1749 = vmatmul.mubr.f32.gmra.mrb[0].mxu0 %v497
    %v1750 = vpop.f32.mrb[0].mxu0
    %v1751 = vadd.f32 %v427, %v1750
    %v1752 = vpop.f32.mrb[0].mxu0
    %1753 = vmatprep.mubr.f32.mxu0 0.0
    %1754 = vmatmul.mubr.f32.gmra.mrb[0].mxu0 %v500
    %v1755 = vpop.f32.mrb[0].mxu0
    %v1756 = vadd.f32 %v427, %v1755
    %v1757 = vpop.f32.mrb[0].mxu0
    %1758 = vmatprep.mubr.f32.mxu0 0.0
    %1759 = vmatmul.mubr.f32.gmra.mrb[0].mxu0 %v503
    %v1760 = vpop.f32.mrb[0].mxu0
    %v1761 = vadd.f32 %v427, %v1760
    %v1762 = vpop.f32.mrb[0].mxu0
    %1763 = vmatprep.mubr.f32.mxu0 0.0
    %1764 = vmatmul.mubr.f32.gmra.mrb[0].mxu0 %v506
    %v1765 = vpop.f32.mrb[0].mxu0
    %v1766 = vadd.f32 %v427, %v1765
    %v1767 = vpop.f32.mrb[0].mxu0
    %1768 = vmatprep.mubr.f32.mxu0 0.0
    %1769 = vmatmul.mubr.f32.gmra.mrb[0].mxu0 %v509
    %v1770 = vpop.f32.mrb[0].mxu0
    %v1771 = vadd.f32 %v427, %v1770
    %v1772 = vpop.f32.mrb[0].mxu0
    %1773 = vmatprep.mubr.f32.mxu0 0.0
    %1774 = vmatmul.mubr.f32.gmra.mrb[0].mxu0 %v512
    %v1775 = vpop.f32.mrb[0].mxu0
    %v1776 = vadd.f32 %v427, %v1775
    %v1777 = vpop.f32.mrb[0].mxu0
    %1778 = vmatprep.mubr.f32.mxu0 0.0
    %1779 = vmatmul.mubr.f32.gmra.mrb[0].mxu0 %v515
    %v1780 = vpop.f32.mrb[0].mxu0
    %v1781 = vadd.f32 %v427, %v1780
    %v1782 = vpop.f32.mrb[0].mxu0
    %1783 = vmatprep.mubr.f32.mxu0 0.0
    %1784 = vmatmul.mubr.f32.gmra.mrb[0].mxu0 %v518
    %v1785 = vpop.f32.mrb[0].mxu0
    %v1786 = vadd.f32 %v427, %v1785
    %v1787 = vpop.f32.mrb[0].mxu0
    %1788 = vmatprep.mubr.f32.mxu0 0.0
    %1789 = vmatmul.mubr.f32.gmra.mrb[0].mxu0 %v521
    %v1790 = vpop.f32.mrb[0].mxu0
    %v1791 = vadd.f32 %v427, %v1790
    %v1792 = vpop.f32.mrb[0].mxu0
    %1793 = vmatprep.mubr.f32.mxu0 0.0
    %1794 = vmatmul.mubr.f32.gmra.mrb[0].mxu0 %v524
    %v1795 = vpop.f32.mrb[0].mxu0
    %v1796 = vadd.f32 %v427, %v1795
    %v1797 = vpop.f32.mrb[0].mxu0
    %1798 = vmatprep.mubr.f32.mxu0 0.0
    %1799 = vmatmul.mubr.f32.gmra.mrb[0].mxu0 %v527
    %v1800 = vpop.f32.mrb[0].mxu0
    %v1801 = vadd.f32 %v427, %v1800
    %v1802 = vpop.f32.mrb[0].mxu0
    %1803 = vmatprep.mubr.f32.mxu0 0.0
    %1804 = vmatmul.mubr.f32.gmra.mrb[0].mxu0 %v530
    %v1805 = vpop.f32.mrb[0].mxu0
    %v1806 = vadd.f32 %v427, %v1805
    %v1807 = vpop.f32.mrb[0].mxu0
    %1808 = vmatprep.mubr.f32.mxu0 0.0
    %1809 = vmatmul.mubr.f32.gmra.mrb[0].mxu0 %v533
    %v1810 = vpop.f32.mrb[0].mxu0
    %v1811 = vadd.f32 %v427, %v1810
    %v1812 = vpop.f32.mrb[0].mxu0
    %1813 = vmatprep.mubr.f32.mxu0 0.0
    %1814 = vmatmul.mubr.f32.gmra.mrb[0].mxu0 %v536
    %v1815 = vpop.f32.mrb[0].mxu0
    %v1816 = vadd.f32 %v427, %v1815
    %v1817 = vpop.f32.mrb[0].mxu0
    %1818 = vmatprep.mubr.f32.mxu0 0.0
    %1819 = vmatmul.mubr.f32.gmra.mrb[0].mxu0 %v539
    %v1820 = vpop.f32.mrb[0].mxu0
    %v1821 = vadd.f32 %v427, %v1820
    %v1822 = vpop.f32.mrb[0].mxu0
    %1823 = vmatprep.mubr.f32.mxu0 0.0
    %1824 = vmatmul.mubr.f32.gmra.mrb[0].mxu0 %v542
    %v1825 = vpop.f32.mrb[0].mxu0
    %v1826 = vadd.f32 %v427, %v1825
    %v1827 = vpop.f32.mrb[0].mxu0
    %1828 = vmatprep.mubr.f32.mxu0 0.0
    %1829 = vmatmul.mubr.f32.gmra.mrb[0].mxu0 %v545
    %v1830 = vpop.f32.mrb[0].mxu0
    %v1831 = vadd.f32 %v427, %v1830
    %v1832 = vpop.f32.mrb[0].mxu0
    %1833 = vmatprep.mubr.f32.mxu0 0.0
    %1834 = vmatmul.mubr.f32.gmra.mrb[0].mxu0 %v548
    %v1835 = vpop.f32.mrb[0].mxu0
    %v1836 = vadd.f32 %v427, %v1835
    %v1837 = vpop.f32.mrb[0].mxu0
    %1838 = vmatprep.mubr.f32.mxu0 0.0
    %1839 = vmatmul.mubr.f32.gmra.mrb[0].mxu0 %v551
    %v1840 = vpop.f32.mrb[0].mxu0
    %v1841 = vadd.f32 %v427, %v1840
    %v1842 = vpop.f32.mrb[0].mxu0
    %1843 = vmatprep.mubr.f32.mxu0 0.0
    %1844 = vmatmul.mubr.f32.gmra.mrb[0].mxu0 %v554
    %v1845 = vpop.f32.mrb[0].mxu0
    %v1846 = vadd.f32 %v427, %v1845
    %v1847 = vpop.f32.mrb[0].mxu0
    %1848 = vmatprep.mubr.f32.mxu0 0.0
    %1849 = vmatmul.mubr.f32.gmra.mrb[0].mxu0 %v557
    %v1850 = vpop.f32.mrb[0].mxu0
    %v1851 = vadd.f32 %v427, %v1850
    %v1852 = vpop.f32.mrb[0].mxu0
    %1853 = vmatprep.mubr.f32.mxu0 0.0
    %1854 = vmatmul.mubr.f32.gmra.mrb[0].mxu0 %v560
    %v1855 = vpop.f32.mrb[0].mxu0
    %v1856 = vadd.f32 %v427, %v1855
    %v1857 = vpop.f32.mrb[0].mxu0
    %1858 = vmatprep.mubr.f32.mxu0 0.0
    %1859 = vmatmul.mubr.f32.gmra.mrb[0].mxu0 %v563
    %v1860 = vpop.f32.mrb[0].mxu0
    %v1861 = vadd.f32 %v427, %v1860
    %v1862 = vpop.f32.mrb[0].mxu0
    %1863 = vmatprep.mubr.f32.mxu0 0.0
    %1864 = vmatmul.mubr.f32.gmra.mrb[0].mxu0 %v566
    %v1865 = vpop.f32.mrb[0].mxu0
    %v1866 = vadd.f32 %v427, %v1865
    %v1867 = vpop.f32.mrb[0].mxu0
    %1868 = vmatprep.mubr.f32.mxu0 0.0
    %1869 = vmatmul.mubr.f32.gmra.mrb[0].mxu0 %v569
    %v1870 = vpop.f32.mrb[0].mxu0
    %v1871 = vadd.f32 %v427, %v1870
    %v1872 = vpop.f32.mrb[0].mxu0
    %1873 = vmatprep.mubr.f32.mxu0 0.0
    %1874 = vmatmul.mubr.f32.gmra.mrb[0].mxu0 %v572
    %v1875 = vpop.f32.mrb[0].mxu0
    %v1876 = vadd.f32 %v427, %v1875
    %v1877 = vpop.f32.mrb[0].mxu0
    %1878 = vmatprep.mubr.f32.mxu0 0.0
    %1879 = vmatmul.mubr.f32.gmra.mrb[0].mxu0 %v575
    %v1880 = vpop.f32.mrb[0].mxu0
    %v1881 = vadd.f32 %v427, %v1880
    %v1882 = vpop.f32.mrb[0].mxu0
    %1883 = vmatprep.mubr.f32.mxu0 0.0
    %1884 = vmatmul.mubr.f32.gmra.mrb[0].mxu0 %v578
    %v1885 = vpop.f32.mrb[0].mxu0
    %v1886 = vadd.f32 %v427, %v1885
    %v1887 = vpop.f32.mrb[0].mxu0
    %1888 = vmatprep.mubr.f32.mxu0 0.0
    %1889 = vmatmul.mubr.f32.gmra.mrb[0].mxu0 %v581
    %v1890 = vpop.f32.mrb[0].mxu0
    %v1891 = vadd.f32 %v427, %v1890
    %v1892 = vpop.f32.mrb[0].mxu0
    %1893 = vmatprep.mubr.f32.mxu0 0.0
    %1894 = vmatmul.mubr.f32.gmra.mrb[0].mxu0 %v584
    %v1895 = vpop.f32.mrb[0].mxu0
    %v1896 = vadd.f32 %v427, %v1895
    %v1897 = vpop.f32.mrb[0].mxu0
    %1898 = vmatprep.mubr.f32.mxu0 0.0
    %1899 = vmatmul.mubr.f32.gmra.mrb[0].mxu0 %v587
    %v1900 = vpop.f32.mrb[0].mxu0
    %v1901 = vadd.f32 %v427, %v1900
    %v1902 = vpop.f32.mrb[0].mxu0
    %1903 = vmatprep.mubr.f32.mxu0 0.0
    %1904 = vmatmul.mubr.f32.gmra.mrb[0].mxu0 %v590
    %v1905 = vpop.f32.mrb[0].mxu0
    %v1906 = vadd.f32 %v427, %v1905
    %v1907 = vpop.f32.mrb[0].mxu0
    %1908 = vmatprep.mubr.f32.mxu0 0.0
    %1909 = vmatmul.mubr.f32.gmra.mrb[0].mxu0 %v593
    %v1910 = vpop.f32.mrb[0].mxu0
    %v1911 = vadd.f32 %v427, %v1910
    %v1912 = vpop.f32.mrb[0].mxu0
    %1913 = vmatprep.mubr.f32.mxu0 0.0
    %1914 = vmatmul.mubr.f32.gmra.mrb[0].mxu0 %v596
    %v1915 = vpop.f32.mrb[0].mxu0
    %v1916 = vadd.f32 %v427, %v1915
    %v1917 = vpop.f32.mrb[0].mxu0
    %1918 = vmatprep.mubr.f32.mxu0 0.0
    %1919 = vmatmul.mubr.f32.gmra.mrb[0].mxu0 %v599
    %v1920 = vpop.f32.mrb[0].mxu0
    %v1921 = vadd.f32 %v427, %v1920
    %v1922 = vpop.f32.mrb[0].mxu0
    %1923 = vmatprep.mubr.f32.mxu0 0.0
    %1924 = vmatmul.mubr.f32.gmra.mrb[0].mxu0 %v602
    %v1925 = vpop.f32.mrb[0].mxu0
    %v1926 = vadd.f32 %v427, %v1925
    %v1927 = vpop.f32.mrb[0].mxu0
    %1928 = vmatprep.mubr.f32.mxu0 0.0
    %1929 = vmatmul.mubr.f32.gmra.mrb[0].mxu0 %v605
    %v1930 = vpop.f32.mrb[0].mxu0
    %v1931 = vadd.f32 %v427, %v1930
    %v1932 = vpop.f32.mrb[0].mxu0
    %1933 = vmatprep.mubr.f32.mxu0 0.0
    %1934 = vmatmul.mubr.f32.gmra.mrb[0].mxu0 %v608
    %v1935 = vpop.f32.mrb[0].mxu0
    %v1936 = vadd.f32 %v427, %v1935
    %v1937 = vpop.f32.mrb[0].mxu0
    %1938 = vmatprep.mubr.f32.mxu0 0.0
    %1939 = vmatmul.mubr.f32.gmra.mrb[0].mxu0 %v611
    %v1940 = vpop.f32.mrb[0].mxu0
    %v1941 = vadd.f32 %v427, %v1940
    %v1942 = vpop.f32.mrb[0].mxu0
    %1943 = vmatprep.mubr.f32.mxu0 0.0
    %1944 = vmatmul.mubr.f32.gmra.mrb[0].mxu0 %v614
    %v1945 = vpop.f32.mrb[0].mxu0
    %v1946 = vadd.f32 %v427, %v1945
    %v1947 = vpop.f32.mrb[0].mxu0
    %1948 = vmatprep.mubr.f32.mxu0 0.0
    %1949 = vmatmul.mubr.f32.gmra.mrb[0].mxu0 %v617
    %v1950 = vpop.f32.mrb[0].mxu0
    %v1951 = vadd.f32 %v427, %v1950
    %v1952 = vpop.f32.mrb[0].mxu0
    %1953 = vmatprep.mubr.f32.mxu0 0.0
    %1954 = vmatmul.mubr.f32.gmra.mrb[0].mxu0 %v620
    %v1955 = vpop.f32.mrb[0].mxu0
    %v1956 = vadd.f32 %v427, %v1955
    %v1957 = vpop.f32.mrb[0].mxu0
    %1958 = vmatprep.mubr.f32.mxu0 0.0
    %1959 = vmatmul.mubr.f32.gmra.mrb[0].mxu0 %v623
    %v1960 = vpop.f32.mrb[0].mxu0
    %v1961 = vadd.f32 %v427, %v1960
    %v1962 = vpop.f32.mrb[0].mxu0
    %1963 = vmatprep.mubr.f32.mxu0 0.0
    %1964 = vmatmul.mubr.f32.gmra.mrb[0].mxu0 %v626
    %v1965 = vpop.f32.mrb[0].mxu0
    %v1966 = vadd.f32 %v427, %v1965
    %v1967 = vpop.f32.mrb[0].mxu0
    %1968 = vmatprep.mubr.f32.mxu0 0.0
    %1969 = vmatmul.mubr.f32.gmra.mrb[0].mxu0 %v629
    %v1970 = vpop.f32.mrb[0].mxu0
    %v1971 = vadd.f32 %v427, %v1970
    %v1972 = vpop.f32.mrb[0].mxu0
    %1973 = vmatprep.mubr.f32.mxu0 0.0
    %1974 = vmatmul.mubr.f32.gmra.mrb[0].mxu0 %v632
    %v1975 = vpop.f32.mrb[0].mxu0
    %v1976 = vadd.f32 %v427, %v1975
    %v1977 = vpop.f32.mrb[0].mxu0
    %1978 = vmatprep.mubr.f32.mxu0 0.0
    %1979 = vmatmul.mubr.f32.gmra.mrb[0].mxu0 %v635
    %v1980 = vpop.f32.mrb[0].mxu0
    %v1981 = vadd.f32 %v427, %v1980
    %v1982 = vpop.f32.mrb[0].mxu0
    %1983 = vmatprep.mubr.f32.mxu0 0.0
    %1984 = vmatmul.mubr.f32.gmra.mrb[0].mxu0 %v638
    %v1985 = vpop.f32.mrb[0].mxu0
    %v1986 = vadd.f32 %v427, %v1985
    %v1987 = vpop.f32.mrb[0].mxu0
    %1988 = vmatprep.mubr.f32.mxu0 0.0
    %1989 = vmatmul.mubr.f32.gmra.mrb[0].mxu0 %v641
    %v1990 = vpop.f32.mrb[0].mxu0
    %v1991 = vadd.f32 %v427, %v1990
    %v1992 = vpop.f32.mrb[0].mxu0
    %1993 = vmatprep.mubr.f32.mxu0 0.0
    %1994 = vmatmul.mubr.f32.gmra.mrb[0].mxu0 %v644
    %v1995 = vpop.f32.mrb[0].mxu0
    %v1996 = vadd.f32 %v427, %v1995
    %v1997 = vpop.f32.mrb[0].mxu0
    %1998 = vmatprep.mubr.f32.mxu0 0.0
    %1999 = vmatmul.mubr.f32.gmra.mrb[0].mxu0 %v647
    %v2000 = vpop.f32.mrb[0].mxu0
    %v2001 = vadd.f32 %v427, %v2000
    %v2002 = vpop.f32.mrb[0].mxu0
    %2003 = vmatprep.mubr.f32.mxu0 0.0
    %2004 = vmatmul.mubr.f32.gmra.mrb[0].mxu0 %v650
    %v2005 = vpop.f32.mrb[0].mxu0
    %v2006 = vadd.f32 %v427, %v2005
    %v2007 = vpop.f32.mrb[0].mxu0
    %2008 = vmatprep.mubr.f32.mxu0 0.0
    %2009 = vmatmul.mubr.f32.gmra.mrb[0].mxu0 %v653
    %v2010 = vpop.f32.mrb[0].mxu0
    %v2011 = vadd.f32 %v427, %v2010
    %v2012 = vpop.f32.mrb[0].mxu0
    %2013 = vmatprep.mubr.f32.mxu0 0.0
    %2014 = vmatmul.mubr.f32.gmra.mrb[0].mxu0 %v656
    %v2015 = vpop.f32.mrb[0].mxu0
    %v2016 = vadd.f32 %v427, %v2015
    %v2017 = vpop.f32.mrb[0].mxu0
    %2018 = vmatprep.mubr.f32.mxu0 0.0
    %2019 = vmatmul.mubr.f32.gmra.mrb[0].mxu0 %v659
    %v2020 = vpop.f32.mrb[0].mxu0
    %v2021 = vadd.f32 %v427, %v2020
    %v2022 = vpop.f32.mrb[0].mxu0
    %2023 = vmatprep.mubr.f32.mxu0 0.0
    %2024 = vmatmul.mubr.f32.gmra.mrb[0].mxu0 %v662
    %v2025 = vpop.f32.mrb[0].mxu0
    %v2026 = vadd.f32 %v427, %v2025
    %v2027 = vpop.f32.mrb[0].mxu0
    %2028 = vmatprep.mubr.f32.mxu0 0.0
    %2029 = vmatmul.mubr.f32.gmra.mrb[0].mxu0 %v665
    %v2030 = vpop.f32.mrb[0].mxu0
    %v2031 = vadd.f32 %v427, %v2030
    %v2032 = vpop.f32.mrb[0].mxu0
    %2033 = vmatprep.mubr.f32.mxu0 0.0
    %2034 = vmatmul.mubr.f32.gmra.mrb[0].mxu0 %v668
    %v2035 = vpop.f32.mrb[0].mxu0
    %v2036 = vadd.f32 %v427, %v2035
    %v2037 = vpop.f32.mrb[0].mxu0
    %2038 = vmatprep.mubr.f32.mxu0 0.0
    %2039 = vmatmul.mubr.f32.gmra.mrb[0].mxu0 %v671
    %v2040 = vpop.f32.mrb[0].mxu0
    %v2041 = vadd.f32 %v427, %v2040
    %v2042 = vpop.f32.mrb[0].mxu0
    %2043 = vmatprep.mubr.f32.mxu0 0.0
    %2044 = vmatmul.mubr.f32.gmra.mrb[0].mxu0 %v674
    %v2045 = vpop.f32.mrb[0].mxu0
    %v2046 = vadd.f32 %v427, %v2045
    %v2047 = vpop.f32.mrb[0].mxu0
    %2048 = vmatprep.mubr.f32.mxu0 0.0
    %2049 = vmatmul.mubr.f32.gmra.mrb[0].mxu0 %v677
    %v2050 = vpop.f32.mrb[0].mxu0
    %v2051 = vadd.f32 %v427, %v2050
    %v2052 = vpop.f32.mrb[0].mxu0
    %2053 = vmatprep.mubr.f32.mxu0 0.0
    %2054 = vmatmul.mubr.f32.gmra.mrb[0].mxu0 %v680
    %v2055 = vpop.f32.mrb[0].mxu0
    %v2056 = vadd.f32 %v427, %v2055
    %v2057 = vpop.f32.mrb[0].mxu0
    %2058 = vmatprep.mubr.f32.mxu0 0.0
    %2059 = vmatmul.mubr.f32.gmra.mrb[0].mxu0 %v683
    %v2060 = vpop.f32.mrb[0].mxu0
    %v2061 = vadd.f32 %v427, %v2060
    %v2062 = vpop.f32.mrb[0].mxu0
    %2063 = vmatprep.mubr.f32.mxu0 0.0
    %2064 = vmatmul.mubr.f32.gmra.mrb[0].mxu0 %v686
    %v2065 = vpop.f32.mrb[0].mxu0
    %v2066 = vadd.f32 %v427, %v2065
    %v2067 = vpop.f32.mrb[0].mxu0
    %2068 = vmatprep.mubr.f32.mxu0 0.0
    %2069 = vmatmul.mubr.f32.gmra.mrb[0].mxu0 %v689
    %v2070 = vpop.f32.mrb[0].mxu0
    %v2071 = vadd.f32 %v427, %v2070
    %v2072 = vpop.f32.mrb[0].mxu0
    %2073 = vmatprep.mubr.f32.mxu0 0.0
    %2074 = vmatmul.mubr.f32.gmra.mrb[0].mxu0 %v692
    %v2075 = vpop.f32.mrb[0].mxu0
    %v2076 = vadd.f32 %v427, %v2075
    %v2077 = vpop.f32.mrb[0].mxu0
    %2078 = vmatprep.mubr.f32.mxu0 0.0
    %2079 = vmatmul.mubr.f32.gmra.mrb[0].mxu0 %v695
    %v2080 = vpop.f32.mrb[0].mxu0
    %v2081 = vadd.f32 %v427, %v2080
    %v2082 = vpop.f32.mrb[0].mxu0
    %2083 = vmatprep.mubr.f32.mxu0 0.0
    %2084 = vmatmul.mubr.f32.gmra.mrb[0].mxu0 %v698
    %v2085 = vpop.f32.mrb[0].mxu0
    %v2086 = vadd.f32 %v427, %v2085
    %v2087 = vpop.f32.mrb[0].mxu0
    %2088 = vmatprep.mubr.f32.mxu0 0.0
    %2089 = vmatmul.mubr.f32.gmra.mrb[0].mxu0 %v701
    %v2090 = vpop.f32.mrb[0].mxu0
    %v2091 = vadd.f32 %v427, %v2090
    %v2092 = vpop.f32.mrb[0].mxu0
    %2093 = vmatprep.mubr.f32.mxu0 0.0
    %2094 = vmatmul.mubr.f32.gmra.mrb[0].mxu0 %v704
    %v2095 = vpop.f32.mrb[0].mxu0
    %v2096 = vadd.f32 %v427, %v2095
    %v2097 = vpop.f32.mrb[0].mxu0
    %2098 = vmatprep.mubr.f32.mxu0 0.0
    %2099 = vmatmul.mubr.f32.gmra.mrb[0].mxu0 %v707
    %v2100 = vpop.f32.mrb[0].mxu0
    %v2101 = vadd.f32 %v427, %v2100
    %v2102 = vpop.f32.mrb[0].mxu0
    %2103 = vmatprep.mubr.f32.mxu0 0.0
    %2104 = vmatmul.mubr.f32.gmra.mrb[0].mxu0 %v710
    %v2105 = vpop.f32.mrb[0].mxu0
    %v2106 = vadd.f32 %v427, %v2105
    %v2107 = vpop.f32.mrb[0].mxu0
    %2108 = vmatprep.mubr.f32.mxu0 0.0
    %2109 = vmatmul.mubr.f32.gmra.mrb[0].mxu0 %v713
    %v2110 = vpop.f32.mrb[0].mxu0
    %v2111 = vadd.f32 %v427, %v2110
    %v2112 = vpop.f32.mrb[0].mxu0
    %2113 = vmatprep.mubr.f32.mxu0 0.0
    %2114 = vmatmul.mubr.f32.gmra.mrb[0].mxu0 %v716
    %v2115 = vpop.f32.mrb[0].mxu0
    %v2116 = vadd.f32 %v427, %v2115
    %v2117 = vpop.f32.mrb[0].mxu0
    %2118 = vmatprep.mubr.f32.mxu0 0.0
    %2119 = vmatmul.mubr.f32.gmra.mrb[0].mxu0 %v719
    %v2120 = vpop.f32.mrb[0].mxu0
    %v2121 = vadd.f32 %v427, %v2120
    %v2122 = vpop.f32.mrb[0].mxu0
    %2123 = vmatprep.mubr.f32.mxu0 0.0
    %2124 = vmatmul.mubr.f32.gmra.mrb[0].mxu0 %v722
    %v2125 = vpop.f32.mrb[0].mxu0
    %v2126 = vadd.f32 %v427, %v2125
    %v2127 = vpop.f32.mrb[0].mxu0
    %2128 = vmatprep.mubr.f32.mxu0 0.0
    %2129 = vmatmul.mubr.f32.gmra.mrb[0].mxu0 %v725
    %v2130 = vpop.f32.mrb[0].mxu0
    %v2131 = vadd.f32 %v427, %v2130
    %v2132 = vpop.f32.mrb[0].mxu0
    %2133 = vmatprep.mubr.f32.mxu0 0.0
    %2134 = vmatmul.mubr.f32.gmra.mrb[0].mxu0 %v728
    %v2135 = vpop.f32.mrb[0].mxu0
    %v2136 = vadd.f32 %v427, %v2135
    %v2137 = vpop.f32.mrb[0].mxu0
    %2138 = vmatprep.mubr.f32.mxu0 0.0
    %2139 = vmatmul.mubr.f32.gmra.mrb[0].mxu0 %v731
    %v2140 = vpop.f32.mrb[0].mxu0
    %v2141 = vadd.f32 %v427, %v2140
    %v2142 = vpop.f32.mrb[0].mxu0
    %2143 = vmatprep.mubr.f32.mxu0 0.0
    %2144 = vmatmul.mubr.f32.gmra.mrb[0].mxu0 %v734
    %v2145 = vpop.f32.mrb[0].mxu0
    %v2146 = vadd.f32 %v427, %v2145
    %v2147 = vpop.f32.mrb[0].mxu0
    %2148 = vmatprep.mubr.f32.mxu0 0.0
    %2149 = vmatmul.mubr.f32.gmra.mrb[0].mxu0 %v737
    %v2150 = vpop.f32.mrb[0].mxu0
    %v2151 = vadd.f32 %v427, %v2150
    %v2152 = vpop.f32.mrb[0].mxu0
    %2153 = vmatprep.mubr.f32.mxu0 0.0
    %2154 = vmatmul.mubr.f32.gmra.mrb[0].mxu0 %v740
    %v2155 = vpop.f32.mrb[0].mxu0
    %v2156 = vadd.f32 %v427, %v2155
    %v2157 = vpop.f32.mrb[0].mxu0
    %2158 = vmatprep.mubr.f32.mxu0 0.0
    %2159 = vmatmul.mubr.f32.gmra.mrb[0].mxu0 %v743
    %v2160 = vpop.f32.mrb[0].mxu0
    %v2161 = vadd.f32 %v427, %v2160
    %v2162 = vpop.f32.mrb[0].mxu0
    %2163 = vmatprep.mubr.f32.mxu0 0.0
    %2164 = vmatmul.mubr.f32.gmra.mrb[0].mxu0 %v746
    %v2165 = vpop.f32.mrb[0].mxu0
    %v2166 = vadd.f32 %v427, %v2165
    %v2167 = vpop.f32.mrb[0].mxu0
    %2168 = vmatprep.mubr.f32.mxu0 0.0
    %2169 = vmatmul.mubr.f32.gmra.mrb[0].mxu0 %v749
    %v2170 = vpop.f32.mrb[0].mxu0
    %v2171 = vadd.f32 %v427, %v2170
    %v2172 = vpop.f32.mrb[0].mxu0
    %2173 = vmatprep.mubr.f32.mxu0 0.0
    %2174 = vmatmul.mubr.f32.gmra.mrb[0].mxu0 %v752
    %v2175 = vpop.f32.mrb[0].mxu0
    %v2176 = vadd.f32 %v427, %v2175
    %v2177 = vpop.f32.mrb[0].mxu0
    %2178 = vmatprep.mubr.f32.mxu0 0.0
    %2179 = vmatmul.mubr.f32.gmra.mrb[0].mxu0 %v755
    %v2180 = vpop.f32.mrb[0].mxu0
    %v2181 = vadd.f32 %v427, %v2180
    %v2182 = vpop.f32.mrb[0].mxu0
    %2183 = vmatprep.mubr.f32.mxu0 0.0
    %2184 = vmatmul.mubr.f32.gmra.mrb[0].mxu0 %v758
    %v2185 = vpop.f32.mrb[0].mxu0
    %v2186 = vadd.f32 %v427, %v2185
    %v2187 = vpop.f32.mrb[0].mxu0
    %2188 = vmatprep.mubr.f32.mxu0 0.0
    %2189 = vmatmul.mubr.f32.gmra.mrb[0].mxu0 %v761
    %v2190 = vpop.f32.mrb[0].mxu0
    %v2191 = vadd.f32 %v427, %v2190
    %v2192 = vpop.f32.mrb[0].mxu0
    %2193 = vmatprep.mubr.f32.mxu0 0.0
    %2194 = vmatmul.mubr.f32.gmra.mrb[0].mxu0 %v764
    %v2195 = vpop.f32.mrb[0].mxu0
    %v2196 = vadd.f32 %v427, %v2195
    %v2197 = vpop.f32.mrb[0].mxu0
    %2198 = vmatprep.mubr.f32.mxu0 0.0
    %2199 = vmatmul.mubr.f32.gmra.mrb[0].mxu0 %v767
    %v2200 = vpop.f32.mrb[0].mxu0
    %v2201 = vadd.f32 %v427, %v2200
    %v2202 = vpop.f32.mrb[0].mxu0
    %2203 = vmatprep.mubr.f32.mxu0 0.0
    %2204 = vmatmul.mubr.f32.gmra.mrb[0].mxu0 %v770
    %v2205 = vpop.f32.mrb[0].mxu0
    %v2206 = vadd.f32 %v427, %v2205
    %v2207 = vpop.f32.mrb[0].mxu0
    %2208 = vmatprep.mubr.f32.mxu0 0.0
    %2209 = vmatmul.mubr.f32.gmra.mrb[0].mxu0 %v773
    %v2210 = vpop.f32.mrb[0].mxu0
    %v2211 = vadd.f32 %v427, %v2210
    %v2212 = vpop.f32.mrb[0].mxu0
    %2213 = vmatprep.mubr.f32.mxu0 0.0
    %2214 = vmatmul.mubr.f32.gmra.mrb[0].mxu0 %v776
    %v2215 = vpop.f32.mrb[0].mxu0
    %v2216 = vadd.f32 %v427, %v2215
    %v2217 = vpop.f32.mrb[0].mxu0
    %2218 = vmatprep.mubr.f32.mxu0 0.0
    %2219 = vmatmul.mubr.f32.gmra.mrb[0].mxu0 %v779
    %v2220 = vpop.f32.mrb[0].mxu0
    %v2221 = vadd.f32 %v427, %v2220
    %v2222 = vpop.f32.mrb[0].mxu0
    %2223 = vmatprep.mubr.f32.mxu0 0.0
    %2224 = vmatmul.mubr.f32.gmra.mrb[0].mxu0 %v782
    %v2225 = vpop.f32.mrb[0].mxu0
    %v2226 = vadd.f32 %v427, %v2225
    %v2227 = vpop.f32.mrb[0].mxu0
    %2228 = vmatprep.mubr.f32.mxu0 0.0
    %2229 = vmatmul.mubr.f32.gmra.mrb[0].mxu0 %v785
    %v2230 = vpop.f32.mrb[0].mxu0
    %v2231 = vadd.f32 %v427, %v2230
    %v2232 = vpop.f32.mrb[0].mxu0
    %2233 = vmatprep.mubr.f32.mxu0 0.0
    %2234 = vmatmul.mubr.f32.gmra.mrb[0].mxu0 %v788
    %v2235 = vpop.f32.mrb[0].mxu0
    %v2236 = vadd.f32 %v427, %v2235
    %v2237 = vpop.f32.mrb[0].mxu0
    %2238 = vmatprep.mubr.f32.mxu0 0.0
    %2239 = vmatmul.mubr.f32.gmra.mrb[0].mxu0 %v791
    %v2240 = vpop.f32.mrb[0].mxu0
    %v2241 = vadd.f32 %v427, %v2240
    %v2242 = vpop.f32.mrb[0].mxu0
    %2243 = vmatprep.mubr.f32.mxu0 0.0
    %2244 = vmatmul.mubr.f32.gmra.mrb[0].mxu0 %v794
    %v2245 = vpop.f32.mrb[0].mxu0
    %v2246 = vadd.f32 %v427, %v2245
    %v2247 = vpop.f32.mrb[0].mxu0
    %2248 = vmatprep.mubr.f32.mxu0 0.0
    %2249 = vmatmul.mubr.f32.gmra.mrb[0].mxu0 %v797
    %v2250 = vpop.f32.mrb[0].mxu0
    %v2251 = vadd.f32 %v427, %v2250
    %v2252 = vpop.f32.mrb[0].mxu0
    %2253 = vmatprep.mubr.f32.mxu0 0.0
    %2254 = vmatmul.mubr.f32.gmra.mrb[0].mxu0 %v800
    %v2255 = vpop.f32.mrb[0].mxu0
    %v2256 = vadd.f32 %v427, %v2255
    %v2257 = vpop.f32.mrb[0].mxu0
    %2258 = vmatprep.mubr.f32.mxu0 0.0
    %2259 = vmatmul.mubr.f32.gmra.mrb[0].mxu0 %v803
    %v2260 = vpop.f32.mrb[0].mxu0
    %v2261 = vadd.f32 %v427, %v2260
    %v2262 = vpop.f32.mrb[0].mxu0
    %2263 = vmatprep.mubr.f32.mxu0 0.0
    %2264 = vmatmul.mubr.f32.gmra.mrb[0].mxu0 %v806
    %v2265 = vpop.f32.mrb[0].mxu0
    %v2266 = vadd.f32 %v427, %v2265
    %v2267 = vpop.f32.mrb[0].mxu0
    %2268 = vmatprep.mubr.f32.mxu0 0.0
    %2269 = vmatmul.mubr.f32.gmra.mrb[0].mxu0 %v809
    %v2270 = vpop.f32.mrb[0].mxu0
    %v2271 = vadd.f32 %v427, %v2270
    %v2272 = vpop.f32.mrb[0].mxu0
    %2273 = vmatprep.mubr.f32.mxu0 0.0
    %2274 = vmatmul.mubr.f32.gmra.mrb[0].mxu0 %v812
    %v2275 = vpop.f32.mrb[0].mxu0
    %v2276 = vadd.f32 %v427, %v2275
    %v2277 = vpop.f32.mrb[0].mxu0
    %2278 = vmatprep.mubr.f32.mxu0 0.0
    %2279 = vmatmul.mubr.f32.gmra.mrb[0].mxu0 %v815
    %v2280 = vpop.f32.mrb[0].mxu0
    %v2281 = vadd.f32 %v427, %v2280
    %v2282 = vpop.f32.mrb[0].mxu0
    %2283 = vmatprep.mubr.f32.mxu0 0.0
    %2284 = vmatmul.mubr.f32.gmra.mrb[0].mxu0 %v818
    %v2285 = vpop.f32.mrb[0].mxu0
    %v2286 = vadd.f32 %v427, %v2285
    %v2287 = vpop.f32.mrb[0].mxu0
    %2288 = vmatprep.mubr.f32.mxu0 0.0
    %2289 = vmatmul.mubr.f32.gmra.mrb[0].mxu0 %v821
    %v2290 = vpop.f32.mrb[0].mxu0
    %v2291 = vadd.f32 %v427, %v2290
    %v2292 = vpop.f32.mrb[0].mxu0
    %2293 = vmatprep.mubr.f32.mxu0 0.0
    %2294 = vmatmul.mubr.f32.gmra.mrb[0].mxu0 %v824
    %v2295 = vpop.f32.mrb[0].mxu0
    %v2296 = vadd.f32 %v427, %v2295
    %v2297 = vpop.f32.mrb[0].mxu0
    %2298 = vmatprep.mubr.f32.mxu0 0.0
    %2299 = vmatmul.mubr.f32.gmra.mrb[0].mxu0 %v827
    %v2300 = vpop.f32.mrb[0].mxu0
    %v2301 = vadd.f32 %v427, %v2300
    %v2302 = vpop.f32.mrb[0].mxu0
    %2303 = vmatprep.mubr.f32.mxu0 0.0
    %2304 = vmatmul.mubr.f32.gmra.mrb[0].mxu0 %v830
    %v2305 = vpop.f32.mrb[0].mxu0
    %v2306 = vadd.f32 %v427, %v2305
    %v2307 = vpop.f32.mrb[0].mxu0
    %2308 = vmatprep.mubr.f32.mxu0 0.0
    %2309 = vmatmul.mubr.f32.gmra.mrb[0].mxu0 %v833
    %v2310 = vpop.f32.mrb[0].mxu0
    %v2311 = vadd.f32 %v427, %v2310
    %v2312 = vpop.f32.mrb[0].mxu0
    %2313 = vmatprep.mubr.f32.mxu0 0.0
    %2314 = vmatmul.mubr.f32.gmra.mrb[0].mxu0 %v836
    %v2315 = vpop.f32.mrb[0].mxu0
    %v2316 = vadd.f32 %v427, %v2315
    %v2317 = vpop.f32.mrb[0].mxu0
    %2318 = vmatprep.mubr.f32.mxu0 0.0
    %2319 = vmatmul.mubr.f32.gmra.mrb[0].mxu0 %v839
    %v2320 = vpop.f32.mrb[0].mxu0
    %v2321 = vadd.f32 %v427, %v2320
    %v2322 = vpop.f32.mrb[0].mxu0
    %2323 = vmatprep.mubr.f32.mxu0 0.0
    %2324 = vmatmul.mubr.f32.gmra.mrb[0].mxu0 %v842
    %v2325 = vpop.f32.mrb[0].mxu0
    %v2326 = vadd.f32 %v427, %v2325
    %v2327 = vpop.f32.mrb[0].mxu0
    %2328 = vmatprep.mubr.f32.mxu0 0.0
    %2329 = vmatmul.mubr.f32.gmra.mrb[0].mxu0 %v845
    %v2330 = vpop.f32.mrb[0].mxu0
    %v2331 = vadd.f32 %v427, %v2330
    %v2332 = vpop.f32.mrb[0].mxu0
    %2333 = vmatprep.mubr.f32.mxu0 0.0
    %2334 = vmatmul.mubr.f32.gmra.mrb[0].mxu0 %v848
    %v2335 = vpop.f32.mrb[0].mxu0
    %v2336 = vadd.f32 %v427, %v2335
    %v2337 = vpop.f32.mrb[0].mxu0
    %2338 = vmatprep.mubr.f32.mxu0 0.0
    %2339 = vmatmul.mubr.f32.gmra.mrb[0].mxu0 %v851
    %v2340 = vpop.f32.mrb[0].mxu0
    %v2341 = vadd.f32 %v427, %v2340
    %v2342 = vpop.f32.mrb[0].mxu0
    %2343 = vmatprep.mubr.f32.mxu0 0.0
    %2344 = vmatmul.mubr.f32.gmra.mrb[0].mxu0 %v854
    %v2345 = vpop.f32.mrb[0].mxu0
    %v2346 = vadd.f32 %v427, %v2345
    %v2347 = vpop.f32.mrb[0].mxu0
    %2348 = vmatprep.mubr.f32.mxu0 0.0
    %2349 = vmatmul.mubr.f32.gmra.mrb[0].mxu0 %v857
    %v2350 = vpop.f32.mrb[0].mxu0
    %v2351 = vadd.f32 %v427, %v2350
    %v2352 = vpop.f32.mrb[0].mxu0
    %2353 = vmatprep.mubr.f32.mxu0 0.0
    %2354 = vmatmul.mubr.f32.gmra.mrb[0].mxu0 %v860
    %v2355 = vpop.f32.mrb[0].mxu0
    %v2356 = vadd.f32 %v427, %v2355
    %v2357 = vpop.f32.mrb[0].mxu0
    %2358 = vmatprep.mubr.f32.mxu0 0.0
    %2359 = vmatmul.mubr.f32.gmra.mrb[0].mxu0 %v863
    %v2360 = vpop.f32.mrb[0].mxu0
    %v2361 = vadd.f32 %v427, %v2360
    %v2362 = vpop.f32.mrb[0].mxu0
    %2363 = vmatprep.mubr.f32.mxu0 0.0
    %2364 = vmatmul.mubr.f32.gmra.mrb[0].mxu0 %v866
    %v2365 = vpop.f32.mrb[0].mxu0
    %v2366 = vadd.f32 %v427, %v2365
    %v2367 = vpop.f32.mrb[0].mxu0
    %2368 = vmatprep.mubr.f32.mxu0 0.0
    %2369 = vmatmul.mubr.f32.gmra.mrb[0].mxu0 %v869
    %v2370 = vpop.f32.mrb[0].mxu0
    %v2371 = vadd.f32 %v427, %v2370
    %v2372 = vpop.f32.mrb[0].mxu0
    %2373 = vmatprep.mubr.f32.mxu0 0.0
    %2374 = vmatmul.mubr.f32.gmra.mrb[0].mxu0 %v872
    %v2375 = vpop.f32.mrb[0].mxu0
    %v2376 = vadd.f32 %v427, %v2375
    %v2377 = vpop.f32.mrb[0].mxu0
    %2378 = vmatprep.mubr.f32.mxu0 0.0
    %2379 = vmatmul.mubr.f32.gmra.mrb[0].mxu0 %v875
    %v2380 = vpop.f32.mrb[0].mxu0
    %v2381 = vadd.f32 %v427, %v2380
    %v2382 = vpop.f32.mrb[0].mxu0
    %2383 = vmatprep.mubr.f32.mxu0 0.0
    %2384 = vmatmul.mubr.f32.gmra.mrb[0].mxu0 %v878
    %v2385 = vpop.f32.mrb[0].mxu0
    %v2386 = vadd.f32 %v427, %v2385
    %v2387 = vpop.f32.mrb[0].mxu0
    %2388 = vmatprep.mubr.f32.mxu0 0.0
    %2389 = vmatmul.mubr.f32.gmra.mrb[0].mxu0 %v881
    %v2390 = vpop.f32.mrb[0].mxu0
    %v2391 = vadd.f32 %v427, %v2390
    %v2392 = vpop.f32.mrb[0].mxu0
    %2393 = vmatprep.mubr.f32.mxu0 0.0
    %2394 = vmatmul.mubr.f32.gmra.mrb[0].mxu0 %v884
    %v2395 = vpop.f32.mrb[0].mxu0
    %v2396 = vadd.f32 %v427, %v2395
    %v2397 = vpop.f32.mrb[0].mxu0
    %2398 = vmatprep.mubr.f32.mxu0 0.0
    %2399 = vmatmul.mubr.f32.gmra.mrb[0].mxu0 %v887
    %v2400 = vpop.f32.mrb[0].mxu0
    %v2401 = vadd.f32 %v427, %v2400
    %v2402 = vpop.f32.mrb[0].mxu0
    %2403 = vmatprep.mubr.f32.mxu0 0.0
    %2404 = vmatmul.mubr.f32.gmra.mrb[0].mxu0 %v890
    %v2405 = vpop.f32.mrb[0].mxu0
    %v2406 = vadd.f32 %v427, %v2405
    %v2407 = vpop.f32.mrb[0].mxu0
    %2408 = vmatprep.mubr.f32.mxu0 0.0
    %2409 = vmatmul.mubr.f32.gmra.mrb[0].mxu0 %v893
    %v2410 = vpop.f32.mrb[0].mxu0
    %v2411 = vadd.f32 %v427, %v2410
    %v2412 = vpop.f32.mrb[0].mxu0
    %2413 = vmatprep.mubr.f32.mxu0 0.0
    %2414 = vmatmul.mubr.f32.gmra.mrb[0].mxu0 %v896
    %v2415 = vpop.f32.mrb[0].mxu0
    %v2416 = vadd.f32 %v427, %v2415
    %v2417 = vpop.f32.mrb[0].mxu0
    %2418 = vmatprep.mubr.f32.mxu0 0.0
    %2419 = vmatmul.mubr.f32.gmra.mrb[0].mxu0 %v899
    %v2420 = vpop.f32.mrb[0].mxu0
    %v2421 = vadd.f32 %v427, %v2420
    %v2422 = vpop.f32.mrb[0].mxu0
    %2423 = vmatprep.mubr.f32.mxu0 0.0
    %2424 = vmatmul.mubr.f32.gmra.mrb[0].mxu0 %v902
    %v2425 = vpop.f32.mrb[0].mxu0
    %v2426 = vadd.f32 %v427, %v2425
    %v2427 = vpop.f32.mrb[0].mxu0
    %2428 = vmatprep.mubr.f32.mxu0 0.0
    %2429 = vmatmul.mubr.f32.gmra.mrb[0].mxu0 %v905
    %v2430 = vpop.f32.mrb[0].mxu0
    %v2431 = vadd.f32 %v427, %v2430
    %v2432 = vpop.f32.mrb[0].mxu0
    %2433 = vmatprep.mubr.f32.mxu0 0.0
    %2434 = vmatmul.mubr.f32.gmra.mrb[0].mxu0 %v908
    %v2435 = vpop.f32.mrb[0].mxu0
    %v2436 = vadd.f32 %v427, %v2435
    %v2437 = vpop.f32.mrb[0].mxu0
    %2438 = vmatprep.mubr.f32.mxu0 0.0
    %2439 = vmatmul.mubr.f32.gmra.mrb[0].mxu0 %v911
    %v2440 = vpop.f32.mrb[0].mxu0
    %v2441 = vadd.f32 %v427, %v2440
    %v2442 = vpop.f32.mrb[0].mxu0
    %2443 = vmatprep.mubr.f32.mxu0 0.0
    %2444 = vmatmul.mubr.f32.gmra.mrb[0].mxu0 %v914
    %v2445 = vpop.f32.mrb[0].mxu0
    %v2446 = vadd.f32 %v427, %v2445
    %v2447 = vpop.f32.mrb[0].mxu0
    %2448 = vmatprep.mubr.f32.mxu0 0.0
    %2449 = vmatmul.mubr.f32.gmra.mrb[0].mxu0 %v917
    %v2450 = vpop.f32.mrb[0].mxu0
    %v2451 = vadd.f32 %v427, %v2450
    %v2452 = vpop.f32.mrb[0].mxu0
    %2453 = vmatprep.mubr.f32.mxu0 0.0
    %2454 = vmatmul.mubr.f32.gmra.mrb[0].mxu0 %v920
    %v2455 = vpop.f32.mrb[0].mxu0
    %v2456 = vadd.f32 %v427, %v2455
    %v2457 = vpop.f32.mrb[0].mxu0
    %2458 = vmatprep.mubr.f32.mxu0 0.0
    %2459 = vmatmul.mubr.f32.gmra.mrb[0].mxu0 %v923
    %v2460 = vpop.f32.mrb[0].mxu0
    %v2461 = vadd.f32 %v427, %v2460
    %v2462 = vpop.f32.mrb[0].mxu0
    %2463 = vmatprep.mubr.f32.mxu0 0.0
    %2464 = vmatmul.mubr.f32.gmra.mrb[0].mxu0 %v926
    %v2465 = vpop.f32.mrb[0].mxu0
    %v2466 = vadd.f32 %v427, %v2465
    %v2467 = vpop.f32.mrb[0].mxu0
    %2468 = vmatprep.mubr.f32.mxu0 0.0
    %2469 = vmatmul.mubr.f32.gmra.mrb[0].mxu0 %v929
    %v2470 = vpop.f32.mrb[0].mxu0
    %v2471 = vadd.f32 %v427, %v2470
    %v2472 = vpop.f32.mrb[0].mxu0
    %2473 = vmatprep.mubr.f32.mxu0 0.0
    %2474 = vmatmul.mubr.f32.gmra.mrb[0].mxu0 %v932
    %v2475 = vpop.f32.mrb[0].mxu0
    %v2476 = vadd.f32 %v427, %v2475
    %v2477 = vpop.f32.mrb[0].mxu0
    %2478 = vmatprep.mubr.f32.mxu0 0.0
    %2479 = vmatmul.mubr.f32.gmra.mrb[0].mxu0 %v935
    %v2480 = vpop.f32.mrb[0].mxu0
    %v2481 = vadd.f32 %v427, %v2480
    %v2482 = vpop.f32.mrb[0].mxu0
    %2483 = vmatprep.mubr.f32.mxu0 0.0
    %2484 = vmatmul.mubr.f32.gmra.mrb[0].mxu0 %v938
    %v2485 = vpop.f32.mrb[0].mxu0
    %v2486 = vadd.f32 %v427, %v2485
    %v2487 = vpop.f32.mrb[0].mxu0
    %2488 = vmatprep.mubr.f32.mxu0 0.0
    %2489 = vmatmul.mubr.f32.gmra.mrb[0].mxu0 %v941
    %v2490 = vpop.f32.mrb[0].mxu0
    %v2491 = vadd.f32 %v427, %v2490
    %v2492 = vpop.f32.mrb[0].mxu0
    %2493 = vmatprep.mubr.f32.mxu0 0.0
    %2494 = vmatmul.mubr.f32.gmra.mrb[0].mxu0 %v944
    %v2495 = vpop.f32.mrb[0].mxu0
    %v2496 = vadd.f32 %v427, %v2495
    %v2497 = vpop.f32.mrb[0].mxu0
    %2498 = vmatprep.mubr.f32.mxu0 0.0
    %2499 = vmatmul.mubr.f32.gmra.mrb[0].mxu0 %v947
    %v2500 = vpop.f32.mrb[0].mxu0
    %v2501 = vadd.f32 %v427, %v2500
    %v2502 = vpop.f32.mrb[0].mxu0
    %2503 = vmatprep.mubr.f32.mxu0 0.0
    %2504 = vmatmul.mubr.f32.gmra.mrb[0].mxu0 %v950
    %v2505 = vpop.f32.mrb[0].mxu0
    %v2506 = vadd.f32 %v427, %v2505
    %v2507 = vpop.f32.mrb[0].mxu0
    %2508 = vmatprep.mubr.f32.mxu0 0.0
    %2509 = vmatmul.mubr.f32.gmra.mrb[0].mxu0 %v953
    %v2510 = vpop.f32.mrb[0].mxu0
    %v2511 = vadd.f32 %v427, %v2510
    %v2512 = vpop.f32.mrb[0].mxu0
    %2513 = vmatprep.mubr.f32.mxu0 0.0
    %2514 = vmatmul.mubr.f32.gmra.mrb[0].mxu0 %v956
    %v2515 = vpop.f32.mrb[0].mxu0
    %v2516 = vadd.f32 %v427, %v2515
    %v2517 = vpop.f32.mrb[0].mxu0
    %2518 = vmatprep.mubr.f32.mxu0 0.0
    %2519 = vmatmul.mubr.f32.gmra.mrb[0].mxu0 %v959
    %v2520 = vpop.f32.mrb[0].mxu0
    %v2521 = vadd.f32 %v427, %v2520
    %v2522 = vpop.f32.mrb[0].mxu0
    %2523 = vmatprep.mubr.f32.mxu0 0.0
    %2524 = vmatmul.mubr.f32.gmra.mrb[0].mxu0 %v962
    %v2525 = vpop.f32.mrb[0].mxu0
    %v2526 = vadd.f32 %v427, %v2525
    %v2527 = vpop.f32.mrb[0].mxu0
    %2528 = vmatprep.mubr.f32.mxu0 0.0
    %2529 = vmatmul.mubr.f32.gmra.mrb[0].mxu0 %v965
    %v2530 = vpop.f32.mrb[0].mxu0
    %v2531 = vadd.f32 %v427, %v2530
    %v2532 = vpop.f32.mrb[0].mxu0
    %2533 = vmatprep.mubr.f32.mxu0 0.0
    %2534 = vmatmul.mubr.f32.gmra.mrb[0].mxu0 %v968
    %v2535 = vpop.f32.mrb[0].mxu0
    %v2536 = vadd.f32 %v427, %v2535
    %v2537 = vpop.f32.mrb[0].mxu0
    %2538 = vmatprep.mubr.f32.mxu0 0.0
    %2539 = vmatmul.mubr.f32.gmra.mrb[0].mxu0 %v971
    %v2540 = vpop.f32.mrb[0].mxu0
    %v2541 = vadd.f32 %v427, %v2540
    %v2542 = vpop.f32.mrb[0].mxu0
    %2543 = vmatprep.mubr.f32.mxu0 0.0
    %2544 = vmatmul.mubr.f32.gmra.mrb[0].mxu0 %v974
    %v2545 = vpop.f32.mrb[0].mxu0
    %v2546 = vadd.f32 %v427, %v2545
    %v2547 = vpop.f32.mrb[0].mxu0
    %2548 = vmatprep.mubr.f32.mxu0 0.0
    %2549 = vmatmul.mubr.f32.gmra.mrb[0].mxu0 %v977
    %v2550 = vpop.f32.mrb[0].mxu0
    %v2551 = vadd.f32 %v427, %v2550
    %v2552 = vpop.f32.mrb[0].mxu0
    %2553 = vmatprep.mubr.f32.mxu0 0.0
    %2554 = vmatmul.mubr.f32.gmra.mrb[0].mxu0 %v980
    %v2555 = vpop.f32.mrb[0].mxu0
    %v2556 = vadd.f32 %v427, %v2555
    %v2557 = vpop.f32.mrb[0].mxu0
    %2558 = vmatprep.mubr.f32.mxu0 0.0
    %2559 = vmatmul.mubr.f32.gmra.mrb[0].mxu0 %v983
    %v2560 = vpop.f32.mrb[0].mxu0
    %v2561 = vadd.f32 %v427, %v2560
    %v2562 = vpop.f32.mrb[0].mxu0
    %2563 = vmatprep.mubr.f32.mxu0 0.0
    %2564 = vmatmul.mubr.f32.gmra.mrb[0].mxu0 %v986
    %v2565 = vpop.f32.mrb[0].mxu0
    %v2566 = vadd.f32 %v427, %v2565
    %v2567 = vpop.f32.mrb[0].mxu0
    %2568 = vmatprep.mubr.f32.mxu0 0.0
    %2569 = vmatmul.mubr.f32.gmra.mrb[0].mxu0 %v989
    %v2570 = vpop.f32.mrb[0].mxu0
    %v2571 = vadd.f32 %v427, %v2570
    %v2572 = vpop.f32.mrb[0].mxu0
    %2573 = vmatprep.mubr.f32.mxu0 0.0
    %2574 = vmatmul.mubr.f32.gmra.mrb[0].mxu0 %v992
    %v2575 = vpop.f32.mrb[0].mxu0
    %v2576 = vadd.f32 %v427, %v2575
    %v2577 = vpop.f32.mrb[0].mxu0
    %2578 = vmatprep.mubr.f32.mxu0 0.0
    %2579 = vmatmul.mubr.f32.gmra.mrb[0].mxu0 %v995
    %v2580 = vpop.f32.mrb[0].mxu0
    %v2581 = vadd.f32 %v427, %v2580
    %v2582 = vpop.f32.mrb[0].mxu0
    %2583 = vmatprep.mubr.f32.mxu0 0.0
    %2584 = vmatmul.mubr.f32.gmra.mrb[0].mxu0 %v998
    %v2585 = vpop.f32.mrb[0].mxu0
    %v2586 = vadd.f32 %v427, %v2585
    %v2587 = vpop.f32.mrb[0].mxu0
    %2588 = vmatprep.mubr.f32.mxu0 0.0
    %2589 = vmatmul.mubr.f32.gmra.mrb[0].mxu0 %v1001
    %v2590 = vpop.f32.mrb[0].mxu0
    %v2591 = vadd.f32 %v427, %v2590
    %v2592 = vpop.f32.mrb[0].mxu0
    %2593 = vmatprep.mubr.f32.mxu0 0.0
    %2594 = vmatmul.mubr.f32.gmra.mrb[0].mxu0 %v1004
    %v2595 = vpop.f32.mrb[0].mxu0
    %v2596 = vadd.f32 %v427, %v2595
    %v2597 = vpop.f32.mrb[0].mxu0
    %2598 = vmatprep.mubr.f32.mxu0 0.0
    %2599 = vmatmul.mubr.f32.gmra.mrb[0].mxu0 %v1007
    %v2600 = vpop.f32.mrb[0].mxu0
    %v2601 = vadd.f32 %v427, %v2600
    %v2602 = vpop.f32.mrb[0].mxu0
    %2603 = vmatprep.mubr.f32.mxu0 0.0
    %2604 = vmatmul.mubr.f32.gmra.mrb[0].mxu0 %v1010
    %v2605 = vpop.f32.mrb[0].mxu0
    %v2606 = vadd.f32 %v427, %v2605
    %v2607 = vpop.f32.mrb[0].mxu0
    %2608 = vmatprep.mubr.f32.mxu0 0.0
    %2609 = vmatmul.mubr.f32.gmra.mrb[0].mxu0 %v1013
    %v2610 = vpop.f32.mrb[0].mxu0
    %v2611 = vadd.f32 %v427, %v2610
    %v2612 = vpop.f32.mrb[0].mxu0
    %2613 = vmatprep.mubr.f32.mxu0 0.0
    %2614 = vmatmul.mubr.f32.gmra.mrb[0].mxu0 %v1016
    %v2615 = vpop.f32.mrb[0].mxu0
    %v2616 = vadd.f32 %v427, %v2615
    %v2617 = vpop.f32.mrb[0].mxu0
    %2618 = vmatprep.mubr.f32.mxu0 0.0
    %2619 = vmatmul.mubr.f32.gmra.mrb[0].mxu0 %v1019
    %v2620 = vpop.f32.mrb[0].mxu0
    %v2621 = vadd.f32 %v427, %v2620
    %v2622 = vpop.f32.mrb[0].mxu0
    %2623 = vmatprep.mubr.f32.mxu0 0.0
    %2624 = vmatmul.mubr.f32.gmra.mrb[0].mxu0 %v1022
    %v2625 = vpop.f32.mrb[0].mxu0
    %v2626 = vadd.f32 %v427, %v2625
    %v2627 = vpop.f32.mrb[0].mxu0
    %2628 = vmatprep.mubr.f32.mxu0 0.0
    %2629 = vmatmul.mubr.f32.gmra.mrb[0].mxu0 %v1025
    %v2630 = vpop.f32.mrb[0].mxu0
    %v2631 = vadd.f32 %v427, %v2630
    %v2632 = vpop.f32.mrb[0].mxu0
    %2633 = vmatprep.mubr.f32.mxu0 0.0
    %2634 = vmatmul.mubr.f32.gmra.mrb[0].mxu0 %v1028
    %v2635 = vpop.f32.mrb[0].mxu0
    %v2636 = vadd.f32 %v427, %v2635
    %v2637 = vpop.f32.mrb[0].mxu0
    %2638 = vmatprep.mubr.f32.mxu0 0.0
    %2639 = vmatmul.mubr.f32.gmra.mrb[0].mxu0 %v1031
    %v2640 = vpop.f32.mrb[0].mxu0
    %v2641 = vadd.f32 %v427, %v2640
    %v2642 = vpop.f32.mrb[0].mxu0
    %2643 = vmatprep.mubr.f32.mxu0 0.0
    %2644 = vmatmul.mubr.f32.gmra.mrb[0].mxu0 %v1034
    %v2645 = vpop.f32.mrb[0].mxu0
    %v2646 = vadd.f32 %v427, %v2645
    %v2647 = vpop.f32.mrb[0].mxu0
    %2648 = vmatprep.mubr.f32.mxu0 0.0
    %2649 = vmatmul.mubr.f32.gmra.mrb[0].mxu0 %v1037
    %v2650 = vpop.f32.mrb[0].mxu0
    %v2651 = vadd.f32 %v427, %v2650
    %v2652 = vpop.f32.mrb[0].mxu0
    %2653 = vmatprep.mubr.f32.mxu0 0.0
    %2654 = vmatmul.mubr.f32.gmra.mrb[0].mxu0 %v1040
    %v2655 = vpop.f32.mrb[0].mxu0
    %v2656 = vadd.f32 %v427, %v2655
    %v2657 = vpop.f32.mrb[0].mxu0
    %2658 = vmatprep.mubr.f32.mxu0 0.0
    %2659 = vmatmul.mubr.f32.gmra.mrb[0].mxu0 %v1043
    %v2660 = vpop.f32.mrb[0].mxu0
    %v2661 = vadd.f32 %v427, %v2660
    %v2662 = vpop.f32.mrb[0].mxu0
    %2663 = vmatprep.mubr.f32.mxu0 0.0
    %2664 = vmatmul.mubr.f32.gmra.mrb[0].mxu0 %v1046
    %v2665 = vpop.f32.mrb[0].mxu0
    %v2666 = vadd.f32 %v427, %v2665
    %v2667 = vpop.f32.mrb[0].mxu0
    %2668 = vmatprep.mubr.f32.mxu0 0.0
    %2669 = vmatmul.mubr.f32.gmra.mrb[0].mxu0 %v1049
    %v2670 = vpop.f32.mrb[0].mxu0
    %v2671 = vadd.f32 %v427, %v2670
    %v2672 = vpop.f32.mrb[0].mxu0
    %2673 = vmatprep.mubr.f32.mxu0 0.0
    %2674 = vmatmul.mubr.f32.gmra.mrb[0].mxu0 %v1052
    %v2675 = vpop.f32.mrb[0].mxu0
    %v2676 = vadd.f32 %v427, %v2675
    %v2677 = vpop.f32.mrb[0].mxu0
    %2678 = vmatprep.mubr.f32.mxu0 0.0
    %2679 = vmatmul.mubr.f32.gmra.mrb[0].mxu0 %v1055
    %v2680 = vpop.f32.mrb[0].mxu0
    %v2681 = vadd.f32 %v427, %v2680
    %v2682 = vpop.f32.mrb[0].mxu0
    %2683 = vmatprep.mubr.f32.mxu0 0.0
    %2684 = vmatmul.mubr.f32.gmra.mrb[0].mxu0 %v1058
    %v2685 = vpop.f32.mrb[0].mxu0
    %v2686 = vadd.f32 %v427, %v2685
    %v2687 = vpop.f32.mrb[0].mxu0
    %2688 = vmatprep.mubr.f32.mxu0 0.0
    %2689 = vmatmul.mubr.f32.gmra.mrb[0].mxu0 %v1061
    %v2690 = vpop.f32.mrb[0].mxu0
    %v2691 = vadd.f32 %v427, %v2690
    %v2692 = vpop.f32.mrb[0].mxu0
    %2693 = vmatprep.mubr.f32.mxu0 0.0
    %2694 = vmatmul.mubr.f32.gmra.mrb[0].mxu0 %v1064
    %v2695 = vpop.f32.mrb[0].mxu0
    %v2696 = vadd.f32 %v427, %v2695
    %v2697 = vpop.f32.mrb[0].mxu0
    %2698 = vmatprep.mubr.f32.mxu0 0.0
    %2699 = vmatmul.mubr.f32.gmra.mrb[0].mxu0 %v1067
    %v2700 = vpop.f32.mrb[0].mxu0
    %v2701 = vadd.f32 %v427, %v2700
    %v2702 = vpop.f32.mrb[0].mxu0
    %2703 = vmatprep.mubr.f32.mxu0 0.0
    %2704 = vmatmul.mubr.f32.gmra.mrb[0].mxu0 %v1070
    %v2705 = vpop.f32.mrb[0].mxu0
    %v2706 = vadd.f32 %v427, %v2705
    %v2707 = vpop.f32.mrb[0].mxu0
    %2708 = vmatprep.mubr.f32.mxu0 0.0
    %2709 = vmatmul.mubr.f32.gmra.mrb[0].mxu0 %v1073
    %v2710 = vpop.f32.mrb[0].mxu0
    %v2711 = vadd.f32 %v427, %v2710
    %v2712 = vpop.f32.mrb[0].mxu0
    %2713 = vmatprep.mubr.f32.mxu0 0.0
    %2714 = vmatmul.mubr.f32.gmra.mrb[0].mxu0 %v1076
    %v2715 = vpop.f32.mrb[0].mxu0
    %v2716 = vadd.f32 %v427, %v2715
    %v2717 = vpop.f32.mrb[0].mxu0
    %2718 = vmatprep.mubr.f32.mxu0 0.0
    %2719 = vmatmul.mubr.f32.gmra.mrb[0].mxu0 %v1079
    %v2720 = vpop.f32.mrb[0].mxu0
    %v2721 = vadd.f32 %v427, %v2720
    %v2722 = vpop.f32.mrb[0].mxu0
    %2723 = vmatprep.mubr.f32.mxu0 0.0
    %2724 = vmatmul.mubr.f32.gmra.mrb[0].mxu0 %v1082
    %v2725 = vpop.f32.mrb[0].mxu0
    %v2726 = vadd.f32 %v427, %v2725
    %v2727 = vpop.f32.mrb[0].mxu0
    %2728 = vmatprep.mubr.f32.mxu0 0.0
    %2729 = vmatmul.mubr.f32.gmra.mrb[0].mxu0 %v1085
    %v2730 = vpop.f32.mrb[0].mxu0
    %v2731 = vadd.f32 %v427, %v2730
    %v2732 = vpop.f32.mrb[0].mxu0
    %2733 = vmatprep.mubr.f32.mxu0 0.0
    %2734 = vmatmul.mubr.f32.gmra.mrb[0].mxu0 %v1088
    %v2735 = vpop.f32.mrb[0].mxu0
    %v2736 = vadd.f32 %v427, %v2735
    %v2737 = vpop.f32.mrb[0].mxu0
    %2738 = vmatprep.mubr.f32.mxu0 0.0
    %2739 = vmatmul.mubr.f32.gmra.mrb[0].mxu0 %v1091
    %v2740 = vpop.f32.mrb[0].mxu0
    %v2741 = vadd.f32 %v427, %v2740
    %v2742 = vpop.f32.mrb[0].mxu0
    %2743 = vmatprep.mubr.f32.mxu0 0.0
    %2744 = vmatmul.mubr.f32.gmra.mrb[0].mxu0 %v1094
    %v2745 = vpop.f32.mrb[0].mxu0
    %v2746 = vadd.f32 %v427, %v2745
    %v2747 = vpop.f32.mrb[0].mxu0
    %2748 = vmatprep.mubr.f32.mxu0 0.0
    %2749 = vmatmul.mubr.f32.gmra.mrb[0].mxu0 %v1097
    %v2750 = vpop.f32.mrb[0].mxu0
    %v2751 = vadd.f32 %v427, %v2750
    %v2752 = vpop.f32.mrb[0].mxu0
    %2753 = vmatprep.mubr.f32.mxu0 0.0
    %2754 = vmatmul.mubr.f32.gmra.mrb[0].mxu0 %v1100
    %v2755 = vpop.f32.mrb[0].mxu0
    %v2756 = vadd.f32 %v427, %v2755
    %v2757 = vpop.f32.mrb[0].mxu0
    %2758 = vmatprep.mubr.f32.mxu0 0.0
    %2759 = vmatmul.mubr.f32.gmra.mrb[0].mxu0 %v1103
    %v2760 = vpop.f32.mrb[0].mxu0
    %v2761 = vadd.f32 %v427, %v2760
    %v2762 = vpop.f32.mrb[0].mxu0
    %2763 = vmatprep.mubr.f32.mxu0 0.0
    %2764 = vmatmul.mubr.f32.gmra.mrb[0].mxu0 %v1106
    %v2765 = vpop.f32.mrb[0].mxu0
    %v2766 = vadd.f32 %v427, %v2765
    %v2767 = vpop.f32.mrb[0].mxu0
    %2768 = vmatprep.mubr.f32.mxu0 0.0
    %2769 = vmatmul.mubr.f32.gmra.mrb[0].mxu0 %v1109
    %v2770 = vpop.f32.mrb[0].mxu0
    %v2771 = vadd.f32 %v427, %v2770
    %v2772 = vpop.f32.mrb[0].mxu0
    %2773 = vmatprep.mubr.f32.mxu0 0.0
    %2774 = vmatmul.mubr.f32.gmra.mrb[0].mxu0 %v1112
    %v2775 = vpop.f32.mrb[0].mxu0
    %v2776 = vadd.f32 %v427, %v2775
    %v2777 = vpop.f32.mrb[0].mxu0
    %2778 = vmatprep.mubr.f32.mxu0 0.0
    %2779 = vmatmul.mubr.f32.gmra.mrb[0].mxu0 %v1115
    %v2780 = vpop.f32.mrb[0].mxu0
    %v2781 = vadd.f32 %v427, %v2780
    %v2782 = vpop.f32.mrb[0].mxu0
    %2783 = vmatprep.mubr.f32.mxu0 0.0
    %2784 = vmatmul.mubr.f32.gmra.mrb[0].mxu0 %v1118
    %v2785 = vpop.f32.mrb[0].mxu0
    %v2786 = vadd.f32 %v427, %v2785
    %v2787 = vpop.f32.mrb[0].mxu0
    %2788 = vmatprep.mubr.f32.mxu0 0.0
    %2789 = vmatmul.mubr.f32.gmra.mrb[0].mxu0 %v1121
    %v2790 = vpop.f32.mrb[0].mxu0
    %v2791 = vadd.f32 %v427, %v2790
    %v2792 = vpop.f32.mrb[0].mxu0
    %2793 = vmatprep.mubr.f32.mxu0 0.0
    %2794 = vmatmul.mubr.f32.gmra.mrb[0].mxu0 %v1124
    %v2795 = vpop.f32.mrb[0].mxu0
    %v2796 = vadd.f32 %v427, %v2795
    %v2797 = vpop.f32.mrb[0].mxu0
    %2798 = vmatprep.mubr.f32.mxu0 0.0
    %2799 = vmatmul.mubr.f32.gmra.mrb[0].mxu0 %v1127
    %v2800 = vpop.f32.mrb[0].mxu0
    %v2801 = vadd.f32 %v427, %v2800
    %v2802 = vpop.f32.mrb[0].mxu0
    %2803 = vmatprep.mubr.f32.mxu0 0.0
    %2804 = vmatmul.mubr.f32.gmra.mrb[0].mxu0 %v1130
    %v2805 = vpop.f32.mrb[0].mxu0
    %v2806 = vadd.f32 %v427, %v2805
    %v2807 = vpop.f32.mrb[0].mxu0
    %2808 = vmatprep.mubr.f32.mxu0 0.0
    %2809 = vmatmul.mubr.f32.gmra.mrb[0].mxu0 %v1133
    %v2810 = vpop.f32.mrb[0].mxu0
    %v2811 = vadd.f32 %v427, %v2810
    %v2812 = vpop.f32.mrb[0].mxu0
    %2813 = vmatprep.mubr.f32.mxu0 0.0
    %2814 = vmatmul.mubr.f32.gmra.mrb[0].mxu0 %v1136
    %v2815 = vpop.f32.mrb[0].mxu0
    %v2816 = vadd.f32 %v427, %v2815
    %v2817 = vpop.f32.mrb[0].mxu0
    %2818 = vmatprep.mubr.f32.mxu0 0.0
    %2819 = vmatmul.mubr.f32.gmra.mrb[0].mxu0 %v1139
    %v2820 = vpop.f32.mrb[0].mxu0
    %v2821 = vadd.f32 %v427, %v2820
    %v2822 = vpop.f32.mrb[0].mxu0
    %2823 = vmatprep.mubr.f32.mxu0 0.0
    %2824 = vmatmul.mubr.f32.gmra.mrb[0].mxu0 %v1142
    %v2825 = vpop.f32.mrb[0].mxu0
    %v2826 = vadd.f32 %v427, %v2825
    %v2827 = vpop.f32.mrb[0].mxu0
    %2828 = vmatprep.mubr.f32.mxu0 0.0
    %2829 = vmatmul.mubr.f32.gmra.mrb[0].mxu0 %v1145
    %v2830 = vpop.f32.mrb[0].mxu0
    %v2831 = vadd.f32 %v427, %v2830
    %v2832 = vpop.f32.mrb[0].mxu0
    %2833 = vmatprep.mubr.f32.mxu0 0.0
    %2834 = vmatmul.mubr.f32.gmra.mrb[0].mxu0 %v1148
    %v2835 = vpop.f32.mrb[0].mxu0
    %v2836 = vadd.f32 %v427, %v2835
    %v2837 = vpop.f32.mrb[0].mxu0
    %2838 = vmatprep.mubr.f32.mxu0 0.0
    %2839 = vmatmul.mubr.f32.gmra.mrb[0].mxu0 %v1151
    %v2840 = vpop.f32.mrb[0].mxu0
    %v2841 = vadd.f32 %v427, %v2840
    %v2842 = vpop.f32.mrb[0].mxu0
    %2843 = vmatprep.mubr.f32.mxu0 0.0
    %2844 = vmatmul.mubr.f32.gmra.mrb[0].mxu0 %v1154
    %v2845 = vpop.f32.mrb[0].mxu0
    %v2846 = vadd.f32 %v427, %v2845
    %v2847 = vpop.f32.mrb[0].mxu0
    %2848 = vmatprep.mubr.f32.mxu0 0.0
    %2849 = vmatmul.mubr.f32.gmra.mrb[0].mxu0 %v1157
    %v2850 = vpop.f32.mrb[0].mxu0
    %v2851 = vadd.f32 %v427, %v2850
    %v2852 = vpop.f32.mrb[0].mxu0
    %2853 = vmatprep.mubr.f32.mxu0 0.0
    %2854 = vmatmul.mubr.f32.gmra.mrb[0].mxu0 %v1160
    %v2855 = vpop.f32.mrb[0].mxu0
    %v2856 = vadd.f32 %v427, %v2855
    %v2857 = vpop.f32.mrb[0].mxu0
    %2858 = vmatprep.mubr.f32.mxu0 0.0
    %2859 = vmatmul.mubr.f32.gmra.mrb[0].mxu0 %v1163
    %v2860 = vpop.f32.mrb[0].mxu0
    %v2861 = vadd.f32 %v427, %v2860
    %v2862 = vpop.f32.mrb[0].mxu0
    %2863 = vmatprep.mubr.f32.mxu0 0.0
    %2864 = vmatmul.mubr.f32.gmra.mrb[0].mxu0 %v1166
    %v2865 = vpop.f32.mrb[0].mxu0
    %v2866 = vadd.f32 %v427, %v2865
    %v2867 = vpop.f32.mrb[0].mxu0
    %2868 = vmatprep.mubr.f32.mxu0 0.0
    %2869 = vmatmul.mubr.f32.gmra.mrb[0].mxu0 %v1169
    %v2870 = vpop.f32.mrb[0].mxu0
    %v2871 = vadd.f32 %v427, %v2870
    %v2872 = vpop.f32.mrb[0].mxu0
    %2873 = vmatprep.mubr.f32.mxu0 0.0
    %2874 = vmatmul.mubr.f32.gmra.mrb[0].mxu0 %v1172
    %v2875 = vpop.f32.mrb[0].mxu0
    %v2876 = vadd.f32 %v427, %v2875
    %v2877 = vpop.f32.mrb[0].mxu0
    %2878 = vmatprep.mubr.f32.mxu0 0.0
    %2879 = vmatmul.mubr.f32.gmra.mrb[0].mxu0 %v1175
    %v2880 = vpop.f32.mrb[0].mxu0
    %v2881 = vadd.f32 %v427, %v2880
    %v2882 = vpop.f32.mrb[0].mxu0
    %2883 = vmatprep.mubr.f32.mxu0 0.0
    %2884 = vmatmul.mubr.f32.gmra.mrb[0].mxu0 %v1178
    %v2885 = vpop.f32.mrb[0].mxu0
    %v2886 = vadd.f32 %v427, %v2885
    %v2887 = vpop.f32.mrb[0].mxu0
    %2888 = vmatprep.mubr.f32.mxu0 0.0
    %2889 = vmatmul.mubr.f32.gmra.mrb[0].mxu0 %v1181
    %v2890 = vpop.f32.mrb[0].mxu0
    %v2891 = vadd.f32 %v427, %v2890
    %v2892 = vpop.f32.mrb[0].mxu0
    %2893 = vmatprep.mubr.f32.mxu0 0.0
    %2894 = vmatmul.mubr.f32.gmra.mrb[0].mxu0 %v1184
    %v2895 = vpop.f32.mrb[0].mxu0
    %v2896 = vadd.f32 %v427, %v2895
    %v2897 = vpop.f32.mrb[0].mxu0
    %2898 = vmatprep.mubr.f32.mxu0 0.0
    %2899 = vmatmul.mubr.f32.gmra.mrb[0].mxu0 %v1187
    %v2900 = vpop.f32.mrb[0].mxu0
    %v2901 = vadd.f32 %v427, %v2900
    %v2902 = vpop.f32.mrb[0].mxu0
    %2903 = vmatprep.mubr.f32.mxu0 0.0
    %2904 = vmatmul.mubr.f32.gmra.mrb[0].mxu0 %v1190
    %v2905 = vpop.f32.mrb[0].mxu0
    %v2906 = vadd.f32 %v427, %v2905
    %v2907 = vpop.f32.mrb[0].mxu0
    %2908 = vmatprep.mubr.f32.mxu0 0.0
    %2909 = vmatmul.mubr.f32.gmra.mrb[0].mxu0 %v1193
    %v2910 = vpop.f32.mrb[0].mxu0
    %v2911 = vadd.f32 %v427, %v2910
    %v2912 = vpop.f32.mrb[0].mxu0
    %2913 = vmatprep.mubr.f32.mxu0 0.0
    %2914 = vmatmul.mubr.f32.gmra.mrb[0].mxu0 %v1196
    %v2915 = vpop.f32.mrb[0].mxu0
    %v2916 = vadd.f32 %v427, %v2915
    %v2917 = vpop.f32.mrb[0].mxu0
    %2918 = vmatprep.mubr.f32.mxu0 0.0
    %2919 = vmatmul.mubr.f32.gmra.mrb[0].mxu0 %v1199
    %v2920 = vpop.f32.mrb[0].mxu0
    %v2921 = vadd.f32 %v427, %v2920
    %v2922 = vpop.f32.mrb[0].mxu0
    %2923 = vmatprep.mubr.f32.mxu0 0.0
    %2924 = vmatmul.mubr.f32.gmra.mrb[0].mxu0 %v1202
    %v2925 = vpop.f32.mrb[0].mxu0
    %v2926 = vadd.f32 %v427, %v2925
    %v2927 = vpop.f32.mrb[0].mxu0
    %2928 = vmatprep.mubr.f32.mxu0 0.0
    %2929 = vmatmul.mubr.f32.gmra.mrb[0].mxu0 %v1205
    %v2930 = vpop.f32.mrb[0].mxu0
    %v2931 = vadd.f32 %v427, %v2930
    %v2932 = vpop.f32.mrb[0].mxu0
    %2933 = vmatprep.mubr.f32.mxu0 0.0
    %2934 = vmatmul.mubr.f32.gmra.mrb[0].mxu0 %v1208
    %v2935 = vpop.f32.mrb[0].mxu0
    %v2936 = vadd.f32 %v427, %v2935
    %v2937 = vpop.f32.mrb[0].mxu0
    %2938 = vmatprep.mubr.f32.mxu0 0.0
    %2939 = vmatmul.mubr.f32.gmra.mrb[0].mxu0 %v1211
    %v2940 = vpop.f32.mrb[0].mxu0
    %v2941 = vadd.f32 %v427, %v2940
    %v2942 = vpop.f32.mrb[0].mxu0
    %2943 = vmatprep.mubr.f32.mxu0 0.0
    %2944 = vmatmul.mubr.f32.gmra.mrb[0].mxu0 %v1214
    %v2945 = vpop.f32.mrb[0].mxu0
    %v2946 = vadd.f32 %v427, %v2945
    %v2947 = vpop.f32.mrb[0].mxu0
    %2948 = vmatprep.mubr.f32.mxu0 0.0
    %2949 = vmatmul.mubr.f32.gmra.mrb[0].mxu0 %v1217
    %v2950 = vpop.f32.mrb[0].mxu0
    %v2951 = vadd.f32 %v427, %v2950
    %v2952 = vpop.f32.mrb[0].mxu0
    %2953 = vmatprep.mubr.f32.mxu0 0.0
    %2954 = vmatmul.mubr.f32.gmra.mrb[0].mxu0 %v1220
    %v2955 = vpop.f32.mrb[0].mxu0
    %v2956 = vadd.f32 %v427, %v2955
    %v2957 = vpop.f32.mrb[0].mxu0
    %2958 = vmatprep.mubr.f32.mxu0 0.0
    %2959 = vmatmul.mubr.f32.gmra.mrb[0].mxu0 %v1223
    %v2960 = vpop.f32.mrb[0].mxu0
    %v2961 = vadd.f32 %v427, %v2960
    %v2962 = vpop.f32.mrb[0].mxu0
    %2963 = vmatprep.mubr.f32.mxu0 0.0
    %2964 = vmatmul.mubr.f32.gmra.mrb[0].mxu0 %v1226
    %v2965 = vpop.f32.mrb[0].mxu0
    %v2966 = vadd.f32 %v427, %v2965
    %v2967 = vpop.f32.mrb[0].mxu0
    %2968 = vmatprep.mubr.f32.mxu0 0.0
    %2969 = vmatmul.mubr.f32.gmra.mrb[0].mxu0 %v1229
    %v2970 = vpop.f32.mrb[0].mxu0
    %v2971 = vadd.f32 %v427, %v2970
    %v2972 = vpop.f32.mrb[0].mxu0
    %2973 = vmatprep.mubr.f32.mxu0 0.0
    %2974 = vmatmul.mubr.f32.gmra.mrb[0].mxu0 %v1232
    %v2975 = vpop.f32.mrb[0].mxu0
    %v2976 = vadd.f32 %v427, %v2975
    %v2977 = vpop.f32.mrb[0].mxu0
    %2978 = vmatprep.mubr.f32.mxu0 0.0
    %2979 = vmatmul.mubr.f32.gmra.mrb[0].mxu0 %v1235
    %v2980 = vpop.f32.mrb[0].mxu0
    %v2981 = vadd.f32 %v427, %v2980
    %v2982 = vpop.f32.mrb[0].mxu0
    %2983 = vmatprep.mubr.f32.mxu0 0.0
    %2984 = vmatmul.mubr.f32.gmra.mrb[0].mxu0 %v1238
    %v2985 = vpop.f32.mrb[0].mxu0
    %v2986 = vadd.f32 %v427, %v2985
    %v2987 = vpop.f32.mrb[0].mxu0
    %2988 = vmatprep.mubr.f32.mxu0 0.0
    %2989 = vmatmul.mubr.f32.gmra.mrb[0].mxu0 %v1241
    %v2990 = vpop.f32.mrb[0].mxu0
    %v2991 = vadd.f32 %v427, %v2990
    %v2992 = vpop.f32.mrb[0].mxu0
    %2993 = vmatprep.mubr.f32.mxu0 0.0
    %2994 = vmatmul.mubr.f32.gmra.mrb[0].mxu0 %v1244
    %v2995 = vpop.f32.mrb[0].mxu0
    %v2996 = vadd.f32 %v427, %v2995
    %v2997 = vpop.f32.mrb[0].mxu0
    %2998 = vmatprep.mubr.f32.mxu0 0.0
    %2999 = vmatmul.mubr.f32.gmra.mrb[0].mxu0 %v1247
    %v3000 = vpop.f32.mrb[0].mxu0
    %v3001 = vadd.f32 %v427, %v3000
    %v3002 = vpop.f32.mrb[0].mxu0
    %3003 = vmatprep.mubr.f32.mxu0 0.0
    %3004 = vmatmul.mubr.f32.gmra.mrb[0].mxu0 %v1250
    %v3005 = vpop.f32.mrb[0].mxu0
    %v3006 = vadd.f32 %v427, %v3005
    %v3007 = vpop.f32.mrb[0].mxu0
    %3008 = vmatprep.mubr.f32.mxu0 0.0
    %3009 = vmatmul.mubr.f32.gmra.mrb[0].mxu0 %v1253
    %v3010 = vpop.f32.mrb[0].mxu0
    %v3011 = vadd.f32 %v427, %v3010
    %v3012 = vpop.f32.mrb[0].mxu0
    %3013 = vmatprep.mubr.f32.mxu0 0.0
    %3014 = vmatmul.mubr.f32.gmra.mrb[0].mxu0 %v1256
    %v3015 = vpop.f32.mrb[0].mxu0
    %v3016 = vadd.f32 %v427, %v3015
    %v3017 = vpop.f32.mrb[0].mxu0
    %3018 = vmatprep.mubr.f32.mxu0 0.0
    %3019 = vmatmul.mubr.f32.gmra.mrb[0].mxu0 %v1259
    %v3020 = vpop.f32.mrb[0].mxu0
    %v3021 = vadd.f32 %v427, %v3020
    %v3022 = vpop.f32.mrb[0].mxu0
    %3023 = vmatprep.mubr.f32.mxu0 0.0
    %3024 = vmatmul.mubr.f32.gmra.mrb[0].mxu0 %v1262
    %v3025 = vpop.f32.mrb[0].mxu0
    %v3026 = vadd.f32 %v427, %v3025
    %v3027 = vpop.f32.mrb[0].mxu0
    %3028 = vmatprep.mubr.f32.mxu0 0.0
    %3029 = vmatmul.mubr.f32.gmra.mrb[0].mxu0 %v1265
    %v3030 = vpop.f32.mrb[0].mxu0
    %v3031 = vadd.f32 %v427, %v3030
    %v3032 = vpop.f32.mrb[0].mxu0
    %3033 = vmatprep.mubr.f32.mxu0 0.0
    %3034 = vmatmul.mubr.f32.gmra.mrb[0].mxu0 %v1268
    %v3035 = vpop.f32.mrb[0].mxu0
    %v3036 = vadd.f32 %v427, %v3035
    %v3037 = vpop.f32.mrb[0].mxu0
    %3038 = vmatprep.mubr.f32.mxu0 0.0
    %3039 = vmatmul.mubr.f32.gmra.mrb[0].mxu0 %v1271
    %v3040 = vpop.f32.mrb[0].mxu0
    %v3041 = vadd.f32 %v427, %v3040
    %v3042 = vpop.f32.mrb[0].mxu0
    %3043 = vmatprep.mubr.f32.mxu0 0.0
    %3044 = vmatmul.mubr.f32.gmra.mrb[0].mxu0 %v1274
    %v3045 = vpop.f32.mrb[0].mxu0
    %v3046 = vadd.f32 %v427, %v3045
    %v3047 = vpop.f32.mrb[0].mxu0
    %3048 = vmatprep.mubr.f32.mxu0 0.0
    %3049 = vmatmul.mubr.f32.gmra.mrb[0].mxu0 %v1277
    %v3050 = vpop.f32.mrb[0].mxu0
    %v3051 = vadd.f32 %v427, %v3050
    %v3052 = vpop.f32.mrb[0].mxu0
    %3053 = vmatprep.mubr.f32.mxu0 0.0
    %3054 = vmatmul.mubr.f32.gmra.mrb[0].mxu0 %v1280
    %v3055 = vpop.f32.mrb[0].mxu0
    %v3056 = vadd.f32 %v427, %v3055
    %v3057 = vpop.f32.mrb[0].mxu0
    %3058 = vmatprep.mubr.f32.mxu0 0.0
    %3059 = vmatmul.mubr.f32.gmra.mrb[0].mxu0 %v1283
    %v3060 = vpop.f32.mrb[0].mxu0
    %v3061 = vadd.f32 %v427, %v3060
    %v3062 = vpop.f32.mrb[0].mxu0
    %3063 = vmatprep.mubr.f32.mxu0 0.0
    %3064 = vmatmul.mubr.f32.gmra.mrb[0].mxu0 %v1286
    %v3065 = vpop.f32.mrb[0].mxu0
    %v3066 = vadd.f32 %v427, %v3065
    %v3067 = vpop.f32.mrb[0].mxu0
    %3068 = vmatprep.mubr.f32.mxu0 0.0
    %3069 = vmatmul.mubr.f32.gmra.mrb[0].mxu0 %v1289
    %v3070 = vpop.f32.mrb[0].mxu0
    %v3071 = vadd.f32 %v427, %v3070
    %v3072 = vpop.f32.mrb[0].mxu0
    %3073 = vmatprep.mubr.f32.mxu0 0.0
    %3074 = vmatmul.mubr.f32.gmra.mrb[0].mxu0 %v1292
    %v3075 = vpop.f32.mrb[0].mxu0
    %v3076 = vadd.f32 %v427, %v3075
    %v3077 = vpop.f32.mrb[0].mxu0
    %3078 = vmatprep.mubr.f32.mxu0 0.0
    %3079 = vmatmul.mubr.f32.gmra.mrb[0].mxu0 %v1295
    %v3080 = vpop.f32.mrb[0].mxu0
    %v3081 = vadd.f32 %v427, %v3080
    %v3082 = vpop.f32.mrb[0].mxu0
    %3083 = vmatprep.mubr.f32.mxu0 0.0
    %3084 = vmatmul.mubr.f32.gmra.mrb[0].mxu0 %v1298
    %v3085 = vpop.f32.mrb[0].mxu0
    %v3086 = vadd.f32 %v427, %v3085
    %v3087 = vpop.f32.mrb[0].mxu0
    %3088 = vmatprep.mubr.f32.mxu0 0.0
    %3089 = vmatmul.mubr.f32.gmra.mrb[0].mxu0 %v1301
    %v3090 = vpop.f32.mrb[0].mxu0
    %v3091 = vadd.f32 %v427, %v3090
    %v3092 = vpop.f32.mrb[0].mxu0
    %3093 = vmatprep.mubr.f32.mxu0 0.0
    %3094 = vmatmul.mubr.f32.gmra.mrb[0].mxu0 %v1304
    %v3095 = vpop.f32.mrb[0].mxu0
    %v3096 = vadd.f32 %v427, %v3095
    %v3097 = vpop.f32.mrb[0].mxu0
    %3098 = vmatprep.mubr.f32.mxu0 0.0
    %3099 = vmatmul.mubr.f32.gmra.mrb[0].mxu0 %v1307
    %v3100 = vpop.f32.mrb[0].mxu0
    %v3101 = vadd.f32 %v427, %v3100
    %v3102 = vpop.f32.mrb[0].mxu0
    %3103 = vmatprep.mubr.f32.mxu0 0.0
    %3104 = vmatmul.mubr.f32.gmra.mrb[0].mxu0 %v1310
    %v3105 = vpop.f32.mrb[0].mxu0
    %v3106 = vadd.f32 %v427, %v3105
    %v3107 = vpop.f32.mrb[0].mxu0
    %3108 = vmatprep.mubr.f32.mxu0 0.0
    %3109 = vmatmul.mubr.f32.gmra.mrb[0].mxu0 %v1313
    %v3110 = vpop.f32.mrb[0].mxu0
    %v3111 = vadd.f32 %v427, %v3110
    %v3112 = vpop.f32.mrb[0].mxu0
    %3113 = vmatprep.mubr.f32.mxu0 0.0
    %3114 = vmatmul.mubr.f32.gmra.mrb[0].mxu0 %v1316
    %v3115 = vpop.f32.mrb[0].mxu0
    %v3116 = vadd.f32 %v427, %v3115
    %v3117 = vpop.f32.mrb[0].mxu0
    %3118 = vmatprep.mubr.f32.mxu0 0.0
    %3119 = vmatmul.mubr.f32.gmra.mrb[0].mxu0 %v1319
    %v3120 = vpop.f32.mrb[0].mxu0
    %v3121 = vadd.f32 %v427, %v3120
    %v3122 = vpop.f32.mrb[0].mxu0
    %3123 = vmatprep.mubr.f32.mxu0 0.0
    %3124 = vmatmul.mubr.f32.gmra.mrb[0].mxu0 %v1322
    %v3125 = vpop.f32.mrb[0].mxu0
    %v3126 = vadd.f32 %v427, %v3125
    %v3127 = vpop.f32.mrb[0].mxu0
    %3128 = vmatprep.mubr.f32.mxu0 0.0
    %3129 = vmatmul.mubr.f32.gmra.mrb[0].mxu0 %v1325
    %v3130 = vpop.f32.mrb[0].mxu0
    %v3131 = vadd.f32 %v427, %v3130
    %v3132 = vpop.f32.mrb[0].mxu0
    %3133 = vmatprep.mubr.f32.mxu0 0.0
    %3134 = vmatmul.mubr.f32.gmra.mrb[0].mxu0 %v1328
    %v3135 = vpop.f32.mrb[0].mxu0
    %v3136 = vadd.f32 %v427, %v3135
    %v3137 = vpop.f32.mrb[0].mxu0
    %3138 = vmatprep.mubr.f32.mxu0 0.0
    %3139 = vmatmul.mubr.f32.gmra.mrb[0].mxu0 %v1331
    %v3140 = vpop.f32.mrb[0].mxu0
    %v3141 = vadd.f32 %v427, %v3140
    %v3142 = vpop.f32.mrb[0].mxu0
    %3143 = vmatprep.mubr.f32.mxu0 0.0
    %3144 = vmatmul.mubr.f32.gmra.mrb[0].mxu0 %v1334
    %v3145 = vpop.f32.mrb[0].mxu0
    %v3146 = vadd.f32 %v427, %v3145
    %v3147 = vpop.f32.mrb[0].mxu0
    %3148 = vmatprep.mubr.f32.mxu0 0.0
    %3149 = vmatmul.mubr.f32.gmra.mrb[0].mxu0 %v1337
    %v3150 = vpop.f32.mrb[0].mxu0
    %v3151 = vadd.f32 %v427, %v3150
    %v3152 = vpop.f32.mrb[0].mxu0
    %3153 = vmatprep.mubr.f32.mxu0 0.0
    %3154 = vmatmul.mubr.f32.gmra.mrb[0].mxu0 %v1340
    %v3155 = vpop.f32.mrb[0].mxu0
    %v3156 = vadd.f32 %v427, %v3155
    %v3157 = vpop.f32.mrb[0].mxu0
    %3158 = vmatprep.mubr.f32.mxu0 0.0
    %3159 = vmatmul.mubr.f32.gmra.mrb[0].mxu0 %v1343
    %v3160 = vpop.f32.mrb[0].mxu0
    %v3161 = vadd.f32 %v427, %v3160
    %v3162 = vpop.f32.mrb[0].mxu0
    %3163 = vmatprep.mubr.f32.mxu0 0.0
    %3164 = vmatmul.mubr.f32.gmra.mrb[0].mxu0 %v1346
    %v3165 = vpop.f32.mrb[0].mxu0
    %v3166 = vadd.f32 %v427, %v3165
    %v3167 = vpop.f32.mrb[0].mxu0
    %3168 = vmatprep.mubr.f32.mxu0 0.0
    %3169 = vmatmul.mubr.f32.gmra.mrb[0].mxu0 %v1349
    %v3170 = vpop.f32.mrb[0].mxu0
    %v3171 = vadd.f32 %v427, %v3170
    %v3172 = vpop.f32.mrb[0].mxu0
    %3173 = vmatprep.mubr.f32.mxu0 0.0
    %3174 = vmatmul.mubr.f32.gmra.mrb[0].mxu0 %v1352
    %v3175 = vpop.f32.mrb[0].mxu0
    %v3176 = vadd.f32 %v427, %v3175
    %v3177 = vpop.f32.mrb[0].mxu0
    %3178 = vmatprep.mubr.f32.mxu0 0.0
    %3179 = vmatmul.mubr.f32.gmra.mrb[0].mxu0 %v1355
    %v3180 = vpop.f32.mrb[0].mxu0
    %v3181 = vadd.f32 %v427, %v3180
    %v3182 = vpop.f32.mrb[0].mxu0
    %3183 = vmatprep.mubr.f32.mxu0 0.0
    %3184 = vmatmul.mubr.f32.gmra.mrb[0].mxu0 %v1358
    %v3185 = vpop.f32.mrb[0].mxu0
    %v3186 = vadd.f32 %v427, %v3185
    %v3187 = vpop.f32.mrb[0].mxu0
    %3188 = vmatprep.mubr.f32.mxu0 0.0
    %3189 = vmatmul.mubr.f32.gmra.mrb[0].mxu0 %v1361
    %v3190 = vpop.f32.mrb[0].mxu0
    %v3191 = vadd.f32 %v427, %v3190
    %v3192 = vpop.f32.mrb[0].mxu0
    %3193 = vmatprep.mubr.f32.mxu0 0.0
    %3194 = vmatmul.mubr.f32.gmra.mrb[0].mxu0 %v1364
    %v3195 = vpop.f32.mrb[0].mxu0
    %v3196 = vadd.f32 %v427, %v3195
    %v3197 = vpop.f32.mrb[0].mxu0
    %3198 = vmatprep.mubr.f32.mxu0 0.0
    %3199 = vmatmul.mubr.f32.gmra.mrb[0].mxu0 %v1367
    %v3200 = vpop.f32.mrb[0].mxu0
    %v3201 = vadd.f32 %v427, %v3200
    %v3202 = vpop.f32.mrb[0].mxu0
    %3203 = vmatprep.mubr.f32.mxu0 0.0
    %3204 = vmatmul.mubr.f32.gmra.mrb[0].mxu0 %v1370
    %v3205 = vpop.f32.mrb[0].mxu0
    %v3206 = vadd.f32 %v427, %v3205
    %v3207 = vpop.f32.mrb[0].mxu0
    %3208 = vmatprep.mubr.f32.mxu0 0.0
    %3209 = vmatmul.mubr.f32.gmra.mrb[0].mxu0 %v1373
    %v3210 = vpop.f32.mrb[0].mxu0
    %v3211 = vadd.f32 %v427, %v3210
    %v3212 = vpop.f32.mrb[0].mxu0
    %3213 = vmatprep.mubr.f32.mxu0 0.0
    %3214 = vmatmul.mubr.f32.gmra.mrb[0].mxu0 %v1376
    %v3215 = vpop.f32.mrb[0].mxu0
    %v3216 = vadd.f32 %v427, %v3215
    %v3217 = vpop.f32.mrb[0].mxu0
    %3218 = vmatprep.mubr.f32.mxu0 0.0
    %3219 = vmatmul.mubr.f32.gmra.mrb[0].mxu0 %v1379
    %v3220 = vpop.f32.mrb[0].mxu0
    %v3221 = vadd.f32 %v427, %v3220
    %v3222 = vpop.f32.mrb[0].mxu0
    %3223 = vmatprep.mubr.f32.mxu0 0.0
    %3224 = vmatmul.mubr.f32.gmra.mrb[0].mxu0 %v1382
    %v3225 = vpop.f32.mrb[0].mxu0
    %v3226 = vadd.f32 %v427, %v3225
    %v3227 = vpop.f32.mrb[0].mxu0
    %3228 = vmatprep.mubr.f32.mxu0 0.0
    %3229 = vmatmul.mubr.f32.gmra.mrb[0].mxu0 %v1385
    %v3230 = vpop.f32.mrb[0].mxu0
    %v3231 = vadd.f32 %v427, %v3230
    %v3232 = vpop.f32.mrb[0].mxu0
    %3233 = vmatprep.mubr.f32.mxu0 0.0
    %3234 = vmatmul.mubr.f32.gmra.mrb[0].mxu0 %v1388
    %v3235 = vpop.f32.mrb[0].mxu0
    %v3236 = vadd.f32 %v427, %v3235
    %v3237 = vpop.f32.mrb[0].mxu0
    %3238 = vmatprep.mubr.f32.mxu0 0.0
    %3239 = vmatmul.mubr.f32.gmra.mrb[0].mxu0 %v1391
    %v3240 = vpop.f32.mrb[0].mxu0
    %v3241 = vadd.f32 %v427, %v3240
    %v3242 = vpop.f32.mrb[0].mxu0
    %3243 = vmatprep.mubr.f32.mxu0 0.0
    %3244 = vmatmul.mubr.f32.gmra.mrb[0].mxu0 %v1394
    %v3245 = vpop.f32.mrb[0].mxu0
    %v3246 = vadd.f32 %v427, %v3245
    %v3247 = vpop.f32.mrb[0].mxu0
    %3248 = vmatprep.mubr.f32.mxu0 0.0
    %3249 = vmatmul.mubr.f32.gmra.mrb[0].mxu0 %v1397
    %v3250 = vpop.f32.mrb[0].mxu0
    %v3251 = vadd.f32 %v427, %v3250
    %v3252 = vpop.f32.mrb[0].mxu0
    %3253 = vmatprep.mubr.f32.mxu0 0.0
    %3254 = vmatmul.mubr.f32.gmra.mrb[0].mxu0 %v1400
    %v3255 = vpop.f32.mrb[0].mxu0
    %v3256 = vadd.f32 %v427, %v3255
    %v3257 = vpop.f32.mrb[0].mxu0
    %3258 = vmatprep.mubr.f32.mxu0 0.0
    %3259 = vmatmul.mubr.f32.gmra.mrb[0].mxu0 %v1403
    %v3260 = vpop.f32.mrb[0].mxu0
    %v3261 = vadd.f32 %v427, %v3260
    %v3262 = vpop.f32.mrb[0].mxu0
    %3263 = vmatprep.mubr.f32.mxu0 0.0
    %3264 = vmatmul.mubr.f32.gmra.mrb[0].mxu0 %v1406
    %v3265 = vpop.f32.mrb[0].mxu0
    %v3266 = vadd.f32 %v427, %v3265
    %v3267 = vpop.f32.mrb[0].mxu0
    %3268 = vmatprep.mubr.f32.mxu0 0.0
    %3269 = vmatmul.mubr.f32.gmra.mrb[0].mxu0 %v1409
    %v3270 = vpop.f32.mrb[0].mxu0
    %v3271 = vadd.f32 %v427, %v3270
    %v3272 = vpop.f32.mrb[0].mxu0
    %3273 = vmatprep.mubr.f32.mxu0 0.0
    %3274 = vmatmul.mubr.f32.gmra.mrb[0].mxu0 %v1412
    %v3275 = vpop.f32.mrb[0].mxu0
    %v3276 = vadd.f32 %v427, %v3275
    %v3277 = vpop.f32.mrb[0].mxu0
    %3278 = vmatprep.mubr.f32.mxu0 0.0
    %3279 = vmatmul.mubr.f32.gmra.mrb[0].mxu0 %v1415
    %v3280 = vpop.f32.mrb[0].mxu0
    %v3281 = vadd.f32 %v427, %v3280
    %v3282 = vpop.f32.mrb[0].mxu0
    %3283 = vmatprep.mubr.f32.mxu0 0.0
    %3284 = vmatmul.mubr.f32.gmra.mrb[0].mxu0 %v1418
    %v3285 = vpop.f32.mrb[0].mxu0
    %v3286 = vadd.f32 %v427, %v3285
    %v3287 = vpop.f32.mrb[0].mxu0
    %3288 = vmatprep.mubr.f32.mxu0 0.0
    %3289 = vmatmul.mubr.f32.gmra.mrb[0].mxu0 %v1421
    %v3290 = vpop.f32.mrb[0].mxu0
    %v3291 = vadd.f32 %v427, %v3290
    %v3292 = vpop.f32.mrb[0].mxu0
    %3293 = vmatprep.mubr.f32.mxu0 0.0
    %3294 = vmatmul.mubr.f32.gmra.mrb[0].mxu0 %v1424
    %v3295 = vpop.f32.mrb[0].mxu0
    %v3296 = vadd.f32 %v427, %v3295
    %v3297 = vpop.f32.mrb[0].mxu0
    %3298 = vmatprep.mubr.f32.mxu0 0.0
    %3299 = vmatmul.mubr.f32.gmra.mrb[0].mxu0 %v1427
    %v3300 = vpop.f32.mrb[0].mxu0
    %v3301 = vadd.f32 %v427, %v3300
    %v3302 = vpop.f32.mrb[0].mxu0
    %3303 = vmatprep.mubr.f32.mxu0 0.0
    %3304 = vmatmul.mubr.f32.gmra.mrb[0].mxu0 %v1430
    %v3305 = vpop.f32.mrb[0].mxu0
    %v3306 = vadd.f32 %v427, %v3305
    %v3307 = vpop.f32.mrb[0].mxu0
    %3308 = vmatprep.mubr.f32.mxu0 0.0
    %3309 = vmatmul.mubr.f32.gmra.mrb[0].mxu0 %v1433
    %v3310 = vpop.f32.mrb[0].mxu0
    %v3311 = vadd.f32 %v427, %v3310
    %v3312 = vpop.f32.mrb[0].mxu0
    %3313 = vmatprep.mubr.f32.mxu0 0.0
    %3314 = vmatmul.mubr.f32.gmra.mrb[0].mxu0 %v1436
    %v3315 = vpop.f32.mrb[0].mxu0
    %v3316 = vadd.f32 %v427, %v3315
    %v3317 = vpop.f32.mrb[0].mxu0
    %3318 = vmatprep.mubr.f32.mxu0 0.0
    %3319 = vmatmul.mubr.f32.gmra.mrb[0].mxu0 %v1439
    %v3320 = vpop.f32.mrb[0].mxu0
    %v3321 = vadd.f32 %v427, %v3320
    %v3322 = vpop.f32.mrb[0].mxu0
    %3323 = vmatprep.mubr.f32.mxu0 0.0
    %3324 = vmatmul.mubr.f32.gmra.mrb[0].mxu0 %v1442
    %v3325 = vpop.f32.mrb[0].mxu0
    %v3326 = vadd.f32 %v427, %v3325
    %v3327 = vpop.f32.mrb[0].mxu0
    %3328 = vmatprep.mubr.f32.mxu0 0.0
    %3329 = vmatmul.mubr.f32.gmra.mrb[0].mxu0 %v1445
    %v3330 = vpop.f32.mrb[0].mxu0
    %v3331 = vadd.f32 %v427, %v3330
    %v3332 = vpop.f32.mrb[0].mxu0
    %3333 = vmatprep.mubr.f32.mxu0 0.0
    %3334 = vmatmul.mubr.f32.gmra.mrb[0].mxu0 %v1448
    %v3335 = vpop.f32.mrb[0].mxu0
    %v3336 = vadd.f32 %v427, %v3335
    %v3337 = vpop.f32.mrb[0].mxu0
    %3338 = vmatprep.mubr.f32.mxu0 0.0
    %3339 = vmatmul.mubr.f32.gmra.mrb[0].mxu0 %v1451
    %v3340 = vpop.f32.mrb[0].mxu0
    %v3341 = vadd.f32 %v427, %v3340
    %v3342 = vpop.f32.mrb[0].mxu0
    %3343 = vmatprep.mubr.f32.mxu0 0.0
    %3344 = vmatmul.mubr.f32.gmra.mrb[0].mxu0 %v1454
    %v3345 = vpop.f32.mrb[0].mxu0
    %v3346 = vadd.f32 %v427, %v3345
    %v3347 = vpop.f32.mrb[0].mxu0
    %3348 = vmatprep.mubr.f32.mxu0 0.0
    %3349 = vmatmul.mubr.f32.gmra.mrb[0].mxu0 %v1457
    %v3350 = vpop.f32.mrb[0].mxu0
    %v3351 = vadd.f32 %v427, %v3350
    %v3352 = vpop.f32.mrb[0].mxu0
    %3353 = vmatprep.mubr.f32.mxu0 0.0
    %3354 = vmatmul.mubr.f32.gmra.mrb[0].mxu0 %v1460
    %v3355 = vpop.f32.mrb[0].mxu0
    %v3356 = vadd.f32 %v427, %v3355
    %v3357 = vpop.f32.mrb[0].mxu0
    %3358 = vmatprep.mubr.f32.mxu0 0.0
    %3359 = vmatmul.mubr.f32.gmra.mrb[0].mxu0 %v1463
    %v3360 = vpop.f32.mrb[0].mxu0
    %v3361 = vadd.f32 %v427, %v3360
    %v3362 = vpop.f32.mrb[0].mxu0
    %3363 = vmatprep.mubr.f32.mxu0 0.0
    %3364 = vmatmul.mubr.f32.gmra.mrb[0].mxu0 %v1466
    %v3365 = vpop.f32.mrb[0].mxu0
    %v3366 = vadd.f32 %v427, %v3365
    %v3367 = vpop.f32.mrb[0].mxu0
    %3368 = vmatprep.mubr.f32.mxu0 0.0
    %3369 = vmatmul.mubr.f32.gmra.mrb[0].mxu0 %v1469
    %v3370 = vpop.f32.mrb[0].mxu0
    %v3371 = vadd.f32 %v427, %v3370
    %v3372 = vpop.f32.mrb[0].mxu0
    %3373 = vmatprep.mubr.f32.mxu0 0.0
    %3374 = vmatmul.mubr.f32.gmra.mrb[0].mxu0 %v1472
    %v3375 = vpop.f32.mrb[0].mxu0
    %v3376 = vadd.f32 %v427, %v3375
    %v3377 = vpop.f32.mrb[0].mxu0
    %3378 = vmatprep.mubr.f32.mxu0 0.0
    %3379 = vmatmul.mubr.f32.gmra.mrb[0].mxu0 %v1475
    %v3380 = vpop.f32.mrb[0].mxu0
    %v3381 = vadd.f32 %v427, %v3380
    %v3382 = vpop.f32.mrb[0].mxu0
    %3383 = vmatprep.mubr.f32.mxu0 0.0
    %3384 = vmatmul.mubr.f32.gmra.mrb[0].mxu0 %v1478
    %v3385 = vpop.f32.mrb[0].mxu0
    %v3386 = vadd.f32 %v427, %v3385
    %v3387 = vpop.f32.mrb[0].mxu0
    %3388 = vmatprep.mubr.f32.mxu0 0.0
    %3389 = vmatmul.mubr.f32.gmra.mrb[0].mxu0 %v1481
    %v3390 = vpop.f32.mrb[0].mxu0
    %v3391 = vadd.f32 %v427, %v3390
    %v3392 = vpop.f32.mrb[0].mxu0
    %3393 = vmatprep.mubr.f32.mxu0 0.0
    %3394 = vmatmul.mubr.f32.gmra.mrb[0].mxu0 %v1484
    %v3395 = vpop.f32.mrb[0].mxu0
    %v3396 = vadd.f32 %v427, %v3395
    %v3397 = vpop.f32.mrb[0].mxu0
    %3398 = vmatprep.mubr.f32.mxu0 0.0
    %3399 = vmatmul.mubr.f32.gmra.mrb[0].mxu0 %v1487
    %v3400 = vpop.f32.mrb[0].mxu0
    %v3401 = vadd.f32 %v427, %v3400
    %v3402 = vpop.f32.mrb[0].mxu0
    %3403 = vmatprep.mubr.f32.mxu0 0.0
    %3404 = vmatmul.mubr.f32.gmra.mrb[0].mxu0 %v1490
    %v3405 = vpop.f32.mrb[0].mxu0
    %v3406 = vadd.f32 %v427, %v3405
    %v3407 = vpop.f32.mrb[0].mxu0
    %3408 = vmatprep.mubr.f32.mxu0 0.0
    %3409 = vmatmul.mubr.f32.gmra.mrb[0].mxu0 %v1493
    %v3410 = vpop.f32.mrb[0].mxu0
    %v3411 = vadd.f32 %v427, %v3410
    %v3412 = vpop.f32.mrb[0].mxu0
    %3413 = vmatprep.mubr.f32.mxu0 0.0
    %3414 = vmatmul.mubr.f32.gmra.mrb[0].mxu0 %v1496
    %v3415 = vpop.f32.mrb[0].mxu0
    %v3416 = vadd.f32 %v427, %v3415
    %v3417 = vpop.f32.mrb[0].mxu0
    %3418 = vmatprep.mubr.f32.mxu0 0.0
    %3419 = vmatmul.mubr.f32.gmra.mrb[0].mxu0 %v1499
    %v3420 = vpop.f32.mrb[0].mxu0
    %v3421 = vadd.f32 %v427, %v3420
    %v3422 = vpop.f32.mrb[0].mxu0
    %3423 = vmatprep.mubr.f32.mxu0 0.0
    %3424 = vmatmul.mubr.f32.gmra.mrb[0].mxu0 %v1502
    %v3425 = vpop.f32.mrb[0].mxu0
    %v3426 = vadd.f32 %v427, %v3425
    %v3427 = vpop.f32.mrb[0].mxu0
    %3428 = vmatprep.mubr.f32.mxu0 0.0
    %3429 = vmatmul.mubr.f32.gmra.mrb[0].mxu0 %v1505
    %v3430 = vpop.f32.mrb[0].mxu0
    %v3431 = vadd.f32 %v427, %v3430
    %v3432 = vpop.f32.mrb[0].mxu0
    %3433 = vmatprep.mubr.f32.mxu0 0.0
    %3434 = vmatmul.mubr.f32.gmra.mrb[0].mxu0 %v1508
    %v3435 = vpop.f32.mrb[0].mxu0
    %v3436 = vadd.f32 %v427, %v3435
    %v3437 = vpop.f32.mrb[0].mxu0
    %3438 = vmatprep.mubr.f32.mxu0 0.0
    %3439 = vmatmul.mubr.f32.gmra.mrb[0].mxu0 %v1511
    %v3440 = vpop.f32.mrb[0].mxu0
    %v3441 = vadd.f32 %v427, %v3440
    %v3442 = vpop.f32.mrb[0].mxu0
    %3443 = vmatprep.mubr.f32.mxu0 0.0
    %3444 = vmatmul.mubr.f32.gmra.mrb[0].mxu0 %v1514
    %v3445 = vpop.f32.mrb[0].mxu0
    %v3446 = vadd.f32 %v427, %v3445
    %v3447 = vpop.f32.mrb[0].mxu0
    %3448 = vmatprep.mubr.f32.mxu0 0.0
    %3449 = vmatmul.mubr.f32.gmra.mrb[0].mxu0 %v1517
    %v3450 = vpop.f32.mrb[0].mxu0
    %v3451 = vadd.f32 %v427, %v3450
    %v3452 = vpop.f32.mrb[0].mxu0
    %3453 = vmatprep.mubr.f32.mxu0 0.0
    %3454 = vmatmul.mubr.f32.gmra.mrb[0].mxu0 %v1520
    %v3455 = vpop.f32.mrb[0].mxu0
    %v3456 = vadd.f32 %v427, %v3455
    %v3457 = vpop.f32.mrb[0].mxu0
    %3458 = vmatprep.mubr.f32.mxu0 0.0
    %3459 = vmatmul.mubr.f32.gmra.mrb[0].mxu0 %v1523
    %v3460 = vpop.f32.mrb[0].mxu0
    %v3461 = vadd.f32 %v427, %v3460
    %v3462 = vpop.f32.mrb[0].mxu0
    %3463 = vmatprep.mubr.f32.mxu0 0.0
    %3464 = vmatmul.mubr.f32.gmra.mrb[0].mxu0 %v1526
    %v3465 = vpop.f32.mrb[0].mxu0
    %v3466 = vadd.f32 %v427, %v3465
    %v3467 = vpop.f32.mrb[0].mxu0
    %3468 = vmatprep.mubr.f32.mxu0 0.0
    %3469 = vmatmul.mubr.f32.gmra.mrb[0].mxu0 %v1529
    %v3470 = vpop.f32.mrb[0].mxu0
    %v3471 = vadd.f32 %v427, %v3470
    %v3472 = vpop.f32.mrb[0].mxu0
    %3473 = vmatprep.mubr.f32.mxu0 0.0
    %3474 = vmatmul.mubr.f32.gmra.mrb[0].mxu0 %v1532
    %v3475 = vpop.f32.mrb[0].mxu0
    %v3476 = vadd.f32 %v427, %v3475
    %v3477 = vpop.f32.mrb[0].mxu0
    %3478 = vmatprep.mubr.f32.mxu0 0.0
    %3479 = vmatmul.mubr.f32.gmra.mrb[0].mxu0 %v1535
    %v3480 = vpop.f32.mrb[0].mxu0
    %v3481 = vadd.f32 %v427, %v3480
    %v3482 = vpop.f32.mrb[0].mxu0
    %3483 = vmatprep.mubr.f32.mxu0 0.0
    %3484 = vmatmul.mubr.f32.gmra.mrb[0].mxu0 %v1538
    %v3485 = vpop.f32.mrb[0].mxu0
    %v3486 = vadd.f32 %v427, %v3485
    %v3487 = vpop.f32.mrb[0].mxu0
    %3488 = vmatprep.mubr.f32.mxu0 0.0
    %3489 = vmatmul.mubr.f32.gmra.mrb[0].mxu0 %v1541
    %v3490 = vpop.f32.mrb[0].mxu0
    %v3491 = vadd.f32 %v427, %v3490
    %v3492 = vpop.f32.mrb[0].mxu0
    %3493 = vmatprep.mubr.f32.mxu0 0.0
    %3494 = vmatmul.mubr.f32.gmra.mrb[0].mxu0 %v1544
    %v3495 = vpop.f32.mrb[0].mxu0
    %v3496 = vadd.f32 %v427, %v3495
    %v3497 = vpop.f32.mrb[0].mxu0
    %3498 = vmatprep.mubr.f32.mxu0 0.0
    %3499 = vmatmul.mubr.f32.gmra.mrb[0].mxu0 %v1547
    %v3500 = vpop.f32.mrb[0].mxu0
    %v3501 = vadd.f32 %v427, %v3500
    %v3502 = vpop.f32.mrb[0].mxu0
    %3503 = vmatprep.mubr.f32.mxu0 0.0
    %3504 = vmatmul.mubr.f32.gmra.mrb[0].mxu0 %v1550
    %v3505 = vpop.f32.mrb[0].mxu0
    %v3506 = vadd.f32 %v427, %v3505
    %v3507 = vpop.f32.mrb[0].mxu0
    %3508 = vmatprep.mubr.f32.mxu0 0.0
    %3509 = vmatmul.mubr.f32.gmra.mrb[0].mxu0 %v1553
    %v3510 = vpop.f32.mrb[0].mxu0
    %v3511 = vadd.f32 %v427, %v3510
    %v3512 = vpop.f32.mrb[0].mxu0
    %3513 = vmatprep.mubr.f32.mxu0 0.0
    %3514 = vmatmul.mubr.f32.gmra.mrb[0].mxu0 %v1556
    %v3515 = vpop.f32.mrb[0].mxu0
    %v3516 = vadd.f32 %v427, %v3515
    %v3517 = vpop.f32.mrb[0].mxu0
    %3518 = vmatprep.mubr.f32.mxu0 0.0
    %3519 = vmatmul.mubr.f32.gmra.mrb[0].mxu0 %v1559
    %v3520 = vpop.f32.mrb[0].mxu0
    %v3521 = vadd.f32 %v427, %v3520
    %v3522 = vpop.f32.mrb[0].mxu0
    %3523 = vmatprep.mubr.f32.mxu0 0.0
    %3524 = vmatmul.mubr.f32.gmra.mrb[0].mxu0 %v1562
    %v3525 = vpop.f32.mrb[0].mxu0
    %v3526 = vadd.f32 %v427, %v3525
    %v3527 = vpop.f32.mrb[0].mxu0
    %3528 = vmatprep.mubr.f32.mxu0 0.0
    %3529 = vmatmul.mubr.f32.gmra.mrb[0].mxu0 %v1565
    %v3530 = vpop.f32.mrb[0].mxu0
    %v3531 = vadd.f32 %v427, %v3530
    %v3532 = vpop.f32.mrb[0].mxu0
    %3533 = vmatprep.mubr.f32.mxu0 0.0
    %3534 = vmatmul.mubr.f32.gmra.mrb[0].mxu0 %v1568
    %v3535 = vpop.f32.mrb[0].mxu0
    %v3536 = vadd.f32 %v427, %v3535
    %v3537 = vpop.f32.mrb[0].mxu0
    %3538 = vdwg.mxu0
    %v3539 = vmax.f32 %v1641, 0.0
    %v3540 = vmax.f32 %v1646, 0.0
    %v3541 = vmax.f32 %v1651, 0.0
    %v3542 = vmax.f32 %v1656, 0.0
    %v3543 = vmax.f32 %v1661, 0.0
    %v3544 = vmax.f32 %v1666, 0.0
    %v3545 = vmax.f32 %v1671, 0.0
    %v3546 = vmax.f32 %v1676, 0.0
    %v3547 = vmax.f32 %v1681, 0.0
    %v3548 = vmax.f32 %v1686, 0.0
    %v3549 = vmax.f32 %v1691, 0.0
    %v3550 = vmax.f32 %v1696, 0.0
    %v3551 = vmax.f32 %v1701, 0.0
    %v3552 = vmax.f32 %v1706, 0.0
    %v3553 = vmax.f32 %v1711, 0.0
    %v3554 = vmax.f32 %v1716, 0.0
    %v3555 = vmax.f32 %v1721, 0.0
    %v3556 = vmax.f32 %v1726, 0.0
    %v3557 = vmax.f32 %v1731, 0.0
    %v3558 = vmax.f32 %v1736, 0.0
    %v3559 = vmax.f32 %v1741, 0.0
    %v3560 = vmax.f32 %v1746, 0.0
    %v3561 = vmax.f32 %v1751, 0.0
    %v3562 = vmax.f32 %v1756, 0.0
    %v3563 = vmax.f32 %v1761, 0.0
    %v3564 = vmax.f32 %v1766, 0.0
    %v3565 = vmax.f32 %v1771, 0.0
    %v3566 = vmax.f32 %v1776, 0.0
    %v3567 = vmax.f32 %v1781, 0.0
    %v3568 = vmax.f32 %v1786, 0.0
    %v3569 = vmax.f32 %v1791, 0.0
    %v3570 = vmax.f32 %v1796, 0.0
    %v3571 = vmax.f32 %v1801, 0.0
    %v3572 = vmax.f32 %v1806, 0.0
    %v3573 = vmax.f32 %v1811, 0.0
    %v3574 = vmax.f32 %v1816, 0.0
    %v3575 = vmax.f32 %v1821, 0.0
    %v3576 = vmax.f32 %v1826, 0.0
    %v3577 = vmax.f32 %v1831, 0.0
    %v3578 = vmax.f32 %v1836, 0.0
    %v3579 = vmax.f32 %v1841, 0.0
    %v3580 = vmax.f32 %v1846, 0.0
    %v3581 = vmax.f32 %v1851, 0.0
    %v3582 = vmax.f32 %v1856, 0.0
    %v3583 = vmax.f32 %v1861, 0.0
    %v3584 = vmax.f32 %v1866, 0.0
    %v3585 = vmax.f32 %v1871, 0.0
    %v3586 = vmax.f32 %v1876, 0.0
    %v3587 = vmax.f32 %v1881, 0.0
    %v3588 = vmax.f32 %v1886, 0.0
    %v3589 = vmax.f32 %v1891, 0.0
    %v3590 = vmax.f32 %v1896, 0.0
    %v3591 = vmax.f32 %v1901, 0.0
    %v3592 = vmax.f32 %v1906, 0.0
    %v3593 = vmax.f32 %v1911, 0.0
    %v3594 = vmax.f32 %v1916, 0.0
    %v3595 = vmax.f32 %v1921, 0.0
    %v3596 = vmax.f32 %v1926, 0.0
    %v3597 = vmax.f32 %v1931, 0.0
    %v3598 = vmax.f32 %v1936, 0.0
    %v3599 = vmax.f32 %v1941, 0.0
    %v3600 = vmax.f32 %v1946, 0.0
    %v3601 = vmax.f32 %v1951, 0.0
    %v3602 = vmax.f32 %v1956, 0.0
    %v3603 = vmax.f32 %v1961, 0.0
    %v3604 = vmax.f32 %v1966, 0.0
    %v3605 = vmax.f32 %v1971, 0.0
    %v3606 = vmax.f32 %v1976, 0.0
    %v3607 = vmax.f32 %v1981, 0.0
    %v3608 = vmax.f32 %v1986, 0.0
    %v3609 = vmax.f32 %v1991, 0.0
    %v3610 = vmax.f32 %v1996, 0.0
    %v3611 = vmax.f32 %v2001, 0.0
    %v3612 = vmax.f32 %v2006, 0.0
    %v3613 = vmax.f32 %v2011, 0.0
    %v3614 = vmax.f32 %v2016, 0.0
    %v3615 = vmax.f32 %v2021, 0.0
    %v3616 = vmax.f32 %v2026, 0.0
    %v3617 = vmax.f32 %v2031, 0.0
    %v3618 = vmax.f32 %v2036, 0.0
    %v3619 = vmax.f32 %v2041, 0.0
    %v3620 = vmax.f32 %v2046, 0.0
    %v3621 = vmax.f32 %v2051, 0.0
    %v3622 = vmax.f32 %v2056, 0.0
    %v3623 = vmax.f32 %v2061, 0.0
    %v3624 = vmax.f32 %v2066, 0.0
    %v3625 = vmax.f32 %v2071, 0.0
    %v3626 = vmax.f32 %v2076, 0.0
    %v3627 = vmax.f32 %v2081, 0.0
    %v3628 = vmax.f32 %v2086, 0.0
    %v3629 = vmax.f32 %v2091, 0.0
    %v3630 = vmax.f32 %v2096, 0.0
    %v3631 = vmax.f32 %v2101, 0.0
    %v3632 = vmax.f32 %v2106, 0.0
    %v3633 = vmax.f32 %v2111, 0.0
    %v3634 = vmax.f32 %v2116, 0.0
    %v3635 = vmax.f32 %v2121, 0.0
    %v3636 = vmax.f32 %v2126, 0.0
    %v3637 = vmax.f32 %v2131, 0.0
    %v3638 = vmax.f32 %v2136, 0.0
    %v3639 = vmax.f32 %v2141, 0.0
    %v3640 = vmax.f32 %v2146, 0.0
    %v3641 = vmax.f32 %v2151, 0.0
    %v3642 = vmax.f32 %v2156, 0.0
    %v3643 = vmax.f32 %v2161, 0.0
    %v3644 = vmax.f32 %v2166, 0.0
    %v3645 = vmax.f32 %v2171, 0.0
    %v3646 = vmax.f32 %v2176, 0.0
    %v3647 = vmax.f32 %v2181, 0.0
    %v3648 = vmax.f32 %v2186, 0.0
    %v3649 = vmax.f32 %v2191, 0.0
    %v3650 = vmax.f32 %v2196, 0.0
    %v3651 = vmax.f32 %v2201, 0.0
    %v3652 = vmax.f32 %v2206, 0.0
    %v3653 = vmax.f32 %v2211, 0.0
    %v3654 = vmax.f32 %v2216, 0.0
    %v3655 = vmax.f32 %v2221, 0.0
    %v3656 = vmax.f32 %v2226, 0.0
    %v3657 = vmax.f32 %v2231, 0.0
    %v3658 = vmax.f32 %v2236, 0.0
    %v3659 = vmax.f32 %v2241, 0.0
    %v3660 = vmax.f32 %v2246, 0.0
    %v3661 = vmax.f32 %v2251, 0.0
    %v3662 = vmax.f32 %v2256, 0.0
    %v3663 = vmax.f32 %v2261, 0.0
    %v3664 = vmax.f32 %v2266, 0.0
    %v3665 = vmax.f32 %v2271, 0.0
    %v3666 = vmax.f32 %v2276, 0.0
    %v3667 = vmax.f32 %v2281, 0.0
    %v3668 = vmax.f32 %v2286, 0.0
    %v3669 = vmax.f32 %v2291, 0.0
    %v3670 = vmax.f32 %v2296, 0.0
    %v3671 = vmax.f32 %v2301, 0.0
    %v3672 = vmax.f32 %v2306, 0.0
    %v3673 = vmax.f32 %v2311, 0.0
    %v3674 = vmax.f32 %v2316, 0.0
    %v3675 = vmax.f32 %v2321, 0.0
    %v3676 = vmax.f32 %v2326, 0.0
    %v3677 = vmax.f32 %v2331, 0.0
    %v3678 = vmax.f32 %v2336, 0.0
    %v3679 = vmax.f32 %v2341, 0.0
    %v3680 = vmax.f32 %v2346, 0.0
    %v3681 = vmax.f32 %v2351, 0.0
    %v3682 = vmax.f32 %v2356, 0.0
    %v3683 = vmax.f32 %v2361, 0.0
    %v3684 = vmax.f32 %v2366, 0.0
    %v3685 = vmax.f32 %v2371, 0.0
    %v3686 = vmax.f32 %v2376, 0.0
    %v3687 = vmax.f32 %v2381, 0.0
    %v3688 = vmax.f32 %v2386, 0.0
    %v3689 = vmax.f32 %v2391, 0.0
    %v3690 = vmax.f32 %v2396, 0.0
    %v3691 = vmax.f32 %v2401, 0.0
    %v3692 = vmax.f32 %v2406, 0.0
    %v3693 = vmax.f32 %v2411, 0.0
    %v3694 = vmax.f32 %v2416, 0.0
    %v3695 = vmax.f32 %v2421, 0.0
    %v3696 = vmax.f32 %v2426, 0.0
    %v3697 = vmax.f32 %v2431, 0.0
    %v3698 = vmax.f32 %v2436, 0.0
    %v3699 = vmax.f32 %v2441, 0.0
    %v3700 = vmax.f32 %v2446, 0.0
    %v3701 = vmax.f32 %v2451, 0.0
    %v3702 = vmax.f32 %v2456, 0.0
    %v3703 = vmax.f32 %v2461, 0.0
    %v3704 = vmax.f32 %v2466, 0.0
    %v3705 = vmax.f32 %v2471, 0.0
    %v3706 = vmax.f32 %v2476, 0.0
    %v3707 = vmax.f32 %v2481, 0.0
    %v3708 = vmax.f32 %v2486, 0.0
    %v3709 = vmax.f32 %v2491, 0.0
    %v3710 = vmax.f32 %v2496, 0.0
    %v3711 = vmax.f32 %v2501, 0.0
    %v3712 = vmax.f32 %v2506, 0.0
    %v3713 = vmax.f32 %v2511, 0.0
    %v3714 = vmax.f32 %v2516, 0.0
    %v3715 = vmax.f32 %v2521, 0.0
    %v3716 = vmax.f32 %v2526, 0.0
    %v3717 = vmax.f32 %v2531, 0.0
    %v3718 = vmax.f32 %v2536, 0.0
    %v3719 = vmax.f32 %v2541, 0.0
    %v3720 = vmax.f32 %v2546, 0.0
    %v3721 = vmax.f32 %v2551, 0.0
    %v3722 = vmax.f32 %v2556, 0.0
    %v3723 = vmax.f32 %v2561, 0.0
    %v3724 = vmax.f32 %v2566, 0.0
    %v3725 = vmax.f32 %v2571, 0.0
    %v3726 = vmax.f32 %v2576, 0.0
    %v3727 = vmax.f32 %v2581, 0.0
    %v3728 = vmax.f32 %v2586, 0.0
    %v3729 = vmax.f32 %v2591, 0.0
    %v3730 = vmax.f32 %v2596, 0.0
    %v3731 = vmax.f32 %v2601, 0.0
    %v3732 = vmax.f32 %v2606, 0.0
    %v3733 = vmax.f32 %v2611, 0.0
    %v3734 = vmax.f32 %v2616, 0.0
    %v3735 = vmax.f32 %v2621, 0.0
    %v3736 = vmax.f32 %v2626, 0.0
    %v3737 = vmax.f32 %v2631, 0.0
    %v3738 = vmax.f32 %v2636, 0.0
    %v3739 = vmax.f32 %v2641, 0.0
    %v3740 = vmax.f32 %v2646, 0.0
    %v3741 = vmax.f32 %v2651, 0.0
    %v3742 = vmax.f32 %v2656, 0.0
    %v3743 = vmax.f32 %v2661, 0.0
    %v3744 = vmax.f32 %v2666, 0.0
    %v3745 = vmax.f32 %v2671, 0.0
    %v3746 = vmax.f32 %v2676, 0.0
    %v3747 = vmax.f32 %v2681, 0.0
    %v3748 = vmax.f32 %v2686, 0.0
    %v3749 = vmax.f32 %v2691, 0.0
    %v3750 = vmax.f32 %v2696, 0.0
    %v3751 = vmax.f32 %v2701, 0.0
    %v3752 = vmax.f32 %v2706, 0.0
    %v3753 = vmax.f32 %v2711, 0.0
    %v3754 = vmax.f32 %v2716, 0.0
    %v3755 = vmax.f32 %v2721, 0.0
    %v3756 = vmax.f32 %v2726, 0.0
    %v3757 = vmax.f32 %v2731, 0.0
    %v3758 = vmax.f32 %v2736, 0.0
    %v3759 = vmax.f32 %v2741, 0.0
    %v3760 = vmax.f32 %v2746, 0.0
    %v3761 = vmax.f32 %v2751, 0.0
    %v3762 = vmax.f32 %v2756, 0.0
    %v3763 = vmax.f32 %v2761, 0.0
    %v3764 = vmax.f32 %v2766, 0.0
    %v3765 = vmax.f32 %v2771, 0.0
    %v3766 = vmax.f32 %v2776, 0.0
    %v3767 = vmax.f32 %v2781, 0.0
    %v3768 = vmax.f32 %v2786, 0.0
    %v3769 = vmax.f32 %v2791, 0.0
    %v3770 = vmax.f32 %v2796, 0.0
    %v3771 = vmax.f32 %v2801, 0.0
    %v3772 = vmax.f32 %v2806, 0.0
    %v3773 = vmax.f32 %v2811, 0.0
    %v3774 = vmax.f32 %v2816, 0.0
    %v3775 = vmax.f32 %v2821, 0.0
    %v3776 = vmax.f32 %v2826, 0.0
    %v3777 = vmax.f32 %v2831, 0.0
    %v3778 = vmax.f32 %v2836, 0.0
    %v3779 = vmax.f32 %v2841, 0.0
    %v3780 = vmax.f32 %v2846, 0.0
    %v3781 = vmax.f32 %v2851, 0.0
    %v3782 = vmax.f32 %v2856, 0.0
    %v3783 = vmax.f32 %v2861, 0.0
    %v3784 = vmax.f32 %v2866, 0.0
    %v3785 = vmax.f32 %v2871, 0.0
    %v3786 = vmax.f32 %v2876, 0.0
    %v3787 = vmax.f32 %v2881, 0.0
    %v3788 = vmax.f32 %v2886, 0.0
    %v3789 = vmax.f32 %v2891, 0.0
    %v3790 = vmax.f32 %v2896, 0.0
    %v3791 = vmax.f32 %v2901, 0.0
    %v3792 = vmax.f32 %v2906, 0.0
    %v3793 = vmax.f32 %v2911, 0.0
    %v3794 = vmax.f32 %v2916, 0.0
    %v3795 = vmax.f32 %v2921, 0.0
    %v3796 = vmax.f32 %v2926, 0.0
    %v3797 = vmax.f32 %v2931, 0.0
    %v3798 = vmax.f32 %v2936, 0.0
    %v3799 = vmax.f32 %v2941, 0.0
    %v3800 = vmax.f32 %v2946, 0.0
    %v3801 = vmax.f32 %v2951, 0.0
    %v3802 = vmax.f32 %v2956, 0.0
    %v3803 = vmax.f32 %v2961, 0.0
    %v3804 = vmax.f32 %v2966, 0.0
    %v3805 = vmax.f32 %v2971, 0.0
    %v3806 = vmax.f32 %v2976, 0.0
    %v3807 = vmax.f32 %v2981, 0.0
    %v3808 = vmax.f32 %v2986, 0.0
    %v3809 = vmax.f32 %v2991, 0.0
    %v3810 = vmax.f32 %v2996, 0.0
    %v3811 = vmax.f32 %v3001, 0.0
    %v3812 = vmax.f32 %v3006, 0.0
    %v3813 = vmax.f32 %v3011, 0.0
    %v3814 = vmax.f32 %v3016, 0.0
    %v3815 = vmax.f32 %v3021, 0.0
    %v3816 = vmax.f32 %v3026, 0.0
    %v3817 = vmax.f32 %v3031, 0.0
    %v3818 = vmax.f32 %v3036, 0.0
    %v3819 = vmax.f32 %v3041, 0.0
    %v3820 = vmax.f32 %v3046, 0.0
    %v3821 = vmax.f32 %v3051, 0.0
    %v3822 = vmax.f32 %v3056, 0.0
    %v3823 = vmax.f32 %v3061, 0.0
    %v3824 = vmax.f32 %v3066, 0.0
    %v3825 = vmax.f32 %v3071, 0.0
    %v3826 = vmax.f32 %v3076, 0.0
    %v3827 = vmax.f32 %v3081, 0.0
    %v3828 = vmax.f32 %v3086, 0.0
    %v3829 = vmax.f32 %v3091, 0.0
    %v3830 = vmax.f32 %v3096, 0.0
    %v3831 = vmax.f32 %v3101, 0.0
    %v3832 = vmax.f32 %v3106, 0.0
    %v3833 = vmax.f32 %v3111, 0.0
    %v3834 = vmax.f32 %v3116, 0.0
    %v3835 = vmax.f32 %v3121, 0.0
    %v3836 = vmax.f32 %v3126, 0.0
    %v3837 = vmax.f32 %v3131, 0.0
    %v3838 = vmax.f32 %v3136, 0.0
    %v3839 = vmax.f32 %v3141, 0.0
    %v3840 = vmax.f32 %v3146, 0.0
    %v3841 = vmax.f32 %v3151, 0.0
    %v3842 = vmax.f32 %v3156, 0.0
    %v3843 = vmax.f32 %v3161, 0.0
    %v3844 = vmax.f32 %v3166, 0.0
    %v3845 = vmax.f32 %v3171, 0.0
    %v3846 = vmax.f32 %v3176, 0.0
    %v3847 = vmax.f32 %v3181, 0.0
    %v3848 = vmax.f32 %v3186, 0.0
    %v3849 = vmax.f32 %v3191, 0.0
    %v3850 = vmax.f32 %v3196, 0.0
    %v3851 = vmax.f32 %v3201, 0.0
    %v3852 = vmax.f32 %v3206, 0.0
    %v3853 = vmax.f32 %v3211, 0.0
    %v3854 = vmax.f32 %v3216, 0.0
    %v3855 = vmax.f32 %v3221, 0.0
    %v3856 = vmax.f32 %v3226, 0.0
    %v3857 = vmax.f32 %v3231, 0.0
    %v3858 = vmax.f32 %v3236, 0.0
    %v3859 = vmax.f32 %v3241, 0.0
    %v3860 = vmax.f32 %v3246, 0.0
    %v3861 = vmax.f32 %v3251, 0.0
    %v3862 = vmax.f32 %v3256, 0.0
    %v3863 = vmax.f32 %v3261, 0.0
    %v3864 = vmax.f32 %v3266, 0.0
    %v3865 = vmax.f32 %v3271, 0.0
    %v3866 = vmax.f32 %v3276, 0.0
    %v3867 = vmax.f32 %v3281, 0.0
    %v3868 = vmax.f32 %v3286, 0.0
    %v3869 = vmax.f32 %v3291, 0.0
    %v3870 = vmax.f32 %v3296, 0.0
    %v3871 = vmax.f32 %v3301, 0.0
    %v3872 = vmax.f32 %v3306, 0.0
    %v3873 = vmax.f32 %v3311, 0.0
    %v3874 = vmax.f32 %v3316, 0.0
    %v3875 = vmax.f32 %v3321, 0.0
    %v3876 = vmax.f32 %v3326, 0.0
    %v3877 = vmax.f32 %v3331, 0.0
    %v3878 = vmax.f32 %v3336, 0.0
    %v3879 = vmax.f32 %v3341, 0.0
    %v3880 = vmax.f32 %v3346, 0.0
    %v3881 = vmax.f32 %v3351, 0.0
    %v3882 = vmax.f32 %v3356, 0.0
    %v3883 = vmax.f32 %v3361, 0.0
    %v3884 = vmax.f32 %v3366, 0.0
    %v3885 = vmax.f32 %v3371, 0.0
    %v3886 = vmax.f32 %v3376, 0.0
    %v3887 = vmax.f32 %v3381, 0.0
    %v3888 = vmax.f32 %v3386, 0.0
    %v3889 = vmax.f32 %v3391, 0.0
    %v3890 = vmax.f32 %v3396, 0.0
    %v3891 = vmax.f32 %v3401, 0.0
    %v3892 = vmax.f32 %v3406, 0.0
    %v3893 = vmax.f32 %v3411, 0.0
    %v3894 = vmax.f32 %v3416, 0.0
    %v3895 = vmax.f32 %v3421, 0.0
    %v3896 = vmax.f32 %v3426, 0.0
    %v3897 = vmax.f32 %v3431, 0.0
    %v3898 = vmax.f32 %v3436, 0.0
    %v3899 = vmax.f32 %v3441, 0.0
    %v3900 = vmax.f32 %v3446, 0.0
    %v3901 = vmax.f32 %v3451, 0.0
    %v3902 = vmax.f32 %v3456, 0.0
    %v3903 = vmax.f32 %v3461, 0.0
    %v3904 = vmax.f32 %v3466, 0.0
    %v3905 = vmax.f32 %v3471, 0.0
    %v3906 = vmax.f32 %v3476, 0.0
    %v3907 = vmax.f32 %v3481, 0.0
    %v3908 = vmax.f32 %v3486, 0.0
    %v3909 = vmax.f32 %v3491, 0.0
    %v3910 = vmax.f32 %v3496, 0.0
    %v3911 = vmax.f32 %v3501, 0.0
    %v3912 = vmax.f32 %v3506, 0.0
    %v3913 = vmax.f32 %v3511, 0.0
    %v3914 = vmax.f32 %v3516, 0.0
    %v3915 = vmax.f32 %v3521, 0.0
    %v3916 = vmax.f32 %v3526, 0.0
    %v3917 = vmax.f32 %v3531, 0.0
    %v3918 = vmax.f32 %v3536, 0.0
    %vm3919 = vcmask 261120
    %3920 = vst.msk [vmem:[%s3] sm:$0xff] %vm3919, %v3539
    %3921 = vst.msk [vmem:[%s3 + $0x8] sm:$0xff] %vm3919, %v3540
    %3922 = vst.msk [vmem:[%s3 + $0x10] sm:$0xff] %vm3919, %v3541
    %3923 = vst.msk [vmem:[%s3 + $0x18] sm:$0xff] %vm3919, %v3542
    %3924 = vst.msk [vmem:[%s3 + $0x20] sm:$0xff] %vm3919, %v3543
    %3925 = vst.msk [vmem:[%s3 + $0x28] sm:$0xff] %vm3919, %v3544
    %3926 = vst.msk [vmem:[%s3 + $0x30] sm:$0xff] %vm3919, %v3545
    %3927 = vst.msk [vmem:[%s3 + $0x38] sm:$0xff] %vm3919, %v3546
    %3928 = vst.msk [vmem:[%s3 + $0x40] sm:$0xff] %vm3919, %v3547
    %3929 = vst.msk [vmem:[%s3 + $0x48] sm:$0xff] %vm3919, %v3548
    %3930 = vst.msk [vmem:[%s3 + $0x50] sm:$0xff] %vm3919, %v3549
    %3931 = vst.msk [vmem:[%s3 + $0x58] sm:$0xff] %vm3919, %v3550
    %3932 = vst.msk [vmem:[%s3 + $0x60] sm:$0xff] %vm3919, %v3551
    %3933 = vst.msk [vmem:[%s3 + $0x68] sm:$0xff] %vm3919, %v3552
    %3934 = vst.msk [vmem:[%s3 + $0x70] sm:$0xff] %vm3919, %v3553
    %3935 = vst.msk [vmem:[%s3 + $0x78] sm:$0xff] %vm3919, %v3554
    %3936 = vst.msk [vmem:[%s3 + $0x80] sm:$0xff] %vm3919, %v3555
    %3937 = vst.msk [vmem:[%s3 + $0x88] sm:$0xff] %vm3919, %v3556
    %3938 = vst.msk [vmem:[%s3 + $0x90] sm:$0xff] %vm3919, %v3557
    %3939 = vst.msk [vmem:[%s3 + $0x98] sm:$0xff] %vm3919, %v3558
    %3940 = vst.msk [vmem:[%s3 + $0xa0] sm:$0xff] %vm3919, %v3559
    %3941 = vst.msk [vmem:[%s3 + $0xa8] sm:$0xff] %vm3919, %v3560
    %3942 = vst.msk [vmem:[%s3 + $0xb0] sm:$0xff] %vm3919, %v3561
    %3943 = vst.msk [vmem:[%s3 + $0xb8] sm:$0xff] %vm3919, %v3562
    %3944 = vst.msk [vmem:[%s3 + $0xc0] sm:$0xff] %vm3919, %v3563
    %3945 = vst.msk [vmem:[%s3 + $0xc8] sm:$0xff] %vm3919, %v3564
    %3946 = vst.msk [vmem:[%s3 + $0xd0] sm:$0xff] %vm3919, %v3565
    %3947 = vst.msk [vmem:[%s3 + $0xd8] sm:$0xff] %vm3919, %v3566
    %3948 = vst.msk [vmem:[%s3 + $0xe0] sm:$0xff] %vm3919, %v3567
    %3949 = vst.msk [vmem:[%s3 + $0xe8] sm:$0xff] %vm3919, %v3568
    %3950 = vst.msk [vmem:[%s3 + $0xf0] sm:$0xff] %vm3919, %v3569
    %3951 = vst.msk [vmem:[%s3 + $0xf8] sm:$0xff] %vm3919, %v3570
    %3952 = vst.msk [vmem:[%s3 + $0x100] sm:$0xff] %vm3919, %v3571
    %3953 = vst.msk [vmem:[%s3 + $0x108] sm:$0xff] %vm3919, %v3572
    %3954 = vst.msk [vmem:[%s3 + $0x110] sm:$0xff] %vm3919, %v3573
    %3955 = vst.msk [vmem:[%s3 + $0x118] sm:$0xff] %vm3919, %v3574
    %3956 = vst.msk [vmem:[%s3 + $0x120] sm:$0xff] %vm3919, %v3575
    %3957 = vst.msk [vmem:[%s3 + $0x128] sm:$0xff] %vm3919, %v3576
    %3958 = vst.msk [vmem:[%s3 + $0x130] sm:$0xff] %vm3919, %v3577
    %3959 = vst.msk [vmem:[%s3 + $0x138] sm:$0xff] %vm3919, %v3578
    %3960 = vst.msk [vmem:[%s3 + $0x140] sm:$0xff] %vm3919, %v3579
    %3961 = vst.msk [vmem:[%s3 + $0x148] sm:$0xff] %vm3919, %v3580
    %3962 = vst.msk [vmem:[%s3 + $0x150] sm:$0xff] %vm3919, %v3581
    %3963 = vst.msk [vmem:[%s3 + $0x158] sm:$0xff] %vm3919, %v3582
    %3964 = vst.msk [vmem:[%s3 + $0x160] sm:$0xff] %vm3919, %v3583
    %3965 = vst.msk [vmem:[%s3 + $0x168] sm:$0xff] %vm3919, %v3584
    %3966 = vst.msk [vmem:[%s3 + $0x170] sm:$0xff] %vm3919, %v3585
    %3967 = vst.msk [vmem:[%s3 + $0x178] sm:$0xff] %vm3919, %v3586
    %3968 = vst.msk [vmem:[%s3 + $0x180] sm:$0xff] %vm3919, %v3587
    %3969 = vst.msk [vmem:[%s3 + $0x188] sm:$0xff] %vm3919, %v3588
    %3970 = vst.msk [vmem:[%s3 + $0x190] sm:$0xff] %vm3919, %v3589
    %3971 = vst.msk [vmem:[%s3 + $0x198] sm:$0xff] %vm3919, %v3590
    %3972 = vst.msk [vmem:[%s3 + $0x1a0] sm:$0xff] %vm3919, %v3591
    %3973 = vst.msk [vmem:[%s3 + $0x1a8] sm:$0xff] %vm3919, %v3592
    %3974 = vst.msk [vmem:[%s3 + $0x1b0] sm:$0xff] %vm3919, %v3593
    %3975 = vst.msk [vmem:[%s3 + $0x1b8] sm:$0xff] %vm3919, %v3594
    %3976 = vst.msk [vmem:[%s3 + $0x1c0] sm:$0xff] %vm3919, %v3595
    %3977 = vst.msk [vmem:[%s3 + $0x1c8] sm:$0xff] %vm3919, %v3596
    %3978 = vst.msk [vmem:[%s3 + $0x1d0] sm:$0xff] %vm3919, %v3597
    %3979 = vst.msk [vmem:[%s3 + $0x1d8] sm:$0xff] %vm3919, %v3598
    %3980 = vst.msk [vmem:[%s3 + $0x1e0] sm:$0xff] %vm3919, %v3599
    %3981 = vst.msk [vmem:[%s3 + $0x1e8] sm:$0xff] %vm3919, %v3600
    %3982 = vst.msk [vmem:[%s3 + $0x1f0] sm:$0xff] %vm3919, %v3601
    %3983 = vst.msk [vmem:[%s3 + $0x1f8] sm:$0xff] %vm3919, %v3602
    %3984 = vst.msk [vmem:[%s3 + $0x200] sm:$0xff] %vm3919, %v3603
    %3985 = vst.msk [vmem:[%s3 + $0x208] sm:$0xff] %vm3919, %v3604
    %3986 = vst.msk [vmem:[%s3 + $0x210] sm:$0xff] %vm3919, %v3605
    %3987 = vst.msk [vmem:[%s3 + $0x218] sm:$0xff] %vm3919, %v3606
    %3988 = vst.msk [vmem:[%s3 + $0x220] sm:$0xff] %vm3919, %v3607
    %3989 = vst.msk [vmem:[%s3 + $0x228] sm:$0xff] %vm3919, %v3608
    %3990 = vst.msk [vmem:[%s3 + $0x230] sm:$0xff] %vm3919, %v3609
    %3991 = vst.msk [vmem:[%s3 + $0x238] sm:$0xff] %vm3919, %v3610
    %3992 = vst.msk [vmem:[%s3 + $0x240] sm:$0xff] %vm3919, %v3611
    %3993 = vst.msk [vmem:[%s3 + $0x248] sm:$0xff] %vm3919, %v3612
    %3994 = vst.msk [vmem:[%s3 + $0x250] sm:$0xff] %vm3919, %v3613
    %3995 = vst.msk [vmem:[%s3 + $0x258] sm:$0xff] %vm3919, %v3614
    %3996 = vst.msk [vmem:[%s3 + $0x260] sm:$0xff] %vm3919, %v3615
    %3997 = vst.msk [vmem:[%s3 + $0x268] sm:$0xff] %vm3919, %v3616
    %3998 = vst.msk [vmem:[%s3 + $0x270] sm:$0xff] %vm3919, %v3617
    %3999 = vst.msk [vmem:[%s3 + $0x278] sm:$0xff] %vm3919, %v3618
    %4000 = vst.msk [vmem:[%s3 + $0x280] sm:$0xff] %vm3919, %v3619
    %4001 = vst.msk [vmem:[%s3 + $0x288] sm:$0xff] %vm3919, %v3620
    %4002 = vst.msk [vmem:[%s3 + $0x290] sm:$0xff] %vm3919, %v3621
    %4003 = vst.msk [vmem:[%s3 + $0x298] sm:$0xff] %vm3919, %v3622
    %4004 = vst.msk [vmem:[%s3 + $0x2a0] sm:$0xff] %vm3919, %v3623
    %4005 = vst.msk [vmem:[%s3 + $0x2a8] sm:$0xff] %vm3919, %v3624
    %4006 = vst.msk [vmem:[%s3 + $0x2b0] sm:$0xff] %vm3919, %v3625
    %4007 = vst.msk [vmem:[%s3 + $0x2b8] sm:$0xff] %vm3919, %v3626
    %4008 = vst.msk [vmem:[%s3 + $0x2c0] sm:$0xff] %vm3919, %v3627
    %4009 = vst.msk [vmem:[%s3 + $0x2c8] sm:$0xff] %vm3919, %v3628
    %4010 = vst.msk [vmem:[%s3 + $0x2d0] sm:$0xff] %vm3919, %v3629
    %4011 = vst.msk [vmem:[%s3 + $0x2d8] sm:$0xff] %vm3919, %v3630
    %4012 = vst.msk [vmem:[%s3 + $0x2e0] sm:$0xff] %vm3919, %v3631
    %4013 = vst.msk [vmem:[%s3 + $0x2e8] sm:$0xff] %vm3919, %v3632
    %4014 = vst.msk [vmem:[%s3 + $0x2f0] sm:$0xff] %vm3919, %v3633
    %4015 = vst.msk [vmem:[%s3 + $0x2f8] sm:$0xff] %vm3919, %v3634
    %4016 = vst.msk [vmem:[%s3 + $0x300] sm:$0xff] %vm3919, %v3635
    %4017 = vst.msk [vmem:[%s3 + $0x308] sm:$0xff] %vm3919, %v3636
    %4018 = vst.msk [vmem:[%s3 + $0x310] sm:$0xff] %vm3919, %v3637
    %4019 = vst.msk [vmem:[%s3 + $0x318] sm:$0xff] %vm3919, %v3638
    %4020 = vst.msk [vmem:[%s3 + $0x320] sm:$0xff] %vm3919, %v3639
    %4021 = vst.msk [vmem:[%s3 + $0x328] sm:$0xff] %vm3919, %v3640
    %4022 = vst.msk [vmem:[%s3 + $0x330] sm:$0xff] %vm3919, %v3641
    %4023 = vst.msk [vmem:[%s3 + $0x338] sm:$0xff] %vm3919, %v3642
    %4024 = vst.msk [vmem:[%s3 + $0x340] sm:$0xff] %vm3919, %v3643
    %4025 = vst.msk [vmem:[%s3 + $0x348] sm:$0xff] %vm3919, %v3644
    %4026 = vst.msk [vmem:[%s3 + $0x350] sm:$0xff] %vm3919, %v3645
    %4027 = vst.msk [vmem:[%s3 + $0x358] sm:$0xff] %vm3919, %v3646
    %4028 = vst.msk [vmem:[%s3 + $0x360] sm:$0xff] %vm3919, %v3647
    %4029 = vst.msk [vmem:[%s3 + $0x368] sm:$0xff] %vm3919, %v3648
    %4030 = vst.msk [vmem:[%s3 + $0x370] sm:$0xff] %vm3919, %v3649
    %4031 = vst.msk [vmem:[%s3 + $0x378] sm:$0xff] %vm3919, %v3650
    %4032 = vst.msk [vmem:[%s3 + $0x380] sm:$0xff] %vm3919, %v3651
    %4033 = vst.msk [vmem:[%s3 + $0x388] sm:$0xff] %vm3919, %v3652
    %4034 = vst.msk [vmem:[%s3 + $0x390] sm:$0xff] %vm3919, %v3653
    %4035 = vst.msk [vmem:[%s3 + $0x398] sm:$0xff] %vm3919, %v3654
    %4036 = vst.msk [vmem:[%s3 + $0x3a0] sm:$0xff] %vm3919, %v3655
    %4037 = vst.msk [vmem:[%s3 + $0x3a8] sm:$0xff] %vm3919, %v3656
    %4038 = vst.msk [vmem:[%s3 + $0x3b0] sm:$0xff] %vm3919, %v3657
    %4039 = vst.msk [vmem:[%s3 + $0x3b8] sm:$0xff] %vm3919, %v3658
    %4040 = vst.msk [vmem:[%s3 + $0x3c0] sm:$0xff] %vm3919, %v3659
    %4041 = vst.msk [vmem:[%s3 + $0x3c8] sm:$0xff] %vm3919, %v3660
    %4042 = vst.msk [vmem:[%s3 + $0x3d0] sm:$0xff] %vm3919, %v3661
    %4043 = vst.msk [vmem:[%s3 + $0x3d8] sm:$0xff] %vm3919, %v3662
    %4044 = vst.msk [vmem:[%s3 + $0x3e0] sm:$0xff] %vm3919, %v3663
    %4045 = vst.msk [vmem:[%s3 + $0x3e8] sm:$0xff] %vm3919, %v3664
    %4046 = vst.msk [vmem:[%s3 + $0x3f0] sm:$0xff] %vm3919, %v3665
    %4047 = vst.msk [vmem:[%s3 + $0x3f8] sm:$0xff] %vm3919, %v3666
    %4048 = vst.msk [vmem:[%s3 + $0x400] sm:$0xff] %vm3919, %v3667
    %4049 = vst.msk [vmem:[%s3 + $0x408] sm:$0xff] %vm3919, %v3668
    %4050 = vst.msk [vmem:[%s3 + $0x410] sm:$0xff] %vm3919, %v3669
    %4051 = vst.msk [vmem:[%s3 + $0x418] sm:$0xff] %vm3919, %v3670
    %4052 = vst.msk [vmem:[%s3 + $0x420] sm:$0xff] %vm3919, %v3671
    %4053 = vst.msk [vmem:[%s3 + $0x428] sm:$0xff] %vm3919, %v3672
    %4054 = vst.msk [vmem:[%s3 + $0x430] sm:$0xff] %vm3919, %v3673
    %4055 = vst.msk [vmem:[%s3 + $0x438] sm:$0xff] %vm3919, %v3674
    %4056 = vst.msk [vmem:[%s3 + $0x440] sm:$0xff] %vm3919, %v3675
    %4057 = vst.msk [vmem:[%s3 + $0x448] sm:$0xff] %vm3919, %v3676
    %4058 = vst.msk [vmem:[%s3 + $0x450] sm:$0xff] %vm3919, %v3677
    %4059 = vst.msk [vmem:[%s3 + $0x458] sm:$0xff] %vm3919, %v3678
    %4060 = vst.msk [vmem:[%s3 + $0x460] sm:$0xff] %vm3919, %v3679
    %4061 = vst.msk [vmem:[%s3 + $0x468] sm:$0xff] %vm3919, %v3680
    %4062 = vst.msk [vmem:[%s3 + $0x470] sm:$0xff] %vm3919, %v3681
    %4063 = vst.msk [vmem:[%s3 + $0x478] sm:$0xff] %vm3919, %v3682
    %4064 = vst.msk [vmem:[%s3 + $0x480] sm:$0xff] %vm3919, %v3683
    %4065 = vst.msk [vmem:[%s3 + $0x488] sm:$0xff] %vm3919, %v3684
    %4066 = vst.msk [vmem:[%s3 + $0x490] sm:$0xff] %vm3919, %v3685
    %4067 = vst.msk [vmem:[%s3 + $0x498] sm:$0xff] %vm3919, %v3686
    %4068 = vst.msk [vmem:[%s3 + $0x4a0] sm:$0xff] %vm3919, %v3687
    %4069 = vst.msk [vmem:[%s3 + $0x4a8] sm:$0xff] %vm3919, %v3688
    %4070 = vst.msk [vmem:[%s3 + $0x4b0] sm:$0xff] %vm3919, %v3689
    %4071 = vst.msk [vmem:[%s3 + $0x4b8] sm:$0xff] %vm3919, %v3690
    %4072 = vst.msk [vmem:[%s3 + $0x4c0] sm:$0xff] %vm3919, %v3691
    %4073 = vst.msk [vmem:[%s3 + $0x4c8] sm:$0xff] %vm3919, %v3692
    %4074 = vst.msk [vmem:[%s3 + $0x4d0] sm:$0xff] %vm3919, %v3693
    %4075 = vst.msk [vmem:[%s3 + $0x4d8] sm:$0xff] %vm3919, %v3694
    %4076 = vst.msk [vmem:[%s3 + $0x4e0] sm:$0xff] %vm3919, %v3695
    %4077 = vst.msk [vmem:[%s3 + $0x4e8] sm:$0xff] %vm3919, %v3696
    %4078 = vst.msk [vmem:[%s3 + $0x4f0] sm:$0xff] %vm3919, %v3697
    %4079 = vst.msk [vmem:[%s3 + $0x4f8] sm:$0xff] %vm3919, %v3698
    %4080 = vst.msk [vmem:[%s3 + $0x500] sm:$0xff] %vm3919, %v3699
    %4081 = vst.msk [vmem:[%s3 + $0x508] sm:$0xff] %vm3919, %v3700
    %4082 = vst.msk [vmem:[%s3 + $0x510] sm:$0xff] %vm3919, %v3701
    %4083 = vst.msk [vmem:[%s3 + $0x518] sm:$0xff] %vm3919, %v3702
    %4084 = vst.msk [vmem:[%s3 + $0x520] sm:$0xff] %vm3919, %v3703
    %4085 = vst.msk [vmem:[%s3 + $0x528] sm:$0xff] %vm3919, %v3704
    %4086 = vst.msk [vmem:[%s3 + $0x530] sm:$0xff] %vm3919, %v3705
    %4087 = vst.msk [vmem:[%s3 + $0x538] sm:$0xff] %vm3919, %v3706
    %4088 = vst.msk [vmem:[%s3 + $0x540] sm:$0xff] %vm3919, %v3707
    %4089 = vst.msk [vmem:[%s3 + $0x548] sm:$0xff] %vm3919, %v3708
    %4090 = vst.msk [vmem:[%s3 + $0x550] sm:$0xff] %vm3919, %v3709
    %4091 = vst.msk [vmem:[%s3 + $0x558] sm:$0xff] %vm3919, %v3710
    %4092 = vst.msk [vmem:[%s3 + $0x560] sm:$0xff] %vm3919, %v3711
    %4093 = vst.msk [vmem:[%s3 + $0x568] sm:$0xff] %vm3919, %v3712
    %4094 = vst.msk [vmem:[%s3 + $0x570] sm:$0xff] %vm3919, %v3713
    %4095 = vst.msk [vmem:[%s3 + $0x578] sm:$0xff] %vm3919, %v3714
    %4096 = vst.msk [vmem:[%s3 + $0x580] sm:$0xff] %vm3919, %v3715
    %4097 = vst.msk [vmem:[%s3 + $0x588] sm:$0xff] %vm3919, %v3716
    %4098 = vst.msk [vmem:[%s3 + $0x590] sm:$0xff] %vm3919, %v3717
    %4099 = vst.msk [vmem:[%s3 + $0x598] sm:$0xff] %vm3919, %v3718
    %4100 = vst.msk [vmem:[%s3 + $0x5a0] sm:$0xff] %vm3919, %v3719
    %4101 = vst.msk [vmem:[%s3 + $0x5a8] sm:$0xff] %vm3919, %v3720
    %4102 = vst.msk [vmem:[%s3 + $0x5b0] sm:$0xff] %vm3919, %v3721
    %4103 = vst.msk [vmem:[%s3 + $0x5b8] sm:$0xff] %vm3919, %v3722
    %4104 = vst.msk [vmem:[%s3 + $0x5c0] sm:$0xff] %vm3919, %v3723
    %4105 = vst.msk [vmem:[%s3 + $0x5c8] sm:$0xff] %vm3919, %v3724
    %4106 = vst.msk [vmem:[%s3 + $0x5d0] sm:$0xff] %vm3919, %v3725
    %4107 = vst.msk [vmem:[%s3 + $0x5d8] sm:$0xff] %vm3919, %v3726
    %4108 = vst.msk [vmem:[%s3 + $0x5e0] sm:$0xff] %vm3919, %v3727
    %4109 = vst.msk [vmem:[%s3 + $0x5e8] sm:$0xff] %vm3919, %v3728
    %4110 = vst.msk [vmem:[%s3 + $0x5f0] sm:$0xff] %vm3919, %v3729
    %4111 = vst.msk [vmem:[%s3 + $0x5f8] sm:$0xff] %vm3919, %v3730
    %4112 = vst.msk [vmem:[%s3 + $0x600] sm:$0xff] %vm3919, %v3731
    %4113 = vst.msk [vmem:[%s3 + $0x608] sm:$0xff] %vm3919, %v3732
    %4114 = vst.msk [vmem:[%s3 + $0x610] sm:$0xff] %vm3919, %v3733
    %4115 = vst.msk [vmem:[%s3 + $0x618] sm:$0xff] %vm3919, %v3734
    %4116 = vst.msk [vmem:[%s3 + $0x620] sm:$0xff] %vm3919, %v3735
    %4117 = vst.msk [vmem:[%s3 + $0x628] sm:$0xff] %vm3919, %v3736
    %4118 = vst.msk [vmem:[%s3 + $0x630] sm:$0xff] %vm3919, %v3737
    %4119 = vst.msk [vmem:[%s3 + $0x638] sm:$0xff] %vm3919, %v3738
    %4120 = vst.msk [vmem:[%s3 + $0x640] sm:$0xff] %vm3919, %v3739
    %4121 = vst.msk [vmem:[%s3 + $0x648] sm:$0xff] %vm3919, %v3740
    %4122 = vst.msk [vmem:[%s3 + $0x650] sm:$0xff] %vm3919, %v3741
    %4123 = vst.msk [vmem:[%s3 + $0x658] sm:$0xff] %vm3919, %v3742
    %4124 = vst.msk [vmem:[%s3 + $0x660] sm:$0xff] %vm3919, %v3743
    %4125 = vst.msk [vmem:[%s3 + $0x668] sm:$0xff] %vm3919, %v3744
    %4126 = vst.msk [vmem:[%s3 + $0x670] sm:$0xff] %vm3919, %v3745
    %4127 = vst.msk [vmem:[%s3 + $0x678] sm:$0xff] %vm3919, %v3746
    %4128 = vst.msk [vmem:[%s3 + $0x680] sm:$0xff] %vm3919, %v3747
    %4129 = vst.msk [vmem:[%s3 + $0x688] sm:$0xff] %vm3919, %v3748
    %4130 = vst.msk [vmem:[%s3 + $0x690] sm:$0xff] %vm3919, %v3749
    %4131 = vst.msk [vmem:[%s3 + $0x698] sm:$0xff] %vm3919, %v3750
    %4132 = vst.msk [vmem:[%s3 + $0x6a0] sm:$0xff] %vm3919, %v3751
    %4133 = vst.msk [vmem:[%s3 + $0x6a8] sm:$0xff] %vm3919, %v3752
    %4134 = vst.msk [vmem:[%s3 + $0x6b0] sm:$0xff] %vm3919, %v3753
    %4135 = vst.msk [vmem:[%s3 + $0x6b8] sm:$0xff] %vm3919, %v3754
    %4136 = vst.msk [vmem:[%s3 + $0x6c0] sm:$0xff] %vm3919, %v3755
    %4137 = vst.msk [vmem:[%s3 + $0x6c8] sm:$0xff] %vm3919, %v3756
    %4138 = vst.msk [vmem:[%s3 + $0x6d0] sm:$0xff] %vm3919, %v3757
    %4139 = vst.msk [vmem:[%s3 + $0x6d8] sm:$0xff] %vm3919, %v3758
    %4140 = vst.msk [vmem:[%s3 + $0x6e0] sm:$0xff] %vm3919, %v3759
    %4141 = vst.msk [vmem:[%s3 + $0x6e8] sm:$0xff] %vm3919, %v3760
    %4142 = vst.msk [vmem:[%s3 + $0x6f0] sm:$0xff] %vm3919, %v3761
    %4143 = vst.msk [vmem:[%s3 + $0x6f8] sm:$0xff] %vm3919, %v3762
    %4144 = vst.msk [vmem:[%s3 + $0x700] sm:$0xff] %vm3919, %v3763
    %4145 = vst.msk [vmem:[%s3 + $0x708] sm:$0xff] %vm3919, %v3764
    %4146 = vst.msk [vmem:[%s3 + $0x710] sm:$0xff] %vm3919, %v3765
    %4147 = vst.msk [vmem:[%s3 + $0x718] sm:$0xff] %vm3919, %v3766
    %4148 = vst.msk [vmem:[%s3 + $0x720] sm:$0xff] %vm3919, %v3767
    %4149 = vst.msk [vmem:[%s3 + $0x728] sm:$0xff] %vm3919, %v3768
    %4150 = vst.msk [vmem:[%s3 + $0x730] sm:$0xff] %vm3919, %v3769
    %4151 = vst.msk [vmem:[%s3 + $0x738] sm:$0xff] %vm3919, %v3770
    %4152 = vst.msk [vmem:[%s3 + $0x740] sm:$0xff] %vm3919, %v3771
    %4153 = vst.msk [vmem:[%s3 + $0x748] sm:$0xff] %vm3919, %v3772
    %4154 = vst.msk [vmem:[%s3 + $0x750] sm:$0xff] %vm3919, %v3773
    %4155 = vst.msk [vmem:[%s3 + $0x758] sm:$0xff] %vm3919, %v3774
    %4156 = vst.msk [vmem:[%s3 + $0x760] sm:$0xff] %vm3919, %v3775
    %4157 = vst.msk [vmem:[%s3 + $0x768] sm:$0xff] %vm3919, %v3776
    %4158 = vst.msk [vmem:[%s3 + $0x770] sm:$0xff] %vm3919, %v3777
    %4159 = vst.msk [vmem:[%s3 + $0x778] sm:$0xff] %vm3919, %v3778
    %4160 = vst.msk [vmem:[%s3 + $0x780] sm:$0xff] %vm3919, %v3779
    %4161 = vst.msk [vmem:[%s3 + $0x788] sm:$0xff] %vm3919, %v3780
    %4162 = vst.msk [vmem:[%s3 + $0x790] sm:$0xff] %vm3919, %v3781
    %4163 = vst.msk [vmem:[%s3 + $0x798] sm:$0xff] %vm3919, %v3782
    %4164 = vst.msk [vmem:[%s3 + $0x7a0] sm:$0xff] %vm3919, %v3783
    %4165 = vst.msk [vmem:[%s3 + $0x7a8] sm:$0xff] %vm3919, %v3784
    %4166 = vst.msk [vmem:[%s3 + $0x7b0] sm:$0xff] %vm3919, %v3785
    %4167 = vst.msk [vmem:[%s3 + $0x7b8] sm:$0xff] %vm3919, %v3786
    %4168 = vst.msk [vmem:[%s3 + $0x7c0] sm:$0xff] %vm3919, %v3787
    %4169 = vst.msk [vmem:[%s3 + $0x7c8] sm:$0xff] %vm3919, %v3788
    %4170 = vst.msk [vmem:[%s3 + $0x7d0] sm:$0xff] %vm3919, %v3789
    %4171 = vst.msk [vmem:[%s3 + $0x7d8] sm:$0xff] %vm3919, %v3790
    %4172 = vst.msk [vmem:[%s3 + $0x7e0] sm:$0xff] %vm3919, %v3791
    %4173 = vst.msk [vmem:[%s3 + $0x7e8] sm:$0xff] %vm3919, %v3792
    %4174 = vst.msk [vmem:[%s3 + $0x7f0] sm:$0xff] %vm3919, %v3793
    %4175 = vst.msk [vmem:[%s3 + $0x7f8] sm:$0xff] %vm3919, %v3794
    %4176 = vst.msk [vmem:[%s3 + $0x800] sm:$0xff] %vm3919, %v3795
    %4177 = vst.msk [vmem:[%s3 + $0x808] sm:$0xff] %vm3919, %v3796
    %4178 = vst.msk [vmem:[%s3 + $0x810] sm:$0xff] %vm3919, %v3797
    %4179 = vst.msk [vmem:[%s3 + $0x818] sm:$0xff] %vm3919, %v3798
    %4180 = vst.msk [vmem:[%s3 + $0x820] sm:$0xff] %vm3919, %v3799
    %4181 = vst.msk [vmem:[%s3 + $0x828] sm:$0xff] %vm3919, %v3800
    %4182 = vst.msk [vmem:[%s3 + $0x830] sm:$0xff] %vm3919, %v3801
    %4183 = vst.msk [vmem:[%s3 + $0x838] sm:$0xff] %vm3919, %v3802
    %4184 = vst.msk [vmem:[%s3 + $0x840] sm:$0xff] %vm3919, %v3803
    %4185 = vst.msk [vmem:[%s3 + $0x848] sm:$0xff] %vm3919, %v3804
    %4186 = vst.msk [vmem:[%s3 + $0x850] sm:$0xff] %vm3919, %v3805
    %4187 = vst.msk [vmem:[%s3 + $0x858] sm:$0xff] %vm3919, %v3806
    %4188 = vst.msk [vmem:[%s3 + $0x860] sm:$0xff] %vm3919, %v3807
    %4189 = vst.msk [vmem:[%s3 + $0x868] sm:$0xff] %vm3919, %v3808
    %4190 = vst.msk [vmem:[%s3 + $0x870] sm:$0xff] %vm3919, %v3809
    %4191 = vst.msk [vmem:[%s3 + $0x878] sm:$0xff] %vm3919, %v3810
    %4192 = vst.msk [vmem:[%s3 + $0x880] sm:$0xff] %vm3919, %v3811
    %4193 = vst.msk [vmem:[%s3 + $0x888] sm:$0xff] %vm3919, %v3812
    %4194 = vst.msk [vmem:[%s3 + $0x890] sm:$0xff] %vm3919, %v3813
    %4195 = vst.msk [vmem:[%s3 + $0x898] sm:$0xff] %vm3919, %v3814
    %4196 = vst.msk [vmem:[%s3 + $0x8a0] sm:$0xff] %vm3919, %v3815
    %4197 = vst.msk [vmem:[%s3 + $0x8a8] sm:$0xff] %vm3919, %v3816
    %4198 = vst.msk [vmem:[%s3 + $0x8b0] sm:$0xff] %vm3919, %v3817
    %4199 = vst.msk [vmem:[%s3 + $0x8b8] sm:$0xff] %vm3919, %v3818
    %4200 = vst.msk [vmem:[%s3 + $0x8c0] sm:$0xff] %vm3919, %v3819
    %4201 = vst.msk [vmem:[%s3 + $0x8c8] sm:$0xff] %vm3919, %v3820
    %4202 = vst.msk [vmem:[%s3 + $0x8d0] sm:$0xff] %vm3919, %v3821
    %4203 = vst.msk [vmem:[%s3 + $0x8d8] sm:$0xff] %vm3919, %v3822
    %4204 = vst.msk [vmem:[%s3 + $0x8e0] sm:$0xff] %vm3919, %v3823
    %4205 = vst.msk [vmem:[%s3 + $0x8e8] sm:$0xff] %vm3919, %v3824
    %4206 = vst.msk [vmem:[%s3 + $0x8f0] sm:$0xff] %vm3919, %v3825
    %4207 = vst.msk [vmem:[%s3 + $0x8f8] sm:$0xff] %vm3919, %v3826
    %4208 = vst.msk [vmem:[%s3 + $0x900] sm:$0xff] %vm3919, %v3827
    %4209 = vst.msk [vmem:[%s3 + $0x908] sm:$0xff] %vm3919, %v3828
    %4210 = vst.msk [vmem:[%s3 + $0x910] sm:$0xff] %vm3919, %v3829
    %4211 = vst.msk [vmem:[%s3 + $0x918] sm:$0xff] %vm3919, %v3830
    %4212 = vst.msk [vmem:[%s3 + $0x920] sm:$0xff] %vm3919, %v3831
    %4213 = vst.msk [vmem:[%s3 + $0x928] sm:$0xff] %vm3919, %v3832
    %4214 = vst.msk [vmem:[%s3 + $0x930] sm:$0xff] %vm3919, %v3833
    %4215 = vst.msk [vmem:[%s3 + $0x938] sm:$0xff] %vm3919, %v3834
    %4216 = vst.msk [vmem:[%s3 + $0x940] sm:$0xff] %vm3919, %v3835
    %4217 = vst.msk [vmem:[%s3 + $0x948] sm:$0xff] %vm3919, %v3836
    %4218 = vst.msk [vmem:[%s3 + $0x950] sm:$0xff] %vm3919, %v3837
    %4219 = vst.msk [vmem:[%s3 + $0x958] sm:$0xff] %vm3919, %v3838
    %4220 = vst.msk [vmem:[%s3 + $0x960] sm:$0xff] %vm3919, %v3839
    %4221 = vst.msk [vmem:[%s3 + $0x968] sm:$0xff] %vm3919, %v3840
    %4222 = vst.msk [vmem:[%s3 + $0x970] sm:$0xff] %vm3919, %v3841
    %4223 = vst.msk [vmem:[%s3 + $0x978] sm:$0xff] %vm3919, %v3842
    %4224 = vst.msk [vmem:[%s3 + $0x980] sm:$0xff] %vm3919, %v3843
    %4225 = vst.msk [vmem:[%s3 + $0x988] sm:$0xff] %vm3919, %v3844
    %4226 = vst.msk [vmem:[%s3 + $0x990] sm:$0xff] %vm3919, %v3845
    %4227 = vst.msk [vmem:[%s3 + $0x998] sm:$0xff] %vm3919, %v3846
    %4228 = vst.msk [vmem:[%s3 + $0x9a0] sm:$0xff] %vm3919, %v3847
    %4229 = vst.msk [vmem:[%s3 + $0x9a8] sm:$0xff] %vm3919, %v3848
    %4230 = vst.msk [vmem:[%s3 + $0x9b0] sm:$0xff] %vm3919, %v3849
    %4231 = vst.msk [vmem:[%s3 + $0x9b8] sm:$0xff] %vm3919, %v3850
    %4232 = vst.msk [vmem:[%s3 + $0x9c0] sm:$0xff] %vm3919, %v3851
    %4233 = vst.msk [vmem:[%s3 + $0x9c8] sm:$0xff] %vm3919, %v3852
    %4234 = vst.msk [vmem:[%s3 + $0x9d0] sm:$0xff] %vm3919, %v3853
    %4235 = vst.msk [vmem:[%s3 + $0x9d8] sm:$0xff] %vm3919, %v3854
    %4236 = vst.msk [vmem:[%s3 + $0x9e0] sm:$0xff] %vm3919, %v3855
    %4237 = vst.msk [vmem:[%s3 + $0x9e8] sm:$0xff] %vm3919, %v3856
    %4238 = vst.msk [vmem:[%s3 + $0x9f0] sm:$0xff] %vm3919, %v3857
    %4239 = vst.msk [vmem:[%s3 + $0x9f8] sm:$0xff] %vm3919, %v3858
    %4240 = vst.msk [vmem:[%s3 + $0xa00] sm:$0xff] %vm3919, %v3859
    %4241 = vst.msk [vmem:[%s3 + $0xa08] sm:$0xff] %vm3919, %v3860
    %4242 = vst.msk [vmem:[%s3 + $0xa10] sm:$0xff] %vm3919, %v3861
    %4243 = vst.msk [vmem:[%s3 + $0xa18] sm:$0xff] %vm3919, %v3862
    %4244 = vst.msk [vmem:[%s3 + $0xa20] sm:$0xff] %vm3919, %v3863
    %4245 = vst.msk [vmem:[%s3 + $0xa28] sm:$0xff] %vm3919, %v3864
    %4246 = vst.msk [vmem:[%s3 + $0xa30] sm:$0xff] %vm3919, %v3865
    %4247 = vst.msk [vmem:[%s3 + $0xa38] sm:$0xff] %vm3919, %v3866
    %4248 = vst.msk [vmem:[%s3 + $0xa40] sm:$0xff] %vm3919, %v3867
    %4249 = vst.msk [vmem:[%s3 + $0xa48] sm:$0xff] %vm3919, %v3868
    %4250 = vst.msk [vmem:[%s3 + $0xa50] sm:$0xff] %vm3919, %v3869
    %4251 = vst.msk [vmem:[%s3 + $0xa58] sm:$0xff] %vm3919, %v3870
    %4252 = vst.msk [vmem:[%s3 + $0xa60] sm:$0xff] %vm3919, %v3871
    %4253 = vst.msk [vmem:[%s3 + $0xa68] sm:$0xff] %vm3919, %v3872
    %4254 = vst.msk [vmem:[%s3 + $0xa70] sm:$0xff] %vm3919, %v3873
    %4255 = vst.msk [vmem:[%s3 + $0xa78] sm:$0xff] %vm3919, %v3874
    %4256 = vst.msk [vmem:[%s3 + $0xa80] sm:$0xff] %vm3919, %v3875
    %4257 = vst.msk [vmem:[%s3 + $0xa88] sm:$0xff] %vm3919, %v3876
    %4258 = vst.msk [vmem:[%s3 + $0xa90] sm:$0xff] %vm3919, %v3877
    %4259 = vst.msk [vmem:[%s3 + $0xa98] sm:$0xff] %vm3919, %v3878
    %4260 = vst.msk [vmem:[%s3 + $0xaa0] sm:$0xff] %vm3919, %v3879
    %4261 = vst.msk [vmem:[%s3 + $0xaa8] sm:$0xff] %vm3919, %v3880
    %4262 = vst.msk [vmem:[%s3 + $0xab0] sm:$0xff] %vm3919, %v3881
    %4263 = vst.msk [vmem:[%s3 + $0xab8] sm:$0xff] %vm3919, %v3882
    %4264 = vst.msk [vmem:[%s3 + $0xac0] sm:$0xff] %vm3919, %v3883
    %4265 = vst.msk [vmem:[%s3 + $0xac8] sm:$0xff] %vm3919, %v3884
    %4266 = vst.msk [vmem:[%s3 + $0xad0] sm:$0xff] %vm3919, %v3885
    %4267 = vst.msk [vmem:[%s3 + $0xad8] sm:$0xff] %vm3919, %v3886
    %4268 = vst.msk [vmem:[%s3 + $0xae0] sm:$0xff] %vm3919, %v3887
    %4269 = vst.msk [vmem:[%s3 + $0xae8] sm:$0xff] %vm3919, %v3888
    %4270 = vst.msk [vmem:[%s3 + $0xaf0] sm:$0xff] %vm3919, %v3889
    %4271 = vst.msk [vmem:[%s3 + $0xaf8] sm:$0xff] %vm3919, %v3890
    %4272 = vst.msk [vmem:[%s3 + $0xb00] sm:$0xff] %vm3919, %v3891
    %4273 = vst.msk [vmem:[%s3 + $0xb08] sm:$0xff] %vm3919, %v3892
    %4274 = vst.msk [vmem:[%s3 + $0xb10] sm:$0xff] %vm3919, %v3893
    %4275 = vst.msk [vmem:[%s3 + $0xb18] sm:$0xff] %vm3919, %v3894
    %4276 = vst.msk [vmem:[%s3 + $0xb20] sm:$0xff] %vm3919, %v3895
    %4277 = vst.msk [vmem:[%s3 + $0xb28] sm:$0xff] %vm3919, %v3896
    %4278 = vst.msk [vmem:[%s3 + $0xb30] sm:$0xff] %vm3919, %v3897
    %4279 = vst.msk [vmem:[%s3 + $0xb38] sm:$0xff] %vm3919, %v3898
    %4280 = vst.msk [vmem:[%s3 + $0xb40] sm:$0xff] %vm3919, %v3899
    %4281 = vst.msk [vmem:[%s3 + $0xb48] sm:$0xff] %vm3919, %v3900
    %4282 = vst.msk [vmem:[%s3 + $0xb50] sm:$0xff] %vm3919, %v3901
    %4283 = vst.msk [vmem:[%s3 + $0xb58] sm:$0xff] %vm3919, %v3902
    %4284 = vst.msk [vmem:[%s3 + $0xb60] sm:$0xff] %vm3919, %v3903
    %4285 = vst.msk [vmem:[%s3 + $0xb68] sm:$0xff] %vm3919, %v3904
    %4286 = vst.msk [vmem:[%s3 + $0xb70] sm:$0xff] %vm3919, %v3905
    %4287 = vst.msk [vmem:[%s3 + $0xb78] sm:$0xff] %vm3919, %v3906
    %4288 = vst.msk [vmem:[%s3 + $0xb80] sm:$0xff] %vm3919, %v3907
    %4289 = vst.msk [vmem:[%s3 + $0xb88] sm:$0xff] %vm3919, %v3908
    %4290 = vst.msk [vmem:[%s3 + $0xb90] sm:$0xff] %vm3919, %v3909
    %4291 = vst.msk [vmem:[%s3 + $0xb98] sm:$0xff] %vm3919, %v3910
    %4292 = vst.msk [vmem:[%s3 + $0xba0] sm:$0xff] %vm3919, %v3911
    %4293 = vst.msk [vmem:[%s3 + $0xba8] sm:$0xff] %vm3919, %v3912
    %4294 = vst.msk [vmem:[%s3 + $0xbb0] sm:$0xff] %vm3919, %v3913
    %4295 = vst.msk [vmem:[%s3 + $0xbb8] sm:$0xff] %vm3919, %v3914
    %4296 = vst.msk [vmem:[%s3 + $0xbc0] sm:$0xff] %vm3919, %v3915
    %4297 = vst.msk [vmem:[%s3 + $0xbc8] sm:$0xff] %vm3919, %v3916
    %4298 = vst.msk [vmem:[%s3 + $0xbd0] sm:$0xff] %vm3919, %v3917
    %vm4299 = vcmask 254976
    %4300 = vst.msk [vmem:[%s3 + $0xbd8] sm:$0x3] %vm4299, %v3918
    // Predicated region
    $region22: #{audio_model_forward.3} parent=1 // pred_check
      _
    $region23: #{audio_model_forward.3} parent=1 // pred_check_branch
      %4302 = sbr.rel (0) target = $region25
    $region24: #{audio_model_forward.3} parent=1 // pred_region
      _
    $region25: #{audio_model_forward.3} parent=1 // pred_fallthru
      _
    // Predicated region
    $region26: #{audio_model_forward.3} parent=1 // pred_check
      _
    $region27: #{audio_model_forward.3} parent=1 // pred_check_branch
      %4304 = sbr.rel (0) target = $region29
    $region28: #{audio_model_forward.3} parent=1 // pred_region
      _
    $region29: #{audio_model_forward.3} parent=1 // pred_fallthru
      _
    %4305 = vsyncpa [#allocation3], 1
    %4306 = vsyncpa [#allocation5], 1

// kernel: audio_model_forward.4
$region0: #{audio_model_forward.4}
  #allocation0 [shape = 'u32[]', space=smem, size = 0x4, offset = 0x4, fixed_abs, tag = 'smem constant byte address 0x4 - core index']
  #allocation1 [shape = 'u32[144,128]{1,0:T(1,128)}', space=vmem, size = 0x12000, scoped, tag = 'internal scratch']
  %s0 = inlined_call_operand.vmem [shape: f32[720,288], index: 0, kind: input, shape index: {}]
  %s1 = inlined_call_operand.vmem [shape: f32[288,32], index: 1, kind: input, shape index: {}]
  %s2 = inlined_call_operand.vmem [shape: f32[1,32], index: 2, kind: input, shape index: {}]
  %s3 = inlined_call_operand.vmem [shape: f32[720,32], index: 3, kind: output, shape index: {}]
  %s4 = sld [smem:[#allocation0]]
  $region22: #{audio_model_forward.4} parent=0
    _
  %s6 = ssub.s32 1, %s4
  %s7 = scalar_select 0, %s6, %s4
  // Predicated region
  $region2: #{audio_model_forward.4} parent=0 // pred_check
    _
  $region3: #{audio_model_forward.4} parent=0 // pred_check_branch
    %9 = sbr.rel (0) target = $region5
  $region4: #{audio_model_forward.4} parent=0 // pred_region
    _
  $region5: #{audio_model_forward.4} parent=0 // pred_fallthru
    _
  // Predicated region
  $region6: #{audio_model_forward.4} parent=0 // pred_check
    _
  $region7: #{audio_model_forward.4} parent=0 // pred_check_branch
    %11 = sbr.rel (0) target = $region9
  $region8: #{audio_model_forward.4} parent=0 // pred_region
    _
  $region9: #{audio_model_forward.4} parent=0 // pred_fallthru
    _
  // Predicated region
  $region10: #{audio_model_forward.4} parent=0 // pred_check
    _
  $region11: #{audio_model_forward.4} parent=0 // pred_check_branch
    %13 = sbr.rel (0) target = $region13
  $region12: #{audio_model_forward.4} parent=0 // pred_region
    _
  $region13: #{audio_model_forward.4} parent=0 // pred_fallthru
    _
  %v14 = vld [vmem:[%s0] sm:$0xff]
  %v15 = vld [vmem:[%s0 + $0x8] sm:$0xff]
  %v16 = vld [vmem:[%s0 + $0x10] sm:$0xff]
  %v17 = vld [vmem:[%s0 + $0x18] sm:$0xff]
  %v18 = vld [vmem:[%s0 + $0x20] sm:$0xff]
  %v19 = vld [vmem:[%s0 + $0x28] sm:$0xff]
  %v20 = vld [vmem:[%s0 + $0x30] sm:$0xff]
  %v21 = vld [vmem:[%s0 + $0x38] sm:$0xff]
  %v22 = vld [vmem:[%s0 + $0x40] sm:$0xff]
  %v23 = vld [vmem:[%s0 + $0x48] sm:$0xff]
  %v24 = vld [vmem:[%s0 + $0x50] sm:$0xff]
  %v25 = vld [vmem:[%s0 + $0x58] sm:$0xff]
  %v26 = vld [vmem:[%s0 + $0x60] sm:$0xff]
  %v27 = vld [vmem:[%s0 + $0x68] sm:$0xff]
  %v28 = vld [vmem:[%s0 + $0x70] sm:$0xff]
  %v29 = vld [vmem:[%s0 + $0x78] sm:$0xff]
  %v30 = vld [vmem:[%s0 + $0x80] sm:$0xff]
  %v31 = vld [vmem:[%s0 + $0x88] sm:$0xff]
  %v32 = vld [vmem:[%s0 + $0x90] sm:$0xff]
  %v33 = vld [vmem:[%s0 + $0x98] sm:$0xff]
  %v34 = vld [vmem:[%s0 + $0xa0] sm:$0xff]
  %v35 = vld [vmem:[%s0 + $0xa8] sm:$0xff]
  %v36 = vld [vmem:[%s0 + $0xb0] sm:$0xff]
  %v37 = vld [vmem:[%s0 + $0xb8] sm:$0xff]
  %v38 = vld [vmem:[%s0 + $0xc0] sm:$0xff]
  %v39 = vld [vmem:[%s0 + $0xc8] sm:$0xff]
  %v40 = vld [vmem:[%s0 + $0xd0] sm:$0xff]
  %v41 = vld [vmem:[%s0 + $0xd8] sm:$0xff]
  %v42 = vld [vmem:[%s0 + $0xe0] sm:$0xff]
  %v43 = vld [vmem:[%s0 + $0xe8] sm:$0xff]
  %v44 = vld [vmem:[%s0 + $0xf0] sm:$0xff]
  %v45 = vld [vmem:[%s0 + $0xf8] sm:$0xff]
  %v46 = vld [vmem:[%s0 + $0x100] sm:$0xff]
  %v47 = vld [vmem:[%s0 + $0x108] sm:$0xff]
  %v48 = vld [vmem:[%s0 + $0x110] sm:$0xff]
  %v49 = vld [vmem:[%s0 + $0x118] sm:$0xff]
  %v50 = vld [vmem:[%s0 + $0x120] sm:$0xff]
  %v51 = vld [vmem:[%s0 + $0x128] sm:$0xff]
  %v52 = vld [vmem:[%s0 + $0x130] sm:$0xff]
  %v53 = vld [vmem:[%s0 + $0x138] sm:$0xff]
  %v54 = vld [vmem:[%s0 + $0x140] sm:$0xff]
  %v55 = vld [vmem:[%s0 + $0x148] sm:$0xff]
  %v56 = vld [vmem:[%s0 + $0x150] sm:$0xff]
  %v57 = vld [vmem:[%s0 + $0x158] sm:$0xff]
  %v58 = vld [vmem:[%s0 + $0x160] sm:$0xff]
  %v59 = vld [vmem:[%s0 + $0x168] sm:$0xff]
  %v60 = vld [vmem:[%s0 + $0x170] sm:$0xff]
  %v61 = vld [vmem:[%s0 + $0x178] sm:$0xff]
  %v62 = vld [vmem:[%s0 + $0x180] sm:$0xff]
  %v63 = vld [vmem:[%s0 + $0x188] sm:$0xff]
  %v64 = vld [vmem:[%s0 + $0x190] sm:$0xff]
  %v65 = vld [vmem:[%s0 + $0x198] sm:$0xff]
  %v66 = vld [vmem:[%s0 + $0x1a0] sm:$0xff]
  %v67 = vld [vmem:[%s0 + $0x1a8] sm:$0xff]
  %v68 = vld [vmem:[%s0 + $0x1b0] sm:$0xff]
  %v69 = vld [vmem:[%s0 + $0x1b8] sm:$0xff]
  %v70 = vld [vmem:[%s0 + $0x1c0] sm:$0xff]
  %v71 = vld [vmem:[%s0 + $0x1c8] sm:$0xff]
  %v72 = vld [vmem:[%s0 + $0x1d0] sm:$0xff]
  %v73 = vld [vmem:[%s0 + $0x1d8] sm:$0xff]
  %v74 = vld [vmem:[%s0 + $0x1e0] sm:$0xff]
  %v75 = vld [vmem:[%s0 + $0x1e8] sm:$0xff]
  %v76 = vld [vmem:[%s0 + $0x1f0] sm:$0xff]
  %v77 = vld [vmem:[%s0 + $0x1f8] sm:$0xff]
  %v78 = vld [vmem:[%s0 + $0x200] sm:$0xff]
  %v79 = vld [vmem:[%s0 + $0x208] sm:$0xff]
  %v80 = vld [vmem:[%s0 + $0x210] sm:$0xff]
  %v81 = vld [vmem:[%s0 + $0x218] sm:$0xff]
  %v82 = vld [vmem:[%s0 + $0x220] sm:$0xff]
  %v83 = vld [vmem:[%s0 + $0x228] sm:$0xff]
  %v84 = vld [vmem:[%s0 + $0x230] sm:$0xff]
  %v85 = vld [vmem:[%s0 + $0x238] sm:$0xff]
  %v86 = vld [vmem:[%s0 + $0x240] sm:$0xff]
  %v87 = vld [vmem:[%s0 + $0x248] sm:$0xff]
  %v88 = vld [vmem:[%s0 + $0x250] sm:$0xff]
  %v89 = vld [vmem:[%s0 + $0x258] sm:$0xff]
  %v90 = vld [vmem:[%s0 + $0x260] sm:$0xff]
  %v91 = vld [vmem:[%s0 + $0x268] sm:$0xff]
  %v92 = vld [vmem:[%s0 + $0x270] sm:$0xff]
  %v93 = vld [vmem:[%s0 + $0x278] sm:$0xff]
  %v94 = vld [vmem:[%s0 + $0x280] sm:$0xff]
  %v95 = vld [vmem:[%s0 + $0x288] sm:$0xff]
  %v96 = vld [vmem:[%s0 + $0x290] sm:$0xff]
  %v97 = vld [vmem:[%s0 + $0x298] sm:$0xff]
  %v98 = vld [vmem:[%s0 + $0x2a0] sm:$0xff]
  %v99 = vld [vmem:[%s0 + $0x2a8] sm:$0xff]
  %v100 = vld [vmem:[%s0 + $0x2b0] sm:$0xff]
  %v101 = vld [vmem:[%s0 + $0x2b8] sm:$0xff]
  %v102 = vld [vmem:[%s0 + $0x2c0] sm:$0xff]
  %v103 = vld [vmem:[%s0 + $0x2c8] sm:$0xff]
  %v104 = vld [vmem:[%s0 + $0x2d0] sm:$0xff]
  %v105 = vld [vmem:[%s0 + $0x2d8] sm:$0xff]
  %v106 = vld [vmem:[%s0 + $0x2e0] sm:$0xff]
  %v107 = vld [vmem:[%s0 + $0x2e8] sm:$0xff]
  %v108 = vld [vmem:[%s0 + $0x2f0] sm:$0xff]
  %v109 = vld [vmem:[%s0 + $0x2f8] sm:$0xff]
  %v110 = vld [vmem:[%s0 + $0x300] sm:$0xff]
  %v111 = vld [vmem:[%s0 + $0x308] sm:$0xff]
  %v112 = vld [vmem:[%s0 + $0x310] sm:$0xff]
  %v113 = vld [vmem:[%s0 + $0x318] sm:$0xff]
  %v114 = vld [vmem:[%s0 + $0x320] sm:$0xff]
  %v115 = vld [vmem:[%s0 + $0x328] sm:$0xff]
  %v116 = vld [vmem:[%s0 + $0x330] sm:$0xff]
  %v117 = vld [vmem:[%s0 + $0x338] sm:$0xff]
  %v118 = vld [vmem:[%s0 + $0x340] sm:$0xff]
  %v119 = vld [vmem:[%s0 + $0x348] sm:$0xff]
  %v120 = vld [vmem:[%s0 + $0x350] sm:$0xff]
  %v121 = vld [vmem:[%s0 + $0x358] sm:$0xff]
  %v122 = vld [vmem:[%s0 + $0x360] sm:$0xff]
  %v123 = vld [vmem:[%s0 + $0x368] sm:$0xff]
  %v124 = vld [vmem:[%s0 + $0x370] sm:$0xff]
  %v125 = vld [vmem:[%s0 + $0x378] sm:$0xff]
  %v126 = vld [vmem:[%s0 + $0x380] sm:$0xff]
  %v127 = vld [vmem:[%s0 + $0x388] sm:$0xff]
  %v128 = vld [vmem:[%s0 + $0x390] sm:$0xff]
  %v129 = vld [vmem:[%s0 + $0x398] sm:$0xff]
  %v130 = vld [vmem:[%s0 + $0x3a0] sm:$0xff]
  %v131 = vld [vmem:[%s0 + $0x3a8] sm:$0xff]
  %v132 = vld [vmem:[%s0 + $0x3b0] sm:$0xff]
  %v133 = vld [vmem:[%s0 + $0x3b8] sm:$0xff]
  %v134 = vld [vmem:[%s0 + $0x3c0] sm:$0xff]
  %v135 = vld [vmem:[%s0 + $0x3c8] sm:$0xff]
  %v136 = vld [vmem:[%s0 + $0x3d0] sm:$0xff]
  %v137 = vld [vmem:[%s0 + $0x3d8] sm:$0xff]
  %v138 = vld [vmem:[%s0 + $0x3e0] sm:$0xff]
  %v139 = vld [vmem:[%s0 + $0x3e8] sm:$0xff]
  %v140 = vld [vmem:[%s0 + $0x3f0] sm:$0xff]
  %v141 = vld [vmem:[%s0 + $0x3f8] sm:$0xff]
  %v142 = vld [vmem:[%s0 + $0x400] sm:$0xff]
  %v143 = vld [vmem:[%s0 + $0x408] sm:$0xff]
  %v144 = vld [vmem:[%s0 + $0x410] sm:$0xff]
  %v145 = vld [vmem:[%s0 + $0x418] sm:$0xff]
  %v146 = vld [vmem:[%s0 + $0x420] sm:$0xff]
  %v147 = vld [vmem:[%s0 + $0x428] sm:$0xff]
  %v148 = vld [vmem:[%s0 + $0x430] sm:$0xff]
  %v149 = vld [vmem:[%s0 + $0x438] sm:$0xff]
  %v150 = vld [vmem:[%s0 + $0x440] sm:$0xff]
  %v151 = vld [vmem:[%s0 + $0x448] sm:$0xff]
  %v152 = vld [vmem:[%s0 + $0x450] sm:$0xff]
  %v153 = vld [vmem:[%s0 + $0x458] sm:$0xff]
  %v154 = vld [vmem:[%s0 + $0x460] sm:$0xff]
  %v155 = vld [vmem:[%s0 + $0x468] sm:$0xff]
  %v156 = vld [vmem:[%s0 + $0x470] sm:$0xff]
  %v157 = vld [vmem:[%s0 + $0x478] sm:$0xff]
  %v158 = vld [vmem:[%s0 + $0x480] sm:$0xff]
  %v159 = vld [vmem:[%s0 + $0x488] sm:$0xff]
  %v160 = vld [vmem:[%s0 + $0x490] sm:$0xff]
  %v161 = vld [vmem:[%s0 + $0x498] sm:$0xff]
  %v162 = vld [vmem:[%s0 + $0x4a0] sm:$0xff]
  %v163 = vld [vmem:[%s0 + $0x4a8] sm:$0xff]
  %v164 = vld [vmem:[%s0 + $0x4b0] sm:$0xff]
  %v165 = vld [vmem:[%s0 + $0x4b8] sm:$0xff]
  %v166 = vld [vmem:[%s0 + $0x4c0] sm:$0xff]
  %v167 = vld [vmem:[%s0 + $0x4c8] sm:$0xff]
  %v168 = vld [vmem:[%s0 + $0x4d0] sm:$0xff]
  %v169 = vld [vmem:[%s0 + $0x4d8] sm:$0xff]
  %v170 = vld [vmem:[%s0 + $0x4e0] sm:$0xff]
  %v171 = vld [vmem:[%s0 + $0x4e8] sm:$0xff]
  %v172 = vld [vmem:[%s0 + $0x4f0] sm:$0xff]
  %v173 = vld [vmem:[%s0 + $0x4f8] sm:$0xff]
  %v174 = vld [vmem:[%s0 + $0x500] sm:$0xff]
  %v175 = vld [vmem:[%s0 + $0x508] sm:$0xff]
  %v176 = vld [vmem:[%s0 + $0x510] sm:$0xff]
  %v177 = vld [vmem:[%s0 + $0x518] sm:$0xff]
  %v178 = vld [vmem:[%s0 + $0x520] sm:$0xff]
  %v179 = vld [vmem:[%s0 + $0x528] sm:$0xff]
  %v180 = vld [vmem:[%s0 + $0x530] sm:$0xff]
  %v181 = vld [vmem:[%s0 + $0x538] sm:$0xff]
  %v182 = vld [vmem:[%s0 + $0x540] sm:$0xff]
  %v183 = vld [vmem:[%s0 + $0x548] sm:$0xff]
  %v184 = vld [vmem:[%s0 + $0x550] sm:$0xff]
  %v185 = vld [vmem:[%s0 + $0x558] sm:$0xff]
  %v186 = vld [vmem:[%s0 + $0x560] sm:$0xff]
  %v187 = vld [vmem:[%s0 + $0x568] sm:$0xff]
  %v188 = vld [vmem:[%s0 + $0x570] sm:$0xff]
  %v189 = vld [vmem:[%s0 + $0x578] sm:$0xff]
  %v190 = vld [vmem:[%s0 + $0x580] sm:$0xff]
  %v191 = vld [vmem:[%s0 + $0x588] sm:$0xff]
  %v192 = vld [vmem:[%s0 + $0x590] sm:$0xff]
  %v193 = vld [vmem:[%s0 + $0x598] sm:$0xff]
  %v194 = vld [vmem:[%s0 + $0x5a0] sm:$0xff]
  %v195 = vld [vmem:[%s0 + $0x5a8] sm:$0xff]
  %v196 = vld [vmem:[%s0 + $0x5b0] sm:$0xff]
  %v197 = vld [vmem:[%s0 + $0x5b8] sm:$0xff]
  %v198 = vld [vmem:[%s0 + $0x5c0] sm:$0xff]
  %v199 = vld [vmem:[%s0 + $0x5c8] sm:$0xff]
  %v200 = vld [vmem:[%s0 + $0x5d0] sm:$0xff]
  %v201 = vld [vmem:[%s0 + $0x5d8] sm:$0xff]
  %v202 = vld [vmem:[%s0 + $0x5e0] sm:$0xff]
  %v203 = vld [vmem:[%s0 + $0x5e8] sm:$0xff]
  %v204 = vld [vmem:[%s0 + $0x5f0] sm:$0xff]
  %v205 = vld [vmem:[%s0 + $0x5f8] sm:$0xff]
  %v206 = vld [vmem:[%s0 + $0x600] sm:$0xff]
  %v207 = vld [vmem:[%s0 + $0x608] sm:$0xff]
  %v208 = vld [vmem:[%s0 + $0x610] sm:$0xff]
  %v209 = vld [vmem:[%s0 + $0x618] sm:$0xff]
  %v210 = vld [vmem:[%s0 + $0x620] sm:$0xff]
  %v211 = vld [vmem:[%s0 + $0x628] sm:$0xff]
  %v212 = vld [vmem:[%s0 + $0x630] sm:$0xff]
  %v213 = vld [vmem:[%s0 + $0x638] sm:$0xff]
  %v214 = vld [vmem:[%s0 + $0x640] sm:$0xff]
  %v215 = vld [vmem:[%s0 + $0x648] sm:$0xff]
  %v216 = vld [vmem:[%s0 + $0x650] sm:$0xff]
  %v217 = vld [vmem:[%s0 + $0x658] sm:$0xff]
  %v218 = vld [vmem:[%s0 + $0x660] sm:$0xff]
  %v219 = vld [vmem:[%s0 + $0x668] sm:$0xff]
  %v220 = vld [vmem:[%s0 + $0x670] sm:$0xff]
  %v221 = vld [vmem:[%s0 + $0x678] sm:$0xff]
  %v222 = vld [vmem:[%s0 + $0x680] sm:$0xff]
  %v223 = vld [vmem:[%s0 + $0x688] sm:$0xff]
  %v224 = vld [vmem:[%s0 + $0x690] sm:$0xff]
  %v225 = vld [vmem:[%s0 + $0x698] sm:$0xff]
  %v226 = vld [vmem:[%s0 + $0x6a0] sm:$0xff]
  %v227 = vld [vmem:[%s0 + $0x6a8] sm:$0xff]
  %v228 = vld [vmem:[%s0 + $0x6b0] sm:$0xff]
  %v229 = vld [vmem:[%s0 + $0x6b8] sm:$0xff]
  %v230 = vld [vmem:[%s0 + $0x6c0] sm:$0xff]
  %v231 = vld [vmem:[%s0 + $0x6c8] sm:$0xff]
  %v232 = vld [vmem:[%s0 + $0x6d0] sm:$0xff]
  %v233 = vld [vmem:[%s0 + $0x6d8] sm:$0xff]
  %v234 = vld [vmem:[%s0 + $0x6e0] sm:$0xff]
  %v235 = vld [vmem:[%s0 + $0x6e8] sm:$0xff]
  %v236 = vld [vmem:[%s0 + $0x6f0] sm:$0xff]
  %v237 = vld [vmem:[%s0 + $0x6f8] sm:$0xff]
  %v238 = vld [vmem:[%s0 + $0x700] sm:$0xff]
  %v239 = vld [vmem:[%s0 + $0x708] sm:$0xff]
  %v240 = vld [vmem:[%s0 + $0x710] sm:$0xff]
  %v241 = vld [vmem:[%s0 + $0x718] sm:$0xff]
  %v242 = vld [vmem:[%s0 + $0x720] sm:$0xff]
  %v243 = vld [vmem:[%s0 + $0x728] sm:$0xff]
  %v244 = vld [vmem:[%s0 + $0x730] sm:$0xff]
  %v245 = vld [vmem:[%s0 + $0x738] sm:$0xff]
  %v246 = vld [vmem:[%s0 + $0x740] sm:$0xff]
  %v247 = vld [vmem:[%s0 + $0x748] sm:$0xff]
  %v248 = vld [vmem:[%s0 + $0x750] sm:$0xff]
  %v249 = vld [vmem:[%s0 + $0x758] sm:$0xff]
  %v250 = vld [vmem:[%s0 + $0x760] sm:$0xff]
  %v251 = vld [vmem:[%s0 + $0x768] sm:$0xff]
  %v252 = vld [vmem:[%s0 + $0x770] sm:$0xff]
  %v253 = vld [vmem:[%s0 + $0x778] sm:$0xff]
  %v254 = vld [vmem:[%s0 + $0x780] sm:$0xff]
  %v255 = vld [vmem:[%s0 + $0x788] sm:$0xff]
  %v256 = vld [vmem:[%s0 + $0x790] sm:$0xff]
  %v257 = vld [vmem:[%s0 + $0x798] sm:$0xff]
  %v258 = vld [vmem:[%s0 + $0x7a0] sm:$0xff]
  %v259 = vld [vmem:[%s0 + $0x7a8] sm:$0xff]
  %v260 = vld [vmem:[%s0 + $0x7b0] sm:$0xff]
  %v261 = vld [vmem:[%s0 + $0x7b8] sm:$0xff]
  %v262 = vld [vmem:[%s0 + $0x7c0] sm:$0xff]
  %v263 = vld [vmem:[%s0 + $0x7c8] sm:$0xff]
  %v264 = vld [vmem:[%s0 + $0x7d0] sm:$0xff]
  %v265 = vld [vmem:[%s0 + $0x7d8] sm:$0xff]
  %v266 = vld [vmem:[%s0 + $0x7e0] sm:$0xff]
  %v267 = vld [vmem:[%s0 + $0x7e8] sm:$0xff]
  %v268 = vld [vmem:[%s0 + $0x7f0] sm:$0xff]
  %v269 = vld [vmem:[%s0 + $0x7f8] sm:$0xff]
  %v270 = vld [vmem:[%s0 + $0x800] sm:$0xff]
  %v271 = vld [vmem:[%s0 + $0x808] sm:$0xff]
  %v272 = vld [vmem:[%s0 + $0x810] sm:$0xff]
  %v273 = vld [vmem:[%s0 + $0x818] sm:$0xff]
  %v274 = vld [vmem:[%s0 + $0x820] sm:$0xff]
  %v275 = vld [vmem:[%s0 + $0x828] sm:$0xff]
  %v276 = vld [vmem:[%s0 + $0x830] sm:$0xff]
  %v277 = vld [vmem:[%s0 + $0x838] sm:$0xff]
  %v278 = vld [vmem:[%s0 + $0x840] sm:$0xff]
  %v279 = vld [vmem:[%s0 + $0x848] sm:$0xff]
  %v280 = vld [vmem:[%s0 + $0x850] sm:$0xff]
  %v281 = vld [vmem:[%s0 + $0x858] sm:$0xff]
  %v282 = vld [vmem:[%s0 + $0x860] sm:$0xff]
  %v283 = vld [vmem:[%s0 + $0x868] sm:$0xff]
  %v284 = vld [vmem:[%s1] sm:$0xff]
  %v285 = vld [vmem:[%s1 + $0x8] sm:$0xff]
  %v286 = vld [vmem:[%s1 + $0x10] sm:$0xff]
  %v287 = vld [vmem:[%s1 + $0x18] sm:$0xff]
  %v288 = vld [vmem:[%s1 + $0x20] sm:$0xff]
  %v289 = vld [vmem:[%s1 + $0x28] sm:$0xff]
  %v290 = vld [vmem:[%s1 + $0x30] sm:$0xff]
  %v291 = vld [vmem:[%s1 + $0x38] sm:$0xff]
  %v292 = vld [vmem:[%s1 + $0x40] sm:$0xff]
  %v293 = vld [vmem:[%s1 + $0x48] sm:$0xff]
  %v294 = vld [vmem:[%s1 + $0x50] sm:$0xff]
  %v295 = vld [vmem:[%s1 + $0x58] sm:$0xff]
  %v296 = vld [vmem:[%s1 + $0x60] sm:$0xff]
  %v297 = vld [vmem:[%s1 + $0x68] sm:$0xff]
  %v298 = vld [vmem:[%s1 + $0x70] sm:$0xff]
  %v299 = vld [vmem:[%s1 + $0x78] sm:$0xff]
  %v300 = vld [vmem:[%s1 + $0x80] sm:$0xff]
  %v301 = vld [vmem:[%s1 + $0x88] sm:$0xff]
  %v302 = vld [vmem:[%s1 + $0x90] sm:$0xff]
  %v303 = vld [vmem:[%s1 + $0x98] sm:$0xff]
  %v304 = vld [vmem:[%s1 + $0xa0] sm:$0xff]
  %v305 = vld [vmem:[%s1 + $0xa8] sm:$0xff]
  %v306 = vld [vmem:[%s1 + $0xb0] sm:$0xff]
  %v307 = vld [vmem:[%s1 + $0xb8] sm:$0xff]
  %v308 = vld [vmem:[%s1 + $0xc0] sm:$0xff]
  %v309 = vld [vmem:[%s1 + $0xc8] sm:$0xff]
  %v310 = vld [vmem:[%s1 + $0xd0] sm:$0xff]
  %v311 = vld [vmem:[%s1 + $0xd8] sm:$0xff]
  %v312 = vld [vmem:[%s1 + $0xe0] sm:$0xff]
  %v313 = vld [vmem:[%s1 + $0xe8] sm:$0xff]
  %v314 = vld [vmem:[%s1 + $0xf0] sm:$0xff]
  %v315 = vld [vmem:[%s1 + $0xf8] sm:$0xff]
  %v316 = vld [vmem:[%s1 + $0x100] sm:$0xff]
  %v317 = vld [vmem:[%s1 + $0x108] sm:$0xff]
  %v318 = vld [vmem:[%s1 + $0x110] sm:$0xff]
  %v319 = vld [vmem:[%s1 + $0x118] sm:$0xff]
  %v320 = vld [vmem:[%s2] sm:$0x1]
  %v322 = vlaneseq
  %v323 = vshrl.u32 %v322, 7
  %v324 = vsub.s32 0, %v323
  %v325 = vrot.slane %v320, %v324
  %vm327 = vcmask 261120
  %v329 = vsel %vm327, %v16, 0
  %v332 = vsel %vm327, %v19, 0
  %v335 = vsel %vm327, %v22, 0
  %v338 = vsel %vm327, %v25, 0
  %v341 = vsel %vm327, %v28, 0
  %v344 = vsel %vm327, %v31, 0
  %v347 = vsel %vm327, %v34, 0
  %v350 = vsel %vm327, %v37, 0
  %v353 = vsel %vm327, %v40, 0
  %v356 = vsel %vm327, %v43, 0
  %v359 = vsel %vm327, %v46, 0
  %v362 = vsel %vm327, %v49, 0
  %v365 = vsel %vm327, %v52, 0
  %v368 = vsel %vm327, %v55, 0
  %v371 = vsel %vm327, %v58, 0
  %v374 = vsel %vm327, %v61, 0
  %v377 = vsel %vm327, %v64, 0
  %v380 = vsel %vm327, %v67, 0
  %v383 = vsel %vm327, %v70, 0
  %v386 = vsel %vm327, %v73, 0
  %v389 = vsel %vm327, %v76, 0
  %v392 = vsel %vm327, %v79, 0
  %v395 = vsel %vm327, %v82, 0
  %v398 = vsel %vm327, %v85, 0
  %v401 = vsel %vm327, %v88, 0
  %v404 = vsel %vm327, %v91, 0
  %v407 = vsel %vm327, %v94, 0
  %v410 = vsel %vm327, %v97, 0
  %v413 = vsel %vm327, %v100, 0
  %v416 = vsel %vm327, %v103, 0
  %v419 = vsel %vm327, %v106, 0
  %v422 = vsel %vm327, %v109, 0
  %v425 = vsel %vm327, %v112, 0
  %v428 = vsel %vm327, %v115, 0
  %v431 = vsel %vm327, %v118, 0
  %v434 = vsel %vm327, %v121, 0
  %v437 = vsel %vm327, %v124, 0
  %v440 = vsel %vm327, %v127, 0
  %v443 = vsel %vm327, %v130, 0
  %v446 = vsel %vm327, %v133, 0
  %v449 = vsel %vm327, %v136, 0
  %v452 = vsel %vm327, %v139, 0
  %v455 = vsel %vm327, %v142, 0
  %v458 = vsel %vm327, %v145, 0
  %v461 = vsel %vm327, %v148, 0
  %v464 = vsel %vm327, %v151, 0
  %v467 = vsel %vm327, %v154, 0
  %v470 = vsel %vm327, %v157, 0
  %v473 = vsel %vm327, %v160, 0
  %v476 = vsel %vm327, %v163, 0
  %v479 = vsel %vm327, %v166, 0
  %v482 = vsel %vm327, %v169, 0
  %v485 = vsel %vm327, %v172, 0
  %v488 = vsel %vm327, %v175, 0
  %v491 = vsel %vm327, %v178, 0
  %v494 = vsel %vm327, %v181, 0
  %v497 = vsel %vm327, %v184, 0
  %v500 = vsel %vm327, %v187, 0
  %v503 = vsel %vm327, %v190, 0
  %v506 = vsel %vm327, %v193, 0
  %v509 = vsel %vm327, %v196, 0
  %v512 = vsel %vm327, %v199, 0
  %v515 = vsel %vm327, %v202, 0
  %v518 = vsel %vm327, %v205, 0
  %v521 = vsel %vm327, %v208, 0
  %v524 = vsel %vm327, %v211, 0
  %v527 = vsel %vm327, %v214, 0
  %v530 = vsel %vm327, %v217, 0
  %v533 = vsel %vm327, %v220, 0
  %v536 = vsel %vm327, %v223, 0
  %v539 = vsel %vm327, %v226, 0
  %v542 = vsel %vm327, %v229, 0
  %v545 = vsel %vm327, %v232, 0
  %v548 = vsel %vm327, %v235, 0
  %v551 = vsel %vm327, %v238, 0
  %v554 = vsel %vm327, %v241, 0
  %v557 = vsel %vm327, %v244, 0
  %v560 = vsel %vm327, %v247, 0
  %v563 = vsel %vm327, %v250, 0
  %v566 = vsel %vm327, %v253, 0
  %v569 = vsel %vm327, %v256, 0
  %v572 = vsel %vm327, %v259, 0
  %v575 = vsel %vm327, %v262, 0
  %v578 = vsel %vm327, %v265, 0
  %v581 = vsel %vm327, %v268, 0
  %v584 = vsel %vm327, %v271, 0
  %v587 = vsel %vm327, %v274, 0
  %v590 = vsel %vm327, %v277, 0
  %v593 = vsel %vm327, %v280, 0
  %v596 = vsel %vm327, %v283, 0
  %598 = vmatprep.subr.mxu0 0.0
  %599 = vmatpush1.msra.mxu0 %v284
  %600 = vmatprep.subr.mxu0 0.0
  %601 = vmatpush1.msra.mxu0 %v285
  %602 = vmatprep.subr.mxu0 0.0
  %603 = vmatpush1.msra.mxu0 %v286
  %604 = vmatprep.subr.mxu0 0.0
  %605 = vmatpush1.msra.mxu0 %v287
  %606 = vmatprep.subr.mxu0 0.0
  %607 = vmatpush1.msra.mxu0 %v288
  %608 = vmatprep.subr.mxu0 0.0
  %609 = vmatpush1.msra.mxu0 %v289
  %610 = vmatprep.subr.mxu0 0.0
  %611 = vmatpush1.msra.mxu0 %v290
  %612 = vmatprep.subr.mxu0 0.0
  %613 = vmatpush1.msra.mxu0 %v291
  %614 = vmatprep.subr.mxu0 0.0
  %615 = vmatpush1.msra.mxu0 %v292
  %616 = vmatprep.subr.mxu0 0.0
  %617 = vmatpush1.msra.mxu0 %v293
  %618 = vmatprep.subr.mxu0 0.0
  %619 = vmatpush1.msra.mxu0 %v294
  %620 = vmatprep.subr.mxu0 0.0
  %621 = vmatpush1.msra.mxu0 %v295
  %622 = vmatprep.subr.mxu0 0.0
  %623 = vmatpush1.msra.mxu0 %v296
  %624 = vmatprep.subr.mxu0 0.0
  %625 = vmatpush1.msra.mxu0 %v297
  %626 = vmatprep.subr.mxu0 0.0
  %627 = vmatpush1.msra.mxu0 %v298
  %628 = vmatprep.subr.mxu0 0.0
  %629 = vmatpush1.msra.mxu0 %v299
  %630 = vmatprep.subr.mxu0 0.0
  %631 = vmatpush1.msra.mxu0 %v300
  %632 = vmatprep.subr.mxu0 0.0
  %633 = vmatpush1.msra.mxu0 %v301
  %634 = vmatprep.subr.mxu0 0.0
  %635 = vmatpush1.msra.mxu0 %v302
  %636 = vmatprep.subr.mxu0 0.0
  %637 = vmatpush1.msra.mxu0 %v303
  %638 = vmatprep.subr.mxu0 0.0
  %639 = vmatpush1.msra.mxu0 %v304
  %640 = vmatprep.subr.mxu0 0.0
  %641 = vmatpush1.msra.mxu0 %v305
  %642 = vmatprep.subr.mxu0 0.0
  %643 = vmatpush1.msra.mxu0 %v306
  %644 = vmatprep.subr.mxu0 0.0
  %645 = vmatpush1.msra.mxu0 %v307
  %646 = vmatprep.subr.mxu0 0.0
  %647 = vmatpush1.msra.mxu0 %v308
  %648 = vmatprep.subr.mxu0 0.0
  %649 = vmatpush1.msra.mxu0 %v309
  %650 = vmatprep.subr.mxu0 0.0
  %651 = vmatpush1.msra.mxu0 %v310
  %652 = vmatprep.subr.mxu0 0.0
  %653 = vmatpush1.msra.mxu0 %v311
  %654 = vmatprep.subr.mxu0 0.0
  %655 = vmatpush1.msra.mxu0 %v312
  %656 = vmatprep.subr.mxu0 0.0
  %657 = vmatpush1.msra.mxu0 %v313
  %658 = vmatprep.subr.mxu0 0.0
  %659 = vmatpush1.msra.mxu0 %v314
  %660 = vmatprep.subr.mxu0 0.0
  %661 = vmatpush1.msra.mxu0 %v315
  %662 = vmatprep.mubr.f32.mxu0 %v15
  %663 = vmatmul.mubr.f32.gmra.mrb[0].mxu0 %v14
  %v664 = vpop.f32.mrb[0].mxu0
  %v665 = vadd.f32 %v325, %v664
  %v666 = vpop.f32.mrb[0].mxu0
  %667 = vmatprep.mubr.f32.mxu0 %v18
  %668 = vmatmul.mubr.f32.gmra.mrb[0].mxu0 %v17
  %v669 = vpop.f32.mrb[0].mxu0
  %v670 = vadd.f32 %v325, %v669
  %v671 = vpop.f32.mrb[0].mxu0
  %672 = vmatprep.mubr.f32.mxu0 %v21
  %673 = vmatmul.mubr.f32.gmra.mrb[0].mxu0 %v20
  %v674 = vpop.f32.mrb[0].mxu0
  %v675 = vadd.f32 %v325, %v674
  %v676 = vpop.f32.mrb[0].mxu0
  %677 = vmatprep.mubr.f32.mxu0 %v24
  %678 = vmatmul.mubr.f32.gmra.mrb[0].mxu0 %v23
  %v679 = vpop.f32.mrb[0].mxu0
  %v680 = vadd.f32 %v325, %v679
  %v681 = vpop.f32.mrb[0].mxu0
  %682 = vmatprep.mubr.f32.mxu0 %v27
  %683 = vmatmul.mubr.f32.gmra.mrb[0].mxu0 %v26
  %v684 = vpop.f32.mrb[0].mxu0
  %v685 = vadd.f32 %v325, %v684
  %v686 = vpop.f32.mrb[0].mxu0
  %687 = vmatprep.mubr.f32.mxu0 %v30
  %688 = vmatmul.mubr.f32.gmra.mrb[0].mxu0 %v29
  %v689 = vpop.f32.mrb[0].mxu0
  %v690 = vadd.f32 %v325, %v689
  %v691 = vpop.f32.mrb[0].mxu0
  %692 = vmatprep.mubr.f32.mxu0 %v33
  %693 = vmatmul.mubr.f32.gmra.mrb[0].mxu0 %v32
  %v694 = vpop.f32.mrb[0].mxu0
  %v695 = vadd.f32 %v325, %v694
  %v696 = vpop.f32.mrb[0].mxu0
  %697 = vmatprep.mubr.f32.mxu0 %v36
  %698 = vmatmul.mubr.f32.gmra.mrb[0].mxu0 %v35
  %v699 = vpop.f32.mrb[0].mxu0
  %v700 = vadd.f32 %v325, %v699
  %v701 = vpop.f32.mrb[0].mxu0
  %702 = vmatprep.mubr.f32.mxu0 %v39
  %703 = vmatmul.mubr.f32.gmra.mrb[0].mxu0 %v38
  %v704 = vpop.f32.mrb[0].mxu0
  %v705 = vadd.f32 %v325, %v704
  %v706 = vpop.f32.mrb[0].mxu0
  %707 = vmatprep.mubr.f32.mxu0 %v42
  %708 = vmatmul.mubr.f32.gmra.mrb[0].mxu0 %v41
  %v709 = vpop.f32.mrb[0].mxu0
  %v710 = vadd.f32 %v325, %v709
  %v711 = vpop.f32.mrb[0].mxu0
  %712 = vmatprep.mubr.f32.mxu0 %v45
  %713 = vmatmul.mubr.f32.gmra.mrb[0].mxu0 %v44
  %v714 = vpop.f32.mrb[0].mxu0
  %v715 = vadd.f32 %v325, %v714
  %v716 = vpop.f32.mrb[0].mxu0
  %717 = vmatprep.mubr.f32.mxu0 %v48
  %718 = vmatmul.mubr.f32.gmra.mrb[0].mxu0 %v47
  %v719 = vpop.f32.mrb[0].mxu0
  %v720 = vadd.f32 %v325, %v719
  %v721 = vpop.f32.mrb[0].mxu0
  %722 = vmatprep.mubr.f32.mxu0 %v51
  %723 = vmatmul.mubr.f32.gmra.mrb[0].mxu0 %v50
  %v724 = vpop.f32.mrb[0].mxu0
  %v725 = vadd.f32 %v325, %v724
  %v726 = vpop.f32.mrb[0].mxu0
  %727 = vmatprep.mubr.f32.mxu0 %v54
  %728 = vmatmul.mubr.f32.gmra.mrb[0].mxu0 %v53
  %v729 = vpop.f32.mrb[0].mxu0
  %v730 = vadd.f32 %v325, %v729
  %v731 = vpop.f32.mrb[0].mxu0
  %732 = vmatprep.mubr.f32.mxu0 %v57
  %733 = vmatmul.mubr.f32.gmra.mrb[0].mxu0 %v56
  %v734 = vpop.f32.mrb[0].mxu0
  %v735 = vadd.f32 %v325, %v734
  %v736 = vpop.f32.mrb[0].mxu0
  %737 = vmatprep.mubr.f32.mxu0 %v60
  %738 = vmatmul.mubr.f32.gmra.mrb[0].mxu0 %v59
  %v739 = vpop.f32.mrb[0].mxu0
  %v740 = vadd.f32 %v325, %v739
  %v741 = vpop.f32.mrb[0].mxu0
  %742 = vmatprep.mubr.f32.mxu0 %v63
  %743 = vmatmul.mubr.f32.gmra.mrb[0].mxu0 %v62
  %v744 = vpop.f32.mrb[0].mxu0
  %v745 = vadd.f32 %v325, %v744
  %v746 = vpop.f32.mrb[0].mxu0
  %747 = vmatprep.mubr.f32.mxu0 %v66
  %748 = vmatmul.mubr.f32.gmra.mrb[0].mxu0 %v65
  %v749 = vpop.f32.mrb[0].mxu0
  %v750 = vadd.f32 %v325, %v749
  %v751 = vpop.f32.mrb[0].mxu0
  %752 = vmatprep.mubr.f32.mxu0 %v69
  %753 = vmatmul.mubr.f32.gmra.mrb[0].mxu0 %v68
  %v754 = vpop.f32.mrb[0].mxu0
  %v755 = vadd.f32 %v325, %v754
  %v756 = vpop.f32.mrb[0].mxu0
  %757 = vmatprep.mubr.f32.mxu0 %v72
  %758 = vmatmul.mubr.f32.gmra.mrb[0].mxu0 %v71
  %v759 = vpop.f32.mrb[0].mxu0
  %v760 = vadd.f32 %v325, %v759
  %v761 = vpop.f32.mrb[0].mxu0
  %762 = vmatprep.mubr.f32.mxu0 %v75
  %763 = vmatmul.mubr.f32.gmra.mrb[0].mxu0 %v74
  %v764 = vpop.f32.mrb[0].mxu0
  %v765 = vadd.f32 %v325, %v764
  %v766 = vpop.f32.mrb[0].mxu0
  %767 = vmatprep.mubr.f32.mxu0 %v78
  %768 = vmatmul.mubr.f32.gmra.mrb[0].mxu0 %v77
  %v769 = vpop.f32.mrb[0].mxu0
  %v770 = vadd.f32 %v325, %v769
  %v771 = vpop.f32.mrb[0].mxu0
  %772 = vmatprep.mubr.f32.mxu0 %v81
  %773 = vmatmul.mubr.f32.gmra.mrb[0].mxu0 %v80
  %v774 = vpop.f32.mrb[0].mxu0
  %v775 = vadd.f32 %v325, %v774
  %v776 = vpop.f32.mrb[0].mxu0
  %777 = vmatprep.mubr.f32.mxu0 %v84
  %778 = vmatmul.mubr.f32.gmra.mrb[0].mxu0 %v83
  %v779 = vpop.f32.mrb[0].mxu0
  %v780 = vadd.f32 %v325, %v779
  %v781 = vpop.f32.mrb[0].mxu0
  %782 = vmatprep.mubr.f32.mxu0 %v87
  %783 = vmatmul.mubr.f32.gmra.mrb[0].mxu0 %v86
  %v784 = vpop.f32.mrb[0].mxu0
  %v785 = vadd.f32 %v325, %v784
  %v786 = vpop.f32.mrb[0].mxu0
  %787 = vmatprep.mubr.f32.mxu0 %v90
  %788 = vmatmul.mubr.f32.gmra.mrb[0].mxu0 %v89
  %v789 = vpop.f32.mrb[0].mxu0
  %v790 = vadd.f32 %v325, %v789
  %v791 = vpop.f32.mrb[0].mxu0
  %792 = vmatprep.mubr.f32.mxu0 %v93
  %793 = vmatmul.mubr.f32.gmra.mrb[0].mxu0 %v92
  %v794 = vpop.f32.mrb[0].mxu0
  %v795 = vadd.f32 %v325, %v794
  %v796 = vpop.f32.mrb[0].mxu0
  %797 = vmatprep.mubr.f32.mxu0 %v96
  %798 = vmatmul.mubr.f32.gmra.mrb[0].mxu0 %v95
  %v799 = vpop.f32.mrb[0].mxu0
  %v800 = vadd.f32 %v325, %v799
  %v801 = vpop.f32.mrb[0].mxu0
  %802 = vmatprep.mubr.f32.mxu0 %v99
  %803 = vmatmul.mubr.f32.gmra.mrb[0].mxu0 %v98
  %v804 = vpop.f32.mrb[0].mxu0
  %v805 = vadd.f32 %v325, %v804
  %v806 = vpop.f32.mrb[0].mxu0
  %807 = vmatprep.mubr.f32.mxu0 %v102
  %808 = vmatmul.mubr.f32.gmra.mrb[0].mxu0 %v101
  %v809 = vpop.f32.mrb[0].mxu0
  %v810 = vadd.f32 %v325, %v809
  %v811 = vpop.f32.mrb[0].mxu0
  %812 = vmatprep.mubr.f32.mxu0 %v105
  %813 = vmatmul.mubr.f32.gmra.mrb[0].mxu0 %v104
  %v814 = vpop.f32.mrb[0].mxu0
  %v815 = vadd.f32 %v325, %v814
  %v816 = vpop.f32.mrb[0].mxu0
  %817 = vmatprep.mubr.f32.mxu0 %v108
  %818 = vmatmul.mubr.f32.gmra.mrb[0].mxu0 %v107
  %v819 = vpop.f32.mrb[0].mxu0
  %v820 = vadd.f32 %v325, %v819
  %v821 = vpop.f32.mrb[0].mxu0
  %822 = vmatprep.mubr.f32.mxu0 %v111
  %823 = vmatmul.mubr.f32.gmra.mrb[0].mxu0 %v110
  %v824 = vpop.f32.mrb[0].mxu0
  %v825 = vadd.f32 %v325, %v824
  %v826 = vpop.f32.mrb[0].mxu0
  %827 = vmatprep.mubr.f32.mxu0 %v114
  %828 = vmatmul.mubr.f32.gmra.mrb[0].mxu0 %v113
  %v829 = vpop.f32.mrb[0].mxu0
  %v830 = vadd.f32 %v325, %v829
  %v831 = vpop.f32.mrb[0].mxu0
  %832 = vmatprep.mubr.f32.mxu0 %v117
  %833 = vmatmul.mubr.f32.gmra.mrb[0].mxu0 %v116
  %v834 = vpop.f32.mrb[0].mxu0
  %v835 = vadd.f32 %v325, %v834
  %v836 = vpop.f32.mrb[0].mxu0
  %837 = vmatprep.mubr.f32.mxu0 %v120
  %838 = vmatmul.mubr.f32.gmra.mrb[0].mxu0 %v119
  %v839 = vpop.f32.mrb[0].mxu0
  %v840 = vadd.f32 %v325, %v839
  %v841 = vpop.f32.mrb[0].mxu0
  %842 = vmatprep.mubr.f32.mxu0 %v123
  %843 = vmatmul.mubr.f32.gmra.mrb[0].mxu0 %v122
  %v844 = vpop.f32.mrb[0].mxu0
  %v845 = vadd.f32 %v325, %v844
  %v846 = vpop.f32.mrb[0].mxu0
  %847 = vmatprep.mubr.f32.mxu0 %v126
  %848 = vmatmul.mubr.f32.gmra.mrb[0].mxu0 %v125
  %v849 = vpop.f32.mrb[0].mxu0
  %v850 = vadd.f32 %v325, %v849
  %v851 = vpop.f32.mrb[0].mxu0
  %852 = vmatprep.mubr.f32.mxu0 %v129
  %853 = vmatmul.mubr.f32.gmra.mrb[0].mxu0 %v128
  %v854 = vpop.f32.mrb[0].mxu0
  %v855 = vadd.f32 %v325, %v854
  %v856 = vpop.f32.mrb[0].mxu0
  %857 = vmatprep.mubr.f32.mxu0 %v132
  %858 = vmatmul.mubr.f32.gmra.mrb[0].mxu0 %v131
  %v859 = vpop.f32.mrb[0].mxu0
  %v860 = vadd.f32 %v325, %v859
  %v861 = vpop.f32.mrb[0].mxu0
  %862 = vmatprep.mubr.f32.mxu0 %v135
  %863 = vmatmul.mubr.f32.gmra.mrb[0].mxu0 %v134
  %v864 = vpop.f32.mrb[0].mxu0
  %v865 = vadd.f32 %v325, %v864
  %v866 = vpop.f32.mrb[0].mxu0
  %867 = vmatprep.mubr.f32.mxu0 %v138
  %868 = vmatmul.mubr.f32.gmra.mrb[0].mxu0 %v137
  %v869 = vpop.f32.mrb[0].mxu0
  %v870 = vadd.f32 %v325, %v869
  %v871 = vpop.f32.mrb[0].mxu0
  %872 = vmatprep.mubr.f32.mxu0 %v141
  %873 = vmatmul.mubr.f32.gmra.mrb[0].mxu0 %v140
  %v874 = vpop.f32.mrb[0].mxu0
  %v875 = vadd.f32 %v325, %v874
  %v876 = vpop.f32.mrb[0].mxu0
  %877 = vmatprep.mubr.f32.mxu0 %v144
  %878 = vmatmul.mubr.f32.gmra.mrb[0].mxu0 %v143
  %v879 = vpop.f32.mrb[0].mxu0
  %v880 = vadd.f32 %v325, %v879
  %v881 = vpop.f32.mrb[0].mxu0
  %882 = vmatprep.mubr.f32.mxu0 %v147
  %883 = vmatmul.mubr.f32.gmra.mrb[0].mxu0 %v146
  %v884 = vpop.f32.mrb[0].mxu0
  %v885 = vadd.f32 %v325, %v884
  %v886 = vpop.f32.mrb[0].mxu0
  %887 = vmatprep.mubr.f32.mxu0 %v150
  %888 = vmatmul.mubr.f32.gmra.mrb[0].mxu0 %v149
  %v889 = vpop.f32.mrb[0].mxu0
  %v890 = vadd.f32 %v325, %v889
  %v891 = vpop.f32.mrb[0].mxu0
  %892 = vmatprep.mubr.f32.mxu0 %v153
  %893 = vmatmul.mubr.f32.gmra.mrb[0].mxu0 %v152
  %v894 = vpop.f32.mrb[0].mxu0
  %v895 = vadd.f32 %v325, %v894
  %v896 = vpop.f32.mrb[0].mxu0
  %897 = vmatprep.mubr.f32.mxu0 %v156
  %898 = vmatmul.mubr.f32.gmra.mrb[0].mxu0 %v155
  %v899 = vpop.f32.mrb[0].mxu0
  %v900 = vadd.f32 %v325, %v899
  %v901 = vpop.f32.mrb[0].mxu0
  %902 = vmatprep.mubr.f32.mxu0 %v159
  %903 = vmatmul.mubr.f32.gmra.mrb[0].mxu0 %v158
  %v904 = vpop.f32.mrb[0].mxu0
  %v905 = vadd.f32 %v325, %v904
  %v906 = vpop.f32.mrb[0].mxu0
  %907 = vmatprep.mubr.f32.mxu0 %v162
  %908 = vmatmul.mubr.f32.gmra.mrb[0].mxu0 %v161
  %v909 = vpop.f32.mrb[0].mxu0
  %v910 = vadd.f32 %v325, %v909
  %v911 = vpop.f32.mrb[0].mxu0
  %912 = vmatprep.mubr.f32.mxu0 %v165
  %913 = vmatmul.mubr.f32.gmra.mrb[0].mxu0 %v164
  %v914 = vpop.f32.mrb[0].mxu0
  %v915 = vadd.f32 %v325, %v914
  %v916 = vpop.f32.mrb[0].mxu0
  %917 = vmatprep.mubr.f32.mxu0 %v168
  %918 = vmatmul.mubr.f32.gmra.mrb[0].mxu0 %v167
  %v919 = vpop.f32.mrb[0].mxu0
  %v920 = vadd.f32 %v325, %v919
  %v921 = vpop.f32.mrb[0].mxu0
  %922 = vmatprep.mubr.f32.mxu0 %v171
  %923 = vmatmul.mubr.f32.gmra.mrb[0].mxu0 %v170
  %v924 = vpop.f32.mrb[0].mxu0
  %v925 = vadd.f32 %v325, %v924
  %v926 = vpop.f32.mrb[0].mxu0
  %927 = vmatprep.mubr.f32.mxu0 %v174
  %928 = vmatmul.mubr.f32.gmra.mrb[0].mxu0 %v173
  %v929 = vpop.f32.mrb[0].mxu0
  %v930 = vadd.f32 %v325, %v929
  %v931 = vpop.f32.mrb[0].mxu0
  %932 = vmatprep.mubr.f32.mxu0 %v177
  %933 = vmatmul.mubr.f32.gmra.mrb[0].mxu0 %v176
  %v934 = vpop.f32.mrb[0].mxu0
  %v935 = vadd.f32 %v325, %v934
  %v936 = vpop.f32.mrb[0].mxu0
  %937 = vmatprep.mubr.f32.mxu0 %v180
  %938 = vmatmul.mubr.f32.gmra.mrb[0].mxu0 %v179
  %v939 = vpop.f32.mrb[0].mxu0
  %v940 = vadd.f32 %v325, %v939
  %v941 = vpop.f32.mrb[0].mxu0
  %942 = vmatprep.mubr.f32.mxu0 %v183
  %943 = vmatmul.mubr.f32.gmra.mrb[0].mxu0 %v182
  %v944 = vpop.f32.mrb[0].mxu0
  %v945 = vadd.f32 %v325, %v944
  %v946 = vpop.f32.mrb[0].mxu0
  %947 = vmatprep.mubr.f32.mxu0 %v186
  %948 = vmatmul.mubr.f32.gmra.mrb[0].mxu0 %v185
  %v949 = vpop.f32.mrb[0].mxu0
  %v950 = vadd.f32 %v325, %v949
  %v951 = vpop.f32.mrb[0].mxu0
  %952 = vmatprep.mubr.f32.mxu0 %v189
  %953 = vmatmul.mubr.f32.gmra.mrb[0].mxu0 %v188
  %v954 = vpop.f32.mrb[0].mxu0
  %v955 = vadd.f32 %v325, %v954
  %v956 = vpop.f32.mrb[0].mxu0
  %957 = vmatprep.mubr.f32.mxu0 %v192
  %958 = vmatmul.mubr.f32.gmra.mrb[0].mxu0 %v191
  %v959 = vpop.f32.mrb[0].mxu0
  %v960 = vadd.f32 %v325, %v959
  %v961 = vpop.f32.mrb[0].mxu0
  %962 = vmatprep.mubr.f32.mxu0 %v195
  %963 = vmatmul.mubr.f32.gmra.mrb[0].mxu0 %v194
  %v964 = vpop.f32.mrb[0].mxu0
  %v965 = vadd.f32 %v325, %v964
  %v966 = vpop.f32.mrb[0].mxu0
  %967 = vmatprep.mubr.f32.mxu0 %v198
  %968 = vmatmul.mubr.f32.gmra.mrb[0].mxu0 %v197
  %v969 = vpop.f32.mrb[0].mxu0
  %v970 = vadd.f32 %v325, %v969
  %v971 = vpop.f32.mrb[0].mxu0
  %972 = vmatprep.mubr.f32.mxu0 %v201
  %973 = vmatmul.mubr.f32.gmra.mrb[0].mxu0 %v200
  %v974 = vpop.f32.mrb[0].mxu0
  %v975 = vadd.f32 %v325, %v974
  %v976 = vpop.f32.mrb[0].mxu0
  %977 = vmatprep.mubr.f32.mxu0 %v204
  %978 = vmatmul.mubr.f32.gmra.mrb[0].mxu0 %v203
  %v979 = vpop.f32.mrb[0].mxu0
  %v980 = vadd.f32 %v325, %v979
  %v981 = vpop.f32.mrb[0].mxu0
  %982 = vmatprep.mubr.f32.mxu0 %v207
  %983 = vmatmul.mubr.f32.gmra.mrb[0].mxu0 %v206
  %v984 = vpop.f32.mrb[0].mxu0
  %v985 = vadd.f32 %v325, %v984
  %v986 = vpop.f32.mrb[0].mxu0
  %987 = vmatprep.mubr.f32.mxu0 %v210
  %988 = vmatmul.mubr.f32.gmra.mrb[0].mxu0 %v209
  %v989 = vpop.f32.mrb[0].mxu0
  %v990 = vadd.f32 %v325, %v989
  %v991 = vpop.f32.mrb[0].mxu0
  %992 = vmatprep.mubr.f32.mxu0 %v213
  %993 = vmatmul.mubr.f32.gmra.mrb[0].mxu0 %v212
  %v994 = vpop.f32.mrb[0].mxu0
  %v995 = vadd.f32 %v325, %v994
  %v996 = vpop.f32.mrb[0].mxu0
  %997 = vmatprep.mubr.f32.mxu0 %v216
  %998 = vmatmul.mubr.f32.gmra.mrb[0].mxu0 %v215
  %v999 = vpop.f32.mrb[0].mxu0
  %v1000 = vadd.f32 %v325, %v999
  %v1001 = vpop.f32.mrb[0].mxu0
  %1002 = vmatprep.mubr.f32.mxu0 %v219
  %1003 = vmatmul.mubr.f32.gmra.mrb[0].mxu0 %v218
  %v1004 = vpop.f32.mrb[0].mxu0
  %v1005 = vadd.f32 %v325, %v1004
  %v1006 = vpop.f32.mrb[0].mxu0
  %1007 = vmatprep.mubr.f32.mxu0 %v222
  %1008 = vmatmul.mubr.f32.gmra.mrb[0].mxu0 %v221
  %v1009 = vpop.f32.mrb[0].mxu0
  %v1010 = vadd.f32 %v325, %v1009
  %v1011 = vpop.f32.mrb[0].mxu0
  %1012 = vmatprep.mubr.f32.mxu0 %v225
  %1013 = vmatmul.mubr.f32.gmra.mrb[0].mxu0 %v224
  %v1014 = vpop.f32.mrb[0].mxu0
  %v1015 = vadd.f32 %v325, %v1014
  %v1016 = vpop.f32.mrb[0].mxu0
  %1017 = vmatprep.mubr.f32.mxu0 %v228
  %1018 = vmatmul.mubr.f32.gmra.mrb[0].mxu0 %v227
  %v1019 = vpop.f32.mrb[0].mxu0
  %v1020 = vadd.f32 %v325, %v1019
  %v1021 = vpop.f32.mrb[0].mxu0
  %1022 = vmatprep.mubr.f32.mxu0 %v231
  %1023 = vmatmul.mubr.f32.gmra.mrb[0].mxu0 %v230
  %v1024 = vpop.f32.mrb[0].mxu0
  %v1025 = vadd.f32 %v325, %v1024
  %v1026 = vpop.f32.mrb[0].mxu0
  %1027 = vmatprep.mubr.f32.mxu0 %v234
  %1028 = vmatmul.mubr.f32.gmra.mrb[0].mxu0 %v233
  %v1029 = vpop.f32.mrb[0].mxu0
  %v1030 = vadd.f32 %v325, %v1029
  %v1031 = vpop.f32.mrb[0].mxu0
  %1032 = vmatprep.mubr.f32.mxu0 %v237
  %1033 = vmatmul.mubr.f32.gmra.mrb[0].mxu0 %v236
  %v1034 = vpop.f32.mrb[0].mxu0
  %v1035 = vadd.f32 %v325, %v1034
  %v1036 = vpop.f32.mrb[0].mxu0
  %1037 = vmatprep.mubr.f32.mxu0 %v240
  %1038 = vmatmul.mubr.f32.gmra.mrb[0].mxu0 %v239
  %v1039 = vpop.f32.mrb[0].mxu0
  %v1040 = vadd.f32 %v325, %v1039
  %v1041 = vpop.f32.mrb[0].mxu0
  %1042 = vmatprep.mubr.f32.mxu0 %v243
  %1043 = vmatmul.mubr.f32.gmra.mrb[0].mxu0 %v242
  %v1044 = vpop.f32.mrb[0].mxu0
  %v1045 = vadd.f32 %v325, %v1044
  %v1046 = vpop.f32.mrb[0].mxu0
  %1047 = vmatprep.mubr.f32.mxu0 %v246
  %1048 = vmatmul.mubr.f32.gmra.mrb[0].mxu0 %v245
  %v1049 = vpop.f32.mrb[0].mxu0
  %v1050 = vadd.f32 %v325, %v1049
  %v1051 = vpop.f32.mrb[0].mxu0
  %1052 = vmatprep.mubr.f32.mxu0 %v249
  %1053 = vmatmul.mubr.f32.gmra.mrb[0].mxu0 %v248
  %v1054 = vpop.f32.mrb[0].mxu0
  %v1055 = vadd.f32 %v325, %v1054
  %v1056 = vpop.f32.mrb[0].mxu0
  %1057 = vmatprep.mubr.f32.mxu0 %v252
  %1058 = vmatmul.mubr.f32.gmra.mrb[0].mxu0 %v251
  %v1059 = vpop.f32.mrb[0].mxu0
  %v1060 = vadd.f32 %v325, %v1059
  %v1061 = vpop.f32.mrb[0].mxu0
  %1062 = vmatprep.mubr.f32.mxu0 %v255
  %1063 = vmatmul.mubr.f32.gmra.mrb[0].mxu0 %v254
  %v1064 = vpop.f32.mrb[0].mxu0
  %v1065 = vadd.f32 %v325, %v1064
  %v1066 = vpop.f32.mrb[0].mxu0
  %1067 = vmatprep.mubr.f32.mxu0 %v258
  %1068 = vmatmul.mubr.f32.gmra.mrb[0].mxu0 %v257
  %v1069 = vpop.f32.mrb[0].mxu0
  %v1070 = vadd.f32 %v325, %v1069
  %v1071 = vpop.f32.mrb[0].mxu0
  %1072 = vmatprep.mubr.f32.mxu0 %v261
  %1073 = vmatmul.mubr.f32.gmra.mrb[0].mxu0 %v260
  %v1074 = vpop.f32.mrb[0].mxu0
  %v1075 = vadd.f32 %v325, %v1074
  %v1076 = vpop.f32.mrb[0].mxu0
  %1077 = vmatprep.mubr.f32.mxu0 %v264
  %1078 = vmatmul.mubr.f32.gmra.mrb[0].mxu0 %v263
  %v1079 = vpop.f32.mrb[0].mxu0
  %v1080 = vadd.f32 %v325, %v1079
  %v1081 = vpop.f32.mrb[0].mxu0
  %1082 = vmatprep.mubr.f32.mxu0 %v267
  %1083 = vmatmul.mubr.f32.gmra.mrb[0].mxu0 %v266
  %v1084 = vpop.f32.mrb[0].mxu0
  %v1085 = vadd.f32 %v325, %v1084
  %v1086 = vpop.f32.mrb[0].mxu0
  %1087 = vmatprep.mubr.f32.mxu0 %v270
  %1088 = vmatmul.mubr.f32.gmra.mrb[0].mxu0 %v269
  %v1089 = vpop.f32.mrb[0].mxu0
  %v1090 = vadd.f32 %v325, %v1089
  %v1091 = vpop.f32.mrb[0].mxu0
  %1092 = vmatprep.mubr.f32.mxu0 %v273
  %1093 = vmatmul.mubr.f32.gmra.mrb[0].mxu0 %v272
  %v1094 = vpop.f32.mrb[0].mxu0
  %v1095 = vadd.f32 %v325, %v1094
  %v1096 = vpop.f32.mrb[0].mxu0
  %1097 = vmatprep.mubr.f32.mxu0 %v276
  %1098 = vmatmul.mubr.f32.gmra.mrb[0].mxu0 %v275
  %v1099 = vpop.f32.mrb[0].mxu0
  %v1100 = vadd.f32 %v325, %v1099
  %v1101 = vpop.f32.mrb[0].mxu0
  %1102 = vmatprep.mubr.f32.mxu0 %v279
  %1103 = vmatmul.mubr.f32.gmra.mrb[0].mxu0 %v278
  %v1104 = vpop.f32.mrb[0].mxu0
  %v1105 = vadd.f32 %v325, %v1104
  %v1106 = vpop.f32.mrb[0].mxu0
  %1107 = vmatprep.mubr.f32.mxu0 %v282
  %1108 = vmatmul.mubr.f32.gmra.mrb[0].mxu0 %v281
  %v1109 = vpop.f32.mrb[0].mxu0
  %v1110 = vadd.f32 %v325, %v1109
  %v1111 = vpop.f32.mrb[0].mxu0
  %1112 = vdwg.mxu0
  %1113 = vmatprep.subr.mxu0 0.0
  %1114 = vmatpush1.msra.mxu0 %v316
  %1115 = vmatprep.subr.mxu0 0.0
  %1116 = vmatpush1.msra.mxu0 %v317
  %1117 = vmatprep.subr.mxu0 0.0
  %1118 = vmatpush1.msra.mxu0 %v318
  %1119 = vmatprep.subr.mxu0 0.0
  %1120 = vmatpush1.msra.mxu0 %v319
  %1121 = vmatprep.subr.mxu0 0.0
  %1122 = vmatpush1.msra.mxu0 0.0
  %1123 = vmatprep.subr.mxu0 0.0
  %1124 = vmatpush1.msra.mxu0 0.0
  %1125 = vmatprep.subr.mxu0 0.0
  %1126 = vmatpush1.msra.mxu0 0.0
  %1127 = vmatprep.subr.mxu0 0.0
  %1128 = vmatpush1.msra.mxu0 0.0
  %1129 = vmatprep.subr.mxu0 0.0
  %1130 = vmatpush1.msra.mxu0 0.0
  %1131 = vmatprep.subr.mxu0 0.0
  %1132 = vmatpush1.msra.mxu0 0.0
  %1133 = vmatprep.subr.mxu0 0.0
  %1134 = vmatpush1.msra.mxu0 0.0
  %1135 = vmatprep.subr.mxu0 0.0
  %1136 = vmatpush1.msra.mxu0 0.0
  %1137 = vmatprep.subr.mxu0 0.0
  %1138 = vmatpush1.msra.mxu0 0.0
  %1139 = vmatprep.subr.mxu0 0.0
  %1140 = vmatpush1.msra.mxu0 0.0
  %1141 = vmatprep.subr.mxu0 0.0
  %1142 = vmatpush1.msra.mxu0 0.0
  %1143 = vmatprep.subr.mxu0 0.0
  %1144 = vmatpush1.msra.mxu0 0.0
  %1145 = vmatprep.subr.mxu0 0.0
  %1146 = vmatpush1.msra.mxu0 0.0
  %1147 = vmatprep.subr.mxu0 0.0
  %1148 = vmatpush1.msra.mxu0 0.0
  %1149 = vmatprep.subr.mxu0 0.0
  %1150 = vmatpush1.msra.mxu0 0.0
  %1151 = vmatprep.subr.mxu0 0.0
  %1152 = vmatpush1.msra.mxu0 0.0
  %1153 = vmatprep.subr.mxu0 0.0
  %1154 = vmatpush1.msra.mxu0 0.0
  %1155 = vmatprep.subr.mxu0 0.0
  %1156 = vmatpush1.msra.mxu0 0.0
  %1157 = vmatprep.subr.mxu0 0.0
  %1158 = vmatpush1.msra.mxu0 0.0
  %1159 = vmatprep.subr.mxu0 0.0
  %1160 = vmatpush1.msra.mxu0 0.0
  %1161 = vmatprep.subr.mxu0 0.0
  %1162 = vmatpush1.msra.mxu0 0.0
  %1163 = vmatprep.subr.mxu0 0.0
  %1164 = vmatpush1.msra.mxu0 0.0
  %1165 = vmatprep.subr.mxu0 0.0
  %1166 = vmatpush1.msra.mxu0 0.0
  %1167 = vmatprep.subr.mxu0 0.0
  %1168 = vmatpush1.msra.mxu0 0.0
  %1169 = vmatprep.subr.mxu0 0.0
  %1170 = vmatpush1.msra.mxu0 0.0
  %1171 = vmatprep.subr.mxu0 0.0
  %1172 = vmatpush1.msra.mxu0 0.0
  %1173 = vmatprep.subr.mxu0 0.0
  %1174 = vmatpush1.msra.mxu0 0.0
  %1175 = vmatprep.subr.mxu0 0.0
  %1176 = vmatpush1.msra.mxu0 0.0
  %1177 = vmatprep.mubr.f32.mxu0 0.0
  %1178 = vmatmul.mubr.f32.gmra.mrb[0].mxu0 %v329
  %v1179 = vpop.f32.mrb[0].mxu0
  %v1180 = vadd.f32 %v665, %v1179
  %v1181 = vpop.f32.mrb[0].mxu0
  %1182 = vmatprep.mubr.f32.mxu0 0.0
  %1183 = vmatmul.mubr.f32.gmra.mrb[0].mxu0 %v332
  %v1184 = vpop.f32.mrb[0].mxu0
  %v1185 = vadd.f32 %v670, %v1184
  %v1186 = vpop.f32.mrb[0].mxu0
  %1187 = vmatprep.mubr.f32.mxu0 0.0
  %1188 = vmatmul.mubr.f32.gmra.mrb[0].mxu0 %v335
  %v1189 = vpop.f32.mrb[0].mxu0
  %v1190 = vadd.f32 %v675, %v1189
  %v1191 = vpop.f32.mrb[0].mxu0
  %1192 = vmatprep.mubr.f32.mxu0 0.0
  %1193 = vmatmul.mubr.f32.gmra.mrb[0].mxu0 %v338
  %v1194 = vpop.f32.mrb[0].mxu0
  %v1195 = vadd.f32 %v680, %v1194
  %v1196 = vpop.f32.mrb[0].mxu0
  %1197 = vmatprep.mubr.f32.mxu0 0.0
  %1198 = vmatmul.mubr.f32.gmra.mrb[0].mxu0 %v341
  %v1199 = vpop.f32.mrb[0].mxu0
  %v1200 = vadd.f32 %v685, %v1199
  %v1201 = vpop.f32.mrb[0].mxu0
  %1202 = vmatprep.mubr.f32.mxu0 0.0
  %1203 = vmatmul.mubr.f32.gmra.mrb[0].mxu0 %v344
  %v1204 = vpop.f32.mrb[0].mxu0
  %v1205 = vadd.f32 %v690, %v1204
  %v1206 = vpop.f32.mrb[0].mxu0
  %1207 = vmatprep.mubr.f32.mxu0 0.0
  %1208 = vmatmul.mubr.f32.gmra.mrb[0].mxu0 %v347
  %v1209 = vpop.f32.mrb[0].mxu0
  %v1210 = vadd.f32 %v695, %v1209
  %v1211 = vpop.f32.mrb[0].mxu0
  %1212 = vmatprep.mubr.f32.mxu0 0.0
  %1213 = vmatmul.mubr.f32.gmra.mrb[0].mxu0 %v350
  %v1214 = vpop.f32.mrb[0].mxu0
  %v1215 = vadd.f32 %v700, %v1214
  %v1216 = vpop.f32.mrb[0].mxu0
  %1217 = vmatprep.mubr.f32.mxu0 0.0
  %1218 = vmatmul.mubr.f32.gmra.mrb[0].mxu0 %v353
  %v1219 = vpop.f32.mrb[0].mxu0
  %v1220 = vadd.f32 %v705, %v1219
  %v1221 = vpop.f32.mrb[0].mxu0
  %1222 = vmatprep.mubr.f32.mxu0 0.0
  %1223 = vmatmul.mubr.f32.gmra.mrb[0].mxu0 %v356
  %v1224 = vpop.f32.mrb[0].mxu0
  %v1225 = vadd.f32 %v710, %v1224
  %v1226 = vpop.f32.mrb[0].mxu0
  %1227 = vmatprep.mubr.f32.mxu0 0.0
  %1228 = vmatmul.mubr.f32.gmra.mrb[0].mxu0 %v359
  %v1229 = vpop.f32.mrb[0].mxu0
  %v1230 = vadd.f32 %v715, %v1229
  %v1231 = vpop.f32.mrb[0].mxu0
  %1232 = vmatprep.mubr.f32.mxu0 0.0
  %1233 = vmatmul.mubr.f32.gmra.mrb[0].mxu0 %v362
  %v1234 = vpop.f32.mrb[0].mxu0
  %v1235 = vadd.f32 %v720, %v1234
  %v1236 = vpop.f32.mrb[0].mxu0
  %1237 = vmatprep.mubr.f32.mxu0 0.0
  %1238 = vmatmul.mubr.f32.gmra.mrb[0].mxu0 %v365
  %v1239 = vpop.f32.mrb[0].mxu0
  %v1240 = vadd.f32 %v725, %v1239
  %v1241 = vpop.f32.mrb[0].mxu0
  %1242 = vmatprep.mubr.f32.mxu0 0.0
  %1243 = vmatmul.mubr.f32.gmra.mrb[0].mxu0 %v368
  %v1244 = vpop.f32.mrb[0].mxu0
  %v1245 = vadd.f32 %v730, %v1244
  %v1246 = vpop.f32.mrb[0].mxu0
  %1247 = vmatprep.mubr.f32.mxu0 0.0
  %1248 = vmatmul.mubr.f32.gmra.mrb[0].mxu0 %v371
  %v1249 = vpop.f32.mrb[0].mxu0
  %v1250 = vadd.f32 %v735, %v1249
  %v1251 = vpop.f32.mrb[0].mxu0
  %1252 = vmatprep.mubr.f32.mxu0 0.0
  %1253 = vmatmul.mubr.f32.gmra.mrb[0].mxu0 %v374
  %v1254 = vpop.f32.mrb[0].mxu0
  %v1255 = vadd.f32 %v740, %v1254
  %v1256 = vpop.f32.mrb[0].mxu0
  %1257 = vmatprep.mubr.f32.mxu0 0.0
  %1258 = vmatmul.mubr.f32.gmra.mrb[0].mxu0 %v377
  %v1259 = vpop.f32.mrb[0].mxu0
  %v1260 = vadd.f32 %v745, %v1259
  %v1261 = vpop.f32.mrb[0].mxu0
  %1262 = vmatprep.mubr.f32.mxu0 0.0
  %1263 = vmatmul.mubr.f32.gmra.mrb[0].mxu0 %v380
  %v1264 = vpop.f32.mrb[0].mxu0
  %v1265 = vadd.f32 %v750, %v1264
  %v1266 = vpop.f32.mrb[0].mxu0
  %1267 = vmatprep.mubr.f32.mxu0 0.0
  %1268 = vmatmul.mubr.f32.gmra.mrb[0].mxu0 %v383
  %v1269 = vpop.f32.mrb[0].mxu0
  %v1270 = vadd.f32 %v755, %v1269
  %v1271 = vpop.f32.mrb[0].mxu0
  %1272 = vmatprep.mubr.f32.mxu0 0.0
  %1273 = vmatmul.mubr.f32.gmra.mrb[0].mxu0 %v386
  %v1274 = vpop.f32.mrb[0].mxu0
  %v1275 = vadd.f32 %v760, %v1274
  %v1276 = vpop.f32.mrb[0].mxu0
  %1277 = vmatprep.mubr.f32.mxu0 0.0
  %1278 = vmatmul.mubr.f32.gmra.mrb[0].mxu0 %v389
  %v1279 = vpop.f32.mrb[0].mxu0
  %v1280 = vadd.f32 %v765, %v1279
  %v1281 = vpop.f32.mrb[0].mxu0
  %1282 = vmatprep.mubr.f32.mxu0 0.0
  %1283 = vmatmul.mubr.f32.gmra.mrb[0].mxu0 %v392
  %v1284 = vpop.f32.mrb[0].mxu0
  %v1285 = vadd.f32 %v770, %v1284
  %v1286 = vpop.f32.mrb[0].mxu0
  %1287 = vmatprep.mubr.f32.mxu0 0.0
  %1288 = vmatmul.mubr.f32.gmra.mrb[0].mxu0 %v395
  %v1289 = vpop.f32.mrb[0].mxu0
  %v1290 = vadd.f32 %v775, %v1289
  %v1291 = vpop.f32.mrb[0].mxu0
  %1292 = vmatprep.mubr.f32.mxu0 0.0
  %1293 = vmatmul.mubr.f32.gmra.mrb[0].mxu0 %v398
  %v1294 = vpop.f32.mrb[0].mxu0
  %v1295 = vadd.f32 %v780, %v1294
  %v1296 = vpop.f32.mrb[0].mxu0
  %1297 = vmatprep.mubr.f32.mxu0 0.0
  %1298 = vmatmul.mubr.f32.gmra.mrb[0].mxu0 %v401
  %v1299 = vpop.f32.mrb[0].mxu0
  %v1300 = vadd.f32 %v785, %v1299
  %v1301 = vpop.f32.mrb[0].mxu0
  %1302 = vmatprep.mubr.f32.mxu0 0.0
  %1303 = vmatmul.mubr.f32.gmra.mrb[0].mxu0 %v404
  %v1304 = vpop.f32.mrb[0].mxu0
  %v1305 = vadd.f32 %v790, %v1304
  %v1306 = vpop.f32.mrb[0].mxu0
  %1307 = vmatprep.mubr.f32.mxu0 0.0
  %1308 = vmatmul.mubr.f32.gmra.mrb[0].mxu0 %v407
  %v1309 = vpop.f32.mrb[0].mxu0
  %v1310 = vadd.f32 %v795, %v1309
  %v1311 = vpop.f32.mrb[0].mxu0
  %1312 = vmatprep.mubr.f32.mxu0 0.0
  %1313 = vmatmul.mubr.f32.gmra.mrb[0].mxu0 %v410
  %v1314 = vpop.f32.mrb[0].mxu0
  %v1315 = vadd.f32 %v800, %v1314
  %v1316 = vpop.f32.mrb[0].mxu0
  %1317 = vmatprep.mubr.f32.mxu0 0.0
  %1318 = vmatmul.mubr.f32.gmra.mrb[0].mxu0 %v413
  %v1319 = vpop.f32.mrb[0].mxu0
  %v1320 = vadd.f32 %v805, %v1319
  %v1321 = vpop.f32.mrb[0].mxu0
  %1322 = vmatprep.mubr.f32.mxu0 0.0
  %1323 = vmatmul.mubr.f32.gmra.mrb[0].mxu0 %v416
  %v1324 = vpop.f32.mrb[0].mxu0
  %v1325 = vadd.f32 %v810, %v1324
  %v1326 = vpop.f32.mrb[0].mxu0
  %1327 = vmatprep.mubr.f32.mxu0 0.0
  %1328 = vmatmul.mubr.f32.gmra.mrb[0].mxu0 %v419
  %v1329 = vpop.f32.mrb[0].mxu0
  %v1330 = vadd.f32 %v815, %v1329
  %v1331 = vpop.f32.mrb[0].mxu0
  %1332 = vmatprep.mubr.f32.mxu0 0.0
  %1333 = vmatmul.mubr.f32.gmra.mrb[0].mxu0 %v422
  %v1334 = vpop.f32.mrb[0].mxu0
  %v1335 = vadd.f32 %v820, %v1334
  %v1336 = vpop.f32.mrb[0].mxu0
  %1337 = vmatprep.mubr.f32.mxu0 0.0
  %1338 = vmatmul.mubr.f32.gmra.mrb[0].mxu0 %v425
  %v1339 = vpop.f32.mrb[0].mxu0
  %v1340 = vadd.f32 %v825, %v1339
  %v1341 = vpop.f32.mrb[0].mxu0
  %1342 = vmatprep.mubr.f32.mxu0 0.0
  %1343 = vmatmul.mubr.f32.gmra.mrb[0].mxu0 %v428
  %v1344 = vpop.f32.mrb[0].mxu0
  %v1345 = vadd.f32 %v830, %v1344
  %v1346 = vpop.f32.mrb[0].mxu0
  %1347 = vmatprep.mubr.f32.mxu0 0.0
  %1348 = vmatmul.mubr.f32.gmra.mrb[0].mxu0 %v431
  %v1349 = vpop.f32.mrb[0].mxu0
  %v1350 = vadd.f32 %v835, %v1349
  %v1351 = vpop.f32.mrb[0].mxu0
  %1352 = vmatprep.mubr.f32.mxu0 0.0
  %1353 = vmatmul.mubr.f32.gmra.mrb[0].mxu0 %v434
  %v1354 = vpop.f32.mrb[0].mxu0
  %v1355 = vadd.f32 %v840, %v1354
  %v1356 = vpop.f32.mrb[0].mxu0
  %1357 = vmatprep.mubr.f32.mxu0 0.0
  %1358 = vmatmul.mubr.f32.gmra.mrb[0].mxu0 %v437
  %v1359 = vpop.f32.mrb[0].mxu0
  %v1360 = vadd.f32 %v845, %v1359
  %v1361 = vpop.f32.mrb[0].mxu0
  %1362 = vmatprep.mubr.f32.mxu0 0.0
  %1363 = vmatmul.mubr.f32.gmra.mrb[0].mxu0 %v440
  %v1364 = vpop.f32.mrb[0].mxu0
  %v1365 = vadd.f32 %v850, %v1364
  %v1366 = vpop.f32.mrb[0].mxu0
  %1367 = vmatprep.mubr.f32.mxu0 0.0
  %1368 = vmatmul.mubr.f32.gmra.mrb[0].mxu0 %v443
  %v1369 = vpop.f32.mrb[0].mxu0
  %v1370 = vadd.f32 %v855, %v1369
  %v1371 = vpop.f32.mrb[0].mxu0
  %1372 = vmatprep.mubr.f32.mxu0 0.0
  %1373 = vmatmul.mubr.f32.gmra.mrb[0].mxu0 %v446
  %v1374 = vpop.f32.mrb[0].mxu0
  %v1375 = vadd.f32 %v860, %v1374
  %v1376 = vpop.f32.mrb[0].mxu0
  %1377 = vmatprep.mubr.f32.mxu0 0.0
  %1378 = vmatmul.mubr.f32.gmra.mrb[0].mxu0 %v449
  %v1379 = vpop.f32.mrb[0].mxu0
  %v1380 = vadd.f32 %v865, %v1379
  %v1381 = vpop.f32.mrb[0].mxu0
  %1382 = vmatprep.mubr.f32.mxu0 0.0
  %1383 = vmatmul.mubr.f32.gmra.mrb[0].mxu0 %v452
  %v1384 = vpop.f32.mrb[0].mxu0
  %v1385 = vadd.f32 %v870, %v1384
  %v1386 = vpop.f32.mrb[0].mxu0
  %1387 = vmatprep.mubr.f32.mxu0 0.0
  %1388 = vmatmul.mubr.f32.gmra.mrb[0].mxu0 %v455
  %v1389 = vpop.f32.mrb[0].mxu0
  %v1390 = vadd.f32 %v875, %v1389
  %v1391 = vpop.f32.mrb[0].mxu0
  %1392 = vmatprep.mubr.f32.mxu0 0.0
  %1393 = vmatmul.mubr.f32.gmra.mrb[0].mxu0 %v458
  %v1394 = vpop.f32.mrb[0].mxu0
  %v1395 = vadd.f32 %v880, %v1394
  %v1396 = vpop.f32.mrb[0].mxu0
  %1397 = vmatprep.mubr.f32.mxu0 0.0
  %1398 = vmatmul.mubr.f32.gmra.mrb[0].mxu0 %v461
  %v1399 = vpop.f32.mrb[0].mxu0
  %v1400 = vadd.f32 %v885, %v1399
  %v1401 = vpop.f32.mrb[0].mxu0
  %1402 = vmatprep.mubr.f32.mxu0 0.0
  %1403 = vmatmul.mubr.f32.gmra.mrb[0].mxu0 %v464
  %v1404 = vpop.f32.mrb[0].mxu0
  %v1405 = vadd.f32 %v890, %v1404
  %v1406 = vpop.f32.mrb[0].mxu0
  %1407 = vmatprep.mubr.f32.mxu0 0.0
  %1408 = vmatmul.mubr.f32.gmra.mrb[0].mxu0 %v467
  %v1409 = vpop.f32.mrb[0].mxu0
  %v1410 = vadd.f32 %v895, %v1409
  %v1411 = vpop.f32.mrb[0].mxu0
  %1412 = vmatprep.mubr.f32.mxu0 0.0
  %1413 = vmatmul.mubr.f32.gmra.mrb[0].mxu0 %v470
  %v1414 = vpop.f32.mrb[0].mxu0
  %v1415 = vadd.f32 %v900, %v1414
  %v1416 = vpop.f32.mrb[0].mxu0
  %1417 = vmatprep.mubr.f32.mxu0 0.0
  %1418 = vmatmul.mubr.f32.gmra.mrb[0].mxu0 %v473
  %v1419 = vpop.f32.mrb[0].mxu0
  %v1420 = vadd.f32 %v905, %v1419
  %v1421 = vpop.f32.mrb[0].mxu0
  %1422 = vmatprep.mubr.f32.mxu0 0.0
  %1423 = vmatmul.mubr.f32.gmra.mrb[0].mxu0 %v476
  %v1424 = vpop.f32.mrb[0].mxu0
  %v1425 = vadd.f32 %v910, %v1424
  %v1426 = vpop.f32.mrb[0].mxu0
  %1427 = vmatprep.mubr.f32.mxu0 0.0
  %1428 = vmatmul.mubr.f32.gmra.mrb[0].mxu0 %v479
  %v1429 = vpop.f32.mrb[0].mxu0
  %v1430 = vadd.f32 %v915, %v1429
  %v1431 = vpop.f32.mrb[0].mxu0
  %1432 = vmatprep.mubr.f32.mxu0 0.0
  %1433 = vmatmul.mubr.f32.gmra.mrb[0].mxu0 %v482
  %v1434 = vpop.f32.mrb[0].mxu0
  %v1435 = vadd.f32 %v920, %v1434
  %v1436 = vpop.f32.mrb[0].mxu0
  %1437 = vmatprep.mubr.f32.mxu0 0.0
  %1438 = vmatmul.mubr.f32.gmra.mrb[0].mxu0 %v485
  %v1439 = vpop.f32.mrb[0].mxu0
  %v1440 = vadd.f32 %v925, %v1439
  %v1441 = vpop.f32.mrb[0].mxu0
  %1442 = vmatprep.mubr.f32.mxu0 0.0
  %1443 = vmatmul.mubr.f32.gmra.mrb[0].mxu0 %v488
  %v1444 = vpop.f32.mrb[0].mxu0
  %v1445 = vadd.f32 %v930, %v1444
  %v1446 = vpop.f32.mrb[0].mxu0
  %1447 = vmatprep.mubr.f32.mxu0 0.0
  %1448 = vmatmul.mubr.f32.gmra.mrb[0].mxu0 %v491
  %v1449 = vpop.f32.mrb[0].mxu0
  %v1450 = vadd.f32 %v935, %v1449
  %v1451 = vpop.f32.mrb[0].mxu0
  %1452 = vmatprep.mubr.f32.mxu0 0.0
  %1453 = vmatmul.mubr.f32.gmra.mrb[0].mxu0 %v494
  %v1454 = vpop.f32.mrb[0].mxu0
  %v1455 = vadd.f32 %v940, %v1454
  %v1456 = vpop.f32.mrb[0].mxu0
  %1457 = vmatprep.mubr.f32.mxu0 0.0
  %1458 = vmatmul.mubr.f32.gmra.mrb[0].mxu0 %v497
  %v1459 = vpop.f32.mrb[0].mxu0
  %v1460 = vadd.f32 %v945, %v1459
  %v1461 = vpop.f32.mrb[0].mxu0
  %1462 = vmatprep.mubr.f32.mxu0 0.0
  %1463 = vmatmul.mubr.f32.gmra.mrb[0].mxu0 %v500
  %v1464 = vpop.f32.mrb[0].mxu0
  %v1465 = vadd.f32 %v950, %v1464
  %v1466 = vpop.f32.mrb[0].mxu0
  %1467 = vmatprep.mubr.f32.mxu0 0.0
  %1468 = vmatmul.mubr.f32.gmra.mrb[0].mxu0 %v503
  %v1469 = vpop.f32.mrb[0].mxu0
  %v1470 = vadd.f32 %v955, %v1469
  %v1471 = vpop.f32.mrb[0].mxu0
  %1472 = vmatprep.mubr.f32.mxu0 0.0
  %1473 = vmatmul.mubr.f32.gmra.mrb[0].mxu0 %v506
  %v1474 = vpop.f32.mrb[0].mxu0
  %v1475 = vadd.f32 %v960, %v1474
  %v1476 = vpop.f32.mrb[0].mxu0
  %1477 = vmatprep.mubr.f32.mxu0 0.0
  %1478 = vmatmul.mubr.f32.gmra.mrb[0].mxu0 %v509
  %v1479 = vpop.f32.mrb[0].mxu0
  %v1480 = vadd.f32 %v965, %v1479
  %v1481 = vpop.f32.mrb[0].mxu0
  %1482 = vmatprep.mubr.f32.mxu0 0.0
  %1483 = vmatmul.mubr.f32.gmra.mrb[0].mxu0 %v512
  %v1484 = vpop.f32.mrb[0].mxu0
  %v1485 = vadd.f32 %v970, %v1484
  %v1486 = vpop.f32.mrb[0].mxu0
  %1487 = vmatprep.mubr.f32.mxu0 0.0
  %1488 = vmatmul.mubr.f32.gmra.mrb[0].mxu0 %v515
  %v1489 = vpop.f32.mrb[0].mxu0
  %v1490 = vadd.f32 %v975, %v1489
  %v1491 = vpop.f32.mrb[0].mxu0
  %1492 = vmatprep.mubr.f32.mxu0 0.0
  %1493 = vmatmul.mubr.f32.gmra.mrb[0].mxu0 %v518
  %v1494 = vpop.f32.mrb[0].mxu0
  %v1495 = vadd.f32 %v980, %v1494
  %v1496 = vpop.f32.mrb[0].mxu0
  %1497 = vmatprep.mubr.f32.mxu0 0.0
  %1498 = vmatmul.mubr.f32.gmra.mrb[0].mxu0 %v521
  %v1499 = vpop.f32.mrb[0].mxu0
  %v1500 = vadd.f32 %v985, %v1499
  %v1501 = vpop.f32.mrb[0].mxu0
  %1502 = vmatprep.mubr.f32.mxu0 0.0
  %1503 = vmatmul.mubr.f32.gmra.mrb[0].mxu0 %v524
  %v1504 = vpop.f32.mrb[0].mxu0
  %v1505 = vadd.f32 %v990, %v1504
  %v1506 = vpop.f32.mrb[0].mxu0
  %1507 = vmatprep.mubr.f32.mxu0 0.0
  %1508 = vmatmul.mubr.f32.gmra.mrb[0].mxu0 %v527
  %v1509 = vpop.f32.mrb[0].mxu0
  %v1510 = vadd.f32 %v995, %v1509
  %v1511 = vpop.f32.mrb[0].mxu0
  %1512 = vmatprep.mubr.f32.mxu0 0.0
  %1513 = vmatmul.mubr.f32.gmra.mrb[0].mxu0 %v530
  %v1514 = vpop.f32.mrb[0].mxu0
  %v1515 = vadd.f32 %v1000, %v1514
  %v1516 = vpop.f32.mrb[0].mxu0
  %1517 = vmatprep.mubr.f32.mxu0 0.0
  %1518 = vmatmul.mubr.f32.gmra.mrb[0].mxu0 %v533
  %v1519 = vpop.f32.mrb[0].mxu0
  %v1520 = vadd.f32 %v1005, %v1519
  %v1521 = vpop.f32.mrb[0].mxu0
  %1522 = vmatprep.mubr.f32.mxu0 0.0
  %1523 = vmatmul.mubr.f32.gmra.mrb[0].mxu0 %v536
  %v1524 = vpop.f32.mrb[0].mxu0
  %v1525 = vadd.f32 %v1010, %v1524
  %v1526 = vpop.f32.mrb[0].mxu0
  %1527 = vmatprep.mubr.f32.mxu0 0.0
  %1528 = vmatmul.mubr.f32.gmra.mrb[0].mxu0 %v539
  %v1529 = vpop.f32.mrb[0].mxu0
  %v1530 = vadd.f32 %v1015, %v1529
  %v1531 = vpop.f32.mrb[0].mxu0
  %1532 = vmatprep.mubr.f32.mxu0 0.0
  %1533 = vmatmul.mubr.f32.gmra.mrb[0].mxu0 %v542
  %v1534 = vpop.f32.mrb[0].mxu0
  %v1535 = vadd.f32 %v1020, %v1534
  %v1536 = vpop.f32.mrb[0].mxu0
  %1537 = vmatprep.mubr.f32.mxu0 0.0
  %1538 = vmatmul.mubr.f32.gmra.mrb[0].mxu0 %v545
  %v1539 = vpop.f32.mrb[0].mxu0
  %v1540 = vadd.f32 %v1025, %v1539
  %v1541 = vpop.f32.mrb[0].mxu0
  %1542 = vmatprep.mubr.f32.mxu0 0.0
  %1543 = vmatmul.mubr.f32.gmra.mrb[0].mxu0 %v548
  %v1544 = vpop.f32.mrb[0].mxu0
  %v1545 = vadd.f32 %v1030, %v1544
  %v1546 = vpop.f32.mrb[0].mxu0
  %1547 = vmatprep.mubr.f32.mxu0 0.0
  %1548 = vmatmul.mubr.f32.gmra.mrb[0].mxu0 %v551
  %v1549 = vpop.f32.mrb[0].mxu0
  %v1550 = vadd.f32 %v1035, %v1549
  %v1551 = vpop.f32.mrb[0].mxu0
  %1552 = vmatprep.mubr.f32.mxu0 0.0
  %1553 = vmatmul.mubr.f32.gmra.mrb[0].mxu0 %v554
  %v1554 = vpop.f32.mrb[0].mxu0
  %v1555 = vadd.f32 %v1040, %v1554
  %v1556 = vpop.f32.mrb[0].mxu0
  %1557 = vmatprep.mubr.f32.mxu0 0.0
  %1558 = vmatmul.mubr.f32.gmra.mrb[0].mxu0 %v557
  %v1559 = vpop.f32.mrb[0].mxu0
  %v1560 = vadd.f32 %v1045, %v1559
  %v1561 = vpop.f32.mrb[0].mxu0
  %1562 = vmatprep.mubr.f32.mxu0 0.0
  %1563 = vmatmul.mubr.f32.gmra.mrb[0].mxu0 %v560
  %v1564 = vpop.f32.mrb[0].mxu0
  %v1565 = vadd.f32 %v1050, %v1564
  %v1566 = vpop.f32.mrb[0].mxu0
  %1567 = vmatprep.mubr.f32.mxu0 0.0
  %1568 = vmatmul.mubr.f32.gmra.mrb[0].mxu0 %v563
  %v1569 = vpop.f32.mrb[0].mxu0
  %v1570 = vadd.f32 %v1055, %v1569
  %v1571 = vpop.f32.mrb[0].mxu0
  %1572 = vmatprep.mubr.f32.mxu0 0.0
  %1573 = vmatmul.mubr.f32.gmra.mrb[0].mxu0 %v566
  %v1574 = vpop.f32.mrb[0].mxu0
  %v1575 = vadd.f32 %v1060, %v1574
  %v1576 = vpop.f32.mrb[0].mxu0
  %1577 = vmatprep.mubr.f32.mxu0 0.0
  %1578 = vmatmul.mubr.f32.gmra.mrb[0].mxu0 %v569
  %v1579 = vpop.f32.mrb[0].mxu0
  %v1580 = vadd.f32 %v1065, %v1579
  %v1581 = vpop.f32.mrb[0].mxu0
  %1582 = vmatprep.mubr.f32.mxu0 0.0
  %1583 = vmatmul.mubr.f32.gmra.mrb[0].mxu0 %v572
  %v1584 = vpop.f32.mrb[0].mxu0
  %v1585 = vadd.f32 %v1070, %v1584
  %v1586 = vpop.f32.mrb[0].mxu0
  %1587 = vmatprep.mubr.f32.mxu0 0.0
  %1588 = vmatmul.mubr.f32.gmra.mrb[0].mxu0 %v575
  %v1589 = vpop.f32.mrb[0].mxu0
  %v1590 = vadd.f32 %v1075, %v1589
  %v1591 = vpop.f32.mrb[0].mxu0
  %1592 = vmatprep.mubr.f32.mxu0 0.0
  %1593 = vmatmul.mubr.f32.gmra.mrb[0].mxu0 %v578
  %v1594 = vpop.f32.mrb[0].mxu0
  %v1595 = vadd.f32 %v1080, %v1594
  %v1596 = vpop.f32.mrb[0].mxu0
  %1597 = vmatprep.mubr.f32.mxu0 0.0
  %1598 = vmatmul.mubr.f32.gmra.mrb[0].mxu0 %v581
  %v1599 = vpop.f32.mrb[0].mxu0
  %v1600 = vadd.f32 %v1085, %v1599
  %v1601 = vpop.f32.mrb[0].mxu0
  %1602 = vmatprep.mubr.f32.mxu0 0.0
  %1603 = vmatmul.mubr.f32.gmra.mrb[0].mxu0 %v584
  %v1604 = vpop.f32.mrb[0].mxu0
  %v1605 = vadd.f32 %v1090, %v1604
  %v1606 = vpop.f32.mrb[0].mxu0
  %1607 = vmatprep.mubr.f32.mxu0 0.0
  %1608 = vmatmul.mubr.f32.gmra.mrb[0].mxu0 %v587
  %v1609 = vpop.f32.mrb[0].mxu0
  %v1610 = vadd.f32 %v1095, %v1609
  %v1611 = vpop.f32.mrb[0].mxu0
  %1612 = vmatprep.mubr.f32.mxu0 0.0
  %1613 = vmatmul.mubr.f32.gmra.mrb[0].mxu0 %v590
  %v1614 = vpop.f32.mrb[0].mxu0
  %v1615 = vadd.f32 %v1100, %v1614
  %v1616 = vpop.f32.mrb[0].mxu0
  %1617 = vmatprep.mubr.f32.mxu0 0.0
  %1618 = vmatmul.mubr.f32.gmra.mrb[0].mxu0 %v593
  %v1619 = vpop.f32.mrb[0].mxu0
  %v1620 = vadd.f32 %v1105, %v1619
  %v1621 = vpop.f32.mrb[0].mxu0
  %1622 = vmatprep.mubr.f32.mxu0 0.0
  %1623 = vmatmul.mubr.f32.gmra.mrb[0].mxu0 %v596
  %v1624 = vpop.f32.mrb[0].mxu0
  %v1625 = vadd.f32 %v1110, %v1624
  %v1626 = vpop.f32.mrb[0].mxu0
  %1627 = vdwg.mxu0
  %v1628 = vmax.f32 %v1180, 0.0
  %v1629 = vmax.f32 %v1185, 0.0
  %v1630 = vmax.f32 %v1190, 0.0
  %v1631 = vmax.f32 %v1195, 0.0
  %v1632 = vmax.f32 %v1200, 0.0
  %v1633 = vmax.f32 %v1205, 0.0
  %v1634 = vmax.f32 %v1210, 0.0
  %v1635 = vmax.f32 %v1215, 0.0
  %v1636 = vmax.f32 %v1220, 0.0
  %v1637 = vmax.f32 %v1225, 0.0
  %v1638 = vmax.f32 %v1230, 0.0
  %v1639 = vmax.f32 %v1235, 0.0
  %v1640 = vmax.f32 %v1240, 0.0
  %v1641 = vmax.f32 %v1245, 0.0
  %v1642 = vmax.f32 %v1250, 0.0
  %v1643 = vmax.f32 %v1255, 0.0
  %v1644 = vmax.f32 %v1260, 0.0
  %v1645 = vmax.f32 %v1265, 0.0
  %v1646 = vmax.f32 %v1270, 0.0
  %v1647 = vmax.f32 %v1275, 0.0
  %v1648 = vmax.f32 %v1280, 0.0
  %v1649 = vmax.f32 %v1285, 0.0
  %v1650 = vmax.f32 %v1290, 0.0
  %v1651 = vmax.f32 %v1295, 0.0
  %v1652 = vmax.f32 %v1300, 0.0
  %v1653 = vmax.f32 %v1305, 0.0
  %v1654 = vmax.f32 %v1310, 0.0
  %v1655 = vmax.f32 %v1315, 0.0
  %v1656 = vmax.f32 %v1320, 0.0
  %v1657 = vmax.f32 %v1325, 0.0
  %v1658 = vmax.f32 %v1330, 0.0
  %v1659 = vmax.f32 %v1335, 0.0
  %v1660 = vmax.f32 %v1340, 0.0
  %v1661 = vmax.f32 %v1345, 0.0
  %v1662 = vmax.f32 %v1350, 0.0
  %v1663 = vmax.f32 %v1355, 0.0
  %v1664 = vmax.f32 %v1360, 0.0
  %v1665 = vmax.f32 %v1365, 0.0
  %v1666 = vmax.f32 %v1370, 0.0
  %v1667 = vmax.f32 %v1375, 0.0
  %v1668 = vmax.f32 %v1380, 0.0
  %v1669 = vmax.f32 %v1385, 0.0
  %v1670 = vmax.f32 %v1390, 0.0
  %v1671 = vmax.f32 %v1395, 0.0
  %v1672 = vmax.f32 %v1400, 0.0
  %v1673 = vmax.f32 %v1405, 0.0
  %v1674 = vmax.f32 %v1410, 0.0
  %v1675 = vmax.f32 %v1415, 0.0
  %v1676 = vmax.f32 %v1420, 0.0
  %v1677 = vmax.f32 %v1425, 0.0
  %v1678 = vmax.f32 %v1430, 0.0
  %v1679 = vmax.f32 %v1435, 0.0
  %v1680 = vmax.f32 %v1440, 0.0
  %v1681 = vmax.f32 %v1445, 0.0
  %v1682 = vmax.f32 %v1450, 0.0
  %v1683 = vmax.f32 %v1455, 0.0
  %v1684 = vmax.f32 %v1460, 0.0
  %v1685 = vmax.f32 %v1465, 0.0
  %v1686 = vmax.f32 %v1470, 0.0
  %v1687 = vmax.f32 %v1475, 0.0
  %v1688 = vmax.f32 %v1480, 0.0
  %v1689 = vmax.f32 %v1485, 0.0
  %v1690 = vmax.f32 %v1490, 0.0
  %v1691 = vmax.f32 %v1495, 0.0
  %v1692 = vmax.f32 %v1500, 0.0
  %v1693 = vmax.f32 %v1505, 0.0
  %v1694 = vmax.f32 %v1510, 0.0
  %v1695 = vmax.f32 %v1515, 0.0
  %v1696 = vmax.f32 %v1520, 0.0
  %v1697 = vmax.f32 %v1525, 0.0
  %v1698 = vmax.f32 %v1530, 0.0
  %v1699 = vmax.f32 %v1535, 0.0
  %v1700 = vmax.f32 %v1540, 0.0
  %v1701 = vmax.f32 %v1545, 0.0
  %v1702 = vmax.f32 %v1550, 0.0
  %v1703 = vmax.f32 %v1555, 0.0
  %v1704 = vmax.f32 %v1560, 0.0
  %v1705 = vmax.f32 %v1565, 0.0
  %v1706 = vmax.f32 %v1570, 0.0
  %v1707 = vmax.f32 %v1575, 0.0
  %v1708 = vmax.f32 %v1580, 0.0
  %v1709 = vmax.f32 %v1585, 0.0
  %v1710 = vmax.f32 %v1590, 0.0
  %v1711 = vmax.f32 %v1595, 0.0
  %v1712 = vmax.f32 %v1600, 0.0
  %v1713 = vmax.f32 %v1605, 0.0
  %v1714 = vmax.f32 %v1610, 0.0
  %v1715 = vmax.f32 %v1615, 0.0
  %v1716 = vmax.f32 %v1620, 0.0
  %v1717 = vmax.f32 %v1625, 0.0
  %1718 = vst.msk [vmem:[%s3] sm:$0xff] %vm327, %v1628
  %1719 = vst.msk [vmem:[%s3 + $0x8] sm:$0xff] %vm327, %v1629
  %1720 = vst.msk [vmem:[%s3 + $0x10] sm:$0xff] %vm327, %v1630
  %1721 = vst.msk [vmem:[%s3 + $0x18] sm:$0xff] %vm327, %v1631
  %1722 = vst.msk [vmem:[%s3 + $0x20] sm:$0xff] %vm327, %v1632
  %1723 = vst.msk [vmem:[%s3 + $0x28] sm:$0xff] %vm327, %v1633
  %1724 = vst.msk [vmem:[%s3 + $0x30] sm:$0xff] %vm327, %v1634
  %1725 = vst.msk [vmem:[%s3 + $0x38] sm:$0xff] %vm327, %v1635
  %1726 = vst.msk [vmem:[%s3 + $0x40] sm:$0xff] %vm327, %v1636
  %1727 = vst.msk [vmem:[%s3 + $0x48] sm:$0xff] %vm327, %v1637
  %1728 = vst.msk [vmem:[%s3 + $0x50] sm:$0xff] %vm327, %v1638
  %1729 = vst.msk [vmem:[%s3 + $0x58] sm:$0xff] %vm327, %v1639
  %1730 = vst.msk [vmem:[%s3 + $0x60] sm:$0xff] %vm327, %v1640
  %1731 = vst.msk [vmem:[%s3 + $0x68] sm:$0xff] %vm327, %v1641
  %1732 = vst.msk [vmem:[%s3 + $0x70] sm:$0xff] %vm327, %v1642
  %1733 = vst.msk [vmem:[%s3 + $0x78] sm:$0xff] %vm327, %v1643
  %1734 = vst.msk [vmem:[%s3 + $0x80] sm:$0xff] %vm327, %v1644
  %1735 = vst.msk [vmem:[%s3 + $0x88] sm:$0xff] %vm327, %v1645
  %1736 = vst.msk [vmem:[%s3 + $0x90] sm:$0xff] %vm327, %v1646
  %1737 = vst.msk [vmem:[%s3 + $0x98] sm:$0xff] %vm327, %v1647
  %1738 = vst.msk [vmem:[%s3 + $0xa0] sm:$0xff] %vm327, %v1648
  %1739 = vst.msk [vmem:[%s3 + $0xa8] sm:$0xff] %vm327, %v1649
  %1740 = vst.msk [vmem:[%s3 + $0xb0] sm:$0xff] %vm327, %v1650
  %1741 = vst.msk [vmem:[%s3 + $0xb8] sm:$0xff] %vm327, %v1651
  %1742 = vst.msk [vmem:[%s3 + $0xc0] sm:$0xff] %vm327, %v1652
  %1743 = vst.msk [vmem:[%s3 + $0xc8] sm:$0xff] %vm327, %v1653
  %1744 = vst.msk [vmem:[%s3 + $0xd0] sm:$0xff] %vm327, %v1654
  %1745 = vst.msk [vmem:[%s3 + $0xd8] sm:$0xff] %vm327, %v1655
  %1746 = vst.msk [vmem:[%s3 + $0xe0] sm:$0xff] %vm327, %v1656
  %1747 = vst.msk [vmem:[%s3 + $0xe8] sm:$0xff] %vm327, %v1657
  %1748 = vst.msk [vmem:[%s3 + $0xf0] sm:$0xff] %vm327, %v1658
  %1749 = vst.msk [vmem:[%s3 + $0xf8] sm:$0xff] %vm327, %v1659
  %1750 = vst.msk [vmem:[%s3 + $0x100] sm:$0xff] %vm327, %v1660
  %1751 = vst.msk [vmem:[%s3 + $0x108] sm:$0xff] %vm327, %v1661
  %1752 = vst.msk [vmem:[%s3 + $0x110] sm:$0xff] %vm327, %v1662
  %1753 = vst.msk [vmem:[%s3 + $0x118] sm:$0xff] %vm327, %v1663
  %1754 = vst.msk [vmem:[%s3 + $0x120] sm:$0xff] %vm327, %v1664
  %1755 = vst.msk [vmem:[%s3 + $0x128] sm:$0xff] %vm327, %v1665
  %1756 = vst.msk [vmem:[%s3 + $0x130] sm:$0xff] %vm327, %v1666
  %1757 = vst.msk [vmem:[%s3 + $0x138] sm:$0xff] %vm327, %v1667
  %1758 = vst.msk [vmem:[%s3 + $0x140] sm:$0xff] %vm327, %v1668
  %1759 = vst.msk [vmem:[%s3 + $0x148] sm:$0xff] %vm327, %v1669
  %1760 = vst.msk [vmem:[%s3 + $0x150] sm:$0xff] %vm327, %v1670
  %1761 = vst.msk [vmem:[%s3 + $0x158] sm:$0xff] %vm327, %v1671
  %1762 = vst.msk [vmem:[%s3 + $0x160] sm:$0xff] %vm327, %v1672
  %1763 = vst.msk [vmem:[%s3 + $0x168] sm:$0xff] %vm327, %v1673
  %1764 = vst.msk [vmem:[%s3 + $0x170] sm:$0xff] %vm327, %v1674
  %1765 = vst.msk [vmem:[%s3 + $0x178] sm:$0xff] %vm327, %v1675
  %1766 = vst.msk [vmem:[%s3 + $0x180] sm:$0xff] %vm327, %v1676
  %1767 = vst.msk [vmem:[%s3 + $0x188] sm:$0xff] %vm327, %v1677
  %1768 = vst.msk [vmem:[%s3 + $0x190] sm:$0xff] %vm327, %v1678
  %1769 = vst.msk [vmem:[%s3 + $0x198] sm:$0xff] %vm327, %v1679
  %1770 = vst.msk [vmem:[%s3 + $0x1a0] sm:$0xff] %vm327, %v1680
  %1771 = vst.msk [vmem:[%s3 + $0x1a8] sm:$0xff] %vm327, %v1681
  %1772 = vst.msk [vmem:[%s3 + $0x1b0] sm:$0xff] %vm327, %v1682
  %1773 = vst.msk [vmem:[%s3 + $0x1b8] sm:$0xff] %vm327, %v1683
  %1774 = vst.msk [vmem:[%s3 + $0x1c0] sm:$0xff] %vm327, %v1684
  %1775 = vst.msk [vmem:[%s3 + $0x1c8] sm:$0xff] %vm327, %v1685
  %1776 = vst.msk [vmem:[%s3 + $0x1d0] sm:$0xff] %vm327, %v1686
  %1777 = vst.msk [vmem:[%s3 + $0x1d8] sm:$0xff] %vm327, %v1687
  %1778 = vst.msk [vmem:[%s3 + $0x1e0] sm:$0xff] %vm327, %v1688
  %1779 = vst.msk [vmem:[%s3 + $0x1e8] sm:$0xff] %vm327, %v1689
  %1780 = vst.msk [vmem:[%s3 + $0x1f0] sm:$0xff] %vm327, %v1690
  %1781 = vst.msk [vmem:[%s3 + $0x1f8] sm:$0xff] %vm327, %v1691
  %1782 = vst.msk [vmem:[%s3 + $0x200] sm:$0xff] %vm327, %v1692
  %1783 = vst.msk [vmem:[%s3 + $0x208] sm:$0xff] %vm327, %v1693
  %1784 = vst.msk [vmem:[%s3 + $0x210] sm:$0xff] %vm327, %v1694
  %1785 = vst.msk [vmem:[%s3 + $0x218] sm:$0xff] %vm327, %v1695
  %1786 = vst.msk [vmem:[%s3 + $0x220] sm:$0xff] %vm327, %v1696
  %1787 = vst.msk [vmem:[%s3 + $0x228] sm:$0xff] %vm327, %v1697
  %1788 = vst.msk [vmem:[%s3 + $0x230] sm:$0xff] %vm327, %v1698
  %1789 = vst.msk [vmem:[%s3 + $0x238] sm:$0xff] %vm327, %v1699
  %1790 = vst.msk [vmem:[%s3 + $0x240] sm:$0xff] %vm327, %v1700
  %1791 = vst.msk [vmem:[%s3 + $0x248] sm:$0xff] %vm327, %v1701
  %1792 = vst.msk [vmem:[%s3 + $0x250] sm:$0xff] %vm327, %v1702
  %1793 = vst.msk [vmem:[%s3 + $0x258] sm:$0xff] %vm327, %v1703
  %1794 = vst.msk [vmem:[%s3 + $0x260] sm:$0xff] %vm327, %v1704
  %1795 = vst.msk [vmem:[%s3 + $0x268] sm:$0xff] %vm327, %v1705
  %1796 = vst.msk [vmem:[%s3 + $0x270] sm:$0xff] %vm327, %v1706
  %1797 = vst.msk [vmem:[%s3 + $0x278] sm:$0xff] %vm327, %v1707
  %1798 = vst.msk [vmem:[%s3 + $0x280] sm:$0xff] %vm327, %v1708
  %1799 = vst.msk [vmem:[%s3 + $0x288] sm:$0xff] %vm327, %v1709
  %1800 = vst.msk [vmem:[%s3 + $0x290] sm:$0xff] %vm327, %v1710
  %1801 = vst.msk [vmem:[%s3 + $0x298] sm:$0xff] %vm327, %v1711
  %1802 = vst.msk [vmem:[%s3 + $0x2a0] sm:$0xff] %vm327, %v1712
  %1803 = vst.msk [vmem:[%s3 + $0x2a8] sm:$0xff] %vm327, %v1713
  %1804 = vst.msk [vmem:[%s3 + $0x2b0] sm:$0xff] %vm327, %v1714
  %1805 = vst.msk [vmem:[%s3 + $0x2b8] sm:$0xff] %vm327, %v1715
  %1806 = vst.msk [vmem:[%s3 + $0x2c0] sm:$0xff] %vm327, %v1716
  %1807 = vst.msk [vmem:[%s3 + $0x2c8] sm:$0xff] %vm327, %v1717
  // Predicated region
  $region14: #{audio_model_forward.4} parent=0 // pred_check
    _
  $region15: #{audio_model_forward.4} parent=0 // pred_check_branch
    %1809 = sbr.rel (0) target = $region17
  $region16: #{audio_model_forward.4} parent=0 // pred_region
    _
  $region17: #{audio_model_forward.4} parent=0 // pred_fallthru
    _
  // Predicated region
  $region18: #{audio_model_forward.4} parent=0 // pred_check
    _
  $region19: #{audio_model_forward.4} parent=0 // pred_check_branch
    %1811 = sbr.rel (0) target = $region21
  $region20: #{audio_model_forward.4} parent=0 // pred_region
    _
  $region21: #{audio_model_forward.4} parent=0 // pred_fallthru
    _

// kernel: audio_model_forward.5
$region0: #{audio_model_forward.5}
  #allocation0 [shape = 'u32[]', space=smem, size = 0x4, offset = 0x4, fixed_abs, tag = 'smem constant byte address 0x4 - core index']
  #allocation1 [shape = 'u32[144,128]{1,0:T(1,128)}', space=vmem, size = 0x12000, scoped, tag = 'internal scratch']
  %s0 = inlined_call_operand.vmem [shape: f32[2,11520], index: 0, kind: input, shape index: {}]
  %s1 = inlined_call_operand.vmem [shape: f32[11520,64], index: 1, kind: input, shape index: {}]
  %s2 = inlined_call_operand.vmem [shape: f32[1,64], index: 2, kind: input, shape index: {}]
  %s3 = inlined_call_operand.hbm [shape: f32[2,64], index: 3, kind: output, shape index: {}]
  %s4 = sld [smem:[#allocation0]]
  $region53: #{audio_model_forward.5} parent=0
    _
  %s6 = ssub.s32 1, %s4
  %s7 = scalar_select 0, %s6, %s4
  $region1: #{audio_model_forward.5} parent=0
    #allocation2 [shape = 'u8[1024]{0}', space=vmem, size = 0x400, scoped, tag = 'output window, operand 0, single buffered']
    #allocation3 [shape = 's32[2]{0}', space=sflag, size = 0x8, scoped, tag = 'scoped memory for audio_model_forward.5']
    %8 = vsyncpa [#allocation3], 0
    loop: start=0, step=1, limit=7
    $region2: #{audio_model_forward.5} parent=1 // loop_pre_header
      _
    $region3: #{audio_model_forward.5} parent=1 // loop_header
      %s10 = sphi 0, %s14
      %p11 = scmp.ge.s32.totalorder %s10, 7
      %s20 = sphi 0, %s22
      %s23 = sphi 0, %s20
      %s24 = sphi 0, %s23
      %s40 = sphi 0, %s24
      %s46 = sphi 0, %s48
      %s49 = sphi 0, %s46
      %s50 = sphi 0, %s49
      %s66 = sphi 0, %s50
      %s70 = sphi 0, %s70
      %s72 = sphi 0, %s70
      %s73 = sphi 0, %s72
      %s87 = sphi 0, %s73
      %s91 = sphi 0, %s91
      %s93 = sphi 0, %s91
      %s94 = sphi 0, %s93
      %s108 = sphi 0, %s94
    $region4: #{audio_model_forward.5} parent=1 // loop_header_branch
      %13 = sbr.rel (%p11) target = $region8
    $region5: #{audio_model_forward.5} parent=1 // loop_body
      %s15 = ssub.s32 %s10, 1
      %s16 = ssub.s32 %s10, 2
      %s17 = sadd.s32 %s10, 1
      %s18 = ssub.s32 %s10, %s17
      %p19 = scmp.eq.s32.totalorder %s18, 0
      %s21 = sadd.s32 %s20, 1
      %s22 = scalar_select %p19, %s20, %s21
      %p25 = pneg %p19
      %p26 = scmp.eq.s32.totalorder %s10, 4
      %p27 = por %p25, %p26
      %p28 = scmp.ne.s32.totalorder %s20, %s23
      %p29 = scmp.eq.s32.totalorder %s10, 0
      %p30 = por %p28, %p29
      %p31 = scmp.ne.s32.totalorder %s20, %s23
      %p32 = scmp.eq.s32.totalorder %s15, 4
      %p33 = por %p31, %p32
      %p34 = scmp.ne.s32.totalorder %s23, %s24
      %p35 = scmp.eq.s32.totalorder %s15, 0
      %p36 = por %p34, %p35
      %p37 = scmp.ne.s32.totalorder %s23, %s24
      %p38 = scmp.eq.s32.totalorder %s16, 4
      %p39 = por %p37, %p38
      %p41 = scmp.ne.s32.totalorder %s24, %s40
      %p42 = scmp.eq.s32.totalorder %s16, 0
      %p43 = por %p41, %p42
      %s44 = ssub.s32 %s10, %s17
      %p45 = scmp.eq.s32.totalorder %s44, 0
      %s47 = sadd.s32 %s46, 1
      %s48 = scalar_select %p45, %s46, %s47
      %p51 = pneg %p45
      %p52 = scmp.eq.s32.totalorder %s10, 4
      %p53 = por %p51, %p52
      %p54 = scmp.ne.s32.totalorder %s46, %s49
      %p55 = scmp.eq.s32.totalorder %s10, 0
      %p56 = por %p54, %p55
      %p57 = scmp.ne.s32.totalorder %s46, %s49
      %p58 = scmp.eq.s32.totalorder %s15, 4
      %p59 = por %p57, %p58
      %p60 = scmp.ne.s32.totalorder %s49, %s50
      %p61 = scmp.eq.s32.totalorder %s15, 0
      %p62 = por %p60, %p61
      %p63 = scmp.ne.s32.totalorder %s49, %s50
      %p64 = scmp.eq.s32.totalorder %s16, 4
      %p65 = por %p63, %p64
      %p67 = scmp.ne.s32.totalorder %s50, %s66
      %p68 = scmp.eq.s32.totalorder %s16, 0
      %p69 = por %p67, %p68
      %s71 = sadd.s32 %s70, 1
      %p74 = scmp.eq.s32.totalorder %s10, 4
      %p75 = scmp.ne.s32.totalorder %s70, %s72
      %p76 = scmp.eq.s32.totalorder %s10, 0
      %p77 = por %p75, %p76
      %p78 = scmp.ne.s32.totalorder %s70, %s72
      %p79 = scmp.eq.s32.totalorder %s15, 4
      %p80 = por %p78, %p79
      %p81 = scmp.ne.s32.totalorder %s72, %s73
      %p82 = scmp.eq.s32.totalorder %s15, 0
      %p83 = por %p81, %p82
      %p84 = scmp.ne.s32.totalorder %s72, %s73
      %p85 = scmp.eq.s32.totalorder %s16, 4
      %p86 = por %p84, %p85
      %p88 = scmp.ne.s32.totalorder %s73, %s87
      %p89 = scmp.eq.s32.totalorder %s16, 0
      %p90 = por %p88, %p89
      %s92 = sadd.s32 %s91, 1
      %p95 = scmp.eq.s32.totalorder %s10, 4
      %p96 = scmp.ne.s32.totalorder %s91, %s93
      %p97 = scmp.eq.s32.totalorder %s10, 0
      %p98 = por %p96, %p97
      %p99 = scmp.ne.s32.totalorder %s91, %s93
      %p100 = scmp.eq.s32.totalorder %s15, 4
      %p101 = por %p99, %p100
      %p102 = scmp.ne.s32.totalorder %s93, %s94
      %p103 = scmp.eq.s32.totalorder %s15, 0
      %p104 = por %p102, %p103
      %p105 = scmp.ne.s32.totalorder %s93, %s94
      %p106 = scmp.eq.s32.totalorder %s16, 4
      %p107 = por %p105, %p106
      %p109 = scmp.ne.s32.totalorder %s94, %s108
      %p110 = scmp.eq.s32.totalorder %s16, 0
      %p111 = por %p109, %p110
      %p112 = scmp.le.s32.totalorder 1, %s10
      %p113 = scmp.lt.s32.totalorder %s10, 6
      %p114 = pnand %p112, %p113
      %p115 = pneg %p114
      // Predicated region
      $region9: #{audio_model_forward.5} parent=5 // pred_check
        _
      $region10: #{audio_model_forward.5} parent=5 // pred_check_branch
        %117 = sbr.rel (%p114) target = $region12
      $region11: #{audio_model_forward.5} parent=5 // pred_region
        %s118 = ssub.s32 %s10, 1
        // Predicated region
        $region13: #{audio_model_forward.5} parent=11 // pred_check
          %p119 = pneg %p83
        $region14: #{audio_model_forward.5} parent=11 // pred_check_branch
          %121 = sbr.rel (%p119) target = $region16
        $region15: #{audio_model_forward.5} parent=11 // pred_region
          _
        $region16: #{audio_model_forward.5} parent=11 // pred_fallthru
          _
      $region12: #{audio_model_forward.5} parent=5 // pred_fallthru
        _
      %p122 = scmp.lt.s32.totalorder %s10, 5
      // Predicated region
      $region17: #{audio_model_forward.5} parent=5 // pred_check
        %p123 = pneg %p122
      $region18: #{audio_model_forward.5} parent=5 // pred_check_branch
        %125 = sbr.rel (%p123) target = $region20
      $region19: #{audio_model_forward.5} parent=5 // pred_region
        // Predicated region
        $region21: #{audio_model_forward.5} parent=19 // pred_check
          %p126 = pneg %p30
        $region22: #{audio_model_forward.5} parent=19 // pred_check_branch
          %128 = sbr.rel (%p126) target = $region24
        $region23: #{audio_model_forward.5} parent=19 // pred_region
          %s129 = smul.u32 18, %s10
          %p130 = scmp.lt.s32.totalorder %s129, 89
          %s131 = scalar_select %p130, %s129, 89
          %s132 = smul.addr %s131, 2
          %s133 = scalar_lea.vmem %s0, %s132
          %s134 = smul.u32 18, %s10
        $region24: #{audio_model_forward.5} parent=19 // pred_fallthru
          _
        // Predicated region
        $region25: #{audio_model_forward.5} parent=19 // pred_check
          %p135 = pneg %p56
        $region26: #{audio_model_forward.5} parent=19 // pred_check_branch
          %137 = sbr.rel (%p135) target = $region28
        $region27: #{audio_model_forward.5} parent=19 // pred_region
          %s138 = smul.u32 288, %s10
          %p139 = scmp.lt.s32.totalorder %s138, 1439
          %s140 = scalar_select %p139, %s138, 1439
          %s141 = smul.addr %s140, 8
          %s142 = scalar_lea.vmem %s1, %s141
          %s143 = smul.u32 288, %s10
        $region28: #{audio_model_forward.5} parent=19 // pred_fallthru
          _
      $region20: #{audio_model_forward.5} parent=5 // pred_fallthru
        _
      %p144 = scmp.le.s32.totalorder 1, %s10
      %p145 = scmp.lt.s32.totalorder %s10, 6
      %p146 = pnand %p144, %p145
      %p147 = pneg %p146
      // Predicated region
      $region29: #{audio_model_forward.5} parent=5 // pred_check
        _
      $region30: #{audio_model_forward.5} parent=5 // pred_check_branch
        %149 = sbr.rel (%p146) target = $region32
      $region31: #{audio_model_forward.5} parent=5 // pred_region
        %s150 = ssub.s32 %s10, 1
        %s151 = smul.u32 18, %s15
        %p152 = scmp.lt.s32.totalorder %s151, 89
        %s153 = scalar_select %p152, %s151, 89
        %s154 = smul.addr %s153, 2
        %s155 = scalar_lea.vmem %s0, %s154
        %p156 = pneg %p36
        %p157 = pneg %p33
        %s158 = smul.u32 288, %s15
        %p159 = scmp.lt.s32.totalorder %s158, 1439
        %s160 = scalar_select %p159, %s158, 1439
        %s161 = smul.addr %s160, 8
        %s162 = scalar_lea.vmem %s1, %s161
        %p163 = pneg %p62
        %p164 = pneg %p59
        %p165 = pneg %p83
        %p166 = pneg %p80
        %p167 = pneg %p104
        %p168 = pneg %p101
        %s169 = smul.u32 18, %s15
        %p170 = scmp.lt.s32.totalorder %s169, 89
        %s171 = scalar_select %p170, %s169, 89
        %s172 = smul.addr %s171, 2
        %s173 = scalar_lea.vmem %s0, %s172
        %s174 = smul.u32 18, %s15
        %s175 = smul.u32 288, %s15
        %p176 = scmp.lt.s32.totalorder %s175, 1439
        %s177 = scalar_select %p176, %s175, 1439
        %s178 = smul.addr %s177, 8
        %s179 = scalar_lea.vmem %s1, %s178
        %s180 = smul.u32 288, %s15
        %p181 = scmp.eq.s32.totalorder %s15, 0
        // Predicated region
        $region33: #{audio_model_forward.5} parent=31 // pred_check
          %p182 = pneg %p181
        $region34: #{audio_model_forward.5} parent=31 // pred_check_branch
          %184 = sbr.rel (%p182) target = $region36
        $region35: #{audio_model_forward.5} parent=31 // pred_region
          %vm185 = vcmask 517120
          %186 = vst.msk [vmem:[#allocation2] sm:$0x3] %vm185, 0.0
        $region36: #{audio_model_forward.5} parent=31 // pred_fallthru
          _
        %v187 = vld [vmem:[#allocation2] sm:$0x3]
        %v188 = vld [vmem:[%s173] sm:$0xff]
        %v189 = vld [vmem:[%s173 + $0x8] sm:$0xff]
        %v190 = vld [vmem:[%s173 + $0x10] sm:$0xff]
        %v191 = vld [vmem:[%s173 + $0x18] sm:$0xff]
        %v192 = vld [vmem:[%s173 + $0x20] sm:$0xf]
        %v193 = vld [vmem:[%s179] sm:$0xff]
        %v194 = vld [vmem:[%s179 + $0x8] sm:$0xff]
        %v195 = vld [vmem:[%s179 + $0x10] sm:$0xff]
        %v196 = vld [vmem:[%s179 + $0x18] sm:$0xff]
        %v197 = vld [vmem:[%s179 + $0x20] sm:$0xff]
        %v198 = vld [vmem:[%s179 + $0x28] sm:$0xff]
        %v199 = vld [vmem:[%s179 + $0x30] sm:$0xff]
        %v200 = vld [vmem:[%s179 + $0x38] sm:$0xff]
        %v201 = vld [vmem:[%s179 + $0x40] sm:$0xff]
        %v202 = vld [vmem:[%s179 + $0x48] sm:$0xff]
        %v203 = vld [vmem:[%s179 + $0x50] sm:$0xff]
        %v204 = vld [vmem:[%s179 + $0x58] sm:$0xff]
        %v205 = vld [vmem:[%s179 + $0x60] sm:$0xff]
        %v206 = vld [vmem:[%s179 + $0x68] sm:$0xff]
        %v207 = vld [vmem:[%s179 + $0x70] sm:$0xff]
        %v208 = vld [vmem:[%s179 + $0x78] sm:$0xff]
        %v209 = vld [vmem:[%s179 + $0x80] sm:$0xff]
        %v210 = vld [vmem:[%s179 + $0x88] sm:$0xff]
        %v211 = vld [vmem:[%s179 + $0x90] sm:$0xff]
        %v212 = vld [vmem:[%s179 + $0x98] sm:$0xff]
        %v213 = vld [vmem:[%s179 + $0xa0] sm:$0xff]
        %v214 = vld [vmem:[%s179 + $0xa8] sm:$0xff]
        %v215 = vld [vmem:[%s179 + $0xb0] sm:$0xff]
        %v216 = vld [vmem:[%s179 + $0xb8] sm:$0xff]
        %v217 = vld [vmem:[%s179 + $0xc0] sm:$0xff]
        %v218 = vld [vmem:[%s179 + $0xc8] sm:$0xff]
        %v219 = vld [vmem:[%s179 + $0xd0] sm:$0xff]
        %v220 = vld [vmem:[%s179 + $0xd8] sm:$0xff]
        %v221 = vld [vmem:[%s179 + $0xe0] sm:$0xff]
        %v222 = vld [vmem:[%s179 + $0xe8] sm:$0xff]
        %v223 = vld [vmem:[%s179 + $0xf0] sm:$0xff]
        %v224 = vld [vmem:[%s179 + $0xf8] sm:$0xff]
        %v225 = vld [vmem:[%s179 + $0x100] sm:$0xff]
        %v226 = vld [vmem:[%s179 + $0x108] sm:$0xff]
        %v227 = vld [vmem:[%s179 + $0x110] sm:$0xff]
        %v228 = vld [vmem:[%s179 + $0x118] sm:$0xff]
        %v229 = vld [vmem:[%s179 + $0x120] sm:$0xff]
        %v230 = vld [vmem:[%s179 + $0x128] sm:$0xff]
        %v231 = vld [vmem:[%s179 + $0x130] sm:$0xff]
        %v232 = vld [vmem:[%s179 + $0x138] sm:$0xff]
        %v233 = vld [vmem:[%s179 + $0x140] sm:$0xff]
        %v234 = vld [vmem:[%s179 + $0x148] sm:$0xff]
        %v235 = vld [vmem:[%s179 + $0x150] sm:$0xff]
        %v236 = vld [vmem:[%s179 + $0x158] sm:$0xff]
        %v237 = vld [vmem:[%s179 + $0x160] sm:$0xff]
        %v238 = vld [vmem:[%s179 + $0x168] sm:$0xff]
        %v239 = vld [vmem:[%s179 + $0x170] sm:$0xff]
        %v240 = vld [vmem:[%s179 + $0x178] sm:$0xff]
        %v241 = vld [vmem:[%s179 + $0x180] sm:$0xff]
        %v242 = vld [vmem:[%s179 + $0x188] sm:$0xff]
        %v243 = vld [vmem:[%s179 + $0x190] sm:$0xff]
        %v244 = vld [vmem:[%s179 + $0x198] sm:$0xff]
        %v245 = vld [vmem:[%s179 + $0x1a0] sm:$0xff]
        %v246 = vld [vmem:[%s179 + $0x1a8] sm:$0xff]
        %v247 = vld [vmem:[%s179 + $0x1b0] sm:$0xff]
        %v248 = vld [vmem:[%s179 + $0x1b8] sm:$0xff]
        %v249 = vld [vmem:[%s179 + $0x1c0] sm:$0xff]
        %v250 = vld [vmem:[%s179 + $0x1c8] sm:$0xff]
        %v251 = vld [vmem:[%s179 + $0x1d0] sm:$0xff]
        %v252 = vld [vmem:[%s179 + $0x1d8] sm:$0xff]
        %v253 = vld [vmem:[%s179 + $0x1e0] sm:$0xff]
        %v254 = vld [vmem:[%s179 + $0x1e8] sm:$0xff]
        %v255 = vld [vmem:[%s179 + $0x1f0] sm:$0xff]
        %v256 = vld [vmem:[%s179 + $0x1f8] sm:$0xff]
        %v257 = vld [vmem:[%s179 + $0x200] sm:$0xff]
        %v258 = vld [vmem:[%s179 + $0x208] sm:$0xff]
        %v259 = vld [vmem:[%s179 + $0x210] sm:$0xff]
        %v260 = vld [vmem:[%s179 + $0x218] sm:$0xff]
        %v261 = vld [vmem:[%s179 + $0x220] sm:$0xff]
        %v262 = vld [vmem:[%s179 + $0x228] sm:$0xff]
        %v263 = vld [vmem:[%s179 + $0x230] sm:$0xff]
        %v264 = vld [vmem:[%s179 + $0x238] sm:$0xff]
        %v265 = vld [vmem:[%s179 + $0x240] sm:$0xff]
        %v266 = vld [vmem:[%s179 + $0x248] sm:$0xff]
        %v267 = vld [vmem:[%s179 + $0x250] sm:$0xff]
        %v268 = vld [vmem:[%s179 + $0x258] sm:$0xff]
        %v269 = vld [vmem:[%s179 + $0x260] sm:$0xff]
        %v270 = vld [vmem:[%s179 + $0x268] sm:$0xff]
        %v271 = vld [vmem:[%s179 + $0x270] sm:$0xff]
        %v272 = vld [vmem:[%s179 + $0x278] sm:$0xff]
        %v273 = vld [vmem:[%s179 + $0x280] sm:$0xff]
        %v274 = vld [vmem:[%s179 + $0x288] sm:$0xff]
        %v275 = vld [vmem:[%s179 + $0x290] sm:$0xff]
        %v276 = vld [vmem:[%s179 + $0x298] sm:$0xff]
        %v277 = vld [vmem:[%s179 + $0x2a0] sm:$0xff]
        %v278 = vld [vmem:[%s179 + $0x2a8] sm:$0xff]
        %v279 = vld [vmem:[%s179 + $0x2b0] sm:$0xff]
        %v280 = vld [vmem:[%s179 + $0x2b8] sm:$0xff]
        %v281 = vld [vmem:[%s179 + $0x2c0] sm:$0xff]
        %v282 = vld [vmem:[%s179 + $0x2c8] sm:$0xff]
        %v283 = vld [vmem:[%s179 + $0x2d0] sm:$0xff]
        %v284 = vld [vmem:[%s179 + $0x2d8] sm:$0xff]
        %v285 = vld [vmem:[%s179 + $0x2e0] sm:$0xff]
        %v286 = vld [vmem:[%s179 + $0x2e8] sm:$0xff]
        %v287 = vld [vmem:[%s179 + $0x2f0] sm:$0xff]
        %v288 = vld [vmem:[%s179 + $0x2f8] sm:$0xff]
        %v289 = vld [vmem:[%s179 + $0x300] sm:$0xff]
        %v290 = vld [vmem:[%s179 + $0x308] sm:$0xff]
        %v291 = vld [vmem:[%s179 + $0x310] sm:$0xff]
        %v292 = vld [vmem:[%s179 + $0x318] sm:$0xff]
        %v293 = vld [vmem:[%s179 + $0x320] sm:$0xff]
        %v294 = vld [vmem:[%s179 + $0x328] sm:$0xff]
        %v295 = vld [vmem:[%s179 + $0x330] sm:$0xff]
        %v296 = vld [vmem:[%s179 + $0x338] sm:$0xff]
        %v297 = vld [vmem:[%s179 + $0x340] sm:$0xff]
        %v298 = vld [vmem:[%s179 + $0x348] sm:$0xff]
        %v299 = vld [vmem:[%s179 + $0x350] sm:$0xff]
        %v300 = vld [vmem:[%s179 + $0x358] sm:$0xff]
        %v301 = vld [vmem:[%s179 + $0x360] sm:$0xff]
        %v302 = vld [vmem:[%s179 + $0x368] sm:$0xff]
        %v303 = vld [vmem:[%s179 + $0x370] sm:$0xff]
        %v304 = vld [vmem:[%s179 + $0x378] sm:$0xff]
        %v305 = vld [vmem:[%s179 + $0x380] sm:$0xff]
        %v306 = vld [vmem:[%s179 + $0x388] sm:$0xff]
        %v307 = vld [vmem:[%s179 + $0x390] sm:$0xff]
        %v308 = vld [vmem:[%s179 + $0x398] sm:$0xff]
        %v309 = vld [vmem:[%s179 + $0x3a0] sm:$0xff]
        %v310 = vld [vmem:[%s179 + $0x3a8] sm:$0xff]
        %v311 = vld [vmem:[%s179 + $0x3b0] sm:$0xff]
        %v312 = vld [vmem:[%s179 + $0x3b8] sm:$0xff]
        %v313 = vld [vmem:[%s179 + $0x3c0] sm:$0xff]
        %v314 = vld [vmem:[%s179 + $0x3c8] sm:$0xff]
        %v315 = vld [vmem:[%s179 + $0x3d0] sm:$0xff]
        %v316 = vld [vmem:[%s179 + $0x3d8] sm:$0xff]
        %v317 = vld [vmem:[%s179 + $0x3e0] sm:$0xff]
        %v318 = vld [vmem:[%s179 + $0x3e8] sm:$0xff]
        %v319 = vld [vmem:[%s179 + $0x3f0] sm:$0xff]
        %v320 = vld [vmem:[%s179 + $0x3f8] sm:$0xff]
        %v321 = vld [vmem:[%s179 + $0x400] sm:$0xff]
        %v322 = vld [vmem:[%s179 + $0x408] sm:$0xff]
        %v323 = vld [vmem:[%s179 + $0x410] sm:$0xff]
        %v324 = vld [vmem:[%s179 + $0x418] sm:$0xff]
        %v325 = vld [vmem:[%s179 + $0x420] sm:$0xff]
        %v326 = vld [vmem:[%s179 + $0x428] sm:$0xff]
        %v327 = vld [vmem:[%s179 + $0x430] sm:$0xff]
        %v328 = vld [vmem:[%s179 + $0x438] sm:$0xff]
        %v329 = vld [vmem:[%s179 + $0x440] sm:$0xff]
        %v330 = vld [vmem:[%s179 + $0x448] sm:$0xff]
        %v331 = vld [vmem:[%s179 + $0x450] sm:$0xff]
        %v332 = vld [vmem:[%s179 + $0x458] sm:$0xff]
        %v333 = vld [vmem:[%s179 + $0x460] sm:$0xff]
        %v334 = vld [vmem:[%s179 + $0x468] sm:$0xff]
        %v335 = vld [vmem:[%s179 + $0x470] sm:$0xff]
        %v336 = vld [vmem:[%s179 + $0x478] sm:$0xff]
        %v337 = vld [vmem:[%s179 + $0x480] sm:$0xff]
        %v338 = vld [vmem:[%s179 + $0x488] sm:$0xff]
        %v339 = vld [vmem:[%s179 + $0x490] sm:$0xff]
        %v340 = vld [vmem:[%s179 + $0x498] sm:$0xff]
        %v341 = vld [vmem:[%s179 + $0x4a0] sm:$0xff]
        %v342 = vld [vmem:[%s179 + $0x4a8] sm:$0xff]
        %v343 = vld [vmem:[%s179 + $0x4b0] sm:$0xff]
        %v344 = vld [vmem:[%s179 + $0x4b8] sm:$0xff]
        %v345 = vld [vmem:[%s179 + $0x4c0] sm:$0xff]
        %v346 = vld [vmem:[%s179 + $0x4c8] sm:$0xff]
        %v347 = vld [vmem:[%s179 + $0x4d0] sm:$0xff]
        %v348 = vld [vmem:[%s179 + $0x4d8] sm:$0xff]
        %v349 = vld [vmem:[%s179 + $0x4e0] sm:$0xff]
        %v350 = vld [vmem:[%s179 + $0x4e8] sm:$0xff]
        %v351 = vld [vmem:[%s179 + $0x4f0] sm:$0xff]
        %v352 = vld [vmem:[%s179 + $0x4f8] sm:$0xff]
        %v353 = vld [vmem:[%s179 + $0x500] sm:$0xff]
        %v354 = vld [vmem:[%s179 + $0x508] sm:$0xff]
        %v355 = vld [vmem:[%s179 + $0x510] sm:$0xff]
        %v356 = vld [vmem:[%s179 + $0x518] sm:$0xff]
        %v357 = vld [vmem:[%s179 + $0x520] sm:$0xff]
        %v358 = vld [vmem:[%s179 + $0x528] sm:$0xff]
        %v359 = vld [vmem:[%s179 + $0x530] sm:$0xff]
        %v360 = vld [vmem:[%s179 + $0x538] sm:$0xff]
        %v361 = vld [vmem:[%s179 + $0x540] sm:$0xff]
        %v362 = vld [vmem:[%s179 + $0x548] sm:$0xff]
        %v363 = vld [vmem:[%s179 + $0x550] sm:$0xff]
        %v364 = vld [vmem:[%s179 + $0x558] sm:$0xff]
        %v365 = vld [vmem:[%s179 + $0x560] sm:$0xff]
        %v366 = vld [vmem:[%s179 + $0x568] sm:$0xff]
        %v367 = vld [vmem:[%s179 + $0x570] sm:$0xff]
        %v368 = vld [vmem:[%s179 + $0x578] sm:$0xff]
        %v369 = vld [vmem:[%s179 + $0x580] sm:$0xff]
        %v370 = vld [vmem:[%s179 + $0x588] sm:$0xff]
        %v371 = vld [vmem:[%s179 + $0x590] sm:$0xff]
        %v372 = vld [vmem:[%s179 + $0x598] sm:$0xff]
        %v373 = vld [vmem:[%s179 + $0x5a0] sm:$0xff]
        %v374 = vld [vmem:[%s179 + $0x5a8] sm:$0xff]
        %v375 = vld [vmem:[%s179 + $0x5b0] sm:$0xff]
        %v376 = vld [vmem:[%s179 + $0x5b8] sm:$0xff]
        %v377 = vld [vmem:[%s179 + $0x5c0] sm:$0xff]
        %v378 = vld [vmem:[%s179 + $0x5c8] sm:$0xff]
        %v379 = vld [vmem:[%s179 + $0x5d0] sm:$0xff]
        %v380 = vld [vmem:[%s179 + $0x5d8] sm:$0xff]
        %v381 = vld [vmem:[%s179 + $0x5e0] sm:$0xff]
        %v382 = vld [vmem:[%s179 + $0x5e8] sm:$0xff]
        %v383 = vld [vmem:[%s179 + $0x5f0] sm:$0xff]
        %v384 = vld [vmem:[%s179 + $0x5f8] sm:$0xff]
        %v385 = vld [vmem:[%s179 + $0x600] sm:$0xff]
        %v386 = vld [vmem:[%s179 + $0x608] sm:$0xff]
        %v387 = vld [vmem:[%s179 + $0x610] sm:$0xff]
        %v388 = vld [vmem:[%s179 + $0x618] sm:$0xff]
        %v389 = vld [vmem:[%s179 + $0x620] sm:$0xff]
        %v390 = vld [vmem:[%s179 + $0x628] sm:$0xff]
        %v391 = vld [vmem:[%s179 + $0x630] sm:$0xff]
        %v392 = vld [vmem:[%s179 + $0x638] sm:$0xff]
        %v393 = vld [vmem:[%s179 + $0x640] sm:$0xff]
        %v394 = vld [vmem:[%s179 + $0x648] sm:$0xff]
        %v395 = vld [vmem:[%s179 + $0x650] sm:$0xff]
        %v396 = vld [vmem:[%s179 + $0x658] sm:$0xff]
        %v397 = vld [vmem:[%s179 + $0x660] sm:$0xff]
        %v398 = vld [vmem:[%s179 + $0x668] sm:$0xff]
        %v399 = vld [vmem:[%s179 + $0x670] sm:$0xff]
        %v400 = vld [vmem:[%s179 + $0x678] sm:$0xff]
        %v401 = vld [vmem:[%s179 + $0x680] sm:$0xff]
        %v402 = vld [vmem:[%s179 + $0x688] sm:$0xff]
        %v403 = vld [vmem:[%s179 + $0x690] sm:$0xff]
        %v404 = vld [vmem:[%s179 + $0x698] sm:$0xff]
        %v405 = vld [vmem:[%s179 + $0x6a0] sm:$0xff]
        %v406 = vld [vmem:[%s179 + $0x6a8] sm:$0xff]
        %v407 = vld [vmem:[%s179 + $0x6b0] sm:$0xff]
        %v408 = vld [vmem:[%s179 + $0x6b8] sm:$0xff]
        %v409 = vld [vmem:[%s179 + $0x6c0] sm:$0xff]
        %v410 = vld [vmem:[%s179 + $0x6c8] sm:$0xff]
        %v411 = vld [vmem:[%s179 + $0x6d0] sm:$0xff]
        %v412 = vld [vmem:[%s179 + $0x6d8] sm:$0xff]
        %v413 = vld [vmem:[%s179 + $0x6e0] sm:$0xff]
        %v414 = vld [vmem:[%s179 + $0x6e8] sm:$0xff]
        %v415 = vld [vmem:[%s179 + $0x6f0] sm:$0xff]
        %v416 = vld [vmem:[%s179 + $0x6f8] sm:$0xff]
        %v417 = vld [vmem:[%s179 + $0x700] sm:$0xff]
        %v418 = vld [vmem:[%s179 + $0x708] sm:$0xff]
        %v419 = vld [vmem:[%s179 + $0x710] sm:$0xff]
        %v420 = vld [vmem:[%s179 + $0x718] sm:$0xff]
        %v421 = vld [vmem:[%s179 + $0x720] sm:$0xff]
        %v422 = vld [vmem:[%s179 + $0x728] sm:$0xff]
        %v423 = vld [vmem:[%s179 + $0x730] sm:$0xff]
        %v424 = vld [vmem:[%s179 + $0x738] sm:$0xff]
        %v425 = vld [vmem:[%s179 + $0x740] sm:$0xff]
        %v426 = vld [vmem:[%s179 + $0x748] sm:$0xff]
        %v427 = vld [vmem:[%s179 + $0x750] sm:$0xff]
        %v428 = vld [vmem:[%s179 + $0x758] sm:$0xff]
        %v429 = vld [vmem:[%s179 + $0x760] sm:$0xff]
        %v430 = vld [vmem:[%s179 + $0x768] sm:$0xff]
        %v431 = vld [vmem:[%s179 + $0x770] sm:$0xff]
        %v432 = vld [vmem:[%s179 + $0x778] sm:$0xff]
        %v433 = vld [vmem:[%s179 + $0x780] sm:$0xff]
        %v434 = vld [vmem:[%s179 + $0x788] sm:$0xff]
        %v435 = vld [vmem:[%s179 + $0x790] sm:$0xff]
        %v436 = vld [vmem:[%s179 + $0x798] sm:$0xff]
        %v437 = vld [vmem:[%s179 + $0x7a0] sm:$0xff]
        %v438 = vld [vmem:[%s179 + $0x7a8] sm:$0xff]
        %v439 = vld [vmem:[%s179 + $0x7b0] sm:$0xff]
        %v440 = vld [vmem:[%s179 + $0x7b8] sm:$0xff]
        %v441 = vld [vmem:[%s179 + $0x7c0] sm:$0xff]
        %v442 = vld [vmem:[%s179 + $0x7c8] sm:$0xff]
        %v443 = vld [vmem:[%s179 + $0x7d0] sm:$0xff]
        %v444 = vld [vmem:[%s179 + $0x7d8] sm:$0xff]
        %v445 = vld [vmem:[%s179 + $0x7e0] sm:$0xff]
        %v446 = vld [vmem:[%s179 + $0x7e8] sm:$0xff]
        %v447 = vld [vmem:[%s179 + $0x7f0] sm:$0xff]
        %v448 = vld [vmem:[%s179 + $0x7f8] sm:$0xff]
        %v449 = vld [vmem:[%s179 + $0x800] sm:$0xff]
        %v450 = vld [vmem:[%s179 + $0x808] sm:$0xff]
        %v451 = vld [vmem:[%s179 + $0x810] sm:$0xff]
        %v452 = vld [vmem:[%s179 + $0x818] sm:$0xff]
        %v453 = vld [vmem:[%s179 + $0x820] sm:$0xff]
        %v454 = vld [vmem:[%s179 + $0x828] sm:$0xff]
        %v455 = vld [vmem:[%s179 + $0x830] sm:$0xff]
        %v456 = vld [vmem:[%s179 + $0x838] sm:$0xff]
        %v457 = vld [vmem:[%s179 + $0x840] sm:$0xff]
        %v458 = vld [vmem:[%s179 + $0x848] sm:$0xff]
        %v459 = vld [vmem:[%s179 + $0x850] sm:$0xff]
        %v460 = vld [vmem:[%s179 + $0x858] sm:$0xff]
        %v461 = vld [vmem:[%s179 + $0x860] sm:$0xff]
        %v462 = vld [vmem:[%s179 + $0x868] sm:$0xff]
        %v463 = vld [vmem:[%s179 + $0x870] sm:$0xff]
        %v464 = vld [vmem:[%s179 + $0x878] sm:$0xff]
        %v465 = vld [vmem:[%s179 + $0x880] sm:$0xff]
        %v466 = vld [vmem:[%s179 + $0x888] sm:$0xff]
        %v467 = vld [vmem:[%s179 + $0x890] sm:$0xff]
        %v468 = vld [vmem:[%s179 + $0x898] sm:$0xff]
        %v469 = vld [vmem:[%s179 + $0x8a0] sm:$0xff]
        %v470 = vld [vmem:[%s179 + $0x8a8] sm:$0xff]
        %v471 = vld [vmem:[%s179 + $0x8b0] sm:$0xff]
        %v472 = vld [vmem:[%s179 + $0x8b8] sm:$0xff]
        %v473 = vld [vmem:[%s179 + $0x8c0] sm:$0xff]
        %v474 = vld [vmem:[%s179 + $0x8c8] sm:$0xff]
        %v475 = vld [vmem:[%s179 + $0x8d0] sm:$0xff]
        %v476 = vld [vmem:[%s179 + $0x8d8] sm:$0xff]
        %v477 = vld [vmem:[%s179 + $0x8e0] sm:$0xff]
        %v478 = vld [vmem:[%s179 + $0x8e8] sm:$0xff]
        %v479 = vld [vmem:[%s179 + $0x8f0] sm:$0xff]
        %v480 = vld [vmem:[%s179 + $0x8f8] sm:$0xff]
        %v486 = vcombine.high %v188, %v188
        %v488 = vunpack.c.l.s4 1983009808
        %v489 = vunpack.c.0.s8 %v488
        %v490 = vlaneseq
        %v491 = vshrl.u32 %v490, 7
        %v492 = vsub.s32 %v489, %v491
        %v493 = vrot.slane %v188, %v492
        %v495 = vunpack.c.l.s4 1983009808
        %v496 = vunpack.c.0.s8 %v495
        %v497 = vlaneseq
        %v498 = vshrl.u32 %v497, 7
        %v499 = vsub.s32 %v496, %v498
        %v500 = vrot.slane %v486, %v499
        %v501 = vcombine.high %v493, %v493
        %v502 = vcombine.high %v500, %v500
        %v503 = vcombine.high %v189, %v189
        %v505 = vunpack.c.l.s4 1983009808
        %v506 = vunpack.c.0.s8 %v505
        %v507 = vlaneseq
        %v508 = vshrl.u32 %v507, 7
        %v509 = vsub.s32 %v506, %v508
        %v510 = vrot.slane %v189, %v509
        %v512 = vunpack.c.l.s4 1983009808
        %v513 = vunpack.c.0.s8 %v512
        %v514 = vlaneseq
        %v515 = vshrl.u32 %v514, 7
        %v516 = vsub.s32 %v513, %v515
        %v517 = vrot.slane %v503, %v516
        %v518 = vcombine.high %v510, %v510
        %v519 = vcombine.high %v517, %v517
        %v520 = vcombine.high %v190, %v190
        %v522 = vunpack.c.l.s4 1983009808
        %v523 = vunpack.c.0.s8 %v522
        %v524 = vlaneseq
        %v525 = vshrl.u32 %v524, 7
        %v526 = vsub.s32 %v523, %v525
        %v527 = vrot.slane %v190, %v526
        %v529 = vunpack.c.l.s4 1983009808
        %v530 = vunpack.c.0.s8 %v529
        %v531 = vlaneseq
        %v532 = vshrl.u32 %v531, 7
        %v533 = vsub.s32 %v530, %v532
        %v534 = vrot.slane %v520, %v533
        %v535 = vcombine.high %v527, %v527
        %v536 = vcombine.high %v534, %v534
        %v537 = vcombine.high %v191, %v191
        %v539 = vunpack.c.l.s4 1983009808
        %v540 = vunpack.c.0.s8 %v539
        %v541 = vlaneseq
        %v542 = vshrl.u32 %v541, 7
        %v543 = vsub.s32 %v540, %v542
        %v544 = vrot.slane %v191, %v543
        %v546 = vunpack.c.l.s4 1983009808
        %v547 = vunpack.c.0.s8 %v546
        %v548 = vlaneseq
        %v549 = vshrl.u32 %v548, 7
        %v550 = vsub.s32 %v547, %v549
        %v551 = vrot.slane %v537, %v550
        %v552 = vcombine.high %v544, %v544
        %v553 = vcombine.high %v551, %v551
        %v555 = vunpack.c.l.s4 1983009808
        %v556 = vunpack.c.0.s8 %v555
        %v557 = vlaneseq
        %v558 = vshrl.u32 %v557, 7
        %v559 = vsub.s32 %v556, %v558
        %v560 = vrot.slane %v192, %v559
        %v561 = vcombine.high %v560, %v560
        %580 = vmatprep.subr.mxu0 0.0
        %581 = vmatpush1.msra.mxu0 %v193
        %582 = vmatprep.subr.mxu0 0.0
        %583 = vmatpush1.msra.mxu0 %v194
        %584 = vmatprep.subr.mxu0 0.0
        %585 = vmatpush1.msra.mxu0 %v195
        %586 = vmatprep.subr.mxu0 0.0
        %587 = vmatpush1.msra.mxu0 %v196
        %588 = vmatprep.subr.mxu0 0.0
        %589 = vmatpush1.msra.mxu0 %v197
        %590 = vmatprep.subr.mxu0 0.0
        %591 = vmatpush1.msra.mxu0 %v198
        %592 = vmatprep.subr.mxu0 0.0
        %593 = vmatpush1.msra.mxu0 %v199
        %594 = vmatprep.subr.mxu0 0.0
        %595 = vmatpush1.msra.mxu0 %v200
        %596 = vmatprep.subr.mxu0 0.0
        %597 = vmatpush1.msra.mxu0 %v201
        %598 = vmatprep.subr.mxu0 0.0
        %599 = vmatpush1.msra.mxu0 %v202
        %600 = vmatprep.subr.mxu0 0.0
        %601 = vmatpush1.msra.mxu0 %v203
        %602 = vmatprep.subr.mxu0 0.0
        %603 = vmatpush1.msra.mxu0 %v204
        %604 = vmatprep.subr.mxu0 0.0
        %605 = vmatpush1.msra.mxu0 %v205
        %606 = vmatprep.subr.mxu0 0.0
        %607 = vmatpush1.msra.mxu0 %v206
        %608 = vmatprep.subr.mxu0 0.0
        %609 = vmatpush1.msra.mxu0 %v207
        %610 = vmatprep.subr.mxu0 0.0
        %611 = vmatpush1.msra.mxu0 %v208
        %612 = vmatprep.subr.mxu0 0.0
        %613 = vmatpush1.msra.mxu0 %v209
        %614 = vmatprep.subr.mxu0 0.0
        %615 = vmatpush1.msra.mxu0 %v210
        %616 = vmatprep.subr.mxu0 0.0
        %617 = vmatpush1.msra.mxu0 %v211
        %618 = vmatprep.subr.mxu0 0.0
        %619 = vmatpush1.msra.mxu0 %v212
        %620 = vmatprep.subr.mxu0 0.0
        %621 = vmatpush1.msra.mxu0 %v213
        %622 = vmatprep.subr.mxu0 0.0
        %623 = vmatpush1.msra.mxu0 %v214
        %624 = vmatprep.subr.mxu0 0.0
        %625 = vmatpush1.msra.mxu0 %v215
        %626 = vmatprep.subr.mxu0 0.0
        %627 = vmatpush1.msra.mxu0 %v216
        %628 = vmatprep.subr.mxu0 0.0
        %629 = vmatpush1.msra.mxu0 %v217
        %630 = vmatprep.subr.mxu0 0.0
        %631 = vmatpush1.msra.mxu0 %v218
        %632 = vmatprep.subr.mxu0 0.0
        %633 = vmatpush1.msra.mxu0 %v219
        %634 = vmatprep.subr.mxu0 0.0
        %635 = vmatpush1.msra.mxu0 %v220
        %636 = vmatprep.subr.mxu0 0.0
        %637 = vmatpush1.msra.mxu0 %v221
        %638 = vmatprep.subr.mxu0 0.0
        %639 = vmatpush1.msra.mxu0 %v222
        %640 = vmatprep.subr.mxu0 0.0
        %641 = vmatpush1.msra.mxu0 %v223
        %642 = vmatprep.subr.mxu0 0.0
        %643 = vmatpush1.msra.mxu0 %v224
        %644 = vmatprep.mubr.f32.mxu0 %v501
        %645 = vmatmul.mubr.f32.gmra.mrb[0].mxu0 %v493
        %v646 = vpop.f32.mrb[0].mxu0
        %v647 = vadd.f32 0.0, %v646
        %v648 = vpop.f32.mrb[0].mxu0
        %649 = vdwg.mxu0
        %650 = vmatprep.subr.mxu0 0.0
        %651 = vmatpush1.msra.mxu0 %v225
        %652 = vmatprep.subr.mxu0 0.0
        %653 = vmatpush1.msra.mxu0 %v226
        %654 = vmatprep.subr.mxu0 0.0
        %655 = vmatpush1.msra.mxu0 %v227
        %656 = vmatprep.subr.mxu0 0.0
        %657 = vmatpush1.msra.mxu0 %v228
        %658 = vmatprep.subr.mxu0 0.0
        %659 = vmatpush1.msra.mxu0 %v229
        %660 = vmatprep.subr.mxu0 0.0
        %661 = vmatpush1.msra.mxu0 %v230
        %662 = vmatprep.subr.mxu0 0.0
        %663 = vmatpush1.msra.mxu0 %v231
        %664 = vmatprep.subr.mxu0 0.0
        %665 = vmatpush1.msra.mxu0 %v232
        %666 = vmatprep.subr.mxu0 0.0
        %667 = vmatpush1.msra.mxu0 %v233
        %668 = vmatprep.subr.mxu0 0.0
        %669 = vmatpush1.msra.mxu0 %v234
        %670 = vmatprep.subr.mxu0 0.0
        %671 = vmatpush1.msra.mxu0 %v235
        %672 = vmatprep.subr.mxu0 0.0
        %673 = vmatpush1.msra.mxu0 %v236
        %674 = vmatprep.subr.mxu0 0.0
        %675 = vmatpush1.msra.mxu0 %v237
        %676 = vmatprep.subr.mxu0 0.0
        %677 = vmatpush1.msra.mxu0 %v238
        %678 = vmatprep.subr.mxu0 0.0
        %679 = vmatpush1.msra.mxu0 %v239
        %680 = vmatprep.subr.mxu0 0.0
        %681 = vmatpush1.msra.mxu0 %v240
        %682 = vmatprep.subr.mxu0 0.0
        %683 = vmatpush1.msra.mxu0 %v241
        %684 = vmatprep.subr.mxu0 0.0
        %685 = vmatpush1.msra.mxu0 %v242
        %686 = vmatprep.subr.mxu0 0.0
        %687 = vmatpush1.msra.mxu0 %v243
        %688 = vmatprep.subr.mxu0 0.0
        %689 = vmatpush1.msra.mxu0 %v244
        %690 = vmatprep.subr.mxu0 0.0
        %691 = vmatpush1.msra.mxu0 %v245
        %692 = vmatprep.subr.mxu0 0.0
        %693 = vmatpush1.msra.mxu0 %v246
        %694 = vmatprep.subr.mxu0 0.0
        %695 = vmatpush1.msra.mxu0 %v247
        %696 = vmatprep.subr.mxu0 0.0
        %697 = vmatpush1.msra.mxu0 %v248
        %698 = vmatprep.subr.mxu0 0.0
        %699 = vmatpush1.msra.mxu0 %v249
        %700 = vmatprep.subr.mxu0 0.0
        %701 = vmatpush1.msra.mxu0 %v250
        %702 = vmatprep.subr.mxu0 0.0
        %703 = vmatpush1.msra.mxu0 %v251
        %704 = vmatprep.subr.mxu0 0.0
        %705 = vmatpush1.msra.mxu0 %v252
        %706 = vmatprep.subr.mxu0 0.0
        %707 = vmatpush1.msra.mxu0 %v253
        %708 = vmatprep.subr.mxu0 0.0
        %709 = vmatpush1.msra.mxu0 %v254
        %710 = vmatprep.subr.mxu0 0.0
        %711 = vmatpush1.msra.mxu0 %v255
        %712 = vmatprep.subr.mxu0 0.0
        %713 = vmatpush1.msra.mxu0 %v256
        %714 = vmatprep.mubr.f32.mxu0 %v502
        %715 = vmatmul.mubr.f32.gmra.mrb[0].mxu0 %v500
        %v716 = vpop.f32.mrb[0].mxu0
        %v717 = vadd.f32 %v647, %v716
        %v718 = vpop.f32.mrb[0].mxu0
        %719 = vdwg.mxu0
        %720 = vmatprep.subr.mxu0 0.0
        %721 = vmatpush1.msra.mxu0 %v257
        %722 = vmatprep.subr.mxu0 0.0
        %723 = vmatpush1.msra.mxu0 %v258
        %724 = vmatprep.subr.mxu0 0.0
        %725 = vmatpush1.msra.mxu0 %v259
        %726 = vmatprep.subr.mxu0 0.0
        %727 = vmatpush1.msra.mxu0 %v260
        %728 = vmatprep.subr.mxu0 0.0
        %729 = vmatpush1.msra.mxu0 %v261
        %730 = vmatprep.subr.mxu0 0.0
        %731 = vmatpush1.msra.mxu0 %v262
        %732 = vmatprep.subr.mxu0 0.0
        %733 = vmatpush1.msra.mxu0 %v263
        %734 = vmatprep.subr.mxu0 0.0
        %735 = vmatpush1.msra.mxu0 %v264
        %736 = vmatprep.subr.mxu0 0.0
        %737 = vmatpush1.msra.mxu0 %v265
        %738 = vmatprep.subr.mxu0 0.0
        %739 = vmatpush1.msra.mxu0 %v266
        %740 = vmatprep.subr.mxu0 0.0
        %741 = vmatpush1.msra.mxu0 %v267
        %742 = vmatprep.subr.mxu0 0.0
        %743 = vmatpush1.msra.mxu0 %v268
        %744 = vmatprep.subr.mxu0 0.0
        %745 = vmatpush1.msra.mxu0 %v269
        %746 = vmatprep.subr.mxu0 0.0
        %747 = vmatpush1.msra.mxu0 %v270
        %748 = vmatprep.subr.mxu0 0.0
        %749 = vmatpush1.msra.mxu0 %v271
        %750 = vmatprep.subr.mxu0 0.0
        %751 = vmatpush1.msra.mxu0 %v272
        %752 = vmatprep.subr.mxu0 0.0
        %753 = vmatpush1.msra.mxu0 %v273
        %754 = vmatprep.subr.mxu0 0.0
        %755 = vmatpush1.msra.mxu0 %v274
        %756 = vmatprep.subr.mxu0 0.0
        %757 = vmatpush1.msra.mxu0 %v275
        %758 = vmatprep.subr.mxu0 0.0
        %759 = vmatpush1.msra.mxu0 %v276
        %760 = vmatprep.subr.mxu0 0.0
        %761 = vmatpush1.msra.mxu0 %v277
        %762 = vmatprep.subr.mxu0 0.0
        %763 = vmatpush1.msra.mxu0 %v278
        %764 = vmatprep.subr.mxu0 0.0
        %765 = vmatpush1.msra.mxu0 %v279
        %766 = vmatprep.subr.mxu0 0.0
        %767 = vmatpush1.msra.mxu0 %v280
        %768 = vmatprep.subr.mxu0 0.0
        %769 = vmatpush1.msra.mxu0 %v281
        %770 = vmatprep.subr.mxu0 0.0
        %771 = vmatpush1.msra.mxu0 %v282
        %772 = vmatprep.subr.mxu0 0.0
        %773 = vmatpush1.msra.mxu0 %v283
        %774 = vmatprep.subr.mxu0 0.0
        %775 = vmatpush1.msra.mxu0 %v284
        %776 = vmatprep.subr.mxu0 0.0
        %777 = vmatpush1.msra.mxu0 %v285
        %778 = vmatprep.subr.mxu0 0.0
        %779 = vmatpush1.msra.mxu0 %v286
        %780 = vmatprep.subr.mxu0 0.0
        %781 = vmatpush1.msra.mxu0 %v287
        %782 = vmatprep.subr.mxu0 0.0
        %783 = vmatpush1.msra.mxu0 %v288
        %784 = vmatprep.mubr.f32.mxu0 %v518
        %785 = vmatmul.mubr.f32.gmra.mrb[0].mxu0 %v510
        %v786 = vpop.f32.mrb[0].mxu0
        %v787 = vadd.f32 %v717, %v786
        %v788 = vpop.f32.mrb[0].mxu0
        %789 = vdwg.mxu0
        %790 = vmatprep.subr.mxu0 0.0
        %791 = vmatpush1.msra.mxu0 %v289
        %792 = vmatprep.subr.mxu0 0.0
        %793 = vmatpush1.msra.mxu0 %v290
        %794 = vmatprep.subr.mxu0 0.0
        %795 = vmatpush1.msra.mxu0 %v291
        %796 = vmatprep.subr.mxu0 0.0
        %797 = vmatpush1.msra.mxu0 %v292
        %798 = vmatprep.subr.mxu0 0.0
        %799 = vmatpush1.msra.mxu0 %v293
        %800 = vmatprep.subr.mxu0 0.0
        %801 = vmatpush1.msra.mxu0 %v294
        %802 = vmatprep.subr.mxu0 0.0
        %803 = vmatpush1.msra.mxu0 %v295
        %804 = vmatprep.subr.mxu0 0.0
        %805 = vmatpush1.msra.mxu0 %v296
        %806 = vmatprep.subr.mxu0 0.0
        %807 = vmatpush1.msra.mxu0 %v297
        %808 = vmatprep.subr.mxu0 0.0
        %809 = vmatpush1.msra.mxu0 %v298
        %810 = vmatprep.subr.mxu0 0.0
        %811 = vmatpush1.msra.mxu0 %v299
        %812 = vmatprep.subr.mxu0 0.0
        %813 = vmatpush1.msra.mxu0 %v300
        %814 = vmatprep.subr.mxu0 0.0
        %815 = vmatpush1.msra.mxu0 %v301
        %816 = vmatprep.subr.mxu0 0.0
        %817 = vmatpush1.msra.mxu0 %v302
        %818 = vmatprep.subr.mxu0 0.0
        %819 = vmatpush1.msra.mxu0 %v303
        %820 = vmatprep.subr.mxu0 0.0
        %821 = vmatpush1.msra.mxu0 %v304
        %822 = vmatprep.subr.mxu0 0.0
        %823 = vmatpush1.msra.mxu0 %v305
        %824 = vmatprep.subr.mxu0 0.0
        %825 = vmatpush1.msra.mxu0 %v306
        %826 = vmatprep.subr.mxu0 0.0
        %827 = vmatpush1.msra.mxu0 %v307
        %828 = vmatprep.subr.mxu0 0.0
        %829 = vmatpush1.msra.mxu0 %v308
        %830 = vmatprep.subr.mxu0 0.0
        %831 = vmatpush1.msra.mxu0 %v309
        %832 = vmatprep.subr.mxu0 0.0
        %833 = vmatpush1.msra.mxu0 %v310
        %834 = vmatprep.subr.mxu0 0.0
        %835 = vmatpush1.msra.mxu0 %v311
        %836 = vmatprep.subr.mxu0 0.0
        %837 = vmatpush1.msra.mxu0 %v312
        %838 = vmatprep.subr.mxu0 0.0
        %839 = vmatpush1.msra.mxu0 %v313
        %840 = vmatprep.subr.mxu0 0.0
        %841 = vmatpush1.msra.mxu0 %v314
        %842 = vmatprep.subr.mxu0 0.0
        %843 = vmatpush1.msra.mxu0 %v315
        %844 = vmatprep.subr.mxu0 0.0
        %845 = vmatpush1.msra.mxu0 %v316
        %846 = vmatprep.subr.mxu0 0.0
        %847 = vmatpush1.msra.mxu0 %v317
        %848 = vmatprep.subr.mxu0 0.0
        %849 = vmatpush1.msra.mxu0 %v318
        %850 = vmatprep.subr.mxu0 0.0
        %851 = vmatpush1.msra.mxu0 %v319
        %852 = vmatprep.subr.mxu0 0.0
        %853 = vmatpush1.msra.mxu0 %v320
        %854 = vmatprep.mubr.f32.mxu0 %v519
        %855 = vmatmul.mubr.f32.gmra.mrb[0].mxu0 %v517
        %v856 = vpop.f32.mrb[0].mxu0
        %v857 = vadd.f32 %v787, %v856
        %v858 = vpop.f32.mrb[0].mxu0
        %859 = vdwg.mxu0
        %860 = vmatprep.subr.mxu0 0.0
        %861 = vmatpush1.msra.mxu0 %v321
        %862 = vmatprep.subr.mxu0 0.0
        %863 = vmatpush1.msra.mxu0 %v322
        %864 = vmatprep.subr.mxu0 0.0
        %865 = vmatpush1.msra.mxu0 %v323
        %866 = vmatprep.subr.mxu0 0.0
        %867 = vmatpush1.msra.mxu0 %v324
        %868 = vmatprep.subr.mxu0 0.0
        %869 = vmatpush1.msra.mxu0 %v325
        %870 = vmatprep.subr.mxu0 0.0
        %871 = vmatpush1.msra.mxu0 %v326
        %872 = vmatprep.subr.mxu0 0.0
        %873 = vmatpush1.msra.mxu0 %v327
        %874 = vmatprep.subr.mxu0 0.0
        %875 = vmatpush1.msra.mxu0 %v328
        %876 = vmatprep.subr.mxu0 0.0
        %877 = vmatpush1.msra.mxu0 %v329
        %878 = vmatprep.subr.mxu0 0.0
        %879 = vmatpush1.msra.mxu0 %v330
        %880 = vmatprep.subr.mxu0 0.0
        %881 = vmatpush1.msra.mxu0 %v331
        %882 = vmatprep.subr.mxu0 0.0
        %883 = vmatpush1.msra.mxu0 %v332
        %884 = vmatprep.subr.mxu0 0.0
        %885 = vmatpush1.msra.mxu0 %v333
        %886 = vmatprep.subr.mxu0 0.0
        %887 = vmatpush1.msra.mxu0 %v334
        %888 = vmatprep.subr.mxu0 0.0
        %889 = vmatpush1.msra.mxu0 %v335
        %890 = vmatprep.subr.mxu0 0.0
        %891 = vmatpush1.msra.mxu0 %v336
        %892 = vmatprep.subr.mxu0 0.0
        %893 = vmatpush1.msra.mxu0 %v337
        %894 = vmatprep.subr.mxu0 0.0
        %895 = vmatpush1.msra.mxu0 %v338
        %896 = vmatprep.subr.mxu0 0.0
        %897 = vmatpush1.msra.mxu0 %v339
        %898 = vmatprep.subr.mxu0 0.0
        %899 = vmatpush1.msra.mxu0 %v340
        %900 = vmatprep.subr.mxu0 0.0
        %901 = vmatpush1.msra.mxu0 %v341
        %902 = vmatprep.subr.mxu0 0.0
        %903 = vmatpush1.msra.mxu0 %v342
        %904 = vmatprep.subr.mxu0 0.0
        %905 = vmatpush1.msra.mxu0 %v343
        %906 = vmatprep.subr.mxu0 0.0
        %907 = vmatpush1.msra.mxu0 %v344
        %908 = vmatprep.subr.mxu0 0.0
        %909 = vmatpush1.msra.mxu0 %v345
        %910 = vmatprep.subr.mxu0 0.0
        %911 = vmatpush1.msra.mxu0 %v346
        %912 = vmatprep.subr.mxu0 0.0
        %913 = vmatpush1.msra.mxu0 %v347
        %914 = vmatprep.subr.mxu0 0.0
        %915 = vmatpush1.msra.mxu0 %v348
        %916 = vmatprep.subr.mxu0 0.0
        %917 = vmatpush1.msra.mxu0 %v349
        %918 = vmatprep.subr.mxu0 0.0
        %919 = vmatpush1.msra.mxu0 %v350
        %920 = vmatprep.subr.mxu0 0.0
        %921 = vmatpush1.msra.mxu0 %v351
        %922 = vmatprep.subr.mxu0 0.0
        %923 = vmatpush1.msra.mxu0 %v352
        %924 = vmatprep.mubr.f32.mxu0 %v535
        %925 = vmatmul.mubr.f32.gmra.mrb[0].mxu0 %v527
        %v926 = vpop.f32.mrb[0].mxu0
        %v927 = vadd.f32 %v857, %v926
        %v928 = vpop.f32.mrb[0].mxu0
        %929 = vdwg.mxu0
        %930 = vmatprep.subr.mxu0 0.0
        %931 = vmatpush1.msra.mxu0 %v353
        %932 = vmatprep.subr.mxu0 0.0
        %933 = vmatpush1.msra.mxu0 %v354
        %934 = vmatprep.subr.mxu0 0.0
        %935 = vmatpush1.msra.mxu0 %v355
        %936 = vmatprep.subr.mxu0 0.0
        %937 = vmatpush1.msra.mxu0 %v356
        %938 = vmatprep.subr.mxu0 0.0
        %939 = vmatpush1.msra.mxu0 %v357
        %940 = vmatprep.subr.mxu0 0.0
        %941 = vmatpush1.msra.mxu0 %v358
        %942 = vmatprep.subr.mxu0 0.0
        %943 = vmatpush1.msra.mxu0 %v359
        %944 = vmatprep.subr.mxu0 0.0
        %945 = vmatpush1.msra.mxu0 %v360
        %946 = vmatprep.subr.mxu0 0.0
        %947 = vmatpush1.msra.mxu0 %v361
        %948 = vmatprep.subr.mxu0 0.0
        %949 = vmatpush1.msra.mxu0 %v362
        %950 = vmatprep.subr.mxu0 0.0
        %951 = vmatpush1.msra.mxu0 %v363
        %952 = vmatprep.subr.mxu0 0.0
        %953 = vmatpush1.msra.mxu0 %v364
        %954 = vmatprep.subr.mxu0 0.0
        %955 = vmatpush1.msra.mxu0 %v365
        %956 = vmatprep.subr.mxu0 0.0
        %957 = vmatpush1.msra.mxu0 %v366
        %958 = vmatprep.subr.mxu0 0.0
        %959 = vmatpush1.msra.mxu0 %v367
        %960 = vmatprep.subr.mxu0 0.0
        %961 = vmatpush1.msra.mxu0 %v368
        %962 = vmatprep.subr.mxu0 0.0
        %963 = vmatpush1.msra.mxu0 %v369
        %964 = vmatprep.subr.mxu0 0.0
        %965 = vmatpush1.msra.mxu0 %v370
        %966 = vmatprep.subr.mxu0 0.0
        %967 = vmatpush1.msra.mxu0 %v371
        %968 = vmatprep.subr.mxu0 0.0
        %969 = vmatpush1.msra.mxu0 %v372
        %970 = vmatprep.subr.mxu0 0.0
        %971 = vmatpush1.msra.mxu0 %v373
        %972 = vmatprep.subr.mxu0 0.0
        %973 = vmatpush1.msra.mxu0 %v374
        %974 = vmatprep.subr.mxu0 0.0
        %975 = vmatpush1.msra.mxu0 %v375
        %976 = vmatprep.subr.mxu0 0.0
        %977 = vmatpush1.msra.mxu0 %v376
        %978 = vmatprep.subr.mxu0 0.0
        %979 = vmatpush1.msra.mxu0 %v377
        %980 = vmatprep.subr.mxu0 0.0
        %981 = vmatpush1.msra.mxu0 %v378
        %982 = vmatprep.subr.mxu0 0.0
        %983 = vmatpush1.msra.mxu0 %v379
        %984 = vmatprep.subr.mxu0 0.0
        %985 = vmatpush1.msra.mxu0 %v380
        %986 = vmatprep.subr.mxu0 0.0
        %987 = vmatpush1.msra.mxu0 %v381
        %988 = vmatprep.subr.mxu0 0.0
        %989 = vmatpush1.msra.mxu0 %v382
        %990 = vmatprep.subr.mxu0 0.0
        %991 = vmatpush1.msra.mxu0 %v383
        %992 = vmatprep.subr.mxu0 0.0
        %993 = vmatpush1.msra.mxu0 %v384
        %994 = vmatprep.mubr.f32.mxu0 %v536
        %995 = vmatmul.mubr.f32.gmra.mrb[0].mxu0 %v534
        %v996 = vpop.f32.mrb[0].mxu0
        %v997 = vadd.f32 %v927, %v996
        %v998 = vpop.f32.mrb[0].mxu0
        %999 = vdwg.mxu0
        %1000 = vmatprep.subr.mxu0 0.0
        %1001 = vmatpush1.msra.mxu0 %v385
        %1002 = vmatprep.subr.mxu0 0.0
        %1003 = vmatpush1.msra.mxu0 %v386
        %1004 = vmatprep.subr.mxu0 0.0
        %1005 = vmatpush1.msra.mxu0 %v387
        %1006 = vmatprep.subr.mxu0 0.0
        %1007 = vmatpush1.msra.mxu0 %v388
        %1008 = vmatprep.subr.mxu0 0.0
        %1009 = vmatpush1.msra.mxu0 %v389
        %1010 = vmatprep.subr.mxu0 0.0
        %1011 = vmatpush1.msra.mxu0 %v390
        %1012 = vmatprep.subr.mxu0 0.0
        %1013 = vmatpush1.msra.mxu0 %v391
        %1014 = vmatprep.subr.mxu0 0.0
        %1015 = vmatpush1.msra.mxu0 %v392
        %1016 = vmatprep.subr.mxu0 0.0
        %1017 = vmatpush1.msra.mxu0 %v393
        %1018 = vmatprep.subr.mxu0 0.0
        %1019 = vmatpush1.msra.mxu0 %v394
        %1020 = vmatprep.subr.mxu0 0.0
        %1021 = vmatpush1.msra.mxu0 %v395
        %1022 = vmatprep.subr.mxu0 0.0
        %1023 = vmatpush1.msra.mxu0 %v396
        %1024 = vmatprep.subr.mxu0 0.0
        %1025 = vmatpush1.msra.mxu0 %v397
        %1026 = vmatprep.subr.mxu0 0.0
        %1027 = vmatpush1.msra.mxu0 %v398
        %1028 = vmatprep.subr.mxu0 0.0
        %1029 = vmatpush1.msra.mxu0 %v399
        %1030 = vmatprep.subr.mxu0 0.0
        %1031 = vmatpush1.msra.mxu0 %v400
        %1032 = vmatprep.subr.mxu0 0.0
        %1033 = vmatpush1.msra.mxu0 %v401
        %1034 = vmatprep.subr.mxu0 0.0
        %1035 = vmatpush1.msra.mxu0 %v402
        %1036 = vmatprep.subr.mxu0 0.0
        %1037 = vmatpush1.msra.mxu0 %v403
        %1038 = vmatprep.subr.mxu0 0.0
        %1039 = vmatpush1.msra.mxu0 %v404
        %1040 = vmatprep.subr.mxu0 0.0
        %1041 = vmatpush1.msra.mxu0 %v405
        %1042 = vmatprep.subr.mxu0 0.0
        %1043 = vmatpush1.msra.mxu0 %v406
        %1044 = vmatprep.subr.mxu0 0.0
        %1045 = vmatpush1.msra.mxu0 %v407
        %1046 = vmatprep.subr.mxu0 0.0
        %1047 = vmatpush1.msra.mxu0 %v408
        %1048 = vmatprep.subr.mxu0 0.0
        %1049 = vmatpush1.msra.mxu0 %v409
        %1050 = vmatprep.subr.mxu0 0.0
        %1051 = vmatpush1.msra.mxu0 %v410
        %1052 = vmatprep.subr.mxu0 0.0
        %1053 = vmatpush1.msra.mxu0 %v411
        %1054 = vmatprep.subr.mxu0 0.0
        %1055 = vmatpush1.msra.mxu0 %v412
        %1056 = vmatprep.subr.mxu0 0.0
        %1057 = vmatpush1.msra.mxu0 %v413
        %1058 = vmatprep.subr.mxu0 0.0
        %1059 = vmatpush1.msra.mxu0 %v414
        %1060 = vmatprep.subr.mxu0 0.0
        %1061 = vmatpush1.msra.mxu0 %v415
        %1062 = vmatprep.subr.mxu0 0.0
        %1063 = vmatpush1.msra.mxu0 %v416
        %1064 = vmatprep.mubr.f32.mxu0 %v552
        %1065 = vmatmul.mubr.f32.gmra.mrb[0].mxu0 %v544
        %v1066 = vpop.f32.mrb[0].mxu0
        %v1067 = vadd.f32 %v997, %v1066
        %v1068 = vpop.f32.mrb[0].mxu0
        %1069 = vdwg.mxu0
        %1070 = vmatprep.subr.mxu0 0.0
        %1071 = vmatpush1.msra.mxu0 %v417
        %1072 = vmatprep.subr.mxu0 0.0
        %1073 = vmatpush1.msra.mxu0 %v418
        %1074 = vmatprep.subr.mxu0 0.0
        %1075 = vmatpush1.msra.mxu0 %v419
        %1076 = vmatprep.subr.mxu0 0.0
        %1077 = vmatpush1.msra.mxu0 %v420
        %1078 = vmatprep.subr.mxu0 0.0
        %1079 = vmatpush1.msra.mxu0 %v421
        %1080 = vmatprep.subr.mxu0 0.0
        %1081 = vmatpush1.msra.mxu0 %v422
        %1082 = vmatprep.subr.mxu0 0.0
        %1083 = vmatpush1.msra.mxu0 %v423
        %1084 = vmatprep.subr.mxu0 0.0
        %1085 = vmatpush1.msra.mxu0 %v424
        %1086 = vmatprep.subr.mxu0 0.0
        %1087 = vmatpush1.msra.mxu0 %v425
        %1088 = vmatprep.subr.mxu0 0.0
        %1089 = vmatpush1.msra.mxu0 %v426
        %1090 = vmatprep.subr.mxu0 0.0
        %1091 = vmatpush1.msra.mxu0 %v427
        %1092 = vmatprep.subr.mxu0 0.0
        %1093 = vmatpush1.msra.mxu0 %v428
        %1094 = vmatprep.subr.mxu0 0.0
        %1095 = vmatpush1.msra.mxu0 %v429
        %1096 = vmatprep.subr.mxu0 0.0
        %1097 = vmatpush1.msra.mxu0 %v430
        %1098 = vmatprep.subr.mxu0 0.0
        %1099 = vmatpush1.msra.mxu0 %v431
        %1100 = vmatprep.subr.mxu0 0.0
        %1101 = vmatpush1.msra.mxu0 %v432
        %1102 = vmatprep.subr.mxu0 0.0
        %1103 = vmatpush1.msra.mxu0 %v433
        %1104 = vmatprep.subr.mxu0 0.0
        %1105 = vmatpush1.msra.mxu0 %v434
        %1106 = vmatprep.subr.mxu0 0.0
        %1107 = vmatpush1.msra.mxu0 %v435
        %1108 = vmatprep.subr.mxu0 0.0
        %1109 = vmatpush1.msra.mxu0 %v436
        %1110 = vmatprep.subr.mxu0 0.0
        %1111 = vmatpush1.msra.mxu0 %v437
        %1112 = vmatprep.subr.mxu0 0.0
        %1113 = vmatpush1.msra.mxu0 %v438
        %1114 = vmatprep.subr.mxu0 0.0
        %1115 = vmatpush1.msra.mxu0 %v439
        %1116 = vmatprep.subr.mxu0 0.0
        %1117 = vmatpush1.msra.mxu0 %v440
        %1118 = vmatprep.subr.mxu0 0.0
        %1119 = vmatpush1.msra.mxu0 %v441
        %1120 = vmatprep.subr.mxu0 0.0
        %1121 = vmatpush1.msra.mxu0 %v442
        %1122 = vmatprep.subr.mxu0 0.0
        %1123 = vmatpush1.msra.mxu0 %v443
        %1124 = vmatprep.subr.mxu0 0.0
        %1125 = vmatpush1.msra.mxu0 %v444
        %1126 = vmatprep.subr.mxu0 0.0
        %1127 = vmatpush1.msra.mxu0 %v445
        %1128 = vmatprep.subr.mxu0 0.0
        %1129 = vmatpush1.msra.mxu0 %v446
        %1130 = vmatprep.subr.mxu0 0.0
        %1131 = vmatpush1.msra.mxu0 %v447
        %1132 = vmatprep.subr.mxu0 0.0
        %1133 = vmatpush1.msra.mxu0 %v448
        %1134 = vmatprep.mubr.f32.mxu0 %v553
        %1135 = vmatmul.mubr.f32.gmra.mrb[0].mxu0 %v551
        %v1136 = vpop.f32.mrb[0].mxu0
        %v1137 = vadd.f32 %v1067, %v1136
        %v1138 = vpop.f32.mrb[0].mxu0
        %1139 = vdwg.mxu0
        %1140 = vmatprep.subr.mxu0 0.0
        %1141 = vmatpush1.msra.mxu0 %v449
        %1142 = vmatprep.subr.mxu0 0.0
        %1143 = vmatpush1.msra.mxu0 %v450
        %1144 = vmatprep.subr.mxu0 0.0
        %1145 = vmatpush1.msra.mxu0 %v451
        %1146 = vmatprep.subr.mxu0 0.0
        %1147 = vmatpush1.msra.mxu0 %v452
        %1148 = vmatprep.subr.mxu0 0.0
        %1149 = vmatpush1.msra.mxu0 %v453
        %1150 = vmatprep.subr.mxu0 0.0
        %1151 = vmatpush1.msra.mxu0 %v454
        %1152 = vmatprep.subr.mxu0 0.0
        %1153 = vmatpush1.msra.mxu0 %v455
        %1154 = vmatprep.subr.mxu0 0.0
        %1155 = vmatpush1.msra.mxu0 %v456
        %1156 = vmatprep.subr.mxu0 0.0
        %1157 = vmatpush1.msra.mxu0 %v457
        %1158 = vmatprep.subr.mxu0 0.0
        %1159 = vmatpush1.msra.mxu0 %v458
        %1160 = vmatprep.subr.mxu0 0.0
        %1161 = vmatpush1.msra.mxu0 %v459
        %1162 = vmatprep.subr.mxu0 0.0
        %1163 = vmatpush1.msra.mxu0 %v460
        %1164 = vmatprep.subr.mxu0 0.0
        %1165 = vmatpush1.msra.mxu0 %v461
        %1166 = vmatprep.subr.mxu0 0.0
        %1167 = vmatpush1.msra.mxu0 %v462
        %1168 = vmatprep.subr.mxu0 0.0
        %1169 = vmatpush1.msra.mxu0 %v463
        %1170 = vmatprep.subr.mxu0 0.0
        %1171 = vmatpush1.msra.mxu0 %v464
        %1172 = vmatprep.subr.mxu0 0.0
        %1173 = vmatpush1.msra.mxu0 %v465
        %1174 = vmatprep.subr.mxu0 0.0
        %1175 = vmatpush1.msra.mxu0 %v466
        %1176 = vmatprep.subr.mxu0 0.0
        %1177 = vmatpush1.msra.mxu0 %v467
        %1178 = vmatprep.subr.mxu0 0.0
        %1179 = vmatpush1.msra.mxu0 %v468
        %1180 = vmatprep.subr.mxu0 0.0
        %1181 = vmatpush1.msra.mxu0 %v469
        %1182 = vmatprep.subr.mxu0 0.0
        %1183 = vmatpush1.msra.mxu0 %v470
        %1184 = vmatprep.subr.mxu0 0.0
        %1185 = vmatpush1.msra.mxu0 %v471
        %1186 = vmatprep.subr.mxu0 0.0
        %1187 = vmatpush1.msra.mxu0 %v472
        %1188 = vmatprep.subr.mxu0 0.0
        %1189 = vmatpush1.msra.mxu0 %v473
        %1190 = vmatprep.subr.mxu0 0.0
        %1191 = vmatpush1.msra.mxu0 %v474
        %1192 = vmatprep.subr.mxu0 0.0
        %1193 = vmatpush1.msra.mxu0 %v475
        %1194 = vmatprep.subr.mxu0 0.0
        %1195 = vmatpush1.msra.mxu0 %v476
        %1196 = vmatprep.subr.mxu0 0.0
        %1197 = vmatpush1.msra.mxu0 %v477
        %1198 = vmatprep.subr.mxu0 0.0
        %1199 = vmatpush1.msra.mxu0 %v478
        %1200 = vmatprep.subr.mxu0 0.0
        %1201 = vmatpush1.msra.mxu0 %v479
        %1202 = vmatprep.subr.mxu0 0.0
        %1203 = vmatpush1.msra.mxu0 %v480
        %1204 = vmatprep.mubr.f32.mxu0 %v561
        %1205 = vmatmul.mubr.f32.gmra.mrb[0].mxu0 %v560
        %v1206 = vpop.f32.mrb[0].mxu0
        %v1207 = vadd.f32 %v1137, %v1206
        %v1208 = vpop.f32.mrb[0].mxu0
        %1209 = vdwg.mxu0
        %v1210 = vadd.f32 %v187, %v1207
        %vm1211 = vcmask 517120
        %1212 = vst.msk [vmem:[#allocation2] sm:$0x3] %vm1211, %v1210
        %p1213 = scmp.eq.s32.totalorder %s15, 4
        // Predicated region
        $region37: #{audio_model_forward.5} parent=31 // pred_check
          %p1214 = pneg %p1213
        $region38: #{audio_model_forward.5} parent=31 // pred_check_branch
          %1216 = sbr.rel (%p1214) target = $region40
        $region39: #{audio_model_forward.5} parent=31 // pred_region
          %v1217 = vld [vmem:[#allocation2] sm:$0x3]
          %v1218 = vld [vmem:[%s2] sm:$0x1]
          %v1220 = vlaneseq
          %v1221 = vshrl.u32 %v1220, 7
          %v1222 = vsub.s32 0, %v1221
          %v1223 = vrot.slane %v1218, %v1222
          %v1225 = vadd.f32 %v1217, %v1223
          %1226 = vst.msk [vmem:[#allocation2] sm:$0x3] %vm1211, %v1225
        $region40: #{audio_model_forward.5} parent=31 // pred_fallthru
          _
        // Predicated region
        $region41: #{audio_model_forward.5} parent=31 // pred_check
          %p1227 = pneg %p101
        $region42: #{audio_model_forward.5} parent=31 // pred_check_branch
          %1229 = sbr.rel (%p1227) target = $region44
        $region43: #{audio_model_forward.5} parent=31 // pred_region
          %s1231 = ssub.s32 32, 32
          %1232 = vsyncadd [#allocation3], %s1231
          %s1234 = sshll.u32 [#allocation2], 4
          %s1235 = int_to_ptr.vmem [resolvable:$true] %s1234
          %1237 = dma.vmem_to_hbm [thread:$0]  %s1235, 32, %s3, [#allocation3]
        $region44: #{audio_model_forward.5} parent=31 // pred_fallthru
          _
        // Predicated region
        $region45: #{audio_model_forward.5} parent=31 // pred_check
          %p1238 = pneg %p101
        $region46: #{audio_model_forward.5} parent=31 // pred_check_branch
          %1240 = sbr.rel (%p1238) target = $region48
        $region47: #{audio_model_forward.5} parent=31 // pred_region
          %1241 = dma.done [#allocation3], 32
        $region48: #{audio_model_forward.5} parent=31 // pred_fallthru
          _
      $region32: #{audio_model_forward.5} parent=5 // pred_fallthru
        _
      %p1242 = scmp.le.s32.totalorder 2, %s10
      // Predicated region
      $region49: #{audio_model_forward.5} parent=5 // pred_check
        %p1243 = pneg %p1242
      $region50: #{audio_model_forward.5} parent=5 // pred_check_branch
        %1245 = sbr.rel (%p1243) target = $region52
      $region51: #{audio_model_forward.5} parent=5 // pred_region
        %s1246 = ssub.s32 %s10, 2
      $region52: #{audio_model_forward.5} parent=5 // pred_fallthru
        _
    $region6: #{audio_model_forward.5} parent=1 // loop_footer
      %s14 = sadd.s32 1, %s10
    $region7: #{audio_model_forward.5} parent=1 // loop_footer_branch
      %9 = sbr.rel target = $region3
    $region8: #{audio_model_forward.5} parent=1 // loop_exit
      _
    %1247 = vsyncpa [#allocation3], 1
    %s1248 = scalar_lea.sflag [#allocation3], 1
    %1249 = vsyncpa %s1248, 1

</llo_original>
